<compile_context>
chip_gen: v5e
topology: v5e:2x2
jax: 0.10.0
libtpu: 0.0.40
codegen_flags: <defaults>
</compile_context>

<pallas_src>
import jax
import jax.numpy as jnp
import numpy as np
from jax.experimental import pallas as pl
from jax.experimental.pallas import tpu as pltpu

# ---------------- config (small, FastSpeech-ish) ----------------
VOCAB = 40
NUM_SPEAKERS = 4
BATCH = 2
SEQ = 8
D_MODEL = 32
NUM_HEADS = 2
HIDDEN = 128          # conv feed-forward channels (lane-dense)
DP_HIDDEN = 32        # duration-predictor hidden channels
OUT_CHANNELS = 128    # mel channels (lane-dense output)
KERNEL = 3
NUM_LAYERS = 2
LN_EPS = 1e-5

TRUNK_KEYS = ("wq", "wk", "wv", "bq", "bk", "bv", "wo", "bo",
              "n1w", "n1b", "n2w", "n2b", "c1w", "c1b", "c2w", "c2b", "fnw", "fnb")
DP_KEYS = ("d1w", "d1b", "l1w", "l1b", "d2w", "d2b", "l2w", "l2b", "dow", "dob")
N_TRUNK = len(TRUNK_KEYS)
N_DP = len(DP_KEYS)


# ---------------- in-kernel helpers (traced inside the Pallas bodies) ----------------
def _layer_norm(x, w, b):
    mu = jnp.mean(x, axis=-1, keepdims=True)
    xc = x - mu
    var = jnp.mean(xc * xc, axis=-1, keepdims=True)
    return xc * jax.lax.rsqrt(var + LN_EPS) * w + b


def _mm(a_bf16, w_bf16):
    """MXU matmul: bf16 operands, f32 accumulation."""
    return jnp.dot(a_bf16, w_bf16, preferred_element_type=jnp.float32)


def _conv1d_k3(x, sp, sn, w, b):
    """'same' Conv1d(kernel=3) over the flattened (N, Cin) sequence as 3 per-tap matmuls.

    sp / sn are block-diagonal 0/1 shift matrices (bf16) that fetch the previous / next row
    within the same batch element (zero across example boundaries -> per-sequence zero pad).
    w: (3, Cin, Cout) bf16, tap 0 = previous row, 1 = center, 2 = next row.
    """
    xb = x.astype(jnp.bfloat16)
    xp = _mm(sp, xb).astype(jnp.bfloat16)   # exact: sp selects bf16 rows
    xn = _mm(sn, xb).astype(jnp.bfloat16)
    return _mm(xp, w[0]) + _mm(xb, w[1]) + _mm(xn, w[2]) + b


def _fftr_trunk(x, attn_bias, sp, sn, keep, t):
    """FFTr block stack + (apply_mask -> LayerNorm -> apply_mask), on flattened (N, D)."""
    (wq, wk, wv, bq, bk, bv, wo, bo,
     n1w, n1b, n2w, n2b, c1w, c1b, c2w, c2b, fnw, fnb) = t
    N, D = x.shape
    Dh = D // NUM_HEADS
    scale = 1.0 / (Dh ** 0.5)

    # NOTE: dropout layers are eval-mode no-ops; attn_mask (src_mask) assumed None.
    for l in range(NUM_LAYERS):
        xb = x.astype(jnp.bfloat16)                 # one cast per layer, shared by all heads
        attn = jnp.zeros((N, D), jnp.float32)
        for h in range(NUM_HEADS):                  # per-head weight slabs: no lane slicing
            q = _mm(xb, wq[l, h]) + bq[l, h]
            k = _mm(xb, wk[l, h]) + bk[l, h]
            v = _mm(xb, wv[l, h]) + bv[l, h]
            qb = (q * scale).astype(jnp.bfloat16)
            kb = k.astype(jnp.bfloat16)
            sc = jnp.einsum("qe,ke->qk", qb, kb,
                            preferred_element_type=jnp.float32) + attn_bias      # (N, N)
            m = jnp.max(sc, axis=-1, keepdims=True)
            e = jnp.exp(sc - m)
            p = e * pl.reciprocal(jnp.sum(e, axis=-1, keepdims=True), approx=True)
            ctx = _mm(p.astype(jnp.bfloat16), v.astype(jnp.bfloat16))             # (N, Dh)
            # per-head out-projection slab accumulated in place: no head concatenation
            attn = attn + _mm(ctx.astype(jnp.bfloat16), wo[l, h])
        attn = attn + bo[l]
        x = _layer_norm(x + attn, n1w[l], n1b[l])

        # position-wise Conv1d(k=3) -> ReLU -> Conv1d(k=3) as per-tap MXU matmuls
        h1 = jnp.maximum(_conv1d_k3(x, sp, sn, c1w[l], c1b[l]), 0.0)
        h2 = _conv1d_k3(h1, sp, sn, c2w[l], c2b[l])
        x = _layer_norm(x + h2, n2w[l], n2b[l])

    # Encoder/Decoder tail: apply_mask -> final LayerNorm -> apply_mask
    x = x * keep
    x = _layer_norm(x, fnw[...], fnb[...])
    x = x * keep
    return x


# ---------------- fused kernels ----------------
def encoder_kernel(x_ref, spk_ref, bias_ref, sp_ref, sn_ref, keep_ref, *rest):
    """FFTr encoder stack -> mask/LN/mask -> blend(+spk) -> duration predictor."""
    trunk = rest[:N_TRUNK]
    dp = rest[N_TRUNK:N_TRUNK + N_DP]
    h_ref = rest[N_TRUNK + N_DP]
    dur_ref = rest[N_TRUNK + N_DP + 1]

    sp = sp_ref[...].astype(jnp.bfloat16)
    sn = sn_ref[...].astype(jnp.bfloat16)
    keep = keep_ref[...]
    h = _fftr_trunk(x_ref[...], bias_ref[...], sp, sn, keep, trunk)
    hb = h + spk_ref[...]                       # blend_embeddings(h_src, spk_emb), "add"
    h_ref[...] = hb

    # duration predictor: (Conv1d k=3 -> ReLU -> LayerNorm) x 2 -> Linear(. -> 1)
    d1w, d1b, l1w, l1b, d2w, d2b, l2w, l2b, dow, dob = dp
    d1 = _layer_norm(jnp.maximum(_conv1d_k3(hb, sp, sn, d1w[...], d1b[...]), 0.0),
                     l1w[...], l1b[...])
    d2 = _layer_norm(jnp.maximum(_conv1d_k3(d1, sp, sn, d2w[...], d2b[...]), 0.0),
                     l2w[...], l2b[...])
    # 1-wide Linear done as elementwise mul + lane reduction (avoids a 1-column matmul)
    dur_ref[...] = jnp.sum(d2 * dow[...], axis=-1, keepdims=True) + dob[...]


def decoder_kernel(x_ref, spk_ref, bias_ref, sp_ref, sn_ref, keep_ref, *rest):
    """blend(+spk) -> FFTr decoder stack -> mask/LN/mask -> Linear(out_channels) -> mask."""
    trunk = rest[:N_TRUNK]
    pw_ref, pb_ref, y_ref = rest[N_TRUNK], rest[N_TRUNK + 1], rest[N_TRUNK + 2]
    sp = sp_ref[...].astype(jnp.bfloat16)
    sn = sn_ref[...].astype(jnp.bfloat16)
    keep = keep_ref[...]
    x = x_ref[...] + spk_ref[...]               # blend_embeddings(h_tgt, spk_emb), "add"
    h = _fftr_trunk(x, bias_ref[...], sp, sn, keep, trunk)
    y = _mm(h.astype(jnp.bfloat16), pw_ref[...]) + pb_ref[...]   # mel projection (lane-dense)
    y_ref[...] = y * keep                       # zero padded target frames


# ---------------- pallas_call plumbing ----------------
def _row_spec(rows, trailing):
    nd = 1 + len(trailing)
    return pl.BlockSpec((rows,) + tuple(trailing),
                        lambda b, _nd=nd: (b,) + (0,) * (_nd - 1))


def _sq_spec(rows):
    return pl.BlockSpec((None, rows, rows), lambda b: (b, 0, 0))


def _full_spec(arr):
    nd = arr.ndim
    return pl.BlockSpec(arr.shape, lambda b, _nd=nd: (0,) * _nd)


def _rows_per_program(B, S, batch_tile):
    # v5e/v6e (single TensorCore): one program over the whole flattened batch
    # (per-grid-step overhead dominates at this size).  On dual-TC v7x pass
    # batch_tile=B//2 so the "parallel" grid axis shards the batch across cores.
    if batch_tile is None or batch_tile >= B:
        return B * S
    if B % batch_tile != 0 or (batch_tile * S) % 8 != 0:
        return B * S
    return batch_tile * S


def _encoder_call(x, spk, attn_bias, sp, sn, keep, enc_w, dp_w, *, rows_per_program):
    N, D = x.shape
    r = rows_per_program
    data = (x, spk, attn_bias, sp, sn, keep)
    data_specs = [
        _row_spec(r, (D,)),
        _row_spec(r, (D,)),
        _sq_spec(r),
        _sq_spec(r),
        _sq_spec(r),
        _row_spec(r, (1,)),
    ]
    weights = tuple(enc_w[k] for k in TRUNK_KEYS) + tuple(dp_w[k] for k in DP_KEYS)
    # TODO(synk): at production sizes (D>=256, S in the hundreds) stream per-layer weights
    # (layer grid axis marked "arbitrary" or manual make_async_copy double-buffering) and
    # set vmem_limit_bytes explicitly instead of keeping the whole stack resident.
    return pl.pallas_call(
        encoder_kernel,
        grid=(N // r,),
        in_specs=data_specs + [_full_spec(w) for w in weights],
        out_specs=(_row_spec(r, (D,)), _row_spec(r, (1,))),
        out_shape=(jax.ShapeDtypeStruct((N, D), jnp.float32),
                   jax.ShapeDtypeStruct((N, 1), jnp.float32)),
        compiler_params=pltpu.CompilerParams(dimension_semantics=("parallel",)),
    )(*data, *weights)


def _decoder_call(x, spk, attn_bias, sp, sn, keep, dec_w, mel_w, mel_b, *, rows_per_program):
    N, D = x.shape
    r = rows_per_program
    data = (x, spk, attn_bias, sp, sn, keep)
    data_specs = [
        _row_spec(r, (D,)),
        _row_spec(r, (D,)),
        _sq_spec(r),
        _sq_spec(r),
        _sq_spec(r),
        _row_spec(r, (1,)),
    ]
    weights = tuple(dec_w[k] for k in TRUNK_KEYS) + (mel_w, mel_b)
    return pl.pallas_call(
        decoder_kernel,
        grid=(N // r,),
        in_specs=data_specs + [_full_spec(w) for w in weights],
        out_specs=_row_spec(r, (OUT_CHANNELS,)),
        out_shape=jax.ShapeDtypeStruct((N, OUT_CHANNELS), jnp.float32),
        compiler_params=pltpu.CompilerParams(dimension_semantics=("parallel",)),
    )(*data, *weights)


# ---------------- JAX glue: PE, masks, full forward ----------------
def sinusoidal_pe(seq_len, d_model):
    pos = jnp.arange(seq_len, dtype=jnp.float32)[:, None]
    i = jnp.arange(0, d_model, 2, dtype=jnp.float32)
    div = jnp.exp(-jnp.log(10000.0) * i / d_model)
    ang = pos * div
    return jnp.stack([jnp.sin(ang), jnp.cos(ang)], axis=-1).reshape(seq_len, d_model)


def _flat_masks(key_padding_mask, rows_per_program):
    """Masks for the flattened (B*S, D) layout.

    attn_bias:  (G, r, r) additive bias per grid program (block-diagonal over batch
                elements; -1e9 on padded keys / cross-example pairs).
    shift_prev/shift_next: (G, r, r) 0/1 matrices fetching the previous / next row inside
                the same batch element (emulate per-sequence conv zero padding, on the MXU).
    keep:       (N, 1) 1.0 on valid positions.
    """
    B, S = key_padding_mask.shape
    N = B * S
    r = rows_per_program
    G = N // r
    pad = key_padding_mask.reshape(N)
    batch_id = jnp.repeat(jnp.arange(B, dtype=jnp.int32), S)
    same_batch = batch_id[:, None] == batch_id[None, :]
    bias = jnp.where(same_batch & jnp.logical_not(pad)[None, :], 0.0, -1e9).astype(jnp.float32)
    idx = jnp.arange(N, dtype=jnp.int32)
    shift_prev = (same_batch & (idx[None, :] == idx[:, None] - 1)).astype(jnp.float32)
    shift_next = (same_batch & (idx[None, :] == idx[:, None] + 1)).astype(jnp.float32)

    g = jnp.arange(G)

    def blk(m):  # (N, N) -> (G, r, r) diagonal blocks
        return m.reshape(G, r, G, r)[g, :, g, :]

    keep = jnp.logical_not(pad).astype(jnp.float32)[:, None]
    return blk(bias), blk(shift_prev), blk(shift_next), keep


def multi_speaker_fastspeech(src, speaker, duration, params, *, max_tgt_len, batch_tile=None):
    """MultiSpeakerFastSpeech.forward (batch_first=True, blend_type='add', duration given)."""
    B, S = src.shape
    D = D_MODEL
    src_key_padding_mask = duration == 0                       # (B, S) bool

    # speaker encoder (nn.Embedding) + encoder front-end (word embedding + PE): glue gathers
    spk_emb = params["spk"][speaker]                           # (B, D)
    x = params["emb"][src] + sinusoidal_pe(S, D)[None]         # (B, S, D)

    rp_src = _rows_per_program(B, S, batch_tile)
    bias_s, sp_s, sn_s, keep_s = _flat_masks(src_key_padding_mask, rp_src)
    spk_s = jnp.broadcast_to(spk_emb[:, None, :], (B, S, D)).reshape(B * S, D)
    h_flat, logd_flat = _encoder_call(
        x.reshape(B * S, D), spk_s, bias_s, sp_s, sn_s, keep_s,
        params["enc"], params["dp"], rows_per_program=rp_src)
    h_blend = h_flat.reshape(B, S, D)                          # blend_embeddings(encoder(src), spk)
    log_est_duration = logd_flat.reshape(B, S)                 # duration_predictor(h_blend)

    # duration is provided -> linear_est_duration = duration
    # TODO(synk): duration=None inference branch (transform_log_duration) not implemented.
    linear_est_duration = duration
    tgt_length = jnp.sum(linear_est_duration, axis=1)          # (B,)
    T = max_tgt_len

    # length regulator (JAX glue: data-dependent gather); token i repeated duration[i] times
    frame = jnp.arange(T, dtype=jnp.int32)
    cum = jnp.cumsum(linear_est_duration, axis=1)              # (B, S)
    token_idx = jnp.sum((cum[:, None, :] <= frame[None, :, None]).astype(jnp.int32), axis=-1)
    token_idx = jnp.minimum(token_idx, S - 1)                  # (B, T)
    h_tgt = h_blend[jnp.arange(B)[:, None], token_idx]         # (B, T, D)
    tgt_key_padding_mask = frame[None, :] >= tgt_length[:, None]
    h_tgt = jnp.where(tgt_key_padding_mask[:, :, None], 0.0, h_tgt)

    rp_tgt = _rows_per_program(B, T, batch_tile)
    bias_t, sp_t, sn_t, keep_t = _flat_masks(tgt_key_padding_mask, rp_tgt)
    spk_t = jnp.broadcast_to(spk_emb[:, None, :], (B, T, D)).reshape(B * T, D)
    y_flat = _decoder_call(
        h_tgt.reshape(B * T, D), spk_t, bias_t, sp_t, sn_t, keep_t,
        params["dec"], params["mel_w"], params["mel_b"], rows_per_program=rp_tgt)
    output = jnp.transpose(y_flat.reshape(B, T, OUT_CHANNELS), (0, 2, 1))   # (B, C_out, T)
    return output, log_est_duration


# ---------------- parameter init (torch-style layouts) + kernel-layout prep ----------------
def init_params(key):
    k_enc, k_dec, k_dp, k_mel, k_emb, k_spk = jax.random.split(key, 6)

    def nrm(k, shape, scale=0.05):
        return scale * jax.random.normal(k, shape, dtype=jnp.float32)

    def trunk(k):
        k1, k2, k3, k4 = jax.random.split(k, 4)
        L, D, Hc, K = NUM_LAYERS, D_MODEL, HIDDEN, KERNEL
        return dict(
            in_proj_w=nrm(k1, (L, 3 * D, D)),
            in_proj_b=jnp.zeros((L, 3 * D), jnp.float32),
            out_proj_w=nrm(k2, (L, D, D)),
            out_proj_b=jnp.zeros((L, D), jnp.float32),
            norm1_w=jnp.ones((L, D), jnp.float32), norm1_b=jnp.zeros((L, D), jnp.float32),
            norm2_w=jnp.ones((L, D), jnp.float32), norm2_b=jnp.zeros((L, D), jnp.float32),
            conv1_w=nrm(k3, (L, Hc, D, K)), conv1_b=jnp.zeros((L, Hc), jnp.float32),
            conv2_w=nrm(k4, (L, D, Hc, K)), conv2_b=jnp.zeros((L, D), jnp.float32),
            final_norm_w=jnp.ones((D,), jnp.float32), final_norm_b=jnp.zeros((D,), jnp.float32),
        )

    kd1, kd2, kd3 = jax.random.split(k_dp, 3)
    dp = dict(
        conv1_w=nrm(kd1, (DP_HIDDEN, D_MODEL, KERNEL)), conv1_b=jnp.zeros((DP_HIDDEN,), jnp.float32),
        ln1_w=jnp.ones((DP_HIDDEN,), jnp.float32), ln1_b=jnp.zeros((DP_HIDDEN,), jnp.float32),
        conv2_w=nrm(kd2, (DP_HIDDEN, DP_HIDDEN, KERNEL)), conv2_b=jnp.zeros((DP_HIDDEN,), jnp.float32),
        ln2_w=jnp.ones((DP_HIDDEN,), jnp.float32), ln2_b=jnp.zeros((DP_HIDDEN,), jnp.float32),
        fc_w=nrm(kd3, (1, DP_HIDDEN)), fc_b=jnp.zeros((1,), jnp.float32),
    )
    return dict(
        emb=nrm(k_emb, (VOCAB, D_MODEL), 0.1).at[0].set(0.0),   # padding_idx=0
        spk=nrm(k_spk, (NUM_SPEAKERS, D_MODEL), 0.1),
        enc=trunk(k_enc),
        dec=trunk(k_dec),
        dp=dp,
        mel_w=nrm(k_mel, (OUT_CHANNELS, D_MODEL)),
        mel_b=jnp.zeros((OUT_CHANNELS,), jnp.float32),
    )


def _prep_trunk(p):
    """Pre-transpose / pre-split torch-layout weights into kernel layouts (one-time)."""
    L, D, H = NUM_LAYERS, D_MODEL, NUM_HEADS
    Dh = D // H
    Wq, Wk, Wv = jnp.split(p["in_proj_w"], 3, axis=1)    # each (L, D, D), rows = output dims
    bq, bk, bv = jnp.split(p["in_proj_b"], 3, axis=1)    # each (L, D)

    def head_w(W):   # -> (L, H, D, Dh), pre-transposed for x @ W
        return jnp.transpose(W.reshape(L, H, Dh, D), (0, 1, 3, 2)).astype(jnp.bfloat16)

    def head_b(b):
        return b.reshape(L, H, 1, Dh)

    def conv_w(w):   # (L, Cout, Cin, K) -> (L, K, Cin, Cout) for per-tap matmuls
        return jnp.transpose(w, (0, 3, 2, 1)).astype(jnp.bfloat16)

    return dict(
        wq=head_w(Wq), wk=head_w(Wk), wv=head_w(Wv),
        bq=head_b(bq), bk=head_b(bk), bv=head_b(bv),
        wo=jnp.transpose(p["out_proj_w"], (0, 2, 1)).reshape(L, H, Dh, D).astype(jnp.bfloat16),
        bo=p["out_proj_b"].reshape(L, 1, D),
        n1w=p["norm1_w"].reshape(L, 1, D), n1b=p["norm1_b"].reshape(L, 1, D),
        n2w=p["norm2_w"].reshape(L, 1, D), n2b=p["norm2_b"].reshape(L, 1, D),
        c1w=conv_w(p["conv1_w"]), c1b=p["conv1_b"].reshape(L, 1, HIDDEN),
        c2w=conv_w(p["conv2_w"]), c2b=p["conv2_b"].reshape(L, 1, D),
        fnw=p["final_norm_w"].reshape(1, D), fnb=p["final_norm_b"].reshape(1, D),
    )


def _prep_durpred(p):
    Hd = DP_HIDDEN

    def conv_w(w):   # (Cout, Cin, K) -> (K, Cin, Cout)
        return jnp.transpose(w, (2, 1, 0)).astype(jnp.bfloat16)

    return dict(
        d1w=conv_w(p["conv1_w"]), d1b=p["conv1_b"].reshape(1, Hd),
        l1w=p["ln1_w"].reshape(1, Hd), l1b=p["ln1_b"].reshape(1, Hd),
        d2w=conv_w(p["conv2_w"]), d2b=p["conv2_b"].reshape(1, Hd),
        l2w=p["ln2_w"].reshape(1, Hd), l2b=p["ln2_b"].reshape(1, Hd),
        dow=p["fc_w"].reshape(1, Hd),      # used as mul + lane reduction in-kernel
        dob=p["fc_b"].reshape(1, 1),
    )


def prepare_params(raw):
    return dict(
        emb=raw["emb"],
        spk=raw["spk"],
        enc=_prep_trunk(raw["enc"]),
        dec=_prep_trunk(raw["dec"]),
        dp=_prep_durpred(raw["dp"]),
        mel_w=jnp.transpose(raw["mel_w"]).astype(jnp.bfloat16),   # (D, OUT_CHANNELS)
        mel_b=raw["mel_b"].reshape(1, OUT_CHANNELS),
    )


# ---------------- main ----------------
if __name__ == "__main__":
    key = jax.random.PRNGKey(0)
    pkey, skey = jax.random.split(key)
    kparams = prepare_params(init_params(pkey))

    duration_np = np.array([[2, 3, 1, 2, 1, 1, 2, 2],
                            [1, 2, 2, 1, 2, 0, 0, 0]], dtype=np.int32)
    duration = jnp.asarray(duration_np)
    tgt_lengths = duration_np.sum(axis=1)
    max_tgt_len = int(tgt_lengths.max())        # torch: max_tgt_length = max(tgt_length)

    src = jax.random.randint(skey, (BATCH, SEQ), 1, VOCAB, dtype=jnp.int32)
    src = jnp.where(duration == 0, 0, src)      # padding_idx tokens at padded positions
    speaker = jnp.array([0, NUM_SPEAKERS - 1], dtype=jnp.int32)

    fwd = jax.jit(multi_speaker_fastspeech, static_argnames=("max_tgt_len", "batch_tile"))
    output, log_est_duration = fwd(src, speaker, duration, kparams, max_tgt_len=max_tgt_len)
    output = jax.block_until_ready(output)
    log_est_duration = jax.block_until_ready(log_est_duration)

    assert output.shape == (BATCH, OUT_CHANNELS, max_tgt_len)
    assert log_est_duration.shape == (BATCH, SEQ)
    assert not bool(jnp.isnan(output).any())
    assert not bool(jnp.isnan(log_est_duration).any())
    # padded target frames (beyond each example's total duration) are zeroed
    assert bool(jnp.all(output[1, :, int(tgt_lengths[1]):] == 0.0))
    print("KERNEL_OK")
</pallas_src>

<mosaic_0001>
module attributes {stable_mosaic.version = 11 : i64} {
  func.func @encoder_kernel(%arg0: i32, %arg1: memref<16x32xf32, #tpu.memory_space<vmem>>, %arg2: memref<16x32xf32, #tpu.memory_space<vmem>>, %arg3: memref<1x16x16xf32, #tpu.memory_space<vmem>>, %arg4: memref<1x16x16xf32, #tpu.memory_space<vmem>>, %arg5: memref<1x16x16xf32, #tpu.memory_space<vmem>>, %arg6: memref<16x1xf32, #tpu.memory_space<vmem>>, %arg7: memref<2x2x32x16xbf16, #tpu.memory_space<vmem>>, %arg8: memref<2x2x32x16xbf16, #tpu.memory_space<vmem>>, %arg9: memref<2x2x32x16xbf16, #tpu.memory_space<vmem>>, %arg10: memref<2x2x1x16xf32, #tpu.memory_space<vmem>>, %arg11: memref<2x2x1x16xf32, #tpu.memory_space<vmem>>, %arg12: memref<2x2x1x16xf32, #tpu.memory_space<vmem>>, %arg13: memref<2x2x16x32xbf16, #tpu.memory_space<vmem>>, %arg14: memref<2x1x32xf32, #tpu.memory_space<vmem>>, %arg15: memref<2x1x32xf32, #tpu.memory_space<vmem>>, %arg16: memref<2x1x32xf32, #tpu.memory_space<vmem>>, %arg17: memref<2x1x32xf32, #tpu.memory_space<vmem>>, %arg18: memref<2x1x32xf32, #tpu.memory_space<vmem>>, %arg19: memref<2x3x32x128xbf16, #tpu.memory_space<vmem>>, %arg20: memref<2x1x128xf32, #tpu.memory_space<vmem>>, %arg21: memref<2x3x128x32xbf16, #tpu.memory_space<vmem>>, %arg22: memref<2x1x32xf32, #tpu.memory_space<vmem>>, %arg23: memref<1x32xf32, #tpu.memory_space<vmem>>, %arg24: memref<1x32xf32, #tpu.memory_space<vmem>>, %arg25: memref<3x32x32xbf16, #tpu.memory_space<vmem>>, %arg26: memref<1x32xf32, #tpu.memory_space<vmem>>, %arg27: memref<1x32xf32, #tpu.memory_space<vmem>>, %arg28: memref<1x32xf32, #tpu.memory_space<vmem>>, %arg29: memref<3x32x32xbf16, #tpu.memory_space<vmem>>, %arg30: memref<1x32xf32, #tpu.memory_space<vmem>>, %arg31: memref<1x32xf32, #tpu.memory_space<vmem>>, %arg32: memref<1x32xf32, #tpu.memory_space<vmem>>, %arg33: memref<1x32xf32, #tpu.memory_space<vmem>>, %arg34: memref<1x1xf32, #tpu.memory_space<vmem>>, %arg35: memref<16x32xf32, #tpu.memory_space<vmem>>, %arg36: memref<16x1xf32, #tpu.memory_space<vmem>>) attributes {dimension_semantics = [#tpu.dimension_semantics<parallel>], iteration_bounds = array<i64: 1>, scalar_prefetch = 0 : i64, scratch_operands = 0 : i64, tpu.core_type = #tpu.core_type<tc>, window_params = [{transform_indices = @transform_0, window_bounds = array<i64: 16, 32>}, {transform_indices = @transform_1, window_bounds = array<i64: 16, 32>}, {transform_indices = @transform_2, window_bounds = array<i64: 1, 16, 16>}, {transform_indices = @transform_3, window_bounds = array<i64: 1, 16, 16>}, {transform_indices = @transform_4, window_bounds = array<i64: 1, 16, 16>}, {transform_indices = @transform_5, window_bounds = array<i64: 16, 1>}, {pipeline_mode = #tpu.pipeline_mode<synchronous>, transform_indices = @transform_6, window_bounds = array<i64: 2, 2, 32, 16>}, {pipeline_mode = #tpu.pipeline_mode<synchronous>, transform_indices = @transform_7, window_bounds = array<i64: 2, 2, 32, 16>}, {pipeline_mode = #tpu.pipeline_mode<synchronous>, transform_indices = @transform_8, window_bounds = array<i64: 2, 2, 32, 16>}, {pipeline_mode = #tpu.pipeline_mode<synchronous>, transform_indices = @transform_9, window_bounds = array<i64: 2, 2, 1, 16>}, {pipeline_mode = #tpu.pipeline_mode<synchronous>, transform_indices = @transform_10, window_bounds = array<i64: 2, 2, 1, 16>}, {pipeline_mode = #tpu.pipeline_mode<synchronous>, transform_indices = @transform_11, window_bounds = array<i64: 2, 2, 1, 16>}, {pipeline_mode = #tpu.pipeline_mode<synchronous>, transform_indices = @transform_12, window_bounds = array<i64: 2, 2, 16, 32>}, {pipeline_mode = #tpu.pipeline_mode<synchronous>, transform_indices = @transform_13, window_bounds = array<i64: 2, 1, 32>}, {pipeline_mode = #tpu.pipeline_mode<synchronous>, transform_indices = @transform_14, window_bounds = array<i64: 2, 1, 32>}, {pipeline_mode = #tpu.pipeline_mode<synchronous>, transform_indices = @transform_15, window_bounds = array<i64: 2, 1, 32>}, {pipeline_mode = #tpu.pipeline_mode<synchronous>, transform_indices = @transform_16, window_bounds = array<i64: 2, 1, 32>}, {pipeline_mode = #tpu.pipeline_mode<synchronous>, transform_indices = @transform_17, window_bounds = array<i64: 2, 1, 32>}, {pipeline_mode = #tpu.pipeline_mode<synchronous>, transform_indices = @transform_18, window_bounds = array<i64: 2, 3, 32, 128>}, {pipeline_mode = #tpu.pipeline_mode<synchronous>, transform_indices = @transform_19, window_bounds = array<i64: 2, 1, 128>}, {pipeline_mode = #tpu.pipeline_mode<synchronous>, transform_indices = @transform_20, window_bounds = array<i64: 2, 3, 128, 32>}, {pipeline_mode = #tpu.pipeline_mode<synchronous>, transform_indices = @transform_21, window_bounds = array<i64: 2, 1, 32>}, {pipeline_mode = #tpu.pipeline_mode<synchronous>, transform_indices = @transform_22, window_bounds = array<i64: 1, 32>}, {pipeline_mode = #tpu.pipeline_mode<synchronous>, transform_indices = @transform_23, window_bounds = array<i64: 1, 32>}, {pipeline_mode = #tpu.pipeline_mode<synchronous>, transform_indices = @transform_24, window_bounds = array<i64: 3, 32, 32>}, {pipeline_mode = #tpu.pipeline_mode<synchronous>, transform_indices = @transform_25, window_bounds = array<i64: 1, 32>}, {pipeline_mode = #tpu.pipeline_mode<synchronous>, transform_indices = @transform_26, window_bounds = array<i64: 1, 32>}, {pipeline_mode = #tpu.pipeline_mode<synchronous>, transform_indices = @transform_27, window_bounds = array<i64: 1, 32>}, {pipeline_mode = #tpu.pipeline_mode<synchronous>, transform_indices = @transform_28, window_bounds = array<i64: 3, 32, 32>}, {pipeline_mode = #tpu.pipeline_mode<synchronous>, transform_indices = @transform_29, window_bounds = array<i64: 1, 32>}, {pipeline_mode = #tpu.pipeline_mode<synchronous>, transform_indices = @transform_30, window_bounds = array<i64: 1, 32>}, {pipeline_mode = #tpu.pipeline_mode<synchronous>, transform_indices = @transform_31, window_bounds = array<i64: 1, 32>}, {pipeline_mode = #tpu.pipeline_mode<synchronous>, transform_indices = @transform_32, window_bounds = array<i64: 1, 32>}, {pipeline_mode = #tpu.pipeline_mode<synchronous>, transform_indices = @transform_33, window_bounds = array<i64: 1, 1>}, {transform_indices = @transform_34, window_bounds = array<i64: 16, 32>}, {transform_indices = @transform_35, window_bounds = array<i64: 16, 1>}]} {
    %c0 = arith.constant 0 : index
    %c0_0 = arith.constant 0 : index
    %c0_1 = arith.constant 0 : index
    %0 = vector.load %arg4[%c0, %c0_0, %c0_1] : memref<1x16x16xf32, #tpu.memory_space<vmem>>, vector<1x16x16xf32>
    %1 = vector.shape_cast %0 : vector<1x16x16xf32> to vector<16x16xf32>
    %2 = arith.truncf %1 : vector<16x16xf32> to vector<16x16xbf16>
    %c0_2 = arith.constant 0 : index
    %c0_3 = arith.constant 0 : index
    %c0_4 = arith.constant 0 : index
    %3 = vector.load %arg5[%c0_2, %c0_3, %c0_4] : memref<1x16x16xf32, #tpu.memory_space<vmem>>, vector<1x16x16xf32>
    %4 = vector.shape_cast %3 : vector<1x16x16xf32> to vector<16x16xf32>
    %5 = arith.truncf %4 : vector<16x16xf32> to vector<16x16xbf16>
    %c0_5 = arith.constant 0 : index
    %c0_6 = arith.constant 0 : index
    %6 = vector.load %arg6[%c0_5, %c0_6] : memref<16x1xf32, #tpu.memory_space<vmem>>, vector<16x1xf32>
    %c0_7 = arith.constant 0 : index
    %c0_8 = arith.constant 0 : index
    %7 = vector.load %arg1[%c0_7, %c0_8] : memref<16x32xf32, #tpu.memory_space<vmem>>, vector<16x32xf32>
    %c0_9 = arith.constant 0 : index
    %c0_10 = arith.constant 0 : index
    %c0_11 = arith.constant 0 : index
    %8 = vector.load %arg3[%c0_9, %c0_10, %c0_11] : memref<1x16x16xf32, #tpu.memory_space<vmem>>, vector<1x16x16xf32>
    %9 = vector.shape_cast %8 : vector<1x16x16xf32> to vector<16x16xf32>
    %10 = arith.truncf %7 : vector<16x32xf32> to vector<16x32xbf16>
    %cst = arith.constant 0.000000e+00 : f32
    %11 = vector.broadcast %cst : f32 to vector<16x32xf32>
    %c0_12 = arith.constant 0 : index
    %c0_13 = arith.constant 0 : index
    %c0_14 = arith.constant 0 : index
    %c0_15 = arith.constant 0 : index
    %12 = vector.load %arg7[%c0_12, %c0_13, %c0_14, %c0_15] : memref<2x2x32x16xbf16, #tpu.memory_space<vmem>>, vector<1x1x32x16xbf16>
    %13 = vector.shape_cast %12 : vector<1x1x32x16xbf16> to vector<32x16xbf16>
    %cst_16 = arith.constant dense<0.000000e+00> : vector<16x16xf32>
    %14 = tpu.matmul %10, %13, %cst_16 {dimension_numbers = #tpu.dot_dimension_numbers<[1], [0], [0], [1], [0, 0, 1, 1], [], []>} : vector<16x32xbf16>, vector<32x16xbf16>, vector<16x16xf32> -> vector<16x16xf32>
    %c0_17 = arith.constant 0 : index
    %c0_18 = arith.constant 0 : index
    %c0_19 = arith.constant 0 : index
    %c0_20 = arith.constant 0 : index
    %15 = vector.load %arg10[%c0_17, %c0_18, %c0_19, %c0_20] : memref<2x2x1x16xf32, #tpu.memory_space<vmem>>, vector<1x1x1x16xf32>
    %16 = vector.shape_cast %15 : vector<1x1x1x16xf32> to vector<1x16xf32>
    %17 = vector.broadcast %16 : vector<1x16xf32> to vector<16x16xf32>
    %18 = arith.addf %14, %17 : vector<16x16xf32>
    %c0_21 = arith.constant 0 : index
    %c0_22 = arith.constant 0 : index
    %c0_23 = arith.constant 0 : index
    %c0_24 = arith.constant 0 : index
    %19 = vector.load %arg8[%c0_21, %c0_22, %c0_23, %c0_24] : memref<2x2x32x16xbf16, #tpu.memory_space<vmem>>, vector<1x1x32x16xbf16>
    %20 = vector.shape_cast %19 : vector<1x1x32x16xbf16> to vector<32x16xbf16>
    %cst_25 = arith.constant dense<0.000000e+00> : vector<16x16xf32>
    %21 = tpu.matmul %10, %20, %cst_25 {dimension_numbers = #tpu.dot_dimension_numbers<[1], [0], [0], [1], [0, 0, 1, 1], [], []>} : vector<16x32xbf16>, vector<32x16xbf16>, vector<16x16xf32> -> vector<16x16xf32>
    %c0_26 = arith.constant 0 : index
    %c0_27 = arith.constant 0 : index
    %c0_28 = arith.constant 0 : index
    %c0_29 = arith.constant 0 : index
    %22 = vector.load %arg11[%c0_26, %c0_27, %c0_28, %c0_29] : memref<2x2x1x16xf32, #tpu.memory_space<vmem>>, vector<1x1x1x16xf32>
    %23 = vector.shape_cast %22 : vector<1x1x1x16xf32> to vector<1x16xf32>
    %24 = vector.broadcast %23 : vector<1x16xf32> to vector<16x16xf32>
    %25 = arith.addf %21, %24 : vector<16x16xf32>
    %c0_30 = arith.constant 0 : index
    %c0_31 = arith.constant 0 : index
    %c0_32 = arith.constant 0 : index
    %c0_33 = arith.constant 0 : index
    %26 = vector.load %arg9[%c0_30, %c0_31, %c0_32, %c0_33] : memref<2x2x32x16xbf16, #tpu.memory_space<vmem>>, vector<1x1x32x16xbf16>
    %27 = vector.shape_cast %26 : vector<1x1x32x16xbf16> to vector<32x16xbf16>
    %cst_34 = arith.constant dense<0.000000e+00> : vector<16x16xf32>
    %28 = tpu.matmul %10, %27, %cst_34 {dimension_numbers = #tpu.dot_dimension_numbers<[1], [0], [0], [1], [0, 0, 1, 1], [], []>} : vector<16x32xbf16>, vector<32x16xbf16>, vector<16x16xf32> -> vector<16x16xf32>
    %c0_35 = arith.constant 0 : index
    %c0_36 = arith.constant 0 : index
    %c0_37 = arith.constant 0 : index
    %c0_38 = arith.constant 0 : index
    %29 = vector.load %arg12[%c0_35, %c0_36, %c0_37, %c0_38] : memref<2x2x1x16xf32, #tpu.memory_space<vmem>>, vector<1x1x1x16xf32>
    %30 = vector.shape_cast %29 : vector<1x1x1x16xf32> to vector<1x16xf32>
    %31 = vector.broadcast %30 : vector<1x16xf32> to vector<16x16xf32>
    %32 = arith.addf %28, %31 : vector<16x16xf32>
    %cst_39 = arith.constant 2.500000e-01 : f32
    %33 = vector.broadcast %cst_39 : f32 to vector<16x16xf32>
    %34 = arith.mulf %18, %33 : vector<16x16xf32>
    %35 = arith.truncf %34 : vector<16x16xf32> to vector<16x16xbf16>
    %36 = arith.truncf %25 : vector<16x16xf32> to vector<16x16xbf16>
    "tpu.trace_start"() <{level = 10 : i32, message = "qe,ke->qk"}> : () -> ()
    %cst_40 = arith.constant dense<0.000000e+00> : vector<16x16xf32>
    %37 = tpu.matmul %35, %36, %cst_40 {dimension_numbers = #tpu.dot_dimension_numbers<[1], [1], [0], [0], [0, 0, 1, 0], [], []>} : vector<16x16xbf16>, vector<16x16xbf16>, vector<16x16xf32> -> vector<16x16xf32>
    "tpu.trace_stop"() : () -> ()
    %38 = arith.addf %37, %9 : vector<16x16xf32>
    %cst_41 = arith.constant dense<0xFF800000> : vector<16xf32>
    %39 = vector.multi_reduction <maximumf>, %38, %cst_41 [1] : vector<16x16xf32> to vector<16xf32>
    %40 = vector.shape_cast %39 : vector<16xf32> to vector<16x1xf32>
    %41 = vector.broadcast %40 : vector<16x1xf32> to vector<16x16xf32>
    %42 = arith.subf %38, %41 : vector<16x16xf32>
    %43 = math.exp %42 : vector<16x16xf32>
    %cst_42 = arith.constant dense<0.000000e+00> : vector<16xf32>
    %44 = vector.multi_reduction <add>, %43, %cst_42 [1] : vector<16x16xf32> to vector<16xf32>
    %45 = vector.shape_cast %44 : vector<16xf32> to vector<16x1xf32>
    %46 = tpu.reciprocal %45 {approx = true} : vector<16x1xf32> -> vector<16x1xf32>
    %47 = vector.broadcast %46 : vector<16x1xf32> to vector<16x16xf32>
    %48 = arith.mulf %43, %47 : vector<16x16xf32>
    %49 = arith.truncf %48 : vector<16x16xf32> to vector<16x16xbf16>
    %50 = arith.truncf %32 : vector<16x16xf32> to vector<16x16xbf16>
    %cst_43 = arith.constant dense<0.000000e+00> : vector<16x16xf32>
    %51 = tpu.matmul %49, %50, %cst_43 {dimension_numbers = #tpu.dot_dimension_numbers<[1], [0], [0], [1], [0, 0, 1, 1], [], []>} : vector<16x16xbf16>, vector<16x16xbf16>, vector<16x16xf32> -> vector<16x16xf32>
    %52 = arith.truncf %51 : vector<16x16xf32> to vector<16x16xbf16>
    %c0_44 = arith.constant 0 : index
    %c0_45 = arith.constant 0 : index
    %c0_46 = arith.constant 0 : index
    %c0_47 = arith.constant 0 : index
    %53 = vector.load %arg13[%c0_44, %c0_45, %c0_46, %c0_47] : memref<2x2x16x32xbf16, #tpu.memory_space<vmem>>, vector<1x1x16x32xbf16>
    %54 = vector.shape_cast %53 : vector<1x1x16x32xbf16> to vector<16x32xbf16>
    %cst_48 = arith.constant dense<0.000000e+00> : vector<16x32xf32>
    %55 = tpu.matmul %52, %54, %cst_48 {dimension_numbers = #tpu.dot_dimension_numbers<[1], [0], [0], [1], [0, 0, 1, 1], [], []>} : vector<16x16xbf16>, vector<16x32xbf16>, vector<16x32xf32> -> vector<16x32xf32>
    %56 = arith.addf %11, %55 : vector<16x32xf32>
    %c0_49 = arith.constant 0 : index
    %c1 = arith.constant 1 : index
    %c0_50 = arith.constant 0 : index
    %c0_51 = arith.constant 0 : index
    %57 = vector.load %arg7[%c0_49, %c1, %c0_50, %c0_51] : memref<2x2x32x16xbf16, #tpu.memory_space<vmem>>, vector<1x1x32x16xbf16>
    %58 = vector.shape_cast %57 : vector<1x1x32x16xbf16> to vector<32x16xbf16>
    %cst_52 = arith.constant dense<0.000000e+00> : vector<16x16xf32>
    %59 = tpu.matmul %10, %58, %cst_52 {dimension_numbers = #tpu.dot_dimension_numbers<[1], [0], [0], [1], [0, 0, 1, 1], [], []>} : vector<16x32xbf16>, vector<32x16xbf16>, vector<16x16xf32> -> vector<16x16xf32>
    %c0_53 = arith.constant 0 : index
    %c1_54 = arith.constant 1 : index
    %c0_55 = arith.constant 0 : index
    %c0_56 = arith.constant 0 : index
    %60 = vector.load %arg10[%c0_53, %c1_54, %c0_55, %c0_56] : memref<2x2x1x16xf32, #tpu.memory_space<vmem>>, vector<1x1x1x16xf32>
    %61 = vector.shape_cast %60 : vector<1x1x1x16xf32> to vector<1x16xf32>
    %62 = vector.broadcast %61 : vector<1x16xf32> to vector<16x16xf32>
    %63 = arith.addf %59, %62 : vector<16x16xf32>
    %c0_57 = arith.constant 0 : index
    %c1_58 = arith.constant 1 : index
    %c0_59 = arith.constant 0 : index
    %c0_60 = arith.constant 0 : index
    %64 = vector.load %arg8[%c0_57, %c1_58, %c0_59, %c0_60] : memref<2x2x32x16xbf16, #tpu.memory_space<vmem>>, vector<1x1x32x16xbf16>
    %65 = vector.shape_cast %64 : vector<1x1x32x16xbf16> to vector<32x16xbf16>
    %cst_61 = arith.constant dense<0.000000e+00> : vector<16x16xf32>
    %66 = tpu.matmul %10, %65, %cst_61 {dimension_numbers = #tpu.dot_dimension_numbers<[1], [0], [0], [1], [0, 0, 1, 1], [], []>} : vector<16x32xbf16>, vector<32x16xbf16>, vector<16x16xf32> -> vector<16x16xf32>
    %c0_62 = arith.constant 0 : index
    %c1_63 = arith.constant 1 : index
    %c0_64 = arith.constant 0 : index
    %c0_65 = arith.constant 0 : index
    %67 = vector.load %arg11[%c0_62, %c1_63, %c0_64, %c0_65] : memref<2x2x1x16xf32, #tpu.memory_space<vmem>>, vector<1x1x1x16xf32>
    %68 = vector.shape_cast %67 : vector<1x1x1x16xf32> to vector<1x16xf32>
    %69 = vector.broadcast %68 : vector<1x16xf32> to vector<16x16xf32>
    %70 = arith.addf %66, %69 : vector<16x16xf32>
    %c0_66 = arith.constant 0 : index
    %c1_67 = arith.constant 1 : index
    %c0_68 = arith.constant 0 : index
    %c0_69 = arith.constant 0 : index
    %71 = vector.load %arg9[%c0_66, %c1_67, %c0_68, %c0_69] : memref<2x2x32x16xbf16, #tpu.memory_space<vmem>>, vector<1x1x32x16xbf16>
    %72 = vector.shape_cast %71 : vector<1x1x32x16xbf16> to vector<32x16xbf16>
    %cst_70 = arith.constant dense<0.000000e+00> : vector<16x16xf32>
    %73 = tpu.matmul %10, %72, %cst_70 {dimension_numbers = #tpu.dot_dimension_numbers<[1], [0], [0], [1], [0, 0, 1, 1], [], []>} : vector<16x32xbf16>, vector<32x16xbf16>, vector<16x16xf32> -> vector<16x16xf32>
    %c0_71 = arith.constant 0 : index
    %c1_72 = arith.constant 1 : index
    %c0_73 = arith.constant 0 : index
    %c0_74 = arith.constant 0 : index
    %74 = vector.load %arg12[%c0_71, %c1_72, %c0_73, %c0_74] : memref<2x2x1x16xf32, #tpu.memory_space<vmem>>, vector<1x1x1x16xf32>
    %75 = vector.shape_cast %74 : vector<1x1x1x16xf32> to vector<1x16xf32>
    %76 = vector.broadcast %75 : vector<1x16xf32> to vector<16x16xf32>
    %77 = arith.addf %73, %76 : vector<16x16xf32>
    %cst_75 = arith.constant 2.500000e-01 : f32
    %78 = vector.broadcast %cst_75 : f32 to vector<16x16xf32>
    %79 = arith.mulf %63, %78 : vector<16x16xf32>
    %80 = arith.truncf %79 : vector<16x16xf32> to vector<16x16xbf16>
    %81 = arith.truncf %70 : vector<16x16xf32> to vector<16x16xbf16>
    "tpu.trace_start"() <{level = 10 : i32, message = "qe,ke->qk"}> : () -> ()
    %cst_76 = arith.constant dense<0.000000e+00> : vector<16x16xf32>
    %82 = tpu.matmul %80, %81, %cst_76 {dimension_numbers = #tpu.dot_dimension_numbers<[1], [1], [0], [0], [0, 0, 1, 0], [], []>} : vector<16x16xbf16>, vector<16x16xbf16>, vector<16x16xf32> -> vector<16x16xf32>
    "tpu.trace_stop"() : () -> ()
    %83 = arith.addf %82, %9 : vector<16x16xf32>
    %cst_77 = arith.constant dense<0xFF800000> : vector<16xf32>
    %84 = vector.multi_reduction <maximumf>, %83, %cst_77 [1] : vector<16x16xf32> to vector<16xf32>
    %85 = vector.shape_cast %84 : vector<16xf32> to vector<16x1xf32>
    %86 = vector.broadcast %85 : vector<16x1xf32> to vector<16x16xf32>
    %87 = arith.subf %83, %86 : vector<16x16xf32>
    %88 = math.exp %87 : vector<16x16xf32>
    %cst_78 = arith.constant dense<0.000000e+00> : vector<16xf32>
    %89 = vector.multi_reduction <add>, %88, %cst_78 [1] : vector<16x16xf32> to vector<16xf32>
    %90 = vector.shape_cast %89 : vector<16xf32> to vector<16x1xf32>
    %91 = tpu.reciprocal %90 {approx = true} : vector<16x1xf32> -> vector<16x1xf32>
    %92 = vector.broadcast %91 : vector<16x1xf32> to vector<16x16xf32>
    %93 = arith.mulf %88, %92 : vector<16x16xf32>
    %94 = arith.truncf %93 : vector<16x16xf32> to vector<16x16xbf16>
    %95 = arith.truncf %77 : vector<16x16xf32> to vector<16x16xbf16>
    %cst_79 = arith.constant dense<0.000000e+00> : vector<16x16xf32>
    %96 = tpu.matmul %94, %95, %cst_79 {dimension_numbers = #tpu.dot_dimension_numbers<[1], [0], [0], [1], [0, 0, 1, 1], [], []>} : vector<16x16xbf16>, vector<16x16xbf16>, vector<16x16xf32> -> vector<16x16xf32>
    %97 = arith.truncf %96 : vector<16x16xf32> to vector<16x16xbf16>
    %c0_80 = arith.constant 0 : index
    %c1_81 = arith.constant 1 : index
    %c0_82 = arith.constant 0 : index
    %c0_83 = arith.constant 0 : index
    %98 = vector.load %arg13[%c0_80, %c1_81, %c0_82, %c0_83] : memref<2x2x16x32xbf16, #tpu.memory_space<vmem>>, vector<1x1x16x32xbf16>
    %99 = vector.shape_cast %98 : vector<1x1x16x32xbf16> to vector<16x32xbf16>
    %cst_84 = arith.constant dense<0.000000e+00> : vector<16x32xf32>
    %100 = tpu.matmul %97, %99, %cst_84 {dimension_numbers = #tpu.dot_dimension_numbers<[1], [0], [0], [1], [0, 0, 1, 1], [], []>} : vector<16x16xbf16>, vector<16x32xbf16>, vector<16x32xf32> -> vector<16x32xf32>
    %101 = arith.addf %56, %100 : vector<16x32xf32>
    %c0_85 = arith.constant 0 : index
    %c0_86 = arith.constant 0 : index
    %c0_87 = arith.constant 0 : index
    %102 = vector.load %arg14[%c0_85, %c0_86, %c0_87] : memref<2x1x32xf32, #tpu.memory_space<vmem>>, vector<1x1x32xf32>
    %103 = vector.shape_cast %102 : vector<1x1x32xf32> to vector<1x32xf32>
    %104 = vector.broadcast %103 : vector<1x32xf32> to vector<16x32xf32>
    %105 = arith.addf %101, %104 : vector<16x32xf32>
    %106 = arith.addf %7, %105 : vector<16x32xf32>
    %c0_88 = arith.constant 0 : index
    %c0_89 = arith.constant 0 : index
    %c0_90 = arith.constant 0 : index
    %107 = vector.load %arg15[%c0_88, %c0_89, %c0_90] : memref<2x1x32xf32, #tpu.memory_space<vmem>>, vector<1x1x32xf32>
    %108 = vector.shape_cast %107 : vector<1x1x32xf32> to vector<1x32xf32>
    %c0_91 = arith.constant 0 : index
    %c0_92 = arith.constant 0 : index
    %c0_93 = arith.constant 0 : index
    %109 = vector.load %arg16[%c0_91, %c0_92, %c0_93] : memref<2x1x32xf32, #tpu.memory_space<vmem>>, vector<1x1x32xf32>
    %110 = vector.shape_cast %109 : vector<1x1x32xf32> to vector<1x32xf32>
    %cst_94 = arith.constant dense<0.000000e+00> : vector<16xf32>
    %111 = vector.multi_reduction <add>, %106, %cst_94 [1] : vector<16x32xf32> to vector<16xf32>
    %112 = vector.shape_cast %111 : vector<16xf32> to vector<16x1xf32>
    %cst_95 = arith.constant 3.200000e+01 : f32
    %113 = vector.broadcast %cst_95 : f32 to vector<16x1xf32>
    %114 = arith.divf %112, %113 : vector<16x1xf32>
    %115 = vector.broadcast %114 : vector<16x1xf32> to vector<16x32xf32>
    %116 = arith.subf %106, %115 : vector<16x32xf32>
    %117 = arith.mulf %116, %116 : vector<16x32xf32>
    %cst_96 = arith.constant dense<0.000000e+00> : vector<16xf32>
    %118 = vector.multi_reduction <add>, %117, %cst_96 [1] : vector<16x32xf32> to vector<16xf32>
    %119 = vector.shape_cast %118 : vector<16xf32> to vector<16x1xf32>
    %cst_97 = arith.constant 3.200000e+01 : f32
    %120 = vector.broadcast %cst_97 : f32 to vector<16x1xf32>
    %121 = arith.divf %119, %120 : vector<16x1xf32>
    %cst_98 = arith.constant 9.99999974E-6 : f32
    %122 = vector.broadcast %cst_98 : f32 to vector<16x1xf32>
    %123 = arith.addf %121, %122 : vector<16x1xf32>
    %124 = math.rsqrt %123 : vector<16x1xf32>
    %125 = vector.broadcast %124 : vector<16x1xf32> to vector<16x32xf32>
    %126 = arith.mulf %116, %125 : vector<16x32xf32>
    %127 = vector.broadcast %108 : vector<1x32xf32> to vector<16x32xf32>
    %128 = arith.mulf %126, %127 : vector<16x32xf32>
    %129 = vector.broadcast %110 : vector<1x32xf32> to vector<16x32xf32>
    %130 = arith.addf %128, %129 : vector<16x32xf32>
    %c0_99 = arith.constant 0 : index
    %c0_100 = arith.constant 0 : index
    %c0_101 = arith.constant 0 : index
    %c0_102 = arith.constant 0 : index
    %131 = vector.load %arg19[%c0_99, %c0_100, %c0_101, %c0_102] : memref<2x3x32x128xbf16, #tpu.memory_space<vmem>>, vector<1x3x32x128xbf16>
    %132 = vector.shape_cast %131 : vector<1x3x32x128xbf16> to vector<3x32x128xbf16>
    %c0_103 = arith.constant 0 : index
    %c0_104 = arith.constant 0 : index
    %c0_105 = arith.constant 0 : index
    %133 = vector.load %arg20[%c0_103, %c0_104, %c0_105] : memref<2x1x128xf32, #tpu.memory_space<vmem>>, vector<1x1x128xf32>
    %134 = vector.shape_cast %133 : vector<1x1x128xf32> to vector<1x128xf32>
    %135 = arith.truncf %130 : vector<16x32xf32> to vector<16x32xbf16>
    %cst_106 = arith.constant dense<0.000000e+00> : vector<16x32xf32>
    %136 = tpu.matmul %2, %135, %cst_106 {dimension_numbers = #tpu.dot_dimension_numbers<[1], [0], [0], [1], [0, 0, 1, 1], [], []>} : vector<16x16xbf16>, vector<16x32xbf16>, vector<16x32xf32> -> vector<16x32xf32>
    %137 = arith.truncf %136 : vector<16x32xf32> to vector<16x32xbf16>
    %cst_107 = arith.constant dense<0.000000e+00> : vector<16x32xf32>
    %138 = tpu.matmul %5, %135, %cst_107 {dimension_numbers = #tpu.dot_dimension_numbers<[1], [0], [0], [1], [0, 0, 1, 1], [], []>} : vector<16x16xbf16>, vector<16x32xbf16>, vector<16x32xf32> -> vector<16x32xf32>
    %139 = arith.truncf %138 : vector<16x32xf32> to vector<16x32xbf16>
    %140 = vector.extract_strided_slice %132 {offsets = [0, 0, 0], sizes = [1, 32, 128], strides = [1, 1, 1]} : vector<3x32x128xbf16> to vector<1x32x128xbf16>
    %141 = vector.shape_cast %140 : vector<1x32x128xbf16> to vector<32x128xbf16>
    %cst_108 = arith.constant dense<0.000000e+00> : vector<16x128xf32>
    %142 = tpu.matmul %137, %141, %cst_108 {dimension_numbers = #tpu.dot_dimension_numbers<[1], [0], [0], [1], [0, 0, 1, 1], [], []>} : vector<16x32xbf16>, vector<32x128xbf16>, vector<16x128xf32> -> vector<16x128xf32>
    %143 = vector.extract_strided_slice %132 {offsets = [1, 0, 0], sizes = [1, 32, 128], strides = [1, 1, 1]} : vector<3x32x128xbf16> to vector<1x32x128xbf16>
    %144 = vector.shape_cast %143 : vector<1x32x128xbf16> to vector<32x128xbf16>
    %cst_109 = arith.constant dense<0.000000e+00> : vector<16x128xf32>
    %145 = tpu.matmul %135, %144, %cst_109 {dimension_numbers = #tpu.dot_dimension_numbers<[1], [0], [0], [1], [0, 0, 1, 1], [], []>} : vector<16x32xbf16>, vector<32x128xbf16>, vector<16x128xf32> -> vector<16x128xf32>
    %146 = arith.addf %142, %145 : vector<16x128xf32>
    %147 = vector.extract_strided_slice %132 {offsets = [2, 0, 0], sizes = [1, 32, 128], strides = [1, 1, 1]} : vector<3x32x128xbf16> to vector<1x32x128xbf16>
    %148 = vector.shape_cast %147 : vector<1x32x128xbf16> to vector<32x128xbf16>
    %cst_110 = arith.constant dense<0.000000e+00> : vector<16x128xf32>
    %149 = tpu.matmul %139, %148, %cst_110 {dimension_numbers = #tpu.dot_dimension_numbers<[1], [0], [0], [1], [0, 0, 1, 1], [], []>} : vector<16x32xbf16>, vector<32x128xbf16>, vector<16x128xf32> -> vector<16x128xf32>
    %150 = arith.addf %146, %149 : vector<16x128xf32>
    %151 = vector.broadcast %134 : vector<1x128xf32> to vector<16x128xf32>
    %152 = arith.addf %150, %151 : vector<16x128xf32>
    %cst_111 = arith.constant 0.000000e+00 : f32
    %153 = vector.broadcast %cst_111 : f32 to vector<16x128xf32>
    %154 = arith.maximumf %152, %153 : vector<16x128xf32>
    %c0_112 = arith.constant 0 : index
    %c0_113 = arith.constant 0 : index
    %c0_114 = arith.constant 0 : index
    %c0_115 = arith.constant 0 : index
    %155 = vector.load %arg21[%c0_112, %c0_113, %c0_114, %c0_115] : memref<2x3x128x32xbf16, #tpu.memory_space<vmem>>, vector<1x3x128x32xbf16>
    %156 = vector.shape_cast %155 : vector<1x3x128x32xbf16> to vector<3x128x32xbf16>
    %c0_116 = arith.constant 0 : index
    %c0_117 = arith.constant 0 : index
    %c0_118 = arith.constant 0 : index
    %157 = vector.load %arg22[%c0_116, %c0_117, %c0_118] : memref<2x1x32xf32, #tpu.memory_space<vmem>>, vector<1x1x32xf32>
    %158 = vector.shape_cast %157 : vector<1x1x32xf32> to vector<1x32xf32>
    %159 = arith.truncf %154 : vector<16x128xf32> to vector<16x128xbf16>
    %cst_119 = arith.constant dense<0.000000e+00> : vector<16x128xf32>
    %160 = tpu.matmul %2, %159, %cst_119 {dimension_numbers = #tpu.dot_dimension_numbers<[1], [0], [0], [1], [0, 0, 1, 1], [], []>} : vector<16x16xbf16>, vector<16x128xbf16>, vector<16x128xf32> -> vector<16x128xf32>
    %161 = arith.truncf %160 : vector<16x128xf32> to vector<16x128xbf16>
    %cst_120 = arith.constant dense<0.000000e+00> : vector<16x128xf32>
    %162 = tpu.matmul %5, %159, %cst_120 {dimension_numbers = #tpu.dot_dimension_numbers<[1], [0], [0], [1], [0, 0, 1, 1], [], []>} : vector<16x16xbf16>, vector<16x128xbf16>, vector<16x128xf32> -> vector<16x128xf32>
    %163 = arith.truncf %162 : vector<16x128xf32> to vector<16x128xbf16>
    %164 = vector.extract_strided_slice %156 {offsets = [0, 0, 0], sizes = [1, 128, 32], strides = [1, 1, 1]} : vector<3x128x32xbf16> to vector<1x128x32xbf16>
    %165 = vector.shape_cast %164 : vector<1x128x32xbf16> to vector<128x32xbf16>
    %cst_121 = arith.constant dense<0.000000e+00> : vector<16x32xf32>
    %166 = tpu.matmul %161, %165, %cst_121 {dimension_numbers = #tpu.dot_dimension_numbers<[1], [0], [0], [1], [0, 0, 1, 1], [], []>} : vector<16x128xbf16>, vector<128x32xbf16>, vector<16x32xf32> -> vector<16x32xf32>
    %167 = vector.extract_strided_slice %156 {offsets = [1, 0, 0], sizes = [1, 128, 32], strides = [1, 1, 1]} : vector<3x128x32xbf16> to vector<1x128x32xbf16>
    %168 = vector.shape_cast %167 : vector<1x128x32xbf16> to vector<128x32xbf16>
    %cst_122 = arith.constant dense<0.000000e+00> : vector<16x32xf32>
    %169 = tpu.matmul %159, %168, %cst_122 {dimension_numbers = #tpu.dot_dimension_numbers<[1], [0], [0], [1], [0, 0, 1, 1], [], []>} : vector<16x128xbf16>, vector<128x32xbf16>, vector<16x32xf32> -> vector<16x32xf32>
    %170 = arith.addf %166, %169 : vector<16x32xf32>
    %171 = vector.extract_strided_slice %156 {offsets = [2, 0, 0], sizes = [1, 128, 32], strides = [1, 1, 1]} : vector<3x128x32xbf16> to vector<1x128x32xbf16>
    %172 = vector.shape_cast %171 : vector<1x128x32xbf16> to vector<128x32xbf16>
    %cst_123 = arith.constant dense<0.000000e+00> : vector<16x32xf32>
    %173 = tpu.matmul %163, %172, %cst_123 {dimension_numbers = #tpu.dot_dimension_numbers<[1], [0], [0], [1], [0, 0, 1, 1], [], []>} : vector<16x128xbf16>, vector<128x32xbf16>, vector<16x32xf32> -> vector<16x32xf32>
    %174 = arith.addf %170, %173 : vector<16x32xf32>
    %175 = vector.broadcast %158 : vector<1x32xf32> to vector<16x32xf32>
    %176 = arith.addf %174, %175 : vector<16x32xf32>
    %177 = arith.addf %130, %176 : vector<16x32xf32>
    %c0_124 = arith.constant 0 : index
    %c0_125 = arith.constant 0 : index
    %c0_126 = arith.constant 0 : index
    %178 = vector.load %arg17[%c0_124, %c0_125, %c0_126] : memref<2x1x32xf32, #tpu.memory_space<vmem>>, vector<1x1x32xf32>
    %179 = vector.shape_cast %178 : vector<1x1x32xf32> to vector<1x32xf32>
    %c0_127 = arith.constant 0 : index
    %c0_128 = arith.constant 0 : index
    %c0_129 = arith.constant 0 : index
    %180 = vector.load %arg18[%c0_127, %c0_128, %c0_129] : memref<2x1x32xf32, #tpu.memory_space<vmem>>, vector<1x1x32xf32>
    %181 = vector.shape_cast %180 : vector<1x1x32xf32> to vector<1x32xf32>
    %cst_130 = arith.constant dense<0.000000e+00> : vector<16xf32>
    %182 = vector.multi_reduction <add>, %177, %cst_130 [1] : vector<16x32xf32> to vector<16xf32>
    %183 = vector.shape_cast %182 : vector<16xf32> to vector<16x1xf32>
    %cst_131 = arith.constant 3.200000e+01 : f32
    %184 = vector.broadcast %cst_131 : f32 to vector<16x1xf32>
    %185 = arith.divf %183, %184 : vector<16x1xf32>
    %186 = vector.broadcast %185 : vector<16x1xf32> to vector<16x32xf32>
    %187 = arith.subf %177, %186 : vector<16x32xf32>
    %188 = arith.mulf %187, %187 : vector<16x32xf32>
    %cst_132 = arith.constant dense<0.000000e+00> : vector<16xf32>
    %189 = vector.multi_reduction <add>, %188, %cst_132 [1] : vector<16x32xf32> to vector<16xf32>
    %190 = vector.shape_cast %189 : vector<16xf32> to vector<16x1xf32>
    %cst_133 = arith.constant 3.200000e+01 : f32
    %191 = vector.broadcast %cst_133 : f32 to vector<16x1xf32>
    %192 = arith.divf %190, %191 : vector<16x1xf32>
    %cst_134 = arith.constant 9.99999974E-6 : f32
    %193 = vector.broadcast %cst_134 : f32 to vector<16x1xf32>
    %194 = arith.addf %192, %193 : vector<16x1xf32>
    %195 = math.rsqrt %194 : vector<16x1xf32>
    %196 = vector.broadcast %195 : vector<16x1xf32> to vector<16x32xf32>
    %197 = arith.mulf %187, %196 : vector<16x32xf32>
    %198 = vector.broadcast %179 : vector<1x32xf32> to vector<16x32xf32>
    %199 = arith.mulf %197, %198 : vector<16x32xf32>
    %200 = vector.broadcast %181 : vector<1x32xf32> to vector<16x32xf32>
    %201 = arith.addf %199, %200 : vector<16x32xf32>
    %202 = arith.truncf %201 : vector<16x32xf32> to vector<16x32xbf16>
    %cst_135 = arith.constant 0.000000e+00 : f32
    %203 = vector.broadcast %cst_135 : f32 to vector<16x32xf32>
    %c1_136 = arith.constant 1 : index
    %c0_137 = arith.constant 0 : index
    %c0_138 = arith.constant 0 : index
    %c0_139 = arith.constant 0 : index
    %204 = vector.load %arg7[%c1_136, %c0_137, %c0_138, %c0_139] : memref<2x2x32x16xbf16, #tpu.memory_space<vmem>>, vector<1x1x32x16xbf16>
    %205 = vector.shape_cast %204 : vector<1x1x32x16xbf16> to vector<32x16xbf16>
    %cst_140 = arith.constant dense<0.000000e+00> : vector<16x16xf32>
    %206 = tpu.matmul %202, %205, %cst_140 {dimension_numbers = #tpu.dot_dimension_numbers<[1], [0], [0], [1], [0, 0, 1, 1], [], []>} : vector<16x32xbf16>, vector<32x16xbf16>, vector<16x16xf32> -> vector<16x16xf32>
    %c1_141 = arith.constant 1 : index
    %c0_142 = arith.constant 0 : index
    %c0_143 = arith.constant 0 : index
    %c0_144 = arith.constant 0 : index
    %207 = vector.load %arg10[%c1_141, %c0_142, %c0_143, %c0_144] : memref<2x2x1x16xf32, #tpu.memory_space<vmem>>, vector<1x1x1x16xf32>
    %208 = vector.shape_cast %207 : vector<1x1x1x16xf32> to vector<1x16xf32>
    %209 = vector.broadcast %208 : vector<1x16xf32> to vector<16x16xf32>
    %210 = arith.addf %206, %209 : vector<16x16xf32>
    %c1_145 = arith.constant 1 : index
    %c0_146 = arith.constant 0 : index
    %c0_147 = arith.constant 0 : index
    %c0_148 = arith.constant 0 : index
    %211 = vector.load %arg8[%c1_145, %c0_146, %c0_147, %c0_148] : memref<2x2x32x16xbf16, #tpu.memory_space<vmem>>, vector<1x1x32x16xbf16>
    %212 = vector.shape_cast %211 : vector<1x1x32x16xbf16> to vector<32x16xbf16>
    %cst_149 = arith.constant dense<0.000000e+00> : vector<16x16xf32>
    %213 = tpu.matmul %202, %212, %cst_149 {dimension_numbers = #tpu.dot_dimension_numbers<[1], [0], [0], [1], [0, 0, 1, 1], [], []>} : vector<16x32xbf16>, vector<32x16xbf16>, vector<16x16xf32> -> vector<16x16xf32>
    %c1_150 = arith.constant 1 : index
    %c0_151 = arith.constant 0 : index
    %c0_152 = arith.constant 0 : index
    %c0_153 = arith.constant 0 : index
    %214 = vector.load %arg11[%c1_150, %c0_151, %c0_152, %c0_153] : memref<2x2x1x16xf32, #tpu.memory_space<vmem>>, vector<1x1x1x16xf32>
    %215 = vector.shape_cast %214 : vector<1x1x1x16xf32> to vector<1x16xf32>
    %216 = vector.broadcast %215 : vector<1x16xf32> to vector<16x16xf32>
    %217 = arith.addf %213, %216 : vector<16x16xf32>
    %c1_154 = arith.constant 1 : index
    %c0_155 = arith.constant 0 : index
    %c0_156 = arith.constant 0 : index
    %c0_157 = arith.constant 0 : index
    %218 = vector.load %arg9[%c1_154, %c0_155, %c0_156, %c0_157] : memref<2x2x32x16xbf16, #tpu.memory_space<vmem>>, vector<1x1x32x16xbf16>
    %219 = vector.shape_cast %218 : vector<1x1x32x16xbf16> to vector<32x16xbf16>
    %cst_158 = arith.constant dense<0.000000e+00> : vector<16x16xf32>
    %220 = tpu.matmul %202, %219, %cst_158 {dimension_numbers = #tpu.dot_dimension_numbers<[1], [0], [0], [1], [0, 0, 1, 1], [], []>} : vector<16x32xbf16>, vector<32x16xbf16>, vector<16x16xf32> -> vector<16x16xf32>
    %c1_159 = arith.constant 1 : index
    %c0_160 = arith.constant 0 : index
    %c0_161 = arith.constant 0 : index
    %c0_162 = arith.constant 0 : index
    %221 = vector.load %arg12[%c1_159, %c0_160, %c0_161, %c0_162] : memref<2x2x1x16xf32, #tpu.memory_space<vmem>>, vector<1x1x1x16xf32>
    %222 = vector.shape_cast %221 : vector<1x1x1x16xf32> to vector<1x16xf32>
    %223 = vector.broadcast %222 : vector<1x16xf32> to vector<16x16xf32>
    %224 = arith.addf %220, %223 : vector<16x16xf32>
    %cst_163 = arith.constant 2.500000e-01 : f32
    %225 = vector.broadcast %cst_163 : f32 to vector<16x16xf32>
    %226 = arith.mulf %210, %225 : vector<16x16xf32>
    %227 = arith.truncf %226 : vector<16x16xf32> to vector<16x16xbf16>
    %228 = arith.truncf %217 : vector<16x16xf32> to vector<16x16xbf16>
    "tpu.trace_start"() <{level = 10 : i32, message = "qe,ke->qk"}> : () -> ()
    %cst_164 = arith.constant dense<0.000000e+00> : vector<16x16xf32>
    %229 = tpu.matmul %227, %228, %cst_164 {dimension_numbers = #tpu.dot_dimension_numbers<[1], [1], [0], [0], [0, 0, 1, 0], [], []>} : vector<16x16xbf16>, vector<16x16xbf16>, vector<16x16xf32> -> vector<16x16xf32>
    "tpu.trace_stop"() : () -> ()
    %230 = arith.addf %229, %9 : vector<16x16xf32>
    %cst_165 = arith.constant dense<0xFF800000> : vector<16xf32>
    %231 = vector.multi_reduction <maximumf>, %230, %cst_165 [1] : vector<16x16xf32> to vector<16xf32>
    %232 = vector.shape_cast %231 : vector<16xf32> to vector<16x1xf32>
    %233 = vector.broadcast %232 : vector<16x1xf32> to vector<16x16xf32>
    %234 = arith.subf %230, %233 : vector<16x16xf32>
    %235 = math.exp %234 : vector<16x16xf32>
    %cst_166 = arith.constant dense<0.000000e+00> : vector<16xf32>
    %236 = vector.multi_reduction <add>, %235, %cst_166 [1] : vector<16x16xf32> to vector<16xf32>
    %237 = vector.shape_cast %236 : vector<16xf32> to vector<16x1xf32>
    %238 = tpu.reciprocal %237 {approx = true} : vector<16x1xf32> -> vector<16x1xf32>
    %239 = vector.broadcast %238 : vector<16x1xf32> to vector<16x16xf32>
    %240 = arith.mulf %235, %239 : vector<16x16xf32>
    %241 = arith.truncf %240 : vector<16x16xf32> to vector<16x16xbf16>
    %242 = arith.truncf %224 : vector<16x16xf32> to vector<16x16xbf16>
    %cst_167 = arith.constant dense<0.000000e+00> : vector<16x16xf32>
    %243 = tpu.matmul %241, %242, %cst_167 {dimension_numbers = #tpu.dot_dimension_numbers<[1], [0], [0], [1], [0, 0, 1, 1], [], []>} : vector<16x16xbf16>, vector<16x16xbf16>, vector<16x16xf32> -> vector<16x16xf32>
    %244 = arith.truncf %243 : vector<16x16xf32> to vector<16x16xbf16>
    %c1_168 = arith.constant 1 : index
    %c0_169 = arith.constant 0 : index
    %c0_170 = arith.constant 0 : index
    %c0_171 = arith.constant 0 : index
    %245 = vector.load %arg13[%c1_168, %c0_169, %c0_170, %c0_171] : memref<2x2x16x32xbf16, #tpu.memory_space<vmem>>, vector<1x1x16x32xbf16>
    %246 = vector.shape_cast %245 : vector<1x1x16x32xbf16> to vector<16x32xbf16>
    %cst_172 = arith.constant dense<0.000000e+00> : vector<16x32xf32>
    %247 = tpu.matmul %244, %246, %cst_172 {dimension_numbers = #tpu.dot_dimension_numbers<[1], [0], [0], [1], [0, 0, 1, 1], [], []>} : vector<16x16xbf16>, vector<16x32xbf16>, vector<16x32xf32> -> vector<16x32xf32>
    %248 = arith.addf %203, %247 : vector<16x32xf32>
    %c1_173 = arith.constant 1 : index
    %c1_174 = arith.constant 1 : index
    %c0_175 = arith.constant 0 : index
    %c0_176 = arith.constant 0 : index
    %249 = vector.load %arg7[%c1_173, %c1_174, %c0_175, %c0_176] : memref<2x2x32x16xbf16, #tpu.memory_space<vmem>>, vector<1x1x32x16xbf16>
    %250 = vector.shape_cast %249 : vector<1x1x32x16xbf16> to vector<32x16xbf16>
    %cst_177 = arith.constant dense<0.000000e+00> : vector<16x16xf32>
    %251 = tpu.matmul %202, %250, %cst_177 {dimension_numbers = #tpu.dot_dimension_numbers<[1], [0], [0], [1], [0, 0, 1, 1], [], []>} : vector<16x32xbf16>, vector<32x16xbf16>, vector<16x16xf32> -> vector<16x16xf32>
    %c1_178 = arith.constant 1 : index
    %c1_179 = arith.constant 1 : index
    %c0_180 = arith.constant 0 : index
    %c0_181 = arith.constant 0 : index
    %252 = vector.load %arg10[%c1_178, %c1_179, %c0_180, %c0_181] : memref<2x2x1x16xf32, #tpu.memory_space<vmem>>, vector<1x1x1x16xf32>
    %253 = vector.shape_cast %252 : vector<1x1x1x16xf32> to vector<1x16xf32>
    %254 = vector.broadcast %253 : vector<1x16xf32> to vector<16x16xf32>
    %255 = arith.addf %251, %254 : vector<16x16xf32>
    %c1_182 = arith.constant 1 : index
    %c1_183 = arith.constant 1 : index
    %c0_184 = arith.constant 0 : index
    %c0_185 = arith.constant 0 : index
    %256 = vector.load %arg8[%c1_182, %c1_183, %c0_184, %c0_185] : memref<2x2x32x16xbf16, #tpu.memory_space<vmem>>, vector<1x1x32x16xbf16>
    %257 = vector.shape_cast %256 : vector<1x1x32x16xbf16> to vector<32x16xbf16>
    %cst_186 = arith.constant dense<0.000000e+00> : vector<16x16xf32>
    %258 = tpu.matmul %202, %257, %cst_186 {dimension_numbers = #tpu.dot_dimension_numbers<[1], [0], [0], [1], [0, 0, 1, 1], [], []>} : vector<16x32xbf16>, vector<32x16xbf16>, vector<16x16xf32> -> vector<16x16xf32>
    %c1_187 = arith.constant 1 : index
    %c1_188 = arith.constant 1 : index
    %c0_189 = arith.constant 0 : index
    %c0_190 = arith.constant 0 : index
    %259 = vector.load %arg11[%c1_187, %c1_188, %c0_189, %c0_190] : memref<2x2x1x16xf32, #tpu.memory_space<vmem>>, vector<1x1x1x16xf32>
    %260 = vector.shape_cast %259 : vector<1x1x1x16xf32> to vector<1x16xf32>
    %261 = vector.broadcast %260 : vector<1x16xf32> to vector<16x16xf32>
    %262 = arith.addf %258, %261 : vector<16x16xf32>
    %c1_191 = arith.constant 1 : index
    %c1_192 = arith.constant 1 : index
    %c0_193 = arith.constant 0 : index
    %c0_194 = arith.constant 0 : index
    %263 = vector.load %arg9[%c1_191, %c1_192, %c0_193, %c0_194] : memref<2x2x32x16xbf16, #tpu.memory_space<vmem>>, vector<1x1x32x16xbf16>
    %264 = vector.shape_cast %263 : vector<1x1x32x16xbf16> to vector<32x16xbf16>
    %cst_195 = arith.constant dense<0.000000e+00> : vector<16x16xf32>
    %265 = tpu.matmul %202, %264, %cst_195 {dimension_numbers = #tpu.dot_dimension_numbers<[1], [0], [0], [1], [0, 0, 1, 1], [], []>} : vector<16x32xbf16>, vector<32x16xbf16>, vector<16x16xf32> -> vector<16x16xf32>
    %c1_196 = arith.constant 1 : index
    %c1_197 = arith.constant 1 : index
    %c0_198 = arith.constant 0 : index
    %c0_199 = arith.constant 0 : index
    %266 = vector.load %arg12[%c1_196, %c1_197, %c0_198, %c0_199] : memref<2x2x1x16xf32, #tpu.memory_space<vmem>>, vector<1x1x1x16xf32>
    %267 = vector.shape_cast %266 : vector<1x1x1x16xf32> to vector<1x16xf32>
    %268 = vector.broadcast %267 : vector<1x16xf32> to vector<16x16xf32>
    %269 = arith.addf %265, %268 : vector<16x16xf32>
    %cst_200 = arith.constant 2.500000e-01 : f32
    %270 = vector.broadcast %cst_200 : f32 to vector<16x16xf32>
    %271 = arith.mulf %255, %270 : vector<16x16xf32>
    %272 = arith.truncf %271 : vector<16x16xf32> to vector<16x16xbf16>
    %273 = arith.truncf %262 : vector<16x16xf32> to vector<16x16xbf16>
    "tpu.trace_start"() <{level = 10 : i32, message = "qe,ke->qk"}> : () -> ()
    %cst_201 = arith.constant dense<0.000000e+00> : vector<16x16xf32>
    %274 = tpu.matmul %272, %273, %cst_201 {dimension_numbers = #tpu.dot_dimension_numbers<[1], [1], [0], [0], [0, 0, 1, 0], [], []>} : vector<16x16xbf16>, vector<16x16xbf16>, vector<16x16xf32> -> vector<16x16xf32>
    "tpu.trace_stop"() : () -> ()
    %275 = arith.addf %274, %9 : vector<16x16xf32>
    %cst_202 = arith.constant dense<0xFF800000> : vector<16xf32>
    %276 = vector.multi_reduction <maximumf>, %275, %cst_202 [1] : vector<16x16xf32> to vector<16xf32>
    %277 = vector.shape_cast %276 : vector<16xf32> to vector<16x1xf32>
    %278 = vector.broadcast %277 : vector<16x1xf32> to vector<16x16xf32>
    %279 = arith.subf %275, %278 : vector<16x16xf32>
    %280 = math.exp %279 : vector<16x16xf32>
    %cst_203 = arith.constant dense<0.000000e+00> : vector<16xf32>
    %281 = vector.multi_reduction <add>, %280, %cst_203 [1] : vector<16x16xf32> to vector<16xf32>
    %282 = vector.shape_cast %281 : vector<16xf32> to vector<16x1xf32>
    %283 = tpu.reciprocal %282 {approx = true} : vector<16x1xf32> -> vector<16x1xf32>
    %284 = vector.broadcast %283 : vector<16x1xf32> to vector<16x16xf32>
    %285 = arith.mulf %280, %284 : vector<16x16xf32>
    %286 = arith.truncf %285 : vector<16x16xf32> to vector<16x16xbf16>
    %287 = arith.truncf %269 : vector<16x16xf32> to vector<16x16xbf16>
    %cst_204 = arith.constant dense<0.000000e+00> : vector<16x16xf32>
    %288 = tpu.matmul %286, %287, %cst_204 {dimension_numbers = #tpu.dot_dimension_numbers<[1], [0], [0], [1], [0, 0, 1, 1], [], []>} : vector<16x16xbf16>, vector<16x16xbf16>, vector<16x16xf32> -> vector<16x16xf32>
    %289 = arith.truncf %288 : vector<16x16xf32> to vector<16x16xbf16>
    %c1_205 = arith.constant 1 : index
    %c1_206 = arith.constant 1 : index
    %c0_207 = arith.constant 0 : index
    %c0_208 = arith.constant 0 : index
    %290 = vector.load %arg13[%c1_205, %c1_206, %c0_207, %c0_208] : memref<2x2x16x32xbf16, #tpu.memory_space<vmem>>, vector<1x1x16x32xbf16>
    %291 = vector.shape_cast %290 : vector<1x1x16x32xbf16> to vector<16x32xbf16>
    %cst_209 = arith.constant dense<0.000000e+00> : vector<16x32xf32>
    %292 = tpu.matmul %289, %291, %cst_209 {dimension_numbers = #tpu.dot_dimension_numbers<[1], [0], [0], [1], [0, 0, 1, 1], [], []>} : vector<16x16xbf16>, vector<16x32xbf16>, vector<16x32xf32> -> vector<16x32xf32>
    %293 = arith.addf %248, %292 : vector<16x32xf32>
    %c1_210 = arith.constant 1 : index
    %c0_211 = arith.constant 0 : index
    %c0_212 = arith.constant 0 : index
    %294 = vector.load %arg14[%c1_210, %c0_211, %c0_212] : memref<2x1x32xf32, #tpu.memory_space<vmem>>, vector<1x1x32xf32>
    %295 = vector.shape_cast %294 : vector<1x1x32xf32> to vector<1x32xf32>
    %296 = vector.broadcast %295 : vector<1x32xf32> to vector<16x32xf32>
    %297 = arith.addf %293, %296 : vector<16x32xf32>
    %298 = arith.addf %201, %297 : vector<16x32xf32>
    %c1_213 = arith.constant 1 : index
    %c0_214 = arith.constant 0 : index
    %c0_215 = arith.constant 0 : index
    %299 = vector.load %arg15[%c1_213, %c0_214, %c0_215] : memref<2x1x32xf32, #tpu.memory_space<vmem>>, vector<1x1x32xf32>
    %300 = vector.shape_cast %299 : vector<1x1x32xf32> to vector<1x32xf32>
    %c1_216 = arith.constant 1 : index
    %c0_217 = arith.constant 0 : index
    %c0_218 = arith.constant 0 : index
    %301 = vector.load %arg16[%c1_216, %c0_217, %c0_218] : memref<2x1x32xf32, #tpu.memory_space<vmem>>, vector<1x1x32xf32>
    %302 = vector.shape_cast %301 : vector<1x1x32xf32> to vector<1x32xf32>
    %cst_219 = arith.constant dense<0.000000e+00> : vector<16xf32>
    %303 = vector.multi_reduction <add>, %298, %cst_219 [1] : vector<16x32xf32> to vector<16xf32>
    %304 = vector.shape_cast %303 : vector<16xf32> to vector<16x1xf32>
    %cst_220 = arith.constant 3.200000e+01 : f32
    %305 = vector.broadcast %cst_220 : f32 to vector<16x1xf32>
    %306 = arith.divf %304, %305 : vector<16x1xf32>
    %307 = vector.broadcast %306 : vector<16x1xf32> to vector<16x32xf32>
    %308 = arith.subf %298, %307 : vector<16x32xf32>
    %309 = arith.mulf %308, %308 : vector<16x32xf32>
    %cst_221 = arith.constant dense<0.000000e+00> : vector<16xf32>
    %310 = vector.multi_reduction <add>, %309, %cst_221 [1] : vector<16x32xf32> to vector<16xf32>
    %311 = vector.shape_cast %310 : vector<16xf32> to vector<16x1xf32>
    %cst_222 = arith.constant 3.200000e+01 : f32
    %312 = vector.broadcast %cst_222 : f32 to vector<16x1xf32>
    %313 = arith.divf %311, %312 : vector<16x1xf32>
    %cst_223 = arith.constant 9.99999974E-6 : f32
    %314 = vector.broadcast %cst_223 : f32 to vector<16x1xf32>
    %315 = arith.addf %313, %314 : vector<16x1xf32>
    %316 = math.rsqrt %315 : vector<16x1xf32>
    %317 = vector.broadcast %316 : vector<16x1xf32> to vector<16x32xf32>
    %318 = arith.mulf %308, %317 : vector<16x32xf32>
    %319 = vector.broadcast %300 : vector<1x32xf32> to vector<16x32xf32>
    %320 = arith.mulf %318, %319 : vector<16x32xf32>
    %321 = vector.broadcast %302 : vector<1x32xf32> to vector<16x32xf32>
    %322 = arith.addf %320, %321 : vector<16x32xf32>
    %c1_224 = arith.constant 1 : index
    %c0_225 = arith.constant 0 : index
    %c0_226 = arith.constant 0 : index
    %c0_227 = arith.constant 0 : index
    %323 = vector.load %arg19[%c1_224, %c0_225, %c0_226, %c0_227] : memref<2x3x32x128xbf16, #tpu.memory_space<vmem>>, vector<1x3x32x128xbf16>
    %324 = vector.shape_cast %323 : vector<1x3x32x128xbf16> to vector<3x32x128xbf16>
    %c1_228 = arith.constant 1 : index
    %c0_229 = arith.constant 0 : index
    %c0_230 = arith.constant 0 : index
    %325 = vector.load %arg20[%c1_228, %c0_229, %c0_230] : memref<2x1x128xf32, #tpu.memory_space<vmem>>, vector<1x1x128xf32>
    %326 = vector.shape_cast %325 : vector<1x1x128xf32> to vector<1x128xf32>
    %327 = arith.truncf %322 : vector<16x32xf32> to vector<16x32xbf16>
    %cst_231 = arith.constant dense<0.000000e+00> : vector<16x32xf32>
    %328 = tpu.matmul %2, %327, %cst_231 {dimension_numbers = #tpu.dot_dimension_numbers<[1], [0], [0], [1], [0, 0, 1, 1], [], []>} : vector<16x16xbf16>, vector<16x32xbf16>, vector<16x32xf32> -> vector<16x32xf32>
    %329 = arith.truncf %328 : vector<16x32xf32> to vector<16x32xbf16>
    %cst_232 = arith.constant dense<0.000000e+00> : vector<16x32xf32>
    %330 = tpu.matmul %5, %327, %cst_232 {dimension_numbers = #tpu.dot_dimension_numbers<[1], [0], [0], [1], [0, 0, 1, 1], [], []>} : vector<16x16xbf16>, vector<16x32xbf16>, vector<16x32xf32> -> vector<16x32xf32>
    %331 = arith.truncf %330 : vector<16x32xf32> to vector<16x32xbf16>
    %332 = vector.extract_strided_slice %324 {offsets = [0, 0, 0], sizes = [1, 32, 128], strides = [1, 1, 1]} : vector<3x32x128xbf16> to vector<1x32x128xbf16>
    %333 = vector.shape_cast %332 : vector<1x32x128xbf16> to vector<32x128xbf16>
    %cst_233 = arith.constant dense<0.000000e+00> : vector<16x128xf32>
    %334 = tpu.matmul %329, %333, %cst_233 {dimension_numbers = #tpu.dot_dimension_numbers<[1], [0], [0], [1], [0, 0, 1, 1], [], []>} : vector<16x32xbf16>, vector<32x128xbf16>, vector<16x128xf32> -> vector<16x128xf32>
    %335 = vector.extract_strided_slice %324 {offsets = [1, 0, 0], sizes = [1, 32, 128], strides = [1, 1, 1]} : vector<3x32x128xbf16> to vector<1x32x128xbf16>
    %336 = vector.shape_cast %335 : vector<1x32x128xbf16> to vector<32x128xbf16>
    %cst_234 = arith.constant dense<0.000000e+00> : vector<16x128xf32>
    %337 = tpu.matmul %327, %336, %cst_234 {dimension_numbers = #tpu.dot_dimension_numbers<[1], [0], [0], [1], [0, 0, 1, 1], [], []>} : vector<16x32xbf16>, vector<32x128xbf16>, vector<16x128xf32> -> vector<16x128xf32>
    %338 = arith.addf %334, %337 : vector<16x128xf32>
    %339 = vector.extract_strided_slice %324 {offsets = [2, 0, 0], sizes = [1, 32, 128], strides = [1, 1, 1]} : vector<3x32x128xbf16> to vector<1x32x128xbf16>
    %340 = vector.shape_cast %339 : vector<1x32x128xbf16> to vector<32x128xbf16>
    %cst_235 = arith.constant dense<0.000000e+00> : vector<16x128xf32>
    %341 = tpu.matmul %331, %340, %cst_235 {dimension_numbers = #tpu.dot_dimension_numbers<[1], [0], [0], [1], [0, 0, 1, 1], [], []>} : vector<16x32xbf16>, vector<32x128xbf16>, vector<16x128xf32> -> vector<16x128xf32>
    %342 = arith.addf %338, %341 : vector<16x128xf32>
    %343 = vector.broadcast %326 : vector<1x128xf32> to vector<16x128xf32>
    %344 = arith.addf %342, %343 : vector<16x128xf32>
    %cst_236 = arith.constant 0.000000e+00 : f32
    %345 = vector.broadcast %cst_236 : f32 to vector<16x128xf32>
    %346 = arith.maximumf %344, %345 : vector<16x128xf32>
    %c1_237 = arith.constant 1 : index
    %c0_238 = arith.constant 0 : index
    %c0_239 = arith.constant 0 : index
    %c0_240 = arith.constant 0 : index
    %347 = vector.load %arg21[%c1_237, %c0_238, %c0_239, %c0_240] : memref<2x3x128x32xbf16, #tpu.memory_space<vmem>>, vector<1x3x128x32xbf16>
    %348 = vector.shape_cast %347 : vector<1x3x128x32xbf16> to vector<3x128x32xbf16>
    %c1_241 = arith.constant 1 : index
    %c0_242 = arith.constant 0 : index
    %c0_243 = arith.constant 0 : index
    %349 = vector.load %arg22[%c1_241, %c0_242, %c0_243] : memref<2x1x32xf32, #tpu.memory_space<vmem>>, vector<1x1x32xf32>
    %350 = vector.shape_cast %349 : vector<1x1x32xf32> to vector<1x32xf32>
    %351 = arith.truncf %346 : vector<16x128xf32> to vector<16x128xbf16>
    %cst_244 = arith.constant dense<0.000000e+00> : vector<16x128xf32>
    %352 = tpu.matmul %2, %351, %cst_244 {dimension_numbers = #tpu.dot_dimension_numbers<[1], [0], [0], [1], [0, 0, 1, 1], [], []>} : vector<16x16xbf16>, vector<16x128xbf16>, vector<16x128xf32> -> vector<16x128xf32>
    %353 = arith.truncf %352 : vector<16x128xf32> to vector<16x128xbf16>
    %cst_245 = arith.constant dense<0.000000e+00> : vector<16x128xf32>
    %354 = tpu.matmul %5, %351, %cst_245 {dimension_numbers = #tpu.dot_dimension_numbers<[1], [0], [0], [1], [0, 0, 1, 1], [], []>} : vector<16x16xbf16>, vector<16x128xbf16>, vector<16x128xf32> -> vector<16x128xf32>
    %355 = arith.truncf %354 : vector<16x128xf32> to vector<16x128xbf16>
    %356 = vector.extract_strided_slice %348 {offsets = [0, 0, 0], sizes = [1, 128, 32], strides = [1, 1, 1]} : vector<3x128x32xbf16> to vector<1x128x32xbf16>
    %357 = vector.shape_cast %356 : vector<1x128x32xbf16> to vector<128x32xbf16>
    %cst_246 = arith.constant dense<0.000000e+00> : vector<16x32xf32>
    %358 = tpu.matmul %353, %357, %cst_246 {dimension_numbers = #tpu.dot_dimension_numbers<[1], [0], [0], [1], [0, 0, 1, 1], [], []>} : vector<16x128xbf16>, vector<128x32xbf16>, vector<16x32xf32> -> vector<16x32xf32>
    %359 = vector.extract_strided_slice %348 {offsets = [1, 0, 0], sizes = [1, 128, 32], strides = [1, 1, 1]} : vector<3x128x32xbf16> to vector<1x128x32xbf16>
    %360 = vector.shape_cast %359 : vector<1x128x32xbf16> to vector<128x32xbf16>
    %cst_247 = arith.constant dense<0.000000e+00> : vector<16x32xf32>
    %361 = tpu.matmul %351, %360, %cst_247 {dimension_numbers = #tpu.dot_dimension_numbers<[1], [0], [0], [1], [0, 0, 1, 1], [], []>} : vector<16x128xbf16>, vector<128x32xbf16>, vector<16x32xf32> -> vector<16x32xf32>
    %362 = arith.addf %358, %361 : vector<16x32xf32>
    %363 = vector.extract_strided_slice %348 {offsets = [2, 0, 0], sizes = [1, 128, 32], strides = [1, 1, 1]} : vector<3x128x32xbf16> to vector<1x128x32xbf16>
    %364 = vector.shape_cast %363 : vector<1x128x32xbf16> to vector<128x32xbf16>
    %cst_248 = arith.constant dense<0.000000e+00> : vector<16x32xf32>
    %365 = tpu.matmul %355, %364, %cst_248 {dimension_numbers = #tpu.dot_dimension_numbers<[1], [0], [0], [1], [0, 0, 1, 1], [], []>} : vector<16x128xbf16>, vector<128x32xbf16>, vector<16x32xf32> -> vector<16x32xf32>
    %366 = arith.addf %362, %365 : vector<16x32xf32>
    %367 = vector.broadcast %350 : vector<1x32xf32> to vector<16x32xf32>
    %368 = arith.addf %366, %367 : vector<16x32xf32>
    %369 = arith.addf %322, %368 : vector<16x32xf32>
    %c1_249 = arith.constant 1 : index
    %c0_250 = arith.constant 0 : index
    %c0_251 = arith.constant 0 : index
    %370 = vector.load %arg17[%c1_249, %c0_250, %c0_251] : memref<2x1x32xf32, #tpu.memory_space<vmem>>, vector<1x1x32xf32>
    %371 = vector.shape_cast %370 : vector<1x1x32xf32> to vector<1x32xf32>
    %c1_252 = arith.constant 1 : index
    %c0_253 = arith.constant 0 : index
    %c0_254 = arith.constant 0 : index
    %372 = vector.load %arg18[%c1_252, %c0_253, %c0_254] : memref<2x1x32xf32, #tpu.memory_space<vmem>>, vector<1x1x32xf32>
    %373 = vector.shape_cast %372 : vector<1x1x32xf32> to vector<1x32xf32>
    %cst_255 = arith.constant dense<0.000000e+00> : vector<16xf32>
    %374 = vector.multi_reduction <add>, %369, %cst_255 [1] : vector<16x32xf32> to vector<16xf32>
    %375 = vector.shape_cast %374 : vector<16xf32> to vector<16x1xf32>
    %cst_256 = arith.constant 3.200000e+01 : f32
    %376 = vector.broadcast %cst_256 : f32 to vector<16x1xf32>
    %377 = arith.divf %375, %376 : vector<16x1xf32>
    %378 = vector.broadcast %377 : vector<16x1xf32> to vector<16x32xf32>
    %379 = arith.subf %369, %378 : vector<16x32xf32>
    %380 = arith.mulf %379, %379 : vector<16x32xf32>
    %cst_257 = arith.constant dense<0.000000e+00> : vector<16xf32>
    %381 = vector.multi_reduction <add>, %380, %cst_257 [1] : vector<16x32xf32> to vector<16xf32>
    %382 = vector.shape_cast %381 : vector<16xf32> to vector<16x1xf32>
    %cst_258 = arith.constant 3.200000e+01 : f32
    %383 = vector.broadcast %cst_258 : f32 to vector<16x1xf32>
    %384 = arith.divf %382, %383 : vector<16x1xf32>
    %cst_259 = arith.constant 9.99999974E-6 : f32
    %385 = vector.broadcast %cst_259 : f32 to vector<16x1xf32>
    %386 = arith.addf %384, %385 : vector<16x1xf32>
    %387 = math.rsqrt %386 : vector<16x1xf32>
    %388 = vector.broadcast %387 : vector<16x1xf32> to vector<16x32xf32>
    %389 = arith.mulf %379, %388 : vector<16x32xf32>
    %390 = vector.broadcast %371 : vector<1x32xf32> to vector<16x32xf32>
    %391 = arith.mulf %389, %390 : vector<16x32xf32>
    %392 = vector.broadcast %373 : vector<1x32xf32> to vector<16x32xf32>
    %393 = arith.addf %391, %392 : vector<16x32xf32>
    %394 = vector.broadcast %6 : vector<16x1xf32> to vector<16x32xf32>
    %395 = arith.mulf %393, %394 : vector<16x32xf32>
    %c0_260 = arith.constant 0 : index
    %c0_261 = arith.constant 0 : index
    %396 = vector.load %arg23[%c0_260, %c0_261] : memref<1x32xf32, #tpu.memory_space<vmem>>, vector<1x32xf32>
    %c0_262 = arith.constant 0 : index
    %c0_263 = arith.constant 0 : index
    %397 = vector.load %arg24[%c0_262, %c0_263] : memref<1x32xf32, #tpu.memory_space<vmem>>, vector<1x32xf32>
    %cst_264 = arith.constant dense<0.000000e+00> : vector<16xf32>
    %398 = vector.multi_reduction <add>, %395, %cst_264 [1] : vector<16x32xf32> to vector<16xf32>
    %399 = vector.shape_cast %398 : vector<16xf32> to vector<16x1xf32>
    %cst_265 = arith.constant 3.200000e+01 : f32
    %400 = vector.broadcast %cst_265 : f32 to vector<16x1xf32>
    %401 = arith.divf %399, %400 : vector<16x1xf32>
    %402 = vector.broadcast %401 : vector<16x1xf32> to vector<16x32xf32>
    %403 = arith.subf %395, %402 : vector<16x32xf32>
    %404 = arith.mulf %403, %403 : vector<16x32xf32>
    %cst_266 = arith.constant dense<0.000000e+00> : vector<16xf32>
    %405 = vector.multi_reduction <add>, %404, %cst_266 [1] : vector<16x32xf32> to vector<16xf32>
    %406 = vector.shape_cast %405 : vector<16xf32> to vector<16x1xf32>
    %cst_267 = arith.constant 3.200000e+01 : f32
    %407 = vector.broadcast %cst_267 : f32 to vector<16x1xf32>
    %408 = arith.divf %406, %407 : vector<16x1xf32>
    %cst_268 = arith.constant 9.99999974E-6 : f32
    %409 = vector.broadcast %cst_268 : f32 to vector<16x1xf32>
    %410 = arith.addf %408, %409 : vector<16x1xf32>
    %411 = math.rsqrt %410 : vector<16x1xf32>
    %412 = vector.broadcast %411 : vector<16x1xf32> to vector<16x32xf32>
    %413 = arith.mulf %403, %412 : vector<16x32xf32>
    %414 = vector.broadcast %396 : vector<1x32xf32> to vector<16x32xf32>
    %415 = arith.mulf %413, %414 : vector<16x32xf32>
    %416 = vector.broadcast %397 : vector<1x32xf32> to vector<16x32xf32>
    %417 = arith.addf %415, %416 : vector<16x32xf32>
    %418 = vector.broadcast %6 : vector<16x1xf32> to vector<16x32xf32>
    %419 = arith.mulf %417, %418 : vector<16x32xf32>
    %c0_269 = arith.constant 0 : index
    %c0_270 = arith.constant 0 : index
    %420 = vector.load %arg2[%c0_269, %c0_270] : memref<16x32xf32, #tpu.memory_space<vmem>>, vector<16x32xf32>
    %421 = arith.addf %419, %420 : vector<16x32xf32>
    %c0_271 = arith.constant 0 : index
    %c0_272 = arith.constant 0 : index
    %422 = vector.load %arg35[%c0_271, %c0_272] : memref<16x32xf32, #tpu.memory_space<vmem>>, vector<16x32xf32>
    tpu.vector_store %arg35[%c0_271, %c0_272], %421 {strides = array<i32>} : memref<16x32xf32, #tpu.memory_space<vmem>>, vector<16x32xf32>,
    %c0_273 = arith.constant 0 : index
    %c0_274 = arith.constant 0 : index
    %c0_275 = arith.constant 0 : index
    %423 = vector.load %arg25[%c0_273, %c0_274, %c0_275] : memref<3x32x32xbf16, #tpu.memory_space<vmem>>, vector<3x32x32xbf16>
    %c0_276 = arith.constant 0 : index
    %c0_277 = arith.constant 0 : index
    %424 = vector.load %arg26[%c0_276, %c0_277] : memref<1x32xf32, #tpu.memory_space<vmem>>, vector<1x32xf32>
    %425 = arith.truncf %421 : vector<16x32xf32> to vector<16x32xbf16>
    %cst_278 = arith.constant dense<0.000000e+00> : vector<16x32xf32>
    %426 = tpu.matmul %2, %425, %cst_278 {dimension_numbers = #tpu.dot_dimension_numbers<[1], [0], [0], [1], [0, 0, 1, 1], [], []>} : vector<16x16xbf16>, vector<16x32xbf16>, vector<16x32xf32> -> vector<16x32xf32>
    %427 = arith.truncf %426 : vector<16x32xf32> to vector<16x32xbf16>
    %cst_279 = arith.constant dense<0.000000e+00> : vector<16x32xf32>
    %428 = tpu.matmul %5, %425, %cst_279 {dimension_numbers = #tpu.dot_dimension_numbers<[1], [0], [0], [1], [0, 0, 1, 1], [], []>} : vector<16x16xbf16>, vector<16x32xbf16>, vector<16x32xf32> -> vector<16x32xf32>
    %429 = arith.truncf %428 : vector<16x32xf32> to vector<16x32xbf16>
    %430 = vector.extract_strided_slice %423 {offsets = [0, 0, 0], sizes = [1, 32, 32], strides = [1, 1, 1]} : vector<3x32x32xbf16> to vector<1x32x32xbf16>
    %431 = vector.shape_cast %430 : vector<1x32x32xbf16> to vector<32x32xbf16>
    %cst_280 = arith.constant dense<0.000000e+00> : vector<16x32xf32>
    %432 = tpu.matmul %427, %431, %cst_280 {dimension_numbers = #tpu.dot_dimension_numbers<[1], [0], [0], [1], [0, 0, 1, 1], [], []>} : vector<16x32xbf16>, vector<32x32xbf16>, vector<16x32xf32> -> vector<16x32xf32>
    %433 = vector.extract_strided_slice %423 {offsets = [1, 0, 0], sizes = [1, 32, 32], strides = [1, 1, 1]} : vector<3x32x32xbf16> to vector<1x32x32xbf16>
    %434 = vector.shape_cast %433 : vector<1x32x32xbf16> to vector<32x32xbf16>
    %cst_281 = arith.constant dense<0.000000e+00> : vector<16x32xf32>
    %435 = tpu.matmul %425, %434, %cst_281 {dimension_numbers = #tpu.dot_dimension_numbers<[1], [0], [0], [1], [0, 0, 1, 1], [], []>} : vector<16x32xbf16>, vector<32x32xbf16>, vector<16x32xf32> -> vector<16x32xf32>
    %436 = arith.addf %432, %435 : vector<16x32xf32>
    %437 = vector.extract_strided_slice %423 {offsets = [2, 0, 0], sizes = [1, 32, 32], strides = [1, 1, 1]} : vector<3x32x32xbf16> to vector<1x32x32xbf16>
    %438 = vector.shape_cast %437 : vector<1x32x32xbf16> to vector<32x32xbf16>
    %cst_282 = arith.constant dense<0.000000e+00> : vector<16x32xf32>
    %439 = tpu.matmul %429, %438, %cst_282 {dimension_numbers = #tpu.dot_dimension_numbers<[1], [0], [0], [1], [0, 0, 1, 1], [], []>} : vector<16x32xbf16>, vector<32x32xbf16>, vector<16x32xf32> -> vector<16x32xf32>
    %440 = arith.addf %436, %439 : vector<16x32xf32>
    %441 = vector.broadcast %424 : vector<1x32xf32> to vector<16x32xf32>
    %442 = arith.addf %440, %441 : vector<16x32xf32>
    %cst_283 = arith.constant 0.000000e+00 : f32
    %443 = vector.broadcast %cst_283 : f32 to vector<16x32xf32>
    %444 = arith.maximumf %442, %443 : vector<16x32xf32>
    %c0_284 = arith.constant 0 : index
    %c0_285 = arith.constant 0 : index
    %445 = vector.load %arg27[%c0_284, %c0_285] : memref<1x32xf32, #tpu.memory_space<vmem>>, vector<1x32xf32>
    %c0_286 = arith.constant 0 : index
    %c0_287 = arith.constant 0 : index
    %446 = vector.load %arg28[%c0_286, %c0_287] : memref<1x32xf32, #tpu.memory_space<vmem>>, vector<1x32xf32>
    %cst_288 = arith.constant dense<0.000000e+00> : vector<16xf32>
    %447 = vector.multi_reduction <add>, %444, %cst_288 [1] : vector<16x32xf32> to vector<16xf32>
    %448 = vector.shape_cast %447 : vector<16xf32> to vector<16x1xf32>
    %cst_289 = arith.constant 3.200000e+01 : f32
    %449 = vector.broadcast %cst_289 : f32 to vector<16x1xf32>
    %450 = arith.divf %448, %449 : vector<16x1xf32>
    %451 = vector.broadcast %450 : vector<16x1xf32> to vector<16x32xf32>
    %452 = arith.subf %444, %451 : vector<16x32xf32>
    %453 = arith.mulf %452, %452 : vector<16x32xf32>
    %cst_290 = arith.constant dense<0.000000e+00> : vector<16xf32>
    %454 = vector.multi_reduction <add>, %453, %cst_290 [1] : vector<16x32xf32> to vector<16xf32>
    %455 = vector.shape_cast %454 : vector<16xf32> to vector<16x1xf32>
    %cst_291 = arith.constant 3.200000e+01 : f32
    %456 = vector.broadcast %cst_291 : f32 to vector<16x1xf32>
    %457 = arith.divf %455, %456 : vector<16x1xf32>
    %cst_292 = arith.constant 9.99999974E-6 : f32
    %458 = vector.broadcast %cst_292 : f32 to vector<16x1xf32>
    %459 = arith.addf %457, %458 : vector<16x1xf32>
    %460 = math.rsqrt %459 : vector<16x1xf32>
    %461 = vector.broadcast %460 : vector<16x1xf32> to vector<16x32xf32>
    %462 = arith.mulf %452, %461 : vector<16x32xf32>
    %463 = vector.broadcast %445 : vector<1x32xf32> to vector<16x32xf32>
    %464 = arith.mulf %462, %463 : vector<16x32xf32>
    %465 = vector.broadcast %446 : vector<1x32xf32> to vector<16x32xf32>
    %466 = arith.addf %464, %465 : vector<16x32xf32>
    %c0_293 = arith.constant 0 : index
    %c0_294 = arith.constant 0 : index
    %c0_295 = arith.constant 0 : index
    %467 = vector.load %arg29[%c0_293, %c0_294, %c0_295] : memref<3x32x32xbf16, #tpu.memory_space<vmem>>, vector<3x32x32xbf16>
    %c0_296 = arith.constant 0 : index
    %c0_297 = arith.constant 0 : index
    %468 = vector.load %arg30[%c0_296, %c0_297] : memref<1x32xf32, #tpu.memory_space<vmem>>, vector<1x32xf32>
    %469 = arith.truncf %466 : vector<16x32xf32> to vector<16x32xbf16>
    %cst_298 = arith.constant dense<0.000000e+00> : vector<16x32xf32>
    %470 = tpu.matmul %2, %469, %cst_298 {dimension_numbers = #tpu.dot_dimension_numbers<[1], [0], [0], [1], [0, 0, 1, 1], [], []>} : vector<16x16xbf16>, vector<16x32xbf16>, vector<16x32xf32> -> vector<16x32xf32>
    %471 = arith.truncf %470 : vector<16x32xf32> to vector<16x32xbf16>
    %cst_299 = arith.constant dense<0.000000e+00> : vector<16x32xf32>
    %472 = tpu.matmul %5, %469, %cst_299 {dimension_numbers = #tpu.dot_dimension_numbers<[1], [0], [0], [1], [0, 0, 1, 1], [], []>} : vector<16x16xbf16>, vector<16x32xbf16>, vector<16x32xf32> -> vector<16x32xf32>
    %473 = arith.truncf %472 : vector<16x32xf32> to vector<16x32xbf16>
    %474 = vector.extract_strided_slice %467 {offsets = [0, 0, 0], sizes = [1, 32, 32], strides = [1, 1, 1]} : vector<3x32x32xbf16> to vector<1x32x32xbf16>
    %475 = vector.shape_cast %474 : vector<1x32x32xbf16> to vector<32x32xbf16>
    %cst_300 = arith.constant dense<0.000000e+00> : vector<16x32xf32>
    %476 = tpu.matmul %471, %475, %cst_300 {dimension_numbers = #tpu.dot_dimension_numbers<[1], [0], [0], [1], [0, 0, 1, 1], [], []>} : vector<16x32xbf16>, vector<32x32xbf16>, vector<16x32xf32> -> vector<16x32xf32>
    %477 = vector.extract_strided_slice %467 {offsets = [1, 0, 0], sizes = [1, 32, 32], strides = [1, 1, 1]} : vector<3x32x32xbf16> to vector<1x32x32xbf16>
    %478 = vector.shape_cast %477 : vector<1x32x32xbf16> to vector<32x32xbf16>
    %cst_301 = arith.constant dense<0.000000e+00> : vector<16x32xf32>
    %479 = tpu.matmul %469, %478, %cst_301 {dimension_numbers = #tpu.dot_dimension_numbers<[1], [0], [0], [1], [0, 0, 1, 1], [], []>} : vector<16x32xbf16>, vector<32x32xbf16>, vector<16x32xf32> -> vector<16x32xf32>
    %480 = arith.addf %476, %479 : vector<16x32xf32>
    %481 = vector.extract_strided_slice %467 {offsets = [2, 0, 0], sizes = [1, 32, 32], strides = [1, 1, 1]} : vector<3x32x32xbf16> to vector<1x32x32xbf16>
    %482 = vector.shape_cast %481 : vector<1x32x32xbf16> to vector<32x32xbf16>
    %cst_302 = arith.constant dense<0.000000e+00> : vector<16x32xf32>
    %483 = tpu.matmul %473, %482, %cst_302 {dimension_numbers = #tpu.dot_dimension_numbers<[1], [0], [0], [1], [0, 0, 1, 1], [], []>} : vector<16x32xbf16>, vector<32x32xbf16>, vector<16x32xf32> -> vector<16x32xf32>
    %484 = arith.addf %480, %483 : vector<16x32xf32>
    %485 = vector.broadcast %468 : vector<1x32xf32> to vector<16x32xf32>
    %486 = arith.addf %484, %485 : vector<16x32xf32>
    %cst_303 = arith.constant 0.000000e+00 : f32
    %487 = vector.broadcast %cst_303 : f32 to vector<16x32xf32>
    %488 = arith.maximumf %486, %487 : vector<16x32xf32>
    %c0_304 = arith.constant 0 : index
    %c0_305 = arith.constant 0 : index
    %489 = vector.load %arg31[%c0_304, %c0_305] : memref<1x32xf32, #tpu.memory_space<vmem>>, vector<1x32xf32>
    %c0_306 = arith.constant 0 : index
    %c0_307 = arith.constant 0 : index
    %490 = vector.load %arg32[%c0_306, %c0_307] : memref<1x32xf32, #tpu.memory_space<vmem>>, vector<1x32xf32>
    %cst_308 = arith.constant dense<0.000000e+00> : vector<16xf32>
    %491 = vector.multi_reduction <add>, %488, %cst_308 [1] : vector<16x32xf32> to vector<16xf32>
    %492 = vector.shape_cast %491 : vector<16xf32> to vector<16x1xf32>
    %cst_309 = arith.constant 3.200000e+01 : f32
    %493 = vector.broadcast %cst_309 : f32 to vector<16x1xf32>
    %494 = arith.divf %492, %493 : vector<16x1xf32>
    %495 = vector.broadcast %494 : vector<16x1xf32> to vector<16x32xf32>
    %496 = arith.subf %488, %495 : vector<16x32xf32>
    %497 = arith.mulf %496, %496 : vector<16x32xf32>
    %cst_310 = arith.constant dense<0.000000e+00> : vector<16xf32>
    %498 = vector.multi_reduction <add>, %497, %cst_310 [1] : vector<16x32xf32> to vector<16xf32>
    %499 = vector.shape_cast %498 : vector<16xf32> to vector<16x1xf32>
    %cst_311 = arith.constant 3.200000e+01 : f32
    %500 = vector.broadcast %cst_311 : f32 to vector<16x1xf32>
    %501 = arith.divf %499, %500 : vector<16x1xf32>
    %cst_312 = arith.constant 9.99999974E-6 : f32
    %502 = vector.broadcast %cst_312 : f32 to vector<16x1xf32>
    %503 = arith.addf %501, %502 : vector<16x1xf32>
    %504 = math.rsqrt %503 : vector<16x1xf32>
    %505 = vector.broadcast %504 : vector<16x1xf32> to vector<16x32xf32>
    %506 = arith.mulf %496, %505 : vector<16x32xf32>
    %507 = vector.broadcast %489 : vector<1x32xf32> to vector<16x32xf32>
    %508 = arith.mulf %506, %507 : vector<16x32xf32>
    %509 = vector.broadcast %490 : vector<1x32xf32> to vector<16x32xf32>
    %510 = arith.addf %508, %509 : vector<16x32xf32>
    %c0_313 = arith.constant 0 : index
    %c0_314 = arith.constant 0 : index
    %511 = vector.load %arg33[%c0_313, %c0_314] : memref<1x32xf32, #tpu.memory_space<vmem>>, vector<1x32xf32>
    %512 = vector.broadcast %511 : vector<1x32xf32> to vector<16x32xf32>
    %513 = arith.mulf %510, %512 : vector<16x32xf32>
    %cst_315 = arith.constant dense<0.000000e+00> : vector<16xf32>
    %514 = vector.multi_reduction <add>, %513, %cst_315 [1] : vector<16x32xf32> to vector<16xf32>
    %515 = vector.shape_cast %514 : vector<16xf32> to vector<16x1xf32>
    %c0_316 = arith.constant 0 : index
    %c0_317 = arith.constant 0 : index
    %516 = vector.load %arg34[%c0_316, %c0_317] : memref<1x1xf32, #tpu.memory_space<vmem>>, vector<1x1xf32>
    %517 = vector.broadcast %516 : vector<1x1xf32> to vector<16x1xf32>
    %518 = arith.addf %515, %517 : vector<16x1xf32>
    %c0_318 = arith.constant 0 : index
    %c0_319 = arith.constant 0 : index
    %519 = vector.load %arg36[%c0_318, %c0_319] : memref<16x1xf32, #tpu.memory_space<vmem>>, vector<16x1xf32>
    tpu.vector_store %arg36[%c0_318, %c0_319], %518 {strides = array<i32>} : memref<16x1xf32, #tpu.memory_space<vmem>>, vector<16x1xf32>,
    return
  }
  func.func @transform_0(%arg0: i32) -> (i32, i32) {
    %c0_i32 = arith.constant 0 : i32
    %c0_i32_0 = arith.constant 0 : i32
    return %arg0, %c0_i32 : i32, i32
  }
  func.func @transform_1(%arg0: i32) -> (i32, i32) {
    %c0_i32 = arith.constant 0 : i32
    %c0_i32_0 = arith.constant 0 : i32
    return %arg0, %c0_i32 : i32, i32
  }
  func.func @transform_2(%arg0: i32) -> (i32, i32, i32) {
    %c0_i32 = arith.constant 0 : i32
    %c0_i32_0 = arith.constant 0 : i32
    %c0_i32_1 = arith.constant 0 : i32
    return %arg0, %c0_i32, %c0_i32_0 : i32, i32, i32
  }
  func.func @transform_3(%arg0: i32) -> (i32, i32, i32) {
    %c0_i32 = arith.constant 0 : i32
    %c0_i32_0 = arith.constant 0 : i32
    %c0_i32_1 = arith.constant 0 : i32
    return %arg0, %c0_i32, %c0_i32_0 : i32, i32, i32
  }
  func.func @transform_4(%arg0: i32) -> (i32, i32, i32) {
    %c0_i32 = arith.constant 0 : i32
    %c0_i32_0 = arith.constant 0 : i32
    %c0_i32_1 = arith.constant 0 : i32
    return %arg0, %c0_i32, %c0_i32_0 : i32, i32, i32
  }
  func.func @transform_5(%arg0: i32) -> (i32, i32) {
    %c0_i32 = arith.constant 0 : i32
    %c0_i32_0 = arith.constant 0 : i32
    return %arg0, %c0_i32 : i32, i32
  }
  func.func @transform_6(%arg0: i32) -> (i32, i32, i32, i32) {
    %c0_i32 = arith.constant 0 : i32
    %c0_i32_0 = arith.constant 0 : i32
    %c0_i32_1 = arith.constant 0 : i32
    %c0_i32_2 = arith.constant 0 : i32
    %c0_i32_3 = arith.constant 0 : i32
    return %c0_i32, %c0_i32_0, %c0_i32_1, %c0_i32_2 : i32, i32, i32, i32
  }
  func.func @transform_7(%arg0: i32) -> (i32, i32, i32, i32) {
    %c0_i32 = arith.constant 0 : i32
    %c0_i32_0 = arith.constant 0 : i32
    %c0_i32_1 = arith.constant 0 : i32
    %c0_i32_2 = arith.constant 0 : i32
    %c0_i32_3 = arith.constant 0 : i32
    return %c0_i32, %c0_i32_0, %c0_i32_1, %c0_i32_2 : i32, i32, i32, i32
  }
  func.func @transform_8(%arg0: i32) -> (i32, i32, i32, i32) {
    %c0_i32 = arith.constant 0 : i32
    %c0_i32_0 = arith.constant 0 : i32
    %c0_i32_1 = arith.constant 0 : i32
    %c0_i32_2 = arith.constant 0 : i32
    %c0_i32_3 = arith.constant 0 : i32
    return %c0_i32, %c0_i32_0, %c0_i32_1, %c0_i32_2 : i32, i32, i32, i32
  }
  func.func @transform_9(%arg0: i32) -> (i32, i32, i32, i32) {
    %c0_i32 = arith.constant 0 : i32
    %c0_i32_0 = arith.constant 0 : i32
    %c0_i32_1 = arith.constant 0 : i32
    %c0_i32_2 = arith.constant 0 : i32
    %c0_i32_3 = arith.constant 0 : i32
    return %c0_i32, %c0_i32_0, %c0_i32_1, %c0_i32_2 : i32, i32, i32, i32
  }
  func.func @transform_10(%arg0: i32) -> (i32, i32, i32, i32) {
    %c0_i32 = arith.constant 0 : i32
    %c0_i32_0 = arith.constant 0 : i32
    %c0_i32_1 = arith.constant 0 : i32
    %c0_i32_2 = arith.constant 0 : i32
    %c0_i32_3 = arith.constant 0 : i32
    return %c0_i32, %c0_i32_0, %c0_i32_1, %c0_i32_2 : i32, i32, i32, i32
  }
  func.func @transform_11(%arg0: i32) -> (i32, i32, i32, i32) {
    %c0_i32 = arith.constant 0 : i32
    %c0_i32_0 = arith.constant 0 : i32
    %c0_i32_1 = arith.constant 0 : i32
    %c0_i32_2 = arith.constant 0 : i32
    %c0_i32_3 = arith.constant 0 : i32
    return %c0_i32, %c0_i32_0, %c0_i32_1, %c0_i32_2 : i32, i32, i32, i32
  }
  func.func @transform_12(%arg0: i32) -> (i32, i32, i32, i32) {
    %c0_i32 = arith.constant 0 : i32
    %c0_i32_0 = arith.constant 0 : i32
    %c0_i32_1 = arith.constant 0 : i32
    %c0_i32_2 = arith.constant 0 : i32
    %c0_i32_3 = arith.constant 0 : i32
    return %c0_i32, %c0_i32_0, %c0_i32_1, %c0_i32_2 : i32, i32, i32, i32
  }
  func.func @transform_13(%arg0: i32) -> (i32, i32, i32) {
    %c0_i32 = arith.constant 0 : i32
    %c0_i32_0 = arith.constant 0 : i32
    %c0_i32_1 = arith.constant 0 : i32
    %c0_i32_2 = arith.constant 0 : i32
    return %c0_i32, %c0_i32_0, %c0_i32_1 : i32, i32, i32
  }
  func.func @transform_14(%arg0: i32) -> (i32, i32, i32) {
    %c0_i32 = arith.constant 0 : i32
    %c0_i32_0 = arith.constant 0 : i32
    %c0_i32_1 = arith.constant 0 : i32
    %c0_i32_2 = arith.constant 0 : i32
    return %c0_i32, %c0_i32_0, %c0_i32_1 : i32, i32, i32
  }
  func.func @transform_15(%arg0: i32) -> (i32, i32, i32) {
    %c0_i32 = arith.constant 0 : i32
    %c0_i32_0 = arith.constant 0 : i32
    %c0_i32_1 = arith.constant 0 : i32
    %c0_i32_2 = arith.constant 0 : i32
    return %c0_i32, %c0_i32_0, %c0_i32_1 : i32, i32, i32
  }
  func.func @transform_16(%arg0: i32) -> (i32, i32, i32) {
    %c0_i32 = arith.constant 0 : i32
    %c0_i32_0 = arith.constant 0 : i32
    %c0_i32_1 = arith.constant 0 : i32
    %c0_i32_2 = arith.constant 0 : i32
    return %c0_i32, %c0_i32_0, %c0_i32_1 : i32, i32, i32
  }
  func.func @transform_17(%arg0: i32) -> (i32, i32, i32) {
    %c0_i32 = arith.constant 0 : i32
    %c0_i32_0 = arith.constant 0 : i32
    %c0_i32_1 = arith.constant 0 : i32
    %c0_i32_2 = arith.constant 0 : i32
    return %c0_i32, %c0_i32_0, %c0_i32_1 : i32, i32, i32
  }
  func.func @transform_18(%arg0: i32) -> (i32, i32, i32, i32) {
    %c0_i32 = arith.constant 0 : i32
    %c0_i32_0 = arith.constant 0 : i32
    %c0_i32_1 = arith.constant 0 : i32
    %c0_i32_2 = arith.constant 0 : i32
    %c0_i32_3 = arith.constant 0 : i32
    return %c0_i32, %c0_i32_0, %c0_i32_1, %c0_i32_2 : i32, i32, i32, i32
  }
  func.func @transform_19(%arg0: i32) -> (i32, i32, i32) {
    %c0_i32 = arith.constant 0 : i32
    %c0_i32_0 = arith.constant 0 : i32
    %c0_i32_1 = arith.constant 0 : i32
    %c0_i32_2 = arith.constant 0 : i32
    return %c0_i32, %c0_i32_0, %c0_i32_1 : i32, i32, i32
  }
  func.func @transform_20(%arg0: i32) -> (i32, i32, i32, i32) {
    %c0_i32 = arith.constant 0 : i32
    %c0_i32_0 = arith.constant 0 : i32
    %c0_i32_1 = arith.constant 0 : i32
    %c0_i32_2 = arith.constant 0 : i32
    %c0_i32_3 = arith.constant 0 : i32
    return %c0_i32, %c0_i32_0, %c0_i32_1, %c0_i32_2 : i32, i32, i32, i32
  }
  func.func @transform_21(%arg0: i32) -> (i32, i32, i32) {
    %c0_i32 = arith.constant 0 : i32
    %c0_i32_0 = arith.constant 0 : i32
    %c0_i32_1 = arith.constant 0 : i32
    %c0_i32_2 = arith.constant 0 : i32
    return %c0_i32, %c0_i32_0, %c0_i32_1 : i32, i32, i32
  }
  func.func @transform_22(%arg0: i32) -> (i32, i32) {
    %c0_i32 = arith.constant 0 : i32
    %c0_i32_0 = arith.constant 0 : i32
    %c0_i32_1 = arith.constant 0 : i32
    return %c0_i32, %c0_i32_0 : i32, i32
  }
  func.func @transform_23(%arg0: i32) -> (i32, i32) {
    %c0_i32 = arith.constant 0 : i32
    %c0_i32_0 = arith.constant 0 : i32
    %c0_i32_1 = arith.constant 0 : i32
    return %c0_i32, %c0_i32_0 : i32, i32
  }
  func.func @transform_24(%arg0: i32) -> (i32, i32, i32) {
    %c0_i32 = arith.constant 0 : i32
    %c0_i32_0 = arith.constant 0 : i32
    %c0_i32_1 = arith.constant 0 : i32
    %c0_i32_2 = arith.constant 0 : i32
    return %c0_i32, %c0_i32_0, %c0_i32_1 : i32, i32, i32
  }
  func.func @transform_25(%arg0: i32) -> (i32, i32) {
    %c0_i32 = arith.constant 0 : i32
    %c0_i32_0 = arith.constant 0 : i32
    %c0_i32_1 = arith.constant 0 : i32
    return %c0_i32, %c0_i32_0 : i32, i32
  }
  func.func @transform_26(%arg0: i32) -> (i32, i32) {
    %c0_i32 = arith.constant 0 : i32
    %c0_i32_0 = arith.constant 0 : i32
    %c0_i32_1 = arith.constant 0 : i32
    return %c0_i32, %c0_i32_0 : i32, i32
  }
  func.func @transform_27(%arg0: i32) -> (i32, i32) {
    %c0_i32 = arith.constant 0 : i32
    %c0_i32_0 = arith.constant 0 : i32
    %c0_i32_1 = arith.constant 0 : i32
    return %c0_i32, %c0_i32_0 : i32, i32
  }
  func.func @transform_28(%arg0: i32) -> (i32, i32, i32) {
    %c0_i32 = arith.constant 0 : i32
    %c0_i32_0 = arith.constant 0 : i32
    %c0_i32_1 = arith.constant 0 : i32
    %c0_i32_2 = arith.constant 0 : i32
    return %c0_i32, %c0_i32_0, %c0_i32_1 : i32, i32, i32
  }
  func.func @transform_29(%arg0: i32) -> (i32, i32) {
    %c0_i32 = arith.constant 0 : i32
    %c0_i32_0 = arith.constant 0 : i32
    %c0_i32_1 = arith.constant 0 : i32
    return %c0_i32, %c0_i32_0 : i32, i32
  }
  func.func @transform_30(%arg0: i32) -> (i32, i32) {
    %c0_i32 = arith.constant 0 : i32
    %c0_i32_0 = arith.constant 0 : i32
    %c0_i32_1 = arith.constant 0 : i32
    return %c0_i32, %c0_i32_0 : i32, i32
  }
  func.func @transform_31(%arg0: i32) -> (i32, i32) {
    %c0_i32 = arith.constant 0 : i32
    %c0_i32_0 = arith.constant 0 : i32
    %c0_i32_1 = arith.constant 0 : i32
    return %c0_i32, %c0_i32_0 : i32, i32
  }
  func.func @transform_32(%arg0: i32) -> (i32, i32) {
    %c0_i32 = arith.constant 0 : i32
    %c0_i32_0 = arith.constant 0 : i32
    %c0_i32_1 = arith.constant 0 : i32
    return %c0_i32, %c0_i32_0 : i32, i32
  }
  func.func @transform_33(%arg0: i32) -> (i32, i32) {
    %c0_i32 = arith.constant 0 : i32
    %c0_i32_0 = arith.constant 0 : i32
    %c0_i32_1 = arith.constant 0 : i32
    return %c0_i32, %c0_i32_0 : i32, i32
  }
  func.func @transform_34(%arg0: i32) -> (i32, i32) {
    %c0_i32 = arith.constant 0 : i32
    %c0_i32_0 = arith.constant 0 : i32
    return %arg0, %c0_i32 : i32, i32
  }
  func.func @transform_35(%arg0: i32) -> (i32, i32) {
    %c0_i32 = arith.constant 0 : i32
    %c0_i32_0 = arith.constant 0 : i32
    return %arg0, %c0_i32 : i32, i32
  }
}

module attributes {stable_mosaic.version = 11 : i64} {
  func.func @decoder_kernel(%arg0: i32, %arg1: memref<28x32xf32, #tpu.memory_space<vmem>>, %arg2: memref<28x32xf32, #tpu.memory_space<vmem>>, %arg3: memref<1x28x28xf32, #tpu.memory_space<vmem>>, %arg4: memref<1x28x28xf32, #tpu.memory_space<vmem>>, %arg5: memref<1x28x28xf32, #tpu.memory_space<vmem>>, %arg6: memref<28x1xf32, #tpu.memory_space<vmem>>, %arg7: memref<2x2x32x16xbf16, #tpu.memory_space<vmem>>, %arg8: memref<2x2x32x16xbf16, #tpu.memory_space<vmem>>, %arg9: memref<2x2x32x16xbf16, #tpu.memory_space<vmem>>, %arg10: memref<2x2x1x16xf32, #tpu.memory_space<vmem>>, %arg11: memref<2x2x1x16xf32, #tpu.memory_space<vmem>>, %arg12: memref<2x2x1x16xf32, #tpu.memory_space<vmem>>, %arg13: memref<2x2x16x32xbf16, #tpu.memory_space<vmem>>, %arg14: memref<2x1x32xf32, #tpu.memory_space<vmem>>, %arg15: memref<2x1x32xf32, #tpu.memory_space<vmem>>, %arg16: memref<2x1x32xf32, #tpu.memory_space<vmem>>, %arg17: memref<2x1x32xf32, #tpu.memory_space<vmem>>, %arg18: memref<2x1x32xf32, #tpu.memory_space<vmem>>, %arg19: memref<2x3x32x128xbf16, #tpu.memory_space<vmem>>, %arg20: memref<2x1x128xf32, #tpu.memory_space<vmem>>, %arg21: memref<2x3x128x32xbf16, #tpu.memory_space<vmem>>, %arg22: memref<2x1x32xf32, #tpu.memory_space<vmem>>, %arg23: memref<1x32xf32, #tpu.memory_space<vmem>>, %arg24: memref<1x32xf32, #tpu.memory_space<vmem>>, %arg25: memref<32x128xbf16, #tpu.memory_space<vmem>>, %arg26: memref<1x128xf32, #tpu.memory_space<vmem>>, %arg27: memref<28x128xf32, #tpu.memory_space<vmem>>) attributes {dimension_semantics = [#tpu.dimension_semantics<parallel>], iteration_bounds = array<i64: 1>, scalar_prefetch = 0 : i64, scratch_operands = 0 : i64, tpu.core_type = #tpu.core_type<tc>, window_params = [{transform_indices = @transform_0, window_bounds = array<i64: 28, 32>}, {transform_indices = @transform_1, window_bounds = array<i64: 28, 32>}, {transform_indices = @transform_2, window_bounds = array<i64: 1, 28, 28>}, {transform_indices = @transform_3, window_bounds = array<i64: 1, 28, 28>}, {transform_indices = @transform_4, window_bounds = array<i64: 1, 28, 28>}, {transform_indices = @transform_5, window_bounds = array<i64: 28, 1>}, {pipeline_mode = #tpu.pipeline_mode<synchronous>, transform_indices = @transform_6, window_bounds = array<i64: 2, 2, 32, 16>}, {pipeline_mode = #tpu.pipeline_mode<synchronous>, transform_indices = @transform_7, window_bounds = array<i64: 2, 2, 32, 16>}, {pipeline_mode = #tpu.pipeline_mode<synchronous>, transform_indices = @transform_8, window_bounds = array<i64: 2, 2, 32, 16>}, {pipeline_mode = #tpu.pipeline_mode<synchronous>, transform_indices = @transform_9, window_bounds = array<i64: 2, 2, 1, 16>}, {pipeline_mode = #tpu.pipeline_mode<synchronous>, transform_indices = @transform_10, window_bounds = array<i64: 2, 2, 1, 16>}, {pipeline_mode = #tpu.pipeline_mode<synchronous>, transform_indices = @transform_11, window_bounds = array<i64: 2, 2, 1, 16>}, {pipeline_mode = #tpu.pipeline_mode<synchronous>, transform_indices = @transform_12, window_bounds = array<i64: 2, 2, 16, 32>}, {pipeline_mode = #tpu.pipeline_mode<synchronous>, transform_indices = @transform_13, window_bounds = array<i64: 2, 1, 32>}, {pipeline_mode = #tpu.pipeline_mode<synchronous>, transform_indices = @transform_14, window_bounds = array<i64: 2, 1, 32>}, {pipeline_mode = #tpu.pipeline_mode<synchronous>, transform_indices = @transform_15, window_bounds = array<i64: 2, 1, 32>}, {pipeline_mode = #tpu.pipeline_mode<synchronous>, transform_indices = @transform_16, window_bounds = array<i64: 2, 1, 32>}, {pipeline_mode = #tpu.pipeline_mode<synchronous>, transform_indices = @transform_17, window_bounds = array<i64: 2, 1, 32>}, {pipeline_mode = #tpu.pipeline_mode<synchronous>, transform_indices = @transform_18, window_bounds = array<i64: 2, 3, 32, 128>}, {pipeline_mode = #tpu.pipeline_mode<synchronous>, transform_indices = @transform_19, window_bounds = array<i64: 2, 1, 128>}, {pipeline_mode = #tpu.pipeline_mode<synchronous>, transform_indices = @transform_20, window_bounds = array<i64: 2, 3, 128, 32>}, {pipeline_mode = #tpu.pipeline_mode<synchronous>, transform_indices = @transform_21, window_bounds = array<i64: 2, 1, 32>}, {pipeline_mode = #tpu.pipeline_mode<synchronous>, transform_indices = @transform_22, window_bounds = array<i64: 1, 32>}, {pipeline_mode = #tpu.pipeline_mode<synchronous>, transform_indices = @transform_23, window_bounds = array<i64: 1, 32>}, {pipeline_mode = #tpu.pipeline_mode<synchronous>, transform_indices = @transform_24, window_bounds = array<i64: 32, 128>}, {pipeline_mode = #tpu.pipeline_mode<synchronous>, transform_indices = @transform_25, window_bounds = array<i64: 1, 128>}, {transform_indices = @transform_26, window_bounds = array<i64: 28, 128>}]} {
    %c0 = arith.constant 0 : index
    %c0_0 = arith.constant 0 : index
    %c0_1 = arith.constant 0 : index
    %0 = vector.load %arg4[%c0, %c0_0, %c0_1] : memref<1x28x28xf32, #tpu.memory_space<vmem>>, vector<1x28x28xf32>
    %1 = vector.shape_cast %0 : vector<1x28x28xf32> to vector<28x28xf32>
    %2 = arith.truncf %1 : vector<28x28xf32> to vector<28x28xbf16>
    %c0_2 = arith.constant 0 : index
    %c0_3 = arith.constant 0 : index
    %c0_4 = arith.constant 0 : index
    %3 = vector.load %arg5[%c0_2, %c0_3, %c0_4] : memref<1x28x28xf32, #tpu.memory_space<vmem>>, vector<1x28x28xf32>
    %4 = vector.shape_cast %3 : vector<1x28x28xf32> to vector<28x28xf32>
    %5 = arith.truncf %4 : vector<28x28xf32> to vector<28x28xbf16>
    %c0_5 = arith.constant 0 : index
    %c0_6 = arith.constant 0 : index
    %6 = vector.load %arg6[%c0_5, %c0_6] : memref<28x1xf32, #tpu.memory_space<vmem>>, vector<28x1xf32>
    %c0_7 = arith.constant 0 : index
    %c0_8 = arith.constant 0 : index
    %7 = vector.load %arg1[%c0_7, %c0_8] : memref<28x32xf32, #tpu.memory_space<vmem>>, vector<28x32xf32>
    %c0_9 = arith.constant 0 : index
    %c0_10 = arith.constant 0 : index
    %8 = vector.load %arg2[%c0_9, %c0_10] : memref<28x32xf32, #tpu.memory_space<vmem>>, vector<28x32xf32>
    %9 = arith.addf %7, %8 : vector<28x32xf32>
    %c0_11 = arith.constant 0 : index
    %c0_12 = arith.constant 0 : index
    %c0_13 = arith.constant 0 : index
    %10 = vector.load %arg3[%c0_11, %c0_12, %c0_13] : memref<1x28x28xf32, #tpu.memory_space<vmem>>, vector<1x28x28xf32>
    %11 = vector.shape_cast %10 : vector<1x28x28xf32> to vector<28x28xf32>
    %12 = arith.truncf %9 : vector<28x32xf32> to vector<28x32xbf16>
    %cst = arith.constant 0.000000e+00 : f32
    %13 = vector.broadcast %cst : f32 to vector<28x32xf32>
    %c0_14 = arith.constant 0 : index
    %c0_15 = arith.constant 0 : index
    %c0_16 = arith.constant 0 : index
    %c0_17 = arith.constant 0 : index
    %14 = vector.load %arg7[%c0_14, %c0_15, %c0_16, %c0_17] : memref<2x2x32x16xbf16, #tpu.memory_space<vmem>>, vector<1x1x32x16xbf16>
    %15 = vector.shape_cast %14 : vector<1x1x32x16xbf16> to vector<32x16xbf16>
    %cst_18 = arith.constant dense<0.000000e+00> : vector<28x16xf32>
    %16 = tpu.matmul %12, %15, %cst_18 {dimension_numbers = #tpu.dot_dimension_numbers<[1], [0], [0], [1], [0, 0, 1, 1], [], []>} : vector<28x32xbf16>, vector<32x16xbf16>, vector<28x16xf32> -> vector<28x16xf32>
    %c0_19 = arith.constant 0 : index
    %c0_20 = arith.constant 0 : index
    %c0_21 = arith.constant 0 : index
    %c0_22 = arith.constant 0 : index
    %17 = vector.load %arg10[%c0_19, %c0_20, %c0_21, %c0_22] : memref<2x2x1x16xf32, #tpu.memory_space<vmem>>, vector<1x1x1x16xf32>
    %18 = vector.shape_cast %17 : vector<1x1x1x16xf32> to vector<1x16xf32>
    %19 = vector.broadcast %18 : vector<1x16xf32> to vector<28x16xf32>
    %20 = arith.addf %16, %19 : vector<28x16xf32>
    %c0_23 = arith.constant 0 : index
    %c0_24 = arith.constant 0 : index
    %c0_25 = arith.constant 0 : index
    %c0_26 = arith.constant 0 : index
    %21 = vector.load %arg8[%c0_23, %c0_24, %c0_25, %c0_26] : memref<2x2x32x16xbf16, #tpu.memory_space<vmem>>, vector<1x1x32x16xbf16>
    %22 = vector.shape_cast %21 : vector<1x1x32x16xbf16> to vector<32x16xbf16>
    %cst_27 = arith.constant dense<0.000000e+00> : vector<28x16xf32>
    %23 = tpu.matmul %12, %22, %cst_27 {dimension_numbers = #tpu.dot_dimension_numbers<[1], [0], [0], [1], [0, 0, 1, 1], [], []>} : vector<28x32xbf16>, vector<32x16xbf16>, vector<28x16xf32> -> vector<28x16xf32>
    %c0_28 = arith.constant 0 : index
    %c0_29 = arith.constant 0 : index
    %c0_30 = arith.constant 0 : index
    %c0_31 = arith.constant 0 : index
    %24 = vector.load %arg11[%c0_28, %c0_29, %c0_30, %c0_31] : memref<2x2x1x16xf32, #tpu.memory_space<vmem>>, vector<1x1x1x16xf32>
    %25 = vector.shape_cast %24 : vector<1x1x1x16xf32> to vector<1x16xf32>
    %26 = vector.broadcast %25 : vector<1x16xf32> to vector<28x16xf32>
    %27 = arith.addf %23, %26 : vector<28x16xf32>
    %c0_32 = arith.constant 0 : index
    %c0_33 = arith.constant 0 : index
    %c0_34 = arith.constant 0 : index
    %c0_35 = arith.constant 0 : index
    %28 = vector.load %arg9[%c0_32, %c0_33, %c0_34, %c0_35] : memref<2x2x32x16xbf16, #tpu.memory_space<vmem>>, vector<1x1x32x16xbf16>
    %29 = vector.shape_cast %28 : vector<1x1x32x16xbf16> to vector<32x16xbf16>
    %cst_36 = arith.constant dense<0.000000e+00> : vector<28x16xf32>
    %30 = tpu.matmul %12, %29, %cst_36 {dimension_numbers = #tpu.dot_dimension_numbers<[1], [0], [0], [1], [0, 0, 1, 1], [], []>} : vector<28x32xbf16>, vector<32x16xbf16>, vector<28x16xf32> -> vector<28x16xf32>
    %c0_37 = arith.constant 0 : index
    %c0_38 = arith.constant 0 : index
    %c0_39 = arith.constant 0 : index
    %c0_40 = arith.constant 0 : index
    %31 = vector.load %arg12[%c0_37, %c0_38, %c0_39, %c0_40] : memref<2x2x1x16xf32, #tpu.memory_space<vmem>>, vector<1x1x1x16xf32>
    %32 = vector.shape_cast %31 : vector<1x1x1x16xf32> to vector<1x16xf32>
    %33 = vector.broadcast %32 : vector<1x16xf32> to vector<28x16xf32>
    %34 = arith.addf %30, %33 : vector<28x16xf32>
    %cst_41 = arith.constant 2.500000e-01 : f32
    %35 = vector.broadcast %cst_41 : f32 to vector<28x16xf32>
    %36 = arith.mulf %20, %35 : vector<28x16xf32>
    %37 = arith.truncf %36 : vector<28x16xf32> to vector<28x16xbf16>
    %38 = arith.truncf %27 : vector<28x16xf32> to vector<28x16xbf16>
    "tpu.trace_start"() <{level = 10 : i32, message = "qe,ke->qk"}> : () -> ()
    %cst_42 = arith.constant dense<0.000000e+00> : vector<28x28xf32>
    %39 = tpu.matmul %37, %38, %cst_42 {dimension_numbers = #tpu.dot_dimension_numbers<[1], [1], [0], [0], [0, 0, 1, 0], [], []>} : vector<28x16xbf16>, vector<28x16xbf16>, vector<28x28xf32> -> vector<28x28xf32>
    "tpu.trace_stop"() : () -> ()
    %40 = arith.addf %39, %11 : vector<28x28xf32>
    %cst_43 = arith.constant dense<0xFF800000> : vector<28xf32>
    %41 = vector.multi_reduction <maximumf>, %40, %cst_43 [1] : vector<28x28xf32> to vector<28xf32>
    %42 = vector.shape_cast %41 : vector<28xf32> to vector<28x1xf32>
    %43 = vector.broadcast %42 : vector<28x1xf32> to vector<28x28xf32>
    %44 = arith.subf %40, %43 : vector<28x28xf32>
    %45 = math.exp %44 : vector<28x28xf32>
    %cst_44 = arith.constant dense<0.000000e+00> : vector<28xf32>
    %46 = vector.multi_reduction <add>, %45, %cst_44 [1] : vector<28x28xf32> to vector<28xf32>
    %47 = vector.shape_cast %46 : vector<28xf32> to vector<28x1xf32>
    %48 = tpu.reciprocal %47 {approx = true} : vector<28x1xf32> -> vector<28x1xf32>
    %49 = vector.broadcast %48 : vector<28x1xf32> to vector<28x28xf32>
    %50 = arith.mulf %45, %49 : vector<28x28xf32>
    %51 = arith.truncf %50 : vector<28x28xf32> to vector<28x28xbf16>
    %52 = arith.truncf %34 : vector<28x16xf32> to vector<28x16xbf16>
    %cst_45 = arith.constant dense<0.000000e+00> : vector<28x16xf32>
    %53 = tpu.matmul %51, %52, %cst_45 {dimension_numbers = #tpu.dot_dimension_numbers<[1], [0], [0], [1], [0, 0, 1, 1], [], []>} : vector<28x28xbf16>, vector<28x16xbf16>, vector<28x16xf32> -> vector<28x16xf32>
    %54 = arith.truncf %53 : vector<28x16xf32> to vector<28x16xbf16>
    %c0_46 = arith.constant 0 : index
    %c0_47 = arith.constant 0 : index
    %c0_48 = arith.constant 0 : index
    %c0_49 = arith.constant 0 : index
    %55 = vector.load %arg13[%c0_46, %c0_47, %c0_48, %c0_49] : memref<2x2x16x32xbf16, #tpu.memory_space<vmem>>, vector<1x1x16x32xbf16>
    %56 = vector.shape_cast %55 : vector<1x1x16x32xbf16> to vector<16x32xbf16>
    %cst_50 = arith.constant dense<0.000000e+00> : vector<28x32xf32>
    %57 = tpu.matmul %54, %56, %cst_50 {dimension_numbers = #tpu.dot_dimension_numbers<[1], [0], [0], [1], [0, 0, 1, 1], [], []>} : vector<28x16xbf16>, vector<16x32xbf16>, vector<28x32xf32> -> vector<28x32xf32>
    %58 = arith.addf %13, %57 : vector<28x32xf32>
    %c0_51 = arith.constant 0 : index
    %c1 = arith.constant 1 : index
    %c0_52 = arith.constant 0 : index
    %c0_53 = arith.constant 0 : index
    %59 = vector.load %arg7[%c0_51, %c1, %c0_52, %c0_53] : memref<2x2x32x16xbf16, #tpu.memory_space<vmem>>, vector<1x1x32x16xbf16>
    %60 = vector.shape_cast %59 : vector<1x1x32x16xbf16> to vector<32x16xbf16>
    %cst_54 = arith.constant dense<0.000000e+00> : vector<28x16xf32>
    %61 = tpu.matmul %12, %60, %cst_54 {dimension_numbers = #tpu.dot_dimension_numbers<[1], [0], [0], [1], [0, 0, 1, 1], [], []>} : vector<28x32xbf16>, vector<32x16xbf16>, vector<28x16xf32> -> vector<28x16xf32>
    %c0_55 = arith.constant 0 : index
    %c1_56 = arith.constant 1 : index
    %c0_57 = arith.constant 0 : index
    %c0_58 = arith.constant 0 : index
    %62 = vector.load %arg10[%c0_55, %c1_56, %c0_57, %c0_58] : memref<2x2x1x16xf32, #tpu.memory_space<vmem>>, vector<1x1x1x16xf32>
    %63 = vector.shape_cast %62 : vector<1x1x1x16xf32> to vector<1x16xf32>
    %64 = vector.broadcast %63 : vector<1x16xf32> to vector<28x16xf32>
    %65 = arith.addf %61, %64 : vector<28x16xf32>
    %c0_59 = arith.constant 0 : index
    %c1_60 = arith.constant 1 : index
    %c0_61 = arith.constant 0 : index
    %c0_62 = arith.constant 0 : index
    %66 = vector.load %arg8[%c0_59, %c1_60, %c0_61, %c0_62] : memref<2x2x32x16xbf16, #tpu.memory_space<vmem>>, vector<1x1x32x16xbf16>
    %67 = vector.shape_cast %66 : vector<1x1x32x16xbf16> to vector<32x16xbf16>
    %cst_63 = arith.constant dense<0.000000e+00> : vector<28x16xf32>
    %68 = tpu.matmul %12, %67, %cst_63 {dimension_numbers = #tpu.dot_dimension_numbers<[1], [0], [0], [1], [0, 0, 1, 1], [], []>} : vector<28x32xbf16>, vector<32x16xbf16>, vector<28x16xf32> -> vector<28x16xf32>
    %c0_64 = arith.constant 0 : index
    %c1_65 = arith.constant 1 : index
    %c0_66 = arith.constant 0 : index
    %c0_67 = arith.constant 0 : index
    %69 = vector.load %arg11[%c0_64, %c1_65, %c0_66, %c0_67] : memref<2x2x1x16xf32, #tpu.memory_space<vmem>>, vector<1x1x1x16xf32>
    %70 = vector.shape_cast %69 : vector<1x1x1x16xf32> to vector<1x16xf32>
    %71 = vector.broadcast %70 : vector<1x16xf32> to vector<28x16xf32>
    %72 = arith.addf %68, %71 : vector<28x16xf32>
    %c0_68 = arith.constant 0 : index
    %c1_69 = arith.constant 1 : index
    %c0_70 = arith.constant 0 : index
    %c0_71 = arith.constant 0 : index
    %73 = vector.load %arg9[%c0_68, %c1_69, %c0_70, %c0_71] : memref<2x2x32x16xbf16, #tpu.memory_space<vmem>>, vector<1x1x32x16xbf16>
    %74 = vector.shape_cast %73 : vector<1x1x32x16xbf16> to vector<32x16xbf16>
    %cst_72 = arith.constant dense<0.000000e+00> : vector<28x16xf32>
    %75 = tpu.matmul %12, %74, %cst_72 {dimension_numbers = #tpu.dot_dimension_numbers<[1], [0], [0], [1], [0, 0, 1, 1], [], []>} : vector<28x32xbf16>, vector<32x16xbf16>, vector<28x16xf32> -> vector<28x16xf32>
    %c0_73 = arith.constant 0 : index
    %c1_74 = arith.constant 1 : index
    %c0_75 = arith.constant 0 : index
    %c0_76 = arith.constant 0 : index
    %76 = vector.load %arg12[%c0_73, %c1_74, %c0_75, %c0_76] : memref<2x2x1x16xf32, #tpu.memory_space<vmem>>, vector<1x1x1x16xf32>
    %77 = vector.shape_cast %76 : vector<1x1x1x16xf32> to vector<1x16xf32>
    %78 = vector.broadcast %77 : vector<1x16xf32> to vector<28x16xf32>
    %79 = arith.addf %75, %78 : vector<28x16xf32>
    %cst_77 = arith.constant 2.500000e-01 : f32
    %80 = vector.broadcast %cst_77 : f32 to vector<28x16xf32>
    %81 = arith.mulf %65, %80 : vector<28x16xf32>
    %82 = arith.truncf %81 : vector<28x16xf32> to vector<28x16xbf16>
    %83 = arith.truncf %72 : vector<28x16xf32> to vector<28x16xbf16>
    "tpu.trace_start"() <{level = 10 : i32, message = "qe,ke->qk"}> : () -> ()
    %cst_78 = arith.constant dense<0.000000e+00> : vector<28x28xf32>
    %84 = tpu.matmul %82, %83, %cst_78 {dimension_numbers = #tpu.dot_dimension_numbers<[1], [1], [0], [0], [0, 0, 1, 0], [], []>} : vector<28x16xbf16>, vector<28x16xbf16>, vector<28x28xf32> -> vector<28x28xf32>
    "tpu.trace_stop"() : () -> ()
    %85 = arith.addf %84, %11 : vector<28x28xf32>
    %cst_79 = arith.constant dense<0xFF800000> : vector<28xf32>
    %86 = vector.multi_reduction <maximumf>, %85, %cst_79 [1] : vector<28x28xf32> to vector<28xf32>
    %87 = vector.shape_cast %86 : vector<28xf32> to vector<28x1xf32>
    %88 = vector.broadcast %87 : vector<28x1xf32> to vector<28x28xf32>
    %89 = arith.subf %85, %88 : vector<28x28xf32>
    %90 = math.exp %89 : vector<28x28xf32>
    %cst_80 = arith.constant dense<0.000000e+00> : vector<28xf32>
    %91 = vector.multi_reduction <add>, %90, %cst_80 [1] : vector<28x28xf32> to vector<28xf32>
    %92 = vector.shape_cast %91 : vector<28xf32> to vector<28x1xf32>
    %93 = tpu.reciprocal %92 {approx = true} : vector<28x1xf32> -> vector<28x1xf32>
    %94 = vector.broadcast %93 : vector<28x1xf32> to vector<28x28xf32>
    %95 = arith.mulf %90, %94 : vector<28x28xf32>
    %96 = arith.truncf %95 : vector<28x28xf32> to vector<28x28xbf16>
    %97 = arith.truncf %79 : vector<28x16xf32> to vector<28x16xbf16>
    %cst_81 = arith.constant dense<0.000000e+00> : vector<28x16xf32>
    %98 = tpu.matmul %96, %97, %cst_81 {dimension_numbers = #tpu.dot_dimension_numbers<[1], [0], [0], [1], [0, 0, 1, 1], [], []>} : vector<28x28xbf16>, vector<28x16xbf16>, vector<28x16xf32> -> vector<28x16xf32>
    %99 = arith.truncf %98 : vector<28x16xf32> to vector<28x16xbf16>
    %c0_82 = arith.constant 0 : index
    %c1_83 = arith.constant 1 : index
    %c0_84 = arith.constant 0 : index
    %c0_85 = arith.constant 0 : index
    %100 = vector.load %arg13[%c0_82, %c1_83, %c0_84, %c0_85] : memref<2x2x16x32xbf16, #tpu.memory_space<vmem>>, vector<1x1x16x32xbf16>
    %101 = vector.shape_cast %100 : vector<1x1x16x32xbf16> to vector<16x32xbf16>
    %cst_86 = arith.constant dense<0.000000e+00> : vector<28x32xf32>
    %102 = tpu.matmul %99, %101, %cst_86 {dimension_numbers = #tpu.dot_dimension_numbers<[1], [0], [0], [1], [0, 0, 1, 1], [], []>} : vector<28x16xbf16>, vector<16x32xbf16>, vector<28x32xf32> -> vector<28x32xf32>
    %103 = arith.addf %58, %102 : vector<28x32xf32>
    %c0_87 = arith.constant 0 : index
    %c0_88 = arith.constant 0 : index
    %c0_89 = arith.constant 0 : index
    %104 = vector.load %arg14[%c0_87, %c0_88, %c0_89] : memref<2x1x32xf32, #tpu.memory_space<vmem>>, vector<1x1x32xf32>
    %105 = vector.shape_cast %104 : vector<1x1x32xf32> to vector<1x32xf32>
    %106 = vector.broadcast %105 : vector<1x32xf32> to vector<28x32xf32>
    %107 = arith.addf %103, %106 : vector<28x32xf32>
    %108 = arith.addf %9, %107 : vector<28x32xf32>
    %c0_90 = arith.constant 0 : index
    %c0_91 = arith.constant 0 : index
    %c0_92 = arith.constant 0 : index
    %109 = vector.load %arg15[%c0_90, %c0_91, %c0_92] : memref<2x1x32xf32, #tpu.memory_space<vmem>>, vector<1x1x32xf32>
    %110 = vector.shape_cast %109 : vector<1x1x32xf32> to vector<1x32xf32>
    %c0_93 = arith.constant 0 : index
    %c0_94 = arith.constant 0 : index
    %c0_95 = arith.constant 0 : index
    %111 = vector.load %arg16[%c0_93, %c0_94, %c0_95] : memref<2x1x32xf32, #tpu.memory_space<vmem>>, vector<1x1x32xf32>
    %112 = vector.shape_cast %111 : vector<1x1x32xf32> to vector<1x32xf32>
    %cst_96 = arith.constant dense<0.000000e+00> : vector<28xf32>
    %113 = vector.multi_reduction <add>, %108, %cst_96 [1] : vector<28x32xf32> to vector<28xf32>
    %114 = vector.shape_cast %113 : vector<28xf32> to vector<28x1xf32>
    %cst_97 = arith.constant 3.200000e+01 : f32
    %115 = vector.broadcast %cst_97 : f32 to vector<28x1xf32>
    %116 = arith.divf %114, %115 : vector<28x1xf32>
    %117 = vector.broadcast %116 : vector<28x1xf32> to vector<28x32xf32>
    %118 = arith.subf %108, %117 : vector<28x32xf32>
    %119 = arith.mulf %118, %118 : vector<28x32xf32>
    %cst_98 = arith.constant dense<0.000000e+00> : vector<28xf32>
    %120 = vector.multi_reduction <add>, %119, %cst_98 [1] : vector<28x32xf32> to vector<28xf32>
    %121 = vector.shape_cast %120 : vector<28xf32> to vector<28x1xf32>
    %cst_99 = arith.constant 3.200000e+01 : f32
    %122 = vector.broadcast %cst_99 : f32 to vector<28x1xf32>
    %123 = arith.divf %121, %122 : vector<28x1xf32>
    %cst_100 = arith.constant 9.99999974E-6 : f32
    %124 = vector.broadcast %cst_100 : f32 to vector<28x1xf32>
    %125 = arith.addf %123, %124 : vector<28x1xf32>
    %126 = math.rsqrt %125 : vector<28x1xf32>
    %127 = vector.broadcast %126 : vector<28x1xf32> to vector<28x32xf32>
    %128 = arith.mulf %118, %127 : vector<28x32xf32>
    %129 = vector.broadcast %110 : vector<1x32xf32> to vector<28x32xf32>
    %130 = arith.mulf %128, %129 : vector<28x32xf32>
    %131 = vector.broadcast %112 : vector<1x32xf32> to vector<28x32xf32>
    %132 = arith.addf %130, %131 : vector<28x32xf32>
    %c0_101 = arith.constant 0 : index
    %c0_102 = arith.constant 0 : index
    %c0_103 = arith.constant 0 : index
    %c0_104 = arith.constant 0 : index
    %133 = vector.load %arg19[%c0_101, %c0_102, %c0_103, %c0_104] : memref<2x3x32x128xbf16, #tpu.memory_space<vmem>>, vector<1x3x32x128xbf16>
    %134 = vector.shape_cast %133 : vector<1x3x32x128xbf16> to vector<3x32x128xbf16>
    %c0_105 = arith.constant 0 : index
    %c0_106 = arith.constant 0 : index
    %c0_107 = arith.constant 0 : index
    %135 = vector.load %arg20[%c0_105, %c0_106, %c0_107] : memref<2x1x128xf32, #tpu.memory_space<vmem>>, vector<1x1x128xf32>
    %136 = vector.shape_cast %135 : vector<1x1x128xf32> to vector<1x128xf32>
    %137 = arith.truncf %132 : vector<28x32xf32> to vector<28x32xbf16>
    %cst_108 = arith.constant dense<0.000000e+00> : vector<28x32xf32>
    %138 = tpu.matmul %2, %137, %cst_108 {dimension_numbers = #tpu.dot_dimension_numbers<[1], [0], [0], [1], [0, 0, 1, 1], [], []>} : vector<28x28xbf16>, vector<28x32xbf16>, vector<28x32xf32> -> vector<28x32xf32>
    %139 = arith.truncf %138 : vector<28x32xf32> to vector<28x32xbf16>
    %cst_109 = arith.constant dense<0.000000e+00> : vector<28x32xf32>
    %140 = tpu.matmul %5, %137, %cst_109 {dimension_numbers = #tpu.dot_dimension_numbers<[1], [0], [0], [1], [0, 0, 1, 1], [], []>} : vector<28x28xbf16>, vector<28x32xbf16>, vector<28x32xf32> -> vector<28x32xf32>
    %141 = arith.truncf %140 : vector<28x32xf32> to vector<28x32xbf16>
    %142 = vector.extract_strided_slice %134 {offsets = [0, 0, 0], sizes = [1, 32, 128], strides = [1, 1, 1]} : vector<3x32x128xbf16> to vector<1x32x128xbf16>
    %143 = vector.shape_cast %142 : vector<1x32x128xbf16> to vector<32x128xbf16>
    %cst_110 = arith.constant dense<0.000000e+00> : vector<28x128xf32>
    %144 = tpu.matmul %139, %143, %cst_110 {dimension_numbers = #tpu.dot_dimension_numbers<[1], [0], [0], [1], [0, 0, 1, 1], [], []>} : vector<28x32xbf16>, vector<32x128xbf16>, vector<28x128xf32> -> vector<28x128xf32>
    %145 = vector.extract_strided_slice %134 {offsets = [1, 0, 0], sizes = [1, 32, 128], strides = [1, 1, 1]} : vector<3x32x128xbf16> to vector<1x32x128xbf16>
    %146 = vector.shape_cast %145 : vector<1x32x128xbf16> to vector<32x128xbf16>
    %cst_111 = arith.constant dense<0.000000e+00> : vector<28x128xf32>
    %147 = tpu.matmul %137, %146, %cst_111 {dimension_numbers = #tpu.dot_dimension_numbers<[1], [0], [0], [1], [0, 0, 1, 1], [], []>} : vector<28x32xbf16>, vector<32x128xbf16>, vector<28x128xf32> -> vector<28x128xf32>
    %148 = arith.addf %144, %147 : vector<28x128xf32>
    %149 = vector.extract_strided_slice %134 {offsets = [2, 0, 0], sizes = [1, 32, 128], strides = [1, 1, 1]} : vector<3x32x128xbf16> to vector<1x32x128xbf16>
    %150 = vector.shape_cast %149 : vector<1x32x128xbf16> to vector<32x128xbf16>
    %cst_112 = arith.constant dense<0.000000e+00> : vector<28x128xf32>
    %151 = tpu.matmul %141, %150, %cst_112 {dimension_numbers = #tpu.dot_dimension_numbers<[1], [0], [0], [1], [0, 0, 1, 1], [], []>} : vector<28x32xbf16>, vector<32x128xbf16>, vector<28x128xf32> -> vector<28x128xf32>
    %152 = arith.addf %148, %151 : vector<28x128xf32>
    %153 = vector.broadcast %136 : vector<1x128xf32> to vector<28x128xf32>
    %154 = arith.addf %152, %153 : vector<28x128xf32>
    %cst_113 = arith.constant 0.000000e+00 : f32
    %155 = vector.broadcast %cst_113 : f32 to vector<28x128xf32>
    %156 = arith.maximumf %154, %155 : vector<28x128xf32>
    %c0_114 = arith.constant 0 : index
    %c0_115 = arith.constant 0 : index
    %c0_116 = arith.constant 0 : index
    %c0_117 = arith.constant 0 : index
    %157 = vector.load %arg21[%c0_114, %c0_115, %c0_116, %c0_117] : memref<2x3x128x32xbf16, #tpu.memory_space<vmem>>, vector<1x3x128x32xbf16>
    %158 = vector.shape_cast %157 : vector<1x3x128x32xbf16> to vector<3x128x32xbf16>
    %c0_118 = arith.constant 0 : index
    %c0_119 = arith.constant 0 : index
    %c0_120 = arith.constant 0 : index
    %159 = vector.load %arg22[%c0_118, %c0_119, %c0_120] : memref<2x1x32xf32, #tpu.memory_space<vmem>>, vector<1x1x32xf32>
    %160 = vector.shape_cast %159 : vector<1x1x32xf32> to vector<1x32xf32>
    %161 = arith.truncf %156 : vector<28x128xf32> to vector<28x128xbf16>
    %cst_121 = arith.constant dense<0.000000e+00> : vector<28x128xf32>
    %162 = tpu.matmul %2, %161, %cst_121 {dimension_numbers = #tpu.dot_dimension_numbers<[1], [0], [0], [1], [0, 0, 1, 1], [], []>} : vector<28x28xbf16>, vector<28x128xbf16>, vector<28x128xf32> -> vector<28x128xf32>
    %163 = arith.truncf %162 : vector<28x128xf32> to vector<28x128xbf16>
    %cst_122 = arith.constant dense<0.000000e+00> : vector<28x128xf32>
    %164 = tpu.matmul %5, %161, %cst_122 {dimension_numbers = #tpu.dot_dimension_numbers<[1], [0], [0], [1], [0, 0, 1, 1], [], []>} : vector<28x28xbf16>, vector<28x128xbf16>, vector<28x128xf32> -> vector<28x128xf32>
    %165 = arith.truncf %164 : vector<28x128xf32> to vector<28x128xbf16>
    %166 = vector.extract_strided_slice %158 {offsets = [0, 0, 0], sizes = [1, 128, 32], strides = [1, 1, 1]} : vector<3x128x32xbf16> to vector<1x128x32xbf16>
    %167 = vector.shape_cast %166 : vector<1x128x32xbf16> to vector<128x32xbf16>
    %cst_123 = arith.constant dense<0.000000e+00> : vector<28x32xf32>
    %168 = tpu.matmul %163, %167, %cst_123 {dimension_numbers = #tpu.dot_dimension_numbers<[1], [0], [0], [1], [0, 0, 1, 1], [], []>} : vector<28x128xbf16>, vector<128x32xbf16>, vector<28x32xf32> -> vector<28x32xf32>
    %169 = vector.extract_strided_slice %158 {offsets = [1, 0, 0], sizes = [1, 128, 32], strides = [1, 1, 1]} : vector<3x128x32xbf16> to vector<1x128x32xbf16>
    %170 = vector.shape_cast %169 : vector<1x128x32xbf16> to vector<128x32xbf16>
    %cst_124 = arith.constant dense<0.000000e+00> : vector<28x32xf32>
    %171 = tpu.matmul %161, %170, %cst_124 {dimension_numbers = #tpu.dot_dimension_numbers<[1], [0], [0], [1], [0, 0, 1, 1], [], []>} : vector<28x128xbf16>, vector<128x32xbf16>, vector<28x32xf32> -> vector<28x32xf32>
    %172 = arith.addf %168, %171 : vector<28x32xf32>
    %173 = vector.extract_strided_slice %158 {offsets = [2, 0, 0], sizes = [1, 128, 32], strides = [1, 1, 1]} : vector<3x128x32xbf16> to vector<1x128x32xbf16>
    %174 = vector.shape_cast %173 : vector<1x128x32xbf16> to vector<128x32xbf16>
    %cst_125 = arith.constant dense<0.000000e+00> : vector<28x32xf32>
    %175 = tpu.matmul %165, %174, %cst_125 {dimension_numbers = #tpu.dot_dimension_numbers<[1], [0], [0], [1], [0, 0, 1, 1], [], []>} : vector<28x128xbf16>, vector<128x32xbf16>, vector<28x32xf32> -> vector<28x32xf32>
    %176 = arith.addf %172, %175 : vector<28x32xf32>
    %177 = vector.broadcast %160 : vector<1x32xf32> to vector<28x32xf32>
    %178 = arith.addf %176, %177 : vector<28x32xf32>
    %179 = arith.addf %132, %178 : vector<28x32xf32>
    %c0_126 = arith.constant 0 : index
    %c0_127 = arith.constant 0 : index
    %c0_128 = arith.constant 0 : index
    %180 = vector.load %arg17[%c0_126, %c0_127, %c0_128] : memref<2x1x32xf32, #tpu.memory_space<vmem>>, vector<1x1x32xf32>
    %181 = vector.shape_cast %180 : vector<1x1x32xf32> to vector<1x32xf32>
    %c0_129 = arith.constant 0 : index
    %c0_130 = arith.constant 0 : index
    %c0_131 = arith.constant 0 : index
    %182 = vector.load %arg18[%c0_129, %c0_130, %c0_131] : memref<2x1x32xf32, #tpu.memory_space<vmem>>, vector<1x1x32xf32>
    %183 = vector.shape_cast %182 : vector<1x1x32xf32> to vector<1x32xf32>
    %cst_132 = arith.constant dense<0.000000e+00> : vector<28xf32>
    %184 = vector.multi_reduction <add>, %179, %cst_132 [1] : vector<28x32xf32> to vector<28xf32>
    %185 = vector.shape_cast %184 : vector<28xf32> to vector<28x1xf32>
    %cst_133 = arith.constant 3.200000e+01 : f32
    %186 = vector.broadcast %cst_133 : f32 to vector<28x1xf32>
    %187 = arith.divf %185, %186 : vector<28x1xf32>
    %188 = vector.broadcast %187 : vector<28x1xf32> to vector<28x32xf32>
    %189 = arith.subf %179, %188 : vector<28x32xf32>
    %190 = arith.mulf %189, %189 : vector<28x32xf32>
    %cst_134 = arith.constant dense<0.000000e+00> : vector<28xf32>
    %191 = vector.multi_reduction <add>, %190, %cst_134 [1] : vector<28x32xf32> to vector<28xf32>
    %192 = vector.shape_cast %191 : vector<28xf32> to vector<28x1xf32>
    %cst_135 = arith.constant 3.200000e+01 : f32
    %193 = vector.broadcast %cst_135 : f32 to vector<28x1xf32>
    %194 = arith.divf %192, %193 : vector<28x1xf32>
    %cst_136 = arith.constant 9.99999974E-6 : f32
    %195 = vector.broadcast %cst_136 : f32 to vector<28x1xf32>
    %196 = arith.addf %194, %195 : vector<28x1xf32>
    %197 = math.rsqrt %196 : vector<28x1xf32>
    %198 = vector.broadcast %197 : vector<28x1xf32> to vector<28x32xf32>
    %199 = arith.mulf %189, %198 : vector<28x32xf32>
    %200 = vector.broadcast %181 : vector<1x32xf32> to vector<28x32xf32>
    %201 = arith.mulf %199, %200 : vector<28x32xf32>
    %202 = vector.broadcast %183 : vector<1x32xf32> to vector<28x32xf32>
    %203 = arith.addf %201, %202 : vector<28x32xf32>
    %204 = arith.truncf %203 : vector<28x32xf32> to vector<28x32xbf16>
    %cst_137 = arith.constant 0.000000e+00 : f32
    %205 = vector.broadcast %cst_137 : f32 to vector<28x32xf32>
    %c1_138 = arith.constant 1 : index
    %c0_139 = arith.constant 0 : index
    %c0_140 = arith.constant 0 : index
    %c0_141 = arith.constant 0 : index
    %206 = vector.load %arg7[%c1_138, %c0_139, %c0_140, %c0_141] : memref<2x2x32x16xbf16, #tpu.memory_space<vmem>>, vector<1x1x32x16xbf16>
    %207 = vector.shape_cast %206 : vector<1x1x32x16xbf16> to vector<32x16xbf16>
    %cst_142 = arith.constant dense<0.000000e+00> : vector<28x16xf32>
    %208 = tpu.matmul %204, %207, %cst_142 {dimension_numbers = #tpu.dot_dimension_numbers<[1], [0], [0], [1], [0, 0, 1, 1], [], []>} : vector<28x32xbf16>, vector<32x16xbf16>, vector<28x16xf32> -> vector<28x16xf32>
    %c1_143 = arith.constant 1 : index
    %c0_144 = arith.constant 0 : index
    %c0_145 = arith.constant 0 : index
    %c0_146 = arith.constant 0 : index
    %209 = vector.load %arg10[%c1_143, %c0_144, %c0_145, %c0_146] : memref<2x2x1x16xf32, #tpu.memory_space<vmem>>, vector<1x1x1x16xf32>
    %210 = vector.shape_cast %209 : vector<1x1x1x16xf32> to vector<1x16xf32>
    %211 = vector.broadcast %210 : vector<1x16xf32> to vector<28x16xf32>
    %212 = arith.addf %208, %211 : vector<28x16xf32>
    %c1_147 = arith.constant 1 : index
    %c0_148 = arith.constant 0 : index
    %c0_149 = arith.constant 0 : index
    %c0_150 = arith.constant 0 : index
    %213 = vector.load %arg8[%c1_147, %c0_148, %c0_149, %c0_150] : memref<2x2x32x16xbf16, #tpu.memory_space<vmem>>, vector<1x1x32x16xbf16>
    %214 = vector.shape_cast %213 : vector<1x1x32x16xbf16> to vector<32x16xbf16>
    %cst_151 = arith.constant dense<0.000000e+00> : vector<28x16xf32>
    %215 = tpu.matmul %204, %214, %cst_151 {dimension_numbers = #tpu.dot_dimension_numbers<[1], [0], [0], [1], [0, 0, 1, 1], [], []>} : vector<28x32xbf16>, vector<32x16xbf16>, vector<28x16xf32> -> vector<28x16xf32>
    %c1_152 = arith.constant 1 : index
    %c0_153 = arith.constant 0 : index
    %c0_154 = arith.constant 0 : index
    %c0_155 = arith.constant 0 : index
    %216 = vector.load %arg11[%c1_152, %c0_153, %c0_154, %c0_155] : memref<2x2x1x16xf32, #tpu.memory_space<vmem>>, vector<1x1x1x16xf32>
    %217 = vector.shape_cast %216 : vector<1x1x1x16xf32> to vector<1x16xf32>
    %218 = vector.broadcast %217 : vector<1x16xf32> to vector<28x16xf32>
    %219 = arith.addf %215, %218 : vector<28x16xf32>
    %c1_156 = arith.constant 1 : index
    %c0_157 = arith.constant 0 : index
    %c0_158 = arith.constant 0 : index
    %c0_159 = arith.constant 0 : index
    %220 = vector.load %arg9[%c1_156, %c0_157, %c0_158, %c0_159] : memref<2x2x32x16xbf16, #tpu.memory_space<vmem>>, vector<1x1x32x16xbf16>
    %221 = vector.shape_cast %220 : vector<1x1x32x16xbf16> to vector<32x16xbf16>
    %cst_160 = arith.constant dense<0.000000e+00> : vector<28x16xf32>
    %222 = tpu.matmul %204, %221, %cst_160 {dimension_numbers = #tpu.dot_dimension_numbers<[1], [0], [0], [1], [0, 0, 1, 1], [], []>} : vector<28x32xbf16>, vector<32x16xbf16>, vector<28x16xf32> -> vector<28x16xf32>
    %c1_161 = arith.constant 1 : index
    %c0_162 = arith.constant 0 : index
    %c0_163 = arith.constant 0 : index
    %c0_164 = arith.constant 0 : index
    %223 = vector.load %arg12[%c1_161, %c0_162, %c0_163, %c0_164] : memref<2x2x1x16xf32, #tpu.memory_space<vmem>>, vector<1x1x1x16xf32>
    %224 = vector.shape_cast %223 : vector<1x1x1x16xf32> to vector<1x16xf32>
    %225 = vector.broadcast %224 : vector<1x16xf32> to vector<28x16xf32>
    %226 = arith.addf %222, %225 : vector<28x16xf32>
    %cst_165 = arith.constant 2.500000e-01 : f32
    %227 = vector.broadcast %cst_165 : f32 to vector<28x16xf32>
    %228 = arith.mulf %212, %227 : vector<28x16xf32>
    %229 = arith.truncf %228 : vector<28x16xf32> to vector<28x16xbf16>
    %230 = arith.truncf %219 : vector<28x16xf32> to vector<28x16xbf16>
    "tpu.trace_start"() <{level = 10 : i32, message = "qe,ke->qk"}> : () -> ()
    %cst_166 = arith.constant dense<0.000000e+00> : vector<28x28xf32>
    %231 = tpu.matmul %229, %230, %cst_166 {dimension_numbers = #tpu.dot_dimension_numbers<[1], [1], [0], [0], [0, 0, 1, 0], [], []>} : vector<28x16xbf16>, vector<28x16xbf16>, vector<28x28xf32> -> vector<28x28xf32>
    "tpu.trace_stop"() : () -> ()
    %232 = arith.addf %231, %11 : vector<28x28xf32>
    %cst_167 = arith.constant dense<0xFF800000> : vector<28xf32>
    %233 = vector.multi_reduction <maximumf>, %232, %cst_167 [1] : vector<28x28xf32> to vector<28xf32>
    %234 = vector.shape_cast %233 : vector<28xf32> to vector<28x1xf32>
    %235 = vector.broadcast %234 : vector<28x1xf32> to vector<28x28xf32>
    %236 = arith.subf %232, %235 : vector<28x28xf32>
    %237 = math.exp %236 : vector<28x28xf32>
    %cst_168 = arith.constant dense<0.000000e+00> : vector<28xf32>
    %238 = vector.multi_reduction <add>, %237, %cst_168 [1] : vector<28x28xf32> to vector<28xf32>
    %239 = vector.shape_cast %238 : vector<28xf32> to vector<28x1xf32>
    %240 = tpu.reciprocal %239 {approx = true} : vector<28x1xf32> -> vector<28x1xf32>
    %241 = vector.broadcast %240 : vector<28x1xf32> to vector<28x28xf32>
    %242 = arith.mulf %237, %241 : vector<28x28xf32>
    %243 = arith.truncf %242 : vector<28x28xf32> to vector<28x28xbf16>
    %244 = arith.truncf %226 : vector<28x16xf32> to vector<28x16xbf16>
    %cst_169 = arith.constant dense<0.000000e+00> : vector<28x16xf32>
    %245 = tpu.matmul %243, %244, %cst_169 {dimension_numbers = #tpu.dot_dimension_numbers<[1], [0], [0], [1], [0, 0, 1, 1], [], []>} : vector<28x28xbf16>, vector<28x16xbf16>, vector<28x16xf32> -> vector<28x16xf32>
    %246 = arith.truncf %245 : vector<28x16xf32> to vector<28x16xbf16>
    %c1_170 = arith.constant 1 : index
    %c0_171 = arith.constant 0 : index
    %c0_172 = arith.constant 0 : index
    %c0_173 = arith.constant 0 : index
    %247 = vector.load %arg13[%c1_170, %c0_171, %c0_172, %c0_173] : memref<2x2x16x32xbf16, #tpu.memory_space<vmem>>, vector<1x1x16x32xbf16>
    %248 = vector.shape_cast %247 : vector<1x1x16x32xbf16> to vector<16x32xbf16>
    %cst_174 = arith.constant dense<0.000000e+00> : vector<28x32xf32>
    %249 = tpu.matmul %246, %248, %cst_174 {dimension_numbers = #tpu.dot_dimension_numbers<[1], [0], [0], [1], [0, 0, 1, 1], [], []>} : vector<28x16xbf16>, vector<16x32xbf16>, vector<28x32xf32> -> vector<28x32xf32>
    %250 = arith.addf %205, %249 : vector<28x32xf32>
    %c1_175 = arith.constant 1 : index
    %c1_176 = arith.constant 1 : index
    %c0_177 = arith.constant 0 : index
    %c0_178 = arith.constant 0 : index
    %251 = vector.load %arg7[%c1_175, %c1_176, %c0_177, %c0_178] : memref<2x2x32x16xbf16, #tpu.memory_space<vmem>>, vector<1x1x32x16xbf16>
    %252 = vector.shape_cast %251 : vector<1x1x32x16xbf16> to vector<32x16xbf16>
    %cst_179 = arith.constant dense<0.000000e+00> : vector<28x16xf32>
    %253 = tpu.matmul %204, %252, %cst_179 {dimension_numbers = #tpu.dot_dimension_numbers<[1], [0], [0], [1], [0, 0, 1, 1], [], []>} : vector<28x32xbf16>, vector<32x16xbf16>, vector<28x16xf32> -> vector<28x16xf32>
    %c1_180 = arith.constant 1 : index
    %c1_181 = arith.constant 1 : index
    %c0_182 = arith.constant 0 : index
    %c0_183 = arith.constant 0 : index
    %254 = vector.load %arg10[%c1_180, %c1_181, %c0_182, %c0_183] : memref<2x2x1x16xf32, #tpu.memory_space<vmem>>, vector<1x1x1x16xf32>
    %255 = vector.shape_cast %254 : vector<1x1x1x16xf32> to vector<1x16xf32>
    %256 = vector.broadcast %255 : vector<1x16xf32> to vector<28x16xf32>
    %257 = arith.addf %253, %256 : vector<28x16xf32>
    %c1_184 = arith.constant 1 : index
    %c1_185 = arith.constant 1 : index
    %c0_186 = arith.constant 0 : index
    %c0_187 = arith.constant 0 : index
    %258 = vector.load %arg8[%c1_184, %c1_185, %c0_186, %c0_187] : memref<2x2x32x16xbf16, #tpu.memory_space<vmem>>, vector<1x1x32x16xbf16>
    %259 = vector.shape_cast %258 : vector<1x1x32x16xbf16> to vector<32x16xbf16>
    %cst_188 = arith.constant dense<0.000000e+00> : vector<28x16xf32>
    %260 = tpu.matmul %204, %259, %cst_188 {dimension_numbers = #tpu.dot_dimension_numbers<[1], [0], [0], [1], [0, 0, 1, 1], [], []>} : vector<28x32xbf16>, vector<32x16xbf16>, vector<28x16xf32> -> vector<28x16xf32>
    %c1_189 = arith.constant 1 : index
    %c1_190 = arith.constant 1 : index
    %c0_191 = arith.constant 0 : index
    %c0_192 = arith.constant 0 : index
    %261 = vector.load %arg11[%c1_189, %c1_190, %c0_191, %c0_192] : memref<2x2x1x16xf32, #tpu.memory_space<vmem>>, vector<1x1x1x16xf32>
    %262 = vector.shape_cast %261 : vector<1x1x1x16xf32> to vector<1x16xf32>
    %263 = vector.broadcast %262 : vector<1x16xf32> to vector<28x16xf32>
    %264 = arith.addf %260, %263 : vector<28x16xf32>
    %c1_193 = arith.constant 1 : index
    %c1_194 = arith.constant 1 : index
    %c0_195 = arith.constant 0 : index
    %c0_196 = arith.constant 0 : index
    %265 = vector.load %arg9[%c1_193, %c1_194, %c0_195, %c0_196] : memref<2x2x32x16xbf16, #tpu.memory_space<vmem>>, vector<1x1x32x16xbf16>
    %266 = vector.shape_cast %265 : vector<1x1x32x16xbf16> to vector<32x16xbf16>
    %cst_197 = arith.constant dense<0.000000e+00> : vector<28x16xf32>
    %267 = tpu.matmul %204, %266, %cst_197 {dimension_numbers = #tpu.dot_dimension_numbers<[1], [0], [0], [1], [0, 0, 1, 1], [], []>} : vector<28x32xbf16>, vector<32x16xbf16>, vector<28x16xf32> -> vector<28x16xf32>
    %c1_198 = arith.constant 1 : index
    %c1_199 = arith.constant 1 : index
    %c0_200 = arith.constant 0 : index
    %c0_201 = arith.constant 0 : index
    %268 = vector.load %arg12[%c1_198, %c1_199, %c0_200, %c0_201] : memref<2x2x1x16xf32, #tpu.memory_space<vmem>>, vector<1x1x1x16xf32>
    %269 = vector.shape_cast %268 : vector<1x1x1x16xf32> to vector<1x16xf32>
    %270 = vector.broadcast %269 : vector<1x16xf32> to vector<28x16xf32>
    %271 = arith.addf %267, %270 : vector<28x16xf32>
    %cst_202 = arith.constant 2.500000e-01 : f32
    %272 = vector.broadcast %cst_202 : f32 to vector<28x16xf32>
    %273 = arith.mulf %257, %272 : vector<28x16xf32>
    %274 = arith.truncf %273 : vector<28x16xf32> to vector<28x16xbf16>
    %275 = arith.truncf %264 : vector<28x16xf32> to vector<28x16xbf16>
    "tpu.trace_start"() <{level = 10 : i32, message = "qe,ke->qk"}> : () -> ()
    %cst_203 = arith.constant dense<0.000000e+00> : vector<28x28xf32>
    %276 = tpu.matmul %274, %275, %cst_203 {dimension_numbers = #tpu.dot_dimension_numbers<[1], [1], [0], [0], [0, 0, 1, 0], [], []>} : vector<28x16xbf16>, vector<28x16xbf16>, vector<28x28xf32> -> vector<28x28xf32>
    "tpu.trace_stop"() : () -> ()
    %277 = arith.addf %276, %11 : vector<28x28xf32>
    %cst_204 = arith.constant dense<0xFF800000> : vector<28xf32>
    %278 = vector.multi_reduction <maximumf>, %277, %cst_204 [1] : vector<28x28xf32> to vector<28xf32>
    %279 = vector.shape_cast %278 : vector<28xf32> to vector<28x1xf32>
    %280 = vector.broadcast %279 : vector<28x1xf32> to vector<28x28xf32>
    %281 = arith.subf %277, %280 : vector<28x28xf32>
    %282 = math.exp %281 : vector<28x28xf32>
    %cst_205 = arith.constant dense<0.000000e+00> : vector<28xf32>
    %283 = vector.multi_reduction <add>, %282, %cst_205 [1] : vector<28x28xf32> to vector<28xf32>
    %284 = vector.shape_cast %283 : vector<28xf32> to vector<28x1xf32>
    %285 = tpu.reciprocal %284 {approx = true} : vector<28x1xf32> -> vector<28x1xf32>
    %286 = vector.broadcast %285 : vector<28x1xf32> to vector<28x28xf32>
    %287 = arith.mulf %282, %286 : vector<28x28xf32>
    %288 = arith.truncf %287 : vector<28x28xf32> to vector<28x28xbf16>
    %289 = arith.truncf %271 : vector<28x16xf32> to vector<28x16xbf16>
    %cst_206 = arith.constant dense<0.000000e+00> : vector<28x16xf32>
    %290 = tpu.matmul %288, %289, %cst_206 {dimension_numbers = #tpu.dot_dimension_numbers<[1], [0], [0], [1], [0, 0, 1, 1], [], []>} : vector<28x28xbf16>, vector<28x16xbf16>, vector<28x16xf32> -> vector<28x16xf32>
    %291 = arith.truncf %290 : vector<28x16xf32> to vector<28x16xbf16>
    %c1_207 = arith.constant 1 : index
    %c1_208 = arith.constant 1 : index
    %c0_209 = arith.constant 0 : index
    %c0_210 = arith.constant 0 : index
    %292 = vector.load %arg13[%c1_207, %c1_208, %c0_209, %c0_210] : memref<2x2x16x32xbf16, #tpu.memory_space<vmem>>, vector<1x1x16x32xbf16>
    %293 = vector.shape_cast %292 : vector<1x1x16x32xbf16> to vector<16x32xbf16>
    %cst_211 = arith.constant dense<0.000000e+00> : vector<28x32xf32>
    %294 = tpu.matmul %291, %293, %cst_211 {dimension_numbers = #tpu.dot_dimension_numbers<[1], [0], [0], [1], [0, 0, 1, 1], [], []>} : vector<28x16xbf16>, vector<16x32xbf16>, vector<28x32xf32> -> vector<28x32xf32>
    %295 = arith.addf %250, %294 : vector<28x32xf32>
    %c1_212 = arith.constant 1 : index
    %c0_213 = arith.constant 0 : index
    %c0_214 = arith.constant 0 : index
    %296 = vector.load %arg14[%c1_212, %c0_213, %c0_214] : memref<2x1x32xf32, #tpu.memory_space<vmem>>, vector<1x1x32xf32>
    %297 = vector.shape_cast %296 : vector<1x1x32xf32> to vector<1x32xf32>
    %298 = vector.broadcast %297 : vector<1x32xf32> to vector<28x32xf32>
    %299 = arith.addf %295, %298 : vector<28x32xf32>
    %300 = arith.addf %203, %299 : vector<28x32xf32>
    %c1_215 = arith.constant 1 : index
    %c0_216 = arith.constant 0 : index
    %c0_217 = arith.constant 0 : index
    %301 = vector.load %arg15[%c1_215, %c0_216, %c0_217] : memref<2x1x32xf32, #tpu.memory_space<vmem>>, vector<1x1x32xf32>
    %302 = vector.shape_cast %301 : vector<1x1x32xf32> to vector<1x32xf32>
    %c1_218 = arith.constant 1 : index
    %c0_219 = arith.constant 0 : index
    %c0_220 = arith.constant 0 : index
    %303 = vector.load %arg16[%c1_218, %c0_219, %c0_220] : memref<2x1x32xf32, #tpu.memory_space<vmem>>, vector<1x1x32xf32>
    %304 = vector.shape_cast %303 : vector<1x1x32xf32> to vector<1x32xf32>
    %cst_221 = arith.constant dense<0.000000e+00> : vector<28xf32>
    %305 = vector.multi_reduction <add>, %300, %cst_221 [1] : vector<28x32xf32> to vector<28xf32>
    %306 = vector.shape_cast %305 : vector<28xf32> to vector<28x1xf32>
    %cst_222 = arith.constant 3.200000e+01 : f32
    %307 = vector.broadcast %cst_222 : f32 to vector<28x1xf32>
    %308 = arith.divf %306, %307 : vector<28x1xf32>
    %309 = vector.broadcast %308 : vector<28x1xf32> to vector<28x32xf32>
    %310 = arith.subf %300, %309 : vector<28x32xf32>
    %311 = arith.mulf %310, %310 : vector<28x32xf32>
    %cst_223 = arith.constant dense<0.000000e+00> : vector<28xf32>
    %312 = vector.multi_reduction <add>, %311, %cst_223 [1] : vector<28x32xf32> to vector<28xf32>
    %313 = vector.shape_cast %312 : vector<28xf32> to vector<28x1xf32>
    %cst_224 = arith.constant 3.200000e+01 : f32
    %314 = vector.broadcast %cst_224 : f32 to vector<28x1xf32>
    %315 = arith.divf %313, %314 : vector<28x1xf32>
    %cst_225 = arith.constant 9.99999974E-6 : f32
    %316 = vector.broadcast %cst_225 : f32 to vector<28x1xf32>
    %317 = arith.addf %315, %316 : vector<28x1xf32>
    %318 = math.rsqrt %317 : vector<28x1xf32>
    %319 = vector.broadcast %318 : vector<28x1xf32> to vector<28x32xf32>
    %320 = arith.mulf %310, %319 : vector<28x32xf32>
    %321 = vector.broadcast %302 : vector<1x32xf32> to vector<28x32xf32>
    %322 = arith.mulf %320, %321 : vector<28x32xf32>
    %323 = vector.broadcast %304 : vector<1x32xf32> to vector<28x32xf32>
    %324 = arith.addf %322, %323 : vector<28x32xf32>
    %c1_226 = arith.constant 1 : index
    %c0_227 = arith.constant 0 : index
    %c0_228 = arith.constant 0 : index
    %c0_229 = arith.constant 0 : index
    %325 = vector.load %arg19[%c1_226, %c0_227, %c0_228, %c0_229] : memref<2x3x32x128xbf16, #tpu.memory_space<vmem>>, vector<1x3x32x128xbf16>
    %326 = vector.shape_cast %325 : vector<1x3x32x128xbf16> to vector<3x32x128xbf16>
    %c1_230 = arith.constant 1 : index
    %c0_231 = arith.constant 0 : index
    %c0_232 = arith.constant 0 : index
    %327 = vector.load %arg20[%c1_230, %c0_231, %c0_232] : memref<2x1x128xf32, #tpu.memory_space<vmem>>, vector<1x1x128xf32>
    %328 = vector.shape_cast %327 : vector<1x1x128xf32> to vector<1x128xf32>
    %329 = arith.truncf %324 : vector<28x32xf32> to vector<28x32xbf16>
    %cst_233 = arith.constant dense<0.000000e+00> : vector<28x32xf32>
    %330 = tpu.matmul %2, %329, %cst_233 {dimension_numbers = #tpu.dot_dimension_numbers<[1], [0], [0], [1], [0, 0, 1, 1], [], []>} : vector<28x28xbf16>, vector<28x32xbf16>, vector<28x32xf32> -> vector<28x32xf32>
    %331 = arith.truncf %330 : vector<28x32xf32> to vector<28x32xbf16>
    %cst_234 = arith.constant dense<0.000000e+00> : vector<28x32xf32>
    %332 = tpu.matmul %5, %329, %cst_234 {dimension_numbers = #tpu.dot_dimension_numbers<[1], [0], [0], [1], [0, 0, 1, 1], [], []>} : vector<28x28xbf16>, vector<28x32xbf16>, vector<28x32xf32> -> vector<28x32xf32>
    %333 = arith.truncf %332 : vector<28x32xf32> to vector<28x32xbf16>
    %334 = vector.extract_strided_slice %326 {offsets = [0, 0, 0], sizes = [1, 32, 128], strides = [1, 1, 1]} : vector<3x32x128xbf16> to vector<1x32x128xbf16>
    %335 = vector.shape_cast %334 : vector<1x32x128xbf16> to vector<32x128xbf16>
    %cst_235 = arith.constant dense<0.000000e+00> : vector<28x128xf32>
    %336 = tpu.matmul %331, %335, %cst_235 {dimension_numbers = #tpu.dot_dimension_numbers<[1], [0], [0], [1], [0, 0, 1, 1], [], []>} : vector<28x32xbf16>, vector<32x128xbf16>, vector<28x128xf32> -> vector<28x128xf32>
    %337 = vector.extract_strided_slice %326 {offsets = [1, 0, 0], sizes = [1, 32, 128], strides = [1, 1, 1]} : vector<3x32x128xbf16> to vector<1x32x128xbf16>
    %338 = vector.shape_cast %337 : vector<1x32x128xbf16> to vector<32x128xbf16>
    %cst_236 = arith.constant dense<0.000000e+00> : vector<28x128xf32>
    %339 = tpu.matmul %329, %338, %cst_236 {dimension_numbers = #tpu.dot_dimension_numbers<[1], [0], [0], [1], [0, 0, 1, 1], [], []>} : vector<28x32xbf16>, vector<32x128xbf16>, vector<28x128xf32> -> vector<28x128xf32>
    %340 = arith.addf %336, %339 : vector<28x128xf32>
    %341 = vector.extract_strided_slice %326 {offsets = [2, 0, 0], sizes = [1, 32, 128], strides = [1, 1, 1]} : vector<3x32x128xbf16> to vector<1x32x128xbf16>
    %342 = vector.shape_cast %341 : vector<1x32x128xbf16> to vector<32x128xbf16>
    %cst_237 = arith.constant dense<0.000000e+00> : vector<28x128xf32>
    %343 = tpu.matmul %333, %342, %cst_237 {dimension_numbers = #tpu.dot_dimension_numbers<[1], [0], [0], [1], [0, 0, 1, 1], [], []>} : vector<28x32xbf16>, vector<32x128xbf16>, vector<28x128xf32> -> vector<28x128xf32>
    %344 = arith.addf %340, %343 : vector<28x128xf32>
    %345 = vector.broadcast %328 : vector<1x128xf32> to vector<28x128xf32>
    %346 = arith.addf %344, %345 : vector<28x128xf32>
    %cst_238 = arith.constant 0.000000e+00 : f32
    %347 = vector.broadcast %cst_238 : f32 to vector<28x128xf32>
    %348 = arith.maximumf %346, %347 : vector<28x128xf32>
    %c1_239 = arith.constant 1 : index
    %c0_240 = arith.constant 0 : index
    %c0_241 = arith.constant 0 : index
    %c0_242 = arith.constant 0 : index
    %349 = vector.load %arg21[%c1_239, %c0_240, %c0_241, %c0_242] : memref<2x3x128x32xbf16, #tpu.memory_space<vmem>>, vector<1x3x128x32xbf16>
    %350 = vector.shape_cast %349 : vector<1x3x128x32xbf16> to vector<3x128x32xbf16>
    %c1_243 = arith.constant 1 : index
    %c0_244 = arith.constant 0 : index
    %c0_245 = arith.constant 0 : index
    %351 = vector.load %arg22[%c1_243, %c0_244, %c0_245] : memref<2x1x32xf32, #tpu.memory_space<vmem>>, vector<1x1x32xf32>
    %352 = vector.shape_cast %351 : vector<1x1x32xf32> to vector<1x32xf32>
    %353 = arith.truncf %348 : vector<28x128xf32> to vector<28x128xbf16>
    %cst_246 = arith.constant dense<0.000000e+00> : vector<28x128xf32>
    %354 = tpu.matmul %2, %353, %cst_246 {dimension_numbers = #tpu.dot_dimension_numbers<[1], [0], [0], [1], [0, 0, 1, 1], [], []>} : vector<28x28xbf16>, vector<28x128xbf16>, vector<28x128xf32> -> vector<28x128xf32>
    %355 = arith.truncf %354 : vector<28x128xf32> to vector<28x128xbf16>
    %cst_247 = arith.constant dense<0.000000e+00> : vector<28x128xf32>
    %356 = tpu.matmul %5, %353, %cst_247 {dimension_numbers = #tpu.dot_dimension_numbers<[1], [0], [0], [1], [0, 0, 1, 1], [], []>} : vector<28x28xbf16>, vector<28x128xbf16>, vector<28x128xf32> -> vector<28x128xf32>
    %357 = arith.truncf %356 : vector<28x128xf32> to vector<28x128xbf16>
    %358 = vector.extract_strided_slice %350 {offsets = [0, 0, 0], sizes = [1, 128, 32], strides = [1, 1, 1]} : vector<3x128x32xbf16> to vector<1x128x32xbf16>
    %359 = vector.shape_cast %358 : vector<1x128x32xbf16> to vector<128x32xbf16>
    %cst_248 = arith.constant dense<0.000000e+00> : vector<28x32xf32>
    %360 = tpu.matmul %355, %359, %cst_248 {dimension_numbers = #tpu.dot_dimension_numbers<[1], [0], [0], [1], [0, 0, 1, 1], [], []>} : vector<28x128xbf16>, vector<128x32xbf16>, vector<28x32xf32> -> vector<28x32xf32>
    %361 = vector.extract_strided_slice %350 {offsets = [1, 0, 0], sizes = [1, 128, 32], strides = [1, 1, 1]} : vector<3x128x32xbf16> to vector<1x128x32xbf16>
    %362 = vector.shape_cast %361 : vector<1x128x32xbf16> to vector<128x32xbf16>
    %cst_249 = arith.constant dense<0.000000e+00> : vector<28x32xf32>
    %363 = tpu.matmul %353, %362, %cst_249 {dimension_numbers = #tpu.dot_dimension_numbers<[1], [0], [0], [1], [0, 0, 1, 1], [], []>} : vector<28x128xbf16>, vector<128x32xbf16>, vector<28x32xf32> -> vector<28x32xf32>
    %364 = arith.addf %360, %363 : vector<28x32xf32>
    %365 = vector.extract_strided_slice %350 {offsets = [2, 0, 0], sizes = [1, 128, 32], strides = [1, 1, 1]} : vector<3x128x32xbf16> to vector<1x128x32xbf16>
    %366 = vector.shape_cast %365 : vector<1x128x32xbf16> to vector<128x32xbf16>
    %cst_250 = arith.constant dense<0.000000e+00> : vector<28x32xf32>
    %367 = tpu.matmul %357, %366, %cst_250 {dimension_numbers = #tpu.dot_dimension_numbers<[1], [0], [0], [1], [0, 0, 1, 1], [], []>} : vector<28x128xbf16>, vector<128x32xbf16>, vector<28x32xf32> -> vector<28x32xf32>
    %368 = arith.addf %364, %367 : vector<28x32xf32>
    %369 = vector.broadcast %352 : vector<1x32xf32> to vector<28x32xf32>
    %370 = arith.addf %368, %369 : vector<28x32xf32>
    %371 = arith.addf %324, %370 : vector<28x32xf32>
    %c1_251 = arith.constant 1 : index
    %c0_252 = arith.constant 0 : index
    %c0_253 = arith.constant 0 : index
    %372 = vector.load %arg17[%c1_251, %c0_252, %c0_253] : memref<2x1x32xf32, #tpu.memory_space<vmem>>, vector<1x1x32xf32>
    %373 = vector.shape_cast %372 : vector<1x1x32xf32> to vector<1x32xf32>
    %c1_254 = arith.constant 1 : index
    %c0_255 = arith.constant 0 : index
    %c0_256 = arith.constant 0 : index
    %374 = vector.load %arg18[%c1_254, %c0_255, %c0_256] : memref<2x1x32xf32, #tpu.memory_space<vmem>>, vector<1x1x32xf32>
    %375 = vector.shape_cast %374 : vector<1x1x32xf32> to vector<1x32xf32>
    %cst_257 = arith.constant dense<0.000000e+00> : vector<28xf32>
    %376 = vector.multi_reduction <add>, %371, %cst_257 [1] : vector<28x32xf32> to vector<28xf32>
    %377 = vector.shape_cast %376 : vector<28xf32> to vector<28x1xf32>
    %cst_258 = arith.constant 3.200000e+01 : f32
    %378 = vector.broadcast %cst_258 : f32 to vector<28x1xf32>
    %379 = arith.divf %377, %378 : vector<28x1xf32>
    %380 = vector.broadcast %379 : vector<28x1xf32> to vector<28x32xf32>
    %381 = arith.subf %371, %380 : vector<28x32xf32>
    %382 = arith.mulf %381, %381 : vector<28x32xf32>
    %cst_259 = arith.constant dense<0.000000e+00> : vector<28xf32>
    %383 = vector.multi_reduction <add>, %382, %cst_259 [1] : vector<28x32xf32> to vector<28xf32>
    %384 = vector.shape_cast %383 : vector<28xf32> to vector<28x1xf32>
    %cst_260 = arith.constant 3.200000e+01 : f32
    %385 = vector.broadcast %cst_260 : f32 to vector<28x1xf32>
    %386 = arith.divf %384, %385 : vector<28x1xf32>
    %cst_261 = arith.constant 9.99999974E-6 : f32
    %387 = vector.broadcast %cst_261 : f32 to vector<28x1xf32>
    %388 = arith.addf %386, %387 : vector<28x1xf32>
    %389 = math.rsqrt %388 : vector<28x1xf32>
    %390 = vector.broadcast %389 : vector<28x1xf32> to vector<28x32xf32>
    %391 = arith.mulf %381, %390 : vector<28x32xf32>
    %392 = vector.broadcast %373 : vector<1x32xf32> to vector<28x32xf32>
    %393 = arith.mulf %391, %392 : vector<28x32xf32>
    %394 = vector.broadcast %375 : vector<1x32xf32> to vector<28x32xf32>
    %395 = arith.addf %393, %394 : vector<28x32xf32>
    %396 = vector.broadcast %6 : vector<28x1xf32> to vector<28x32xf32>
    %397 = arith.mulf %395, %396 : vector<28x32xf32>
    %c0_262 = arith.constant 0 : index
    %c0_263 = arith.constant 0 : index
    %398 = vector.load %arg23[%c0_262, %c0_263] : memref<1x32xf32, #tpu.memory_space<vmem>>, vector<1x32xf32>
    %c0_264 = arith.constant 0 : index
    %c0_265 = arith.constant 0 : index
    %399 = vector.load %arg24[%c0_264, %c0_265] : memref<1x32xf32, #tpu.memory_space<vmem>>, vector<1x32xf32>
    %cst_266 = arith.constant dense<0.000000e+00> : vector<28xf32>
    %400 = vector.multi_reduction <add>, %397, %cst_266 [1] : vector<28x32xf32> to vector<28xf32>
    %401 = vector.shape_cast %400 : vector<28xf32> to vector<28x1xf32>
    %cst_267 = arith.constant 3.200000e+01 : f32
    %402 = vector.broadcast %cst_267 : f32 to vector<28x1xf32>
    %403 = arith.divf %401, %402 : vector<28x1xf32>
    %404 = vector.broadcast %403 : vector<28x1xf32> to vector<28x32xf32>
    %405 = arith.subf %397, %404 : vector<28x32xf32>
    %406 = arith.mulf %405, %405 : vector<28x32xf32>
    %cst_268 = arith.constant dense<0.000000e+00> : vector<28xf32>
    %407 = vector.multi_reduction <add>, %406, %cst_268 [1] : vector<28x32xf32> to vector<28xf32>
    %408 = vector.shape_cast %407 : vector<28xf32> to vector<28x1xf32>
    %cst_269 = arith.constant 3.200000e+01 : f32
    %409 = vector.broadcast %cst_269 : f32 to vector<28x1xf32>
    %410 = arith.divf %408, %409 : vector<28x1xf32>
    %cst_270 = arith.constant 9.99999974E-6 : f32
    %411 = vector.broadcast %cst_270 : f32 to vector<28x1xf32>
    %412 = arith.addf %410, %411 : vector<28x1xf32>
    %413 = math.rsqrt %412 : vector<28x1xf32>
    %414 = vector.broadcast %413 : vector<28x1xf32> to vector<28x32xf32>
    %415 = arith.mulf %405, %414 : vector<28x32xf32>
    %416 = vector.broadcast %398 : vector<1x32xf32> to vector<28x32xf32>
    %417 = arith.mulf %415, %416 : vector<28x32xf32>
    %418 = vector.broadcast %399 : vector<1x32xf32> to vector<28x32xf32>
    %419 = arith.addf %417, %418 : vector<28x32xf32>
    %420 = vector.broadcast %6 : vector<28x1xf32> to vector<28x32xf32>
    %421 = arith.mulf %419, %420 : vector<28x32xf32>
    %422 = arith.truncf %421 : vector<28x32xf32> to vector<28x32xbf16>
    %c0_271 = arith.constant 0 : index
    %c0_272 = arith.constant 0 : index
    %423 = vector.load %arg25[%c0_271, %c0_272] : memref<32x128xbf16, #tpu.memory_space<vmem>>, vector<32x128xbf16>
    %cst_273 = arith.constant dense<0.000000e+00> : vector<28x128xf32>
    %424 = tpu.matmul %422, %423, %cst_273 {dimension_numbers = #tpu.dot_dimension_numbers<[1], [0], [0], [1], [0, 0, 1, 1], [], []>} : vector<28x32xbf16>, vector<32x128xbf16>, vector<28x128xf32> -> vector<28x128xf32>
    %c0_274 = arith.constant 0 : index
    %c0_275 = arith.constant 0 : index
    %425 = vector.load %arg26[%c0_274, %c0_275] : memref<1x128xf32, #tpu.memory_space<vmem>>, vector<1x128xf32>
    %426 = vector.broadcast %425 : vector<1x128xf32> to vector<28x128xf32>
    %427 = arith.addf %424, %426 : vector<28x128xf32>
    %428 = vector.broadcast %6 : vector<28x1xf32> to vector<28x128xf32>
    %429 = arith.mulf %427, %428 : vector<28x128xf32>
    %c0_276 = arith.constant 0 : index
    %c0_277 = arith.constant 0 : index
    %430 = vector.load %arg27[%c0_276, %c0_277] : memref<28x128xf32, #tpu.memory_space<vmem>>, vector<28x128xf32>
    tpu.vector_store %arg27[%c0_276, %c0_277], %429 {strides = array<i32>} : memref<28x128xf32, #tpu.memory_space<vmem>>, vector<28x128xf32>,
    return
  }
  func.func @transform_0(%arg0: i32) -> (i32, i32) {
    %c0_i32 = arith.constant 0 : i32
    %c0_i32_0 = arith.constant 0 : i32
    return %arg0, %c0_i32 : i32, i32
  }
  func.func @transform_1(%arg0: i32) -> (i32, i32) {
    %c0_i32 = arith.constant 0 : i32
    %c0_i32_0 = arith.constant 0 : i32
    return %arg0, %c0_i32 : i32, i32
  }
  func.func @transform_2(%arg0: i32) -> (i32, i32, i32) {
    %c0_i32 = arith.constant 0 : i32
    %c0_i32_0 = arith.constant 0 : i32
    %c0_i32_1 = arith.constant 0 : i32
    return %arg0, %c0_i32, %c0_i32_0 : i32, i32, i32
  }
  func.func @transform_3(%arg0: i32) -> (i32, i32, i32) {
    %c0_i32 = arith.constant 0 : i32
    %c0_i32_0 = arith.constant 0 : i32
    %c0_i32_1 = arith.constant 0 : i32
    return %arg0, %c0_i32, %c0_i32_0 : i32, i32, i32
  }
  func.func @transform_4(%arg0: i32) -> (i32, i32, i32) {
    %c0_i32 = arith.constant 0 : i32
    %c0_i32_0 = arith.constant 0 : i32
    %c0_i32_1 = arith.constant 0 : i32
    return %arg0, %c0_i32, %c0_i32_0 : i32, i32, i32
  }
  func.func @transform_5(%arg0: i32) -> (i32, i32) {
    %c0_i32 = arith.constant 0 : i32
    %c0_i32_0 = arith.constant 0 : i32
    return %arg0, %c0_i32 : i32, i32
  }
  func.func @transform_6(%arg0: i32) -> (i32, i32, i32, i32) {
    %c0_i32 = arith.constant 0 : i32
    %c0_i32_0 = arith.constant 0 : i32
    %c0_i32_1 = arith.constant 0 : i32
    %c0_i32_2 = arith.constant 0 : i32
    %c0_i32_3 = arith.constant 0 : i32
    return %c0_i32, %c0_i32_0, %c0_i32_1, %c0_i32_2 : i32, i32, i32, i32
  }
  func.func @transform_7(%arg0: i32) -> (i32, i32, i32, i32) {
    %c0_i32 = arith.constant 0 : i32
    %c0_i32_0 = arith.constant 0 : i32
    %c0_i32_1 = arith.constant 0 : i32
    %c0_i32_2 = arith.constant 0 : i32
    %c0_i32_3 = arith.constant 0 : i32
    return %c0_i32, %c0_i32_0, %c0_i32_1, %c0_i32_2 : i32, i32, i32, i32
  }
  func.func @transform_8(%arg0: i32) -> (i32, i32, i32, i32) {
    %c0_i32 = arith.constant 0 : i32
    %c0_i32_0 = arith.constant 0 : i32
    %c0_i32_1 = arith.constant 0 : i32
    %c0_i32_2 = arith.constant 0 : i32
    %c0_i32_3 = arith.constant 0 : i32
    return %c0_i32, %c0_i32_0, %c0_i32_1, %c0_i32_2 : i32, i32, i32, i32
  }
  func.func @transform_9(%arg0: i32) -> (i32, i32, i32, i32) {
    %c0_i32 = arith.constant 0 : i32
    %c0_i32_0 = arith.constant 0 : i32
    %c0_i32_1 = arith.constant 0 : i32
    %c0_i32_2 = arith.constant 0 : i32
    %c0_i32_3 = arith.constant 0 : i32
    return %c0_i32, %c0_i32_0, %c0_i32_1, %c0_i32_2 : i32, i32, i32, i32
  }
  func.func @transform_10(%arg0: i32) -> (i32, i32, i32, i32) {
    %c0_i32 = arith.constant 0 : i32
    %c0_i32_0 = arith.constant 0 : i32
    %c0_i32_1 = arith.constant 0 : i32
    %c0_i32_2 = arith.constant 0 : i32
    %c0_i32_3 = arith.constant 0 : i32
    return %c0_i32, %c0_i32_0, %c0_i32_1, %c0_i32_2 : i32, i32, i32, i32
  }
  func.func @transform_11(%arg0: i32) -> (i32, i32, i32, i32) {
    %c0_i32 = arith.constant 0 : i32
    %c0_i32_0 = arith.constant 0 : i32
    %c0_i32_1 = arith.constant 0 : i32
    %c0_i32_2 = arith.constant 0 : i32
    %c0_i32_3 = arith.constant 0 : i32
    return %c0_i32, %c0_i32_0, %c0_i32_1, %c0_i32_2 : i32, i32, i32, i32
  }
  func.func @transform_12(%arg0: i32) -> (i32, i32, i32, i32) {
    %c0_i32 = arith.constant 0 : i32
    %c0_i32_0 = arith.constant 0 : i32
    %c0_i32_1 = arith.constant 0 : i32
    %c0_i32_2 = arith.constant 0 : i32
    %c0_i32_3 = arith.constant 0 : i32
    return %c0_i32, %c0_i32_0, %c0_i32_1, %c0_i32_2 : i32, i32, i32, i32
  }
  func.func @transform_13(%arg0: i32) -> (i32, i32, i32) {
    %c0_i32 = arith.constant 0 : i32
    %c0_i32_0 = arith.constant 0 : i32
    %c0_i32_1 = arith.constant 0 : i32
    %c0_i32_2 = arith.constant 0 : i32
    return %c0_i32, %c0_i32_0, %c0_i32_1 : i32, i32, i32
  }
  func.func @transform_14(%arg0: i32) -> (i32, i32, i32) {
    %c0_i32 = arith.constant 0 : i32
    %c0_i32_0 = arith.constant 0 : i32
    %c0_i32_1 = arith.constant 0 : i32
    %c0_i32_2 = arith.constant 0 : i32
    return %c0_i32, %c0_i32_0, %c0_i32_1 : i32, i32, i32
  }
  func.func @transform_15(%arg0: i32) -> (i32, i32, i32) {
    %c0_i32 = arith.constant 0 : i32
    %c0_i32_0 = arith.constant 0 : i32
    %c0_i32_1 = arith.constant 0 : i32
    %c0_i32_2 = arith.constant 0 : i32
    return %c0_i32, %c0_i32_0, %c0_i32_1 : i32, i32, i32
  }
  func.func @transform_16(%arg0: i32) -> (i32, i32, i32) {
    %c0_i32 = arith.constant 0 : i32
    %c0_i32_0 = arith.constant 0 : i32
    %c0_i32_1 = arith.constant 0 : i32
    %c0_i32_2 = arith.constant 0 : i32
    return %c0_i32, %c0_i32_0, %c0_i32_1 : i32, i32, i32
  }
  func.func @transform_17(%arg0: i32) -> (i32, i32, i32) {
    %c0_i32 = arith.constant 0 : i32
    %c0_i32_0 = arith.constant 0 : i32
    %c0_i32_1 = arith.constant 0 : i32
    %c0_i32_2 = arith.constant 0 : i32
    return %c0_i32, %c0_i32_0, %c0_i32_1 : i32, i32, i32
  }
  func.func @transform_18(%arg0: i32) -> (i32, i32, i32, i32) {
    %c0_i32 = arith.constant 0 : i32
    %c0_i32_0 = arith.constant 0 : i32
    %c0_i32_1 = arith.constant 0 : i32
    %c0_i32_2 = arith.constant 0 : i32
    %c0_i32_3 = arith.constant 0 : i32
    return %c0_i32, %c0_i32_0, %c0_i32_1, %c0_i32_2 : i32, i32, i32, i32
  }
  func.func @transform_19(%arg0: i32) -> (i32, i32, i32) {
    %c0_i32 = arith.constant 0 : i32
    %c0_i32_0 = arith.constant 0 : i32
    %c0_i32_1 = arith.constant 0 : i32
    %c0_i32_2 = arith.constant 0 : i32
    return %c0_i32, %c0_i32_0, %c0_i32_1 : i32, i32, i32
  }
  func.func @transform_20(%arg0: i32) -> (i32, i32, i32, i32) {
    %c0_i32 = arith.constant 0 : i32
    %c0_i32_0 = arith.constant 0 : i32
    %c0_i32_1 = arith.constant 0 : i32
    %c0_i32_2 = arith.constant 0 : i32
    %c0_i32_3 = arith.constant 0 : i32
    return %c0_i32, %c0_i32_0, %c0_i32_1, %c0_i32_2 : i32, i32, i32, i32
  }
  func.func @transform_21(%arg0: i32) -> (i32, i32, i32) {
    %c0_i32 = arith.constant 0 : i32
    %c0_i32_0 = arith.constant 0 : i32
    %c0_i32_1 = arith.constant 0 : i32
    %c0_i32_2 = arith.constant 0 : i32
    return %c0_i32, %c0_i32_0, %c0_i32_1 : i32, i32, i32
  }
  func.func @transform_22(%arg0: i32) -> (i32, i32) {
    %c0_i32 = arith.constant 0 : i32
    %c0_i32_0 = arith.constant 0 : i32
    %c0_i32_1 = arith.constant 0 : i32
    return %c0_i32, %c0_i32_0 : i32, i32
  }
  func.func @transform_23(%arg0: i32) -> (i32, i32) {
    %c0_i32 = arith.constant 0 : i32
    %c0_i32_0 = arith.constant 0 : i32
    %c0_i32_1 = arith.constant 0 : i32
    return %c0_i32, %c0_i32_0 : i32, i32
  }
  func.func @transform_24(%arg0: i32) -> (i32, i32) {
    %c0_i32 = arith.constant 0 : i32
    %c0_i32_0 = arith.constant 0 : i32
    %c0_i32_1 = arith.constant 0 : i32
    return %c0_i32, %c0_i32_0 : i32, i32
  }
  func.func @transform_25(%arg0: i32) -> (i32, i32) {
    %c0_i32 = arith.constant 0 : i32
    %c0_i32_0 = arith.constant 0 : i32
    %c0_i32_1 = arith.constant 0 : i32
    return %c0_i32, %c0_i32_0 : i32, i32
  }
  func.func @transform_26(%arg0: i32) -> (i32, i32) {
    %c0_i32 = arith.constant 0 : i32
    %c0_i32_0 = arith.constant 0 : i32
    return %arg0, %c0_i32 : i32, i32
  }
}

</mosaic_0001>

<llo_original>
// kernel: multi_speaker_fastspeech.2
$region0: #{multi_speaker_fastspeech.2}
  #allocation0 [shape = 'u32[]', space=smem, size = 0x4, offset = 0x4, fixed_abs, tag = 'smem constant byte address 0x4 - core index']
  #allocation1 [shape = 'u32[72,128]{1,0:T(1,128)}', space=vmem, size = 0x9000, scoped, tag = 'internal scratch']
  #allocation2 [shape = 'f32[1,1]{1,0:T(1,128)S(1)}', space=vmem, size = 0x200, scoped, tag = 'scoped memory for multi_speaker_fastspeech.2']
  %s0 = inlined_call_operand.smem [shape: u32[36], index: -1, kind: input, shape index: {}]
  %s1 = sld [smem:[%s0]]
  %s2 = scalar_lea.smem %s0, 1
  %s3 = sld [smem:[%s2]]
  %s4 = scalar_lea.smem %s0, 2
  %s5 = sld [smem:[%s4]]
  %s6 = scalar_lea.smem %s0, 3
  %s7 = sld [smem:[%s6]]
  %s8 = scalar_lea.smem %s0, 4
  %s9 = sld [smem:[%s8]]
  %s10 = scalar_lea.smem %s0, 5
  %s11 = sld [smem:[%s10]]
  %s12 = scalar_lea.smem %s0, 6
  %s13 = sld [smem:[%s12]]
  %s14 = scalar_lea.smem %s0, 7
  %s15 = sld [smem:[%s14]]
  %s16 = scalar_lea.smem %s0, 8
  %s17 = sld [smem:[%s16]]
  %s18 = scalar_lea.smem %s0, 9
  %s19 = sld [smem:[%s18]]
  %s20 = scalar_lea.smem %s0, 10
  %s21 = sld [smem:[%s20]]
  %s22 = scalar_lea.smem %s0, 11
  %s23 = sld [smem:[%s22]]
  %s24 = scalar_lea.smem %s0, 12
  %s25 = sld [smem:[%s24]]
  %s26 = scalar_lea.smem %s0, 13
  %s27 = sld [smem:[%s26]]
  %s28 = scalar_lea.smem %s0, 14
  %s29 = sld [smem:[%s28]]
  %s30 = scalar_lea.smem %s0, 15
  %s31 = sld [smem:[%s30]]
  %s32 = scalar_lea.smem %s0, 16
  %s33 = sld [smem:[%s32]]
  %s34 = scalar_lea.smem %s0, 17
  %s35 = sld [smem:[%s34]]
  %s36 = scalar_lea.smem %s0, 18
  %s37 = sld [smem:[%s36]]
  %s38 = scalar_lea.smem %s0, 19
  %s39 = sld [smem:[%s38]]
  %s40 = scalar_lea.smem %s0, 20
  %s41 = sld [smem:[%s40]]
  %s42 = scalar_lea.smem %s0, 21
  %s43 = sld [smem:[%s42]]
  %s44 = scalar_lea.smem %s0, 22
  %s45 = sld [smem:[%s44]]
  %s46 = scalar_lea.smem %s0, 23
  %s47 = sld [smem:[%s46]]
  %s48 = scalar_lea.smem %s0, 24
  %s49 = sld [smem:[%s48]]
  %s50 = scalar_lea.smem %s0, 25
  %s51 = sld [smem:[%s50]]
  %s52 = scalar_lea.smem %s0, 26
  %s53 = sld [smem:[%s52]]
  %s54 = scalar_lea.smem %s0, 27
  %s55 = sld [smem:[%s54]]
  %s56 = scalar_lea.smem %s0, 28
  %s57 = sld [smem:[%s56]]
  %s58 = scalar_lea.smem %s0, 29
  %s59 = sld [smem:[%s58]]
  %s60 = scalar_lea.smem %s0, 30
  %s61 = sld [smem:[%s60]]
  %s62 = scalar_lea.smem %s0, 31
  %s63 = sld [smem:[%s62]]
  %s64 = scalar_lea.smem %s0, 32
  %s65 = sld [smem:[%s64]]
  %s66 = scalar_lea.smem %s0, 33
  %s67 = sld [smem:[%s66]]
  %s68 = scalar_lea.smem %s0, 34
  %s69 = sld [smem:[%s68]]
  %s70 = scalar_lea.smem %s0, 35
  %s71 = sld [smem:[%s70]]
  %72 = xla_tuple %s69, %s71
  %s73 = sld [smem:[#allocation0]]
  $region154: #{multi_speaker_fastspeech.2} parent=0
    _
  %s75 = ssub.s32 1, %s73
  %s76 = scalar_select 0, %s75, %s73
  %v77 = vstv %s67
  %78 = vst [vmem:[#allocation2] sm:$0x1] %v77
  // Predicated region
  $region2: #{multi_speaker_fastspeech.2} parent=0 // pred_check
    _
  $region3: #{multi_speaker_fastspeech.2} parent=0 // pred_check_branch
    %80 = sbr.rel (0) target = $region5
  $region4: #{multi_speaker_fastspeech.2} parent=0 // pred_region
    _
  $region5: #{multi_speaker_fastspeech.2} parent=0 // pred_fallthru
    _
  // Predicated region
  $region6: #{multi_speaker_fastspeech.2} parent=0 // pred_check
    _
  $region7: #{multi_speaker_fastspeech.2} parent=0 // pred_check_branch
    %82 = sbr.rel (0) target = $region9
  $region8: #{multi_speaker_fastspeech.2} parent=0 // pred_region
    _
  $region9: #{multi_speaker_fastspeech.2} parent=0 // pred_fallthru
    _
  // Predicated region
  $region10: #{multi_speaker_fastspeech.2} parent=0 // pred_check
    _
  $region11: #{multi_speaker_fastspeech.2} parent=0 // pred_check_branch
    %84 = sbr.rel (0) target = $region13
  $region12: #{multi_speaker_fastspeech.2} parent=0 // pred_region
    _
  $region13: #{multi_speaker_fastspeech.2} parent=0 // pred_fallthru
    _
  // Predicated region
  $region14: #{multi_speaker_fastspeech.2} parent=0 // pred_check
    _
  $region15: #{multi_speaker_fastspeech.2} parent=0 // pred_check_branch
    %86 = sbr.rel (0) target = $region17
  $region16: #{multi_speaker_fastspeech.2} parent=0 // pred_region
    _
  $region17: #{multi_speaker_fastspeech.2} parent=0 // pred_fallthru
    _
  // Predicated region
  $region18: #{multi_speaker_fastspeech.2} parent=0 // pred_check
    _
  $region19: #{multi_speaker_fastspeech.2} parent=0 // pred_check_branch
    %88 = sbr.rel (0) target = $region21
  $region20: #{multi_speaker_fastspeech.2} parent=0 // pred_region
    _
  $region21: #{multi_speaker_fastspeech.2} parent=0 // pred_fallthru
    _
  // Predicated region
  $region22: #{multi_speaker_fastspeech.2} parent=0 // pred_check
    _
  $region23: #{multi_speaker_fastspeech.2} parent=0 // pred_check_branch
    %90 = sbr.rel (0) target = $region25
  $region24: #{multi_speaker_fastspeech.2} parent=0 // pred_region
    _
  $region25: #{multi_speaker_fastspeech.2} parent=0 // pred_fallthru
    _
  // Predicated region
  $region26: #{multi_speaker_fastspeech.2} parent=0 // pred_check
    _
  $region27: #{multi_speaker_fastspeech.2} parent=0 // pred_check_branch
    %92 = sbr.rel (0) target = $region29
  $region28: #{multi_speaker_fastspeech.2} parent=0 // pred_region
    _
  $region29: #{multi_speaker_fastspeech.2} parent=0 // pred_fallthru
    _
  // Predicated region
  $region30: #{multi_speaker_fastspeech.2} parent=0 // pred_check
    _
  $region31: #{multi_speaker_fastspeech.2} parent=0 // pred_check_branch
    %94 = sbr.rel (0) target = $region33
  $region32: #{multi_speaker_fastspeech.2} parent=0 // pred_region
    _
  $region33: #{multi_speaker_fastspeech.2} parent=0 // pred_fallthru
    _
  // Predicated region
  $region34: #{multi_speaker_fastspeech.2} parent=0 // pred_check
    _
  $region35: #{multi_speaker_fastspeech.2} parent=0 // pred_check_branch
    %96 = sbr.rel (0) target = $region37
  $region36: #{multi_speaker_fastspeech.2} parent=0 // pred_region
    _
  $region37: #{multi_speaker_fastspeech.2} parent=0 // pred_fallthru
    _
  // Predicated region
  $region38: #{multi_speaker_fastspeech.2} parent=0 // pred_check
    _
  $region39: #{multi_speaker_fastspeech.2} parent=0 // pred_check_branch
    %98 = sbr.rel (0) target = $region41
  $region40: #{multi_speaker_fastspeech.2} parent=0 // pred_region
    _
  $region41: #{multi_speaker_fastspeech.2} parent=0 // pred_fallthru
    _
  // Predicated region
  $region42: #{multi_speaker_fastspeech.2} parent=0 // pred_check
    _
  $region43: #{multi_speaker_fastspeech.2} parent=0 // pred_check_branch
    %100 = sbr.rel (0) target = $region45
  $region44: #{multi_speaker_fastspeech.2} parent=0 // pred_region
    _
  $region45: #{multi_speaker_fastspeech.2} parent=0 // pred_fallthru
    _
  // Predicated region
  $region46: #{multi_speaker_fastspeech.2} parent=0 // pred_check
    _
  $region47: #{multi_speaker_fastspeech.2} parent=0 // pred_check_branch
    %102 = sbr.rel (0) target = $region49
  $region48: #{multi_speaker_fastspeech.2} parent=0 // pred_region
    _
  $region49: #{multi_speaker_fastspeech.2} parent=0 // pred_fallthru
    _
  // Predicated region
  $region50: #{multi_speaker_fastspeech.2} parent=0 // pred_check
    _
  $region51: #{multi_speaker_fastspeech.2} parent=0 // pred_check_branch
    %104 = sbr.rel (0) target = $region53
  $region52: #{multi_speaker_fastspeech.2} parent=0 // pred_region
    _
  $region53: #{multi_speaker_fastspeech.2} parent=0 // pred_fallthru
    _
  // Predicated region
  $region54: #{multi_speaker_fastspeech.2} parent=0 // pred_check
    _
  $region55: #{multi_speaker_fastspeech.2} parent=0 // pred_check_branch
    %106 = sbr.rel (0) target = $region57
  $region56: #{multi_speaker_fastspeech.2} parent=0 // pred_region
    _
  $region57: #{multi_speaker_fastspeech.2} parent=0 // pred_fallthru
    _
  // Predicated region
  $region58: #{multi_speaker_fastspeech.2} parent=0 // pred_check
    _
  $region59: #{multi_speaker_fastspeech.2} parent=0 // pred_check_branch
    %108 = sbr.rel (0) target = $region61
  $region60: #{multi_speaker_fastspeech.2} parent=0 // pred_region
    _
  $region61: #{multi_speaker_fastspeech.2} parent=0 // pred_fallthru
    _
  // Predicated region
  $region62: #{multi_speaker_fastspeech.2} parent=0 // pred_check
    _
  $region63: #{multi_speaker_fastspeech.2} parent=0 // pred_check_branch
    %110 = sbr.rel (0) target = $region65
  $region64: #{multi_speaker_fastspeech.2} parent=0 // pred_region
    _
  $region65: #{multi_speaker_fastspeech.2} parent=0 // pred_fallthru
    _
  // Predicated region
  $region66: #{multi_speaker_fastspeech.2} parent=0 // pred_check
    _
  $region67: #{multi_speaker_fastspeech.2} parent=0 // pred_check_branch
    %112 = sbr.rel (0) target = $region69
  $region68: #{multi_speaker_fastspeech.2} parent=0 // pred_region
    _
  $region69: #{multi_speaker_fastspeech.2} parent=0 // pred_fallthru
    _
  // Predicated region
  $region70: #{multi_speaker_fastspeech.2} parent=0 // pred_check
    _
  $region71: #{multi_speaker_fastspeech.2} parent=0 // pred_check_branch
    %114 = sbr.rel (0) target = $region73
  $region72: #{multi_speaker_fastspeech.2} parent=0 // pred_region
    _
  $region73: #{multi_speaker_fastspeech.2} parent=0 // pred_fallthru
    _
  // Predicated region
  $region74: #{multi_speaker_fastspeech.2} parent=0 // pred_check
    _
  $region75: #{multi_speaker_fastspeech.2} parent=0 // pred_check_branch
    %116 = sbr.rel (0) target = $region77
  $region76: #{multi_speaker_fastspeech.2} parent=0 // pred_region
    _
  $region77: #{multi_speaker_fastspeech.2} parent=0 // pred_fallthru
    _
  // Predicated region
  $region78: #{multi_speaker_fastspeech.2} parent=0 // pred_check
    _
  $region79: #{multi_speaker_fastspeech.2} parent=0 // pred_check_branch
    %118 = sbr.rel (0) target = $region81
  $region80: #{multi_speaker_fastspeech.2} parent=0 // pred_region
    _
  $region81: #{multi_speaker_fastspeech.2} parent=0 // pred_fallthru
    _
  // Predicated region
  $region82: #{multi_speaker_fastspeech.2} parent=0 // pred_check
    _
  $region83: #{multi_speaker_fastspeech.2} parent=0 // pred_check_branch
    %120 = sbr.rel (0) target = $region85
  $region84: #{multi_speaker_fastspeech.2} parent=0 // pred_region
    _
  $region85: #{multi_speaker_fastspeech.2} parent=0 // pred_fallthru
    _
  // Predicated region
  $region86: #{multi_speaker_fastspeech.2} parent=0 // pred_check
    _
  $region87: #{multi_speaker_fastspeech.2} parent=0 // pred_check_branch
    %122 = sbr.rel (0) target = $region89
  $region88: #{multi_speaker_fastspeech.2} parent=0 // pred_region
    _
  $region89: #{multi_speaker_fastspeech.2} parent=0 // pred_fallthru
    _
  // Predicated region
  $region90: #{multi_speaker_fastspeech.2} parent=0 // pred_check
    _
  $region91: #{multi_speaker_fastspeech.2} parent=0 // pred_check_branch
    %124 = sbr.rel (0) target = $region93
  $region92: #{multi_speaker_fastspeech.2} parent=0 // pred_region
    _
  $region93: #{multi_speaker_fastspeech.2} parent=0 // pred_fallthru
    _
  // Predicated region
  $region94: #{multi_speaker_fastspeech.2} parent=0 // pred_check
    _
  $region95: #{multi_speaker_fastspeech.2} parent=0 // pred_check_branch
    %126 = sbr.rel (0) target = $region97
  $region96: #{multi_speaker_fastspeech.2} parent=0 // pred_region
    _
  $region97: #{multi_speaker_fastspeech.2} parent=0 // pred_fallthru
    _
  // Predicated region
  $region98: #{multi_speaker_fastspeech.2} parent=0 // pred_check
    _
  $region99: #{multi_speaker_fastspeech.2} parent=0 // pred_check_branch
    %128 = sbr.rel (0) target = $region101
  $region100: #{multi_speaker_fastspeech.2} parent=0 // pred_region
    _
  $region101: #{multi_speaker_fastspeech.2} parent=0 // pred_fallthru
    _
  // Predicated region
  $region102: #{multi_speaker_fastspeech.2} parent=0 // pred_check
    _
  $region103: #{multi_speaker_fastspeech.2} parent=0 // pred_check_branch
    %130 = sbr.rel (0) target = $region105
  $region104: #{multi_speaker_fastspeech.2} parent=0 // pred_region
    _
  $region105: #{multi_speaker_fastspeech.2} parent=0 // pred_fallthru
    _
  // Predicated region
  $region106: #{multi_speaker_fastspeech.2} parent=0 // pred_check
    _
  $region107: #{multi_speaker_fastspeech.2} parent=0 // pred_check_branch
    %132 = sbr.rel (0) target = $region109
  $region108: #{multi_speaker_fastspeech.2} parent=0 // pred_region
    _
  $region109: #{multi_speaker_fastspeech.2} parent=0 // pred_fallthru
    _
  // Predicated region
  $region110: #{multi_speaker_fastspeech.2} parent=0 // pred_check
    _
  $region111: #{multi_speaker_fastspeech.2} parent=0 // pred_check_branch
    %134 = sbr.rel (0) target = $region113
  $region112: #{multi_speaker_fastspeech.2} parent=0 // pred_region
    _
  $region113: #{multi_speaker_fastspeech.2} parent=0 // pred_fallthru
    _
  // Predicated region
  $region114: #{multi_speaker_fastspeech.2} parent=0 // pred_check
    _
  $region115: #{multi_speaker_fastspeech.2} parent=0 // pred_check_branch
    %136 = sbr.rel (0) target = $region117
  $region116: #{multi_speaker_fastspeech.2} parent=0 // pred_region
    _
  $region117: #{multi_speaker_fastspeech.2} parent=0 // pred_fallthru
    _
  // Predicated region
  $region118: #{multi_speaker_fastspeech.2} parent=0 // pred_check
    _
  $region119: #{multi_speaker_fastspeech.2} parent=0 // pred_check_branch
    %138 = sbr.rel (0) target = $region121
  $region120: #{multi_speaker_fastspeech.2} parent=0 // pred_region
    _
  $region121: #{multi_speaker_fastspeech.2} parent=0 // pred_fallthru
    _
  // Predicated region
  $region122: #{multi_speaker_fastspeech.2} parent=0 // pred_check
    _
  $region123: #{multi_speaker_fastspeech.2} parent=0 // pred_check_branch
    %140 = sbr.rel (0) target = $region125
  $region124: #{multi_speaker_fastspeech.2} parent=0 // pred_region
    _
  $region125: #{multi_speaker_fastspeech.2} parent=0 // pred_fallthru
    _
  // Predicated region
  $region126: #{multi_speaker_fastspeech.2} parent=0 // pred_check
    _
  $region127: #{multi_speaker_fastspeech.2} parent=0 // pred_check_branch
    %142 = sbr.rel (0) target = $region129
  $region128: #{multi_speaker_fastspeech.2} parent=0 // pred_region
    _
  $region129: #{multi_speaker_fastspeech.2} parent=0 // pred_fallthru
    _
  // Predicated region
  $region130: #{multi_speaker_fastspeech.2} parent=0 // pred_check
    _
  $region131: #{multi_speaker_fastspeech.2} parent=0 // pred_check_branch
    %144 = sbr.rel (0) target = $region133
  $region132: #{multi_speaker_fastspeech.2} parent=0 // pred_region
    _
  $region133: #{multi_speaker_fastspeech.2} parent=0 // pred_fallthru
    _
  // Predicated region
  $region134: #{multi_speaker_fastspeech.2} parent=0 // pred_check
    _
  $region135: #{multi_speaker_fastspeech.2} parent=0 // pred_check_branch
    %146 = sbr.rel (0) target = $region137
  $region136: #{multi_speaker_fastspeech.2} parent=0 // pred_region
    _
  $region137: #{multi_speaker_fastspeech.2} parent=0 // pred_fallthru
    _
  %v148 = vld [vmem:[%s7] sm:$0xff]
  %v149 = vld [vmem:[%s7 + $0x8] sm:$0xff]
  %v150 = vpack.c.bf16 %v149, %v148
  %v151 = vld [vmem:[%s9] sm:$0xff]
  %v152 = vld [vmem:[%s9 + $0x8] sm:$0xff]
  %v153 = vpack.c.bf16 %v152, %v151
  %v154 = vld [vmem:[%s11] sm:$0xff]
  %v155 = vld [vmem:[%s11 + $0x8] sm:$0xff]
  %v156 = vld [vmem:[%s1] sm:$0xff]
  %v157 = vld [vmem:[%s1 + $0x8] sm:$0xff]
  %v158 = vld [vmem:[%s5] sm:$0xff]
  %v159 = vld [vmem:[%s5 + $0x8] sm:$0xff]
  %v160 = vpack.c.bf16 %v157, %v156
  %v161 = vld [vmem:[%s13] sm:$0xf]
  %v162 = vld [vmem:[%s13 + $0x4] sm:$0xf]
  %v163 = vld [vmem:[%s13 + $0x8] sm:$0xf]
  %v164 = vld [vmem:[%s13 + $0xc] sm:$0xf]
  %v165 = vld [vmem:[%s19] sm:$0x1]
  %v167 = vperm.slane %v165, 0
  %v173 = vunpack.c.l.b16 %v161
  %v174 = vunpack.c.l.b16 %v162
  %v175 = vunpack.c.l.b16 %v163
  %v176 = vunpack.c.l.b16 %v164
  %v177 = vpack.c.b16 %v174, %v173
  %v178 = vpack.c.b16 %v176, %v175
  %vm181 = vcmask 261120
  %v183 = vsel %vm181, %v160, 0
  %185 = vmatpush.bf16.msra.mxu0 0
  %186 = vmatpush.bf16.msra.mxu0 0
  %187 = vmatpush.bf16.msra.mxu0 0
  %188 = vmatpush.bf16.msra.mxu0 0
  %189 = vmatpush.bf16.msra.mxu0 0
  %190 = vmatpush.bf16.msra.mxu0 0
  %191 = vmatpush.bf16.msra.mxu0 %v178
  %192 = vmatpush.bf16.msra.mxu0 %v177
  %193 = vmatmul.bf16.gmra.mxu0 %v183
  %v194 = vpop.f32.mrf.mxu0
  %v195 = vadd.f32 %v167, %v194
  %v196 = vpop.f32.mrf.mxu0
  %v197 = vadd.f32 %v167, %v196
  %198 = vdwg.mxu0
  %v199 = vld [vmem:[%s15] sm:$0xf]
  %v200 = vld [vmem:[%s15 + $0x4] sm:$0xf]
  %v201 = vld [vmem:[%s15 + $0x8] sm:$0xf]
  %v202 = vld [vmem:[%s15 + $0xc] sm:$0xf]
  %v203 = vld [vmem:[%s21] sm:$0x1]
  %v205 = vperm.slane %v203, 0
  %v211 = vunpack.c.l.b16 %v199
  %v212 = vunpack.c.l.b16 %v200
  %v213 = vunpack.c.l.b16 %v201
  %v214 = vunpack.c.l.b16 %v202
  %v215 = vpack.c.b16 %v212, %v211
  %v216 = vpack.c.b16 %v214, %v213
  %219 = vmatpush.bf16.msra.mxu0 0
  %220 = vmatpush.bf16.msra.mxu0 0
  %221 = vmatpush.bf16.msra.mxu0 0
  %222 = vmatpush.bf16.msra.mxu0 0
  %223 = vmatpush.bf16.msra.mxu0 0
  %224 = vmatpush.bf16.msra.mxu0 0
  %225 = vmatpush.bf16.msra.mxu0 %v216
  %226 = vmatpush.bf16.msra.mxu0 %v215
  %227 = vmatmul.bf16.gmra.mxu0 %v183
  %v228 = vpop.f32.mrf.mxu0
  %v229 = vadd.f32 %v205, %v228
  %v230 = vpop.f32.mrf.mxu0
  %v231 = vadd.f32 %v205, %v230
  %232 = vdwg.mxu0
  %v233 = vld [vmem:[%s17] sm:$0xf]
  %v234 = vld [vmem:[%s17 + $0x4] sm:$0xf]
  %v235 = vld [vmem:[%s17 + $0x8] sm:$0xf]
  %v236 = vld [vmem:[%s17 + $0xc] sm:$0xf]
  %v237 = vld [vmem:[%s23] sm:$0x1]
  %v239 = vperm.slane %v237, 0
  %v245 = vunpack.c.l.b16 %v233
  %v246 = vunpack.c.l.b16 %v234
  %v247 = vunpack.c.l.b16 %v235
  %v248 = vunpack.c.l.b16 %v236
  %v249 = vpack.c.b16 %v246, %v245
  %v250 = vpack.c.b16 %v248, %v247
  %253 = vmatpush.bf16.msra.mxu0 0
  %254 = vmatpush.bf16.msra.mxu0 0
  %255 = vmatpush.bf16.msra.mxu0 0
  %256 = vmatpush.bf16.msra.mxu0 0
  %257 = vmatpush.bf16.msra.mxu0 0
  %258 = vmatpush.bf16.msra.mxu0 0
  %259 = vmatpush.bf16.msra.mxu0 %v250
  %260 = vmatpush.bf16.msra.mxu0 %v249
  %261 = vmatmul.bf16.gmra.mxu0 %v183
  %v262 = vpop.f32.mrf.mxu0
  %v263 = vadd.f32 %v239, %v262
  %v264 = vpop.f32.mrf.mxu0
  %v265 = vadd.f32 %v239, %v264
  %266 = vdwg.mxu0
  %v267 = vmul.f32 %v195, 0.25
  %v268 = vmul.f32 %v197, 0.25
  %v269 = vpack.c.bf16 %v268, %v267
  %v270 = vpack.c.bf16 %v231, %v229
  %vm271 = vcmask 130048
  %v273 = vsel %vm271, %v269, 0
  %v276 = vsel %vm271, %v270, 0
  %278 = vmatpush.bf16.xpose.msra.mxu0 0
  %279 = vmatpush.bf16.xpose.msra.mxu0 0
  %280 = vmatpush.bf16.xpose.msra.mxu0 0
  %281 = vmatpush.bf16.xpose.msra.mxu0 0
  %282 = vmatpush.bf16.xpose.msra.mxu0 0
  %283 = vmatpush.bf16.xpose.msra.mxu0 0
  %284 = vmatpush.bf16.xpose.msra.mxu0 0
  %285 = vmatpush.bf16.xpose.msra.mxu0 %v276
  %286 = vmatmul.bf16.gmra.mxu0 %v273
  %v287 = vpop.f32.mrf.mxu0
  %v288 = vadd.f32 %v158, %v287
  %v289 = vpop.f32.mrf.mxu0
  %v290 = vadd.f32 %v159, %v289
  %291 = vdwg.mxu0
  %v292 = vsel %vm271, %v288, -inf
  %293 = vmax.xlane.f32.xlu0 %v292
  %v294 = vpop.xlane.xlu0 %293
  %v295 = vsel %vm271, %v290, -inf
  %296 = vmax.xlane.f32.xlu0 %v295
  %v297 = vpop.xlane.xlu0 %296
  %v298 = vsub.f32 %v288, %v294
  %v299 = vsub.f32 %v290, %v297
  %v300 = vmul.f32 %v298, 1.442695
  %v301 = vpow.pop %v300
  %v302 = vmul.f32 %v299, 1.442695
  %v303 = vpow.pop %v302
  %v304 = vsel %vm271, %v301, 0.0
  %305 = vadd.xlane.f32.xlu0 %v304
  %v306 = vpop.xlane.xlu0 %305
  %v307 = vsel %vm271, %v303, 0.0
  %308 = vadd.xlane.f32.xlu0 %v307
  %v309 = vpop.xlane.xlu0 %308
  %v310 = vrcp.pop %v306
  %v311 = vrcp.pop %v309
  %v312 = vmul.f32 %v301, %v310
  %v313 = vmul.f32 %v303, %v311
  %v314 = vpack.c.bf16 %v313, %v312
  %v315 = vpack.c.bf16 %v265, %v263
  %v317 = vsel %vm271, %v314, 0
  %319 = vmatpush.bf16.msra.mxu0 0
  %320 = vmatpush.bf16.msra.mxu0 0
  %321 = vmatpush.bf16.msra.mxu0 0
  %322 = vmatpush.bf16.msra.mxu0 0
  %323 = vmatpush.bf16.msra.mxu0 0
  %324 = vmatpush.bf16.msra.mxu0 0
  %325 = vmatpush.bf16.msra.mxu0 0
  %326 = vmatpush.bf16.msra.mxu0 %v315
  %327 = vmatmul.bf16.gmra.mxu0 %v317
  %v328 = vpop.f32.mrf.mxu0
  %v329 = vadd.f32 0.0, %v328
  %v330 = vpop.f32.mrf.mxu0
  %v331 = vadd.f32 0.0, %v330
  %332 = vdwg.mxu0
  %v333 = vpack.c.bf16 %v331, %v329
  %v334 = vld [vmem:[%s25] sm:$0xf]
  %v335 = vld [vmem:[%s25 + $0x4] sm:$0xf]
  %s336 = scalar_lea.vmem %s13, 16
  %v337 = vld [vmem:[%s336] sm:$0xf]
  %v338 = vld [vmem:[%s336 + $0x4] sm:$0xf]
  %v339 = vld [vmem:[%s336 + $0x8] sm:$0xf]
  %v340 = vld [vmem:[%s336 + $0xc] sm:$0xf]
  %s341 = scalar_lea.vmem %s19, 1
  %v342 = vld [vmem:[%s341] sm:$0x1]
  %v344 = vperm.slane %v342, 0
  %v350 = vunpack.c.l.b16 %v337
  %v351 = vunpack.c.l.b16 %v338
  %v352 = vunpack.c.l.b16 %v339
  %v353 = vunpack.c.l.b16 %v340
  %v354 = vpack.c.b16 %v351, %v350
  %v355 = vpack.c.b16 %v353, %v352
  %358 = vmatpush.bf16.msra.mxu0 0
  %359 = vmatpush.bf16.msra.mxu0 0
  %360 = vmatpush.bf16.msra.mxu0 0
  %361 = vmatpush.bf16.msra.mxu0 0
  %362 = vmatpush.bf16.msra.mxu0 0
  %363 = vmatpush.bf16.msra.mxu0 0
  %364 = vmatpush.bf16.msra.mxu0 %v355
  %365 = vmatpush.bf16.msra.mxu0 %v354
  %366 = vmatmul.bf16.gmra.mxu0 %v183
  %v367 = vpop.f32.mrf.mxu0
  %v368 = vadd.f32 %v344, %v367
  %v369 = vpop.f32.mrf.mxu0
  %v370 = vadd.f32 %v344, %v369
  %371 = vdwg.mxu0
  %s372 = scalar_lea.vmem %s15, 16
  %v373 = vld [vmem:[%s372] sm:$0xf]
  %v374 = vld [vmem:[%s372 + $0x4] sm:$0xf]
  %v375 = vld [vmem:[%s372 + $0x8] sm:$0xf]
  %v376 = vld [vmem:[%s372 + $0xc] sm:$0xf]
  %s377 = scalar_lea.vmem %s21, 1
  %v378 = vld [vmem:[%s377] sm:$0x1]
  %v380 = vperm.slane %v378, 0
  %v386 = vunpack.c.l.b16 %v373
  %v387 = vunpack.c.l.b16 %v374
  %v388 = vunpack.c.l.b16 %v375
  %v389 = vunpack.c.l.b16 %v376
  %v390 = vpack.c.b16 %v387, %v386
  %v391 = vpack.c.b16 %v389, %v388
  %394 = vmatpush.bf16.msra.mxu0 0
  %395 = vmatpush.bf16.msra.mxu0 0
  %396 = vmatpush.bf16.msra.mxu0 0
  %397 = vmatpush.bf16.msra.mxu0 0
  %398 = vmatpush.bf16.msra.mxu0 0
  %399 = vmatpush.bf16.msra.mxu0 0
  %400 = vmatpush.bf16.msra.mxu0 %v391
  %401 = vmatpush.bf16.msra.mxu0 %v390
  %402 = vmatmul.bf16.gmra.mxu0 %v183
  %v403 = vpop.f32.mrf.mxu0
  %v404 = vadd.f32 %v380, %v403
  %v405 = vpop.f32.mrf.mxu0
  %v406 = vadd.f32 %v380, %v405
  %407 = vdwg.mxu0
  %s408 = scalar_lea.vmem %s17, 16
  %v409 = vld [vmem:[%s408] sm:$0xf]
  %v410 = vld [vmem:[%s408 + $0x4] sm:$0xf]
  %v411 = vld [vmem:[%s408 + $0x8] sm:$0xf]
  %v412 = vld [vmem:[%s408 + $0xc] sm:$0xf]
  %s413 = scalar_lea.vmem %s23, 1
  %v414 = vld [vmem:[%s413] sm:$0x1]
  %v416 = vperm.slane %v414, 0
  %v422 = vunpack.c.l.b16 %v409
  %v423 = vunpack.c.l.b16 %v410
  %v424 = vunpack.c.l.b16 %v411
  %v425 = vunpack.c.l.b16 %v412
  %v426 = vpack.c.b16 %v423, %v422
  %v427 = vpack.c.b16 %v425, %v424
  %430 = vmatpush.bf16.msra.mxu0 0
  %431 = vmatpush.bf16.msra.mxu0 0
  %432 = vmatpush.bf16.msra.mxu0 0
  %433 = vmatpush.bf16.msra.mxu0 0
  %434 = vmatpush.bf16.msra.mxu0 0
  %435 = vmatpush.bf16.msra.mxu0 0
  %436 = vmatpush.bf16.msra.mxu0 %v427
  %437 = vmatpush.bf16.msra.mxu0 %v426
  %438 = vmatmul.bf16.gmra.mxu0 %v183
  %v439 = vpop.f32.mrf.mxu0
  %v440 = vadd.f32 %v416, %v439
  %v441 = vpop.f32.mrf.mxu0
  %v442 = vadd.f32 %v416, %v441
  %443 = vdwg.mxu0
  %v444 = vmul.f32 %v368, 0.25
  %v445 = vmul.f32 %v370, 0.25
  %v446 = vpack.c.bf16 %v445, %v444
  %v447 = vpack.c.bf16 %v406, %v404
  %v449 = vsel %vm271, %v446, 0
  %v452 = vsel %vm271, %v447, 0
  %454 = vmatpush.bf16.xpose.msra.mxu0 0
  %455 = vmatpush.bf16.xpose.msra.mxu0 0
  %456 = vmatpush.bf16.xpose.msra.mxu0 0
  %457 = vmatpush.bf16.xpose.msra.mxu0 0
  %458 = vmatpush.bf16.xpose.msra.mxu0 0
  %459 = vmatpush.bf16.xpose.msra.mxu0 0
  %460 = vmatpush.bf16.xpose.msra.mxu0 0
  %461 = vmatpush.bf16.xpose.msra.mxu0 %v452
  %462 = vmatmul.bf16.gmra.mxu0 %v449
  %v463 = vpop.f32.mrf.mxu0
  %v464 = vadd.f32 %v158, %v463
  %v465 = vpop.f32.mrf.mxu0
  %v466 = vadd.f32 %v159, %v465
  %467 = vdwg.mxu0
  %v468 = vsel %vm271, %v464, -inf
  %469 = vmax.xlane.f32.xlu0 %v468
  %v470 = vpop.xlane.xlu0 %469
  %v471 = vsel %vm271, %v466, -inf
  %472 = vmax.xlane.f32.xlu0 %v471
  %v473 = vpop.xlane.xlu0 %472
  %v474 = vsub.f32 %v464, %v470
  %v475 = vsub.f32 %v466, %v473
  %v476 = vmul.f32 %v474, 1.442695
  %v477 = vpow.pop %v476
  %v478 = vmul.f32 %v475, 1.442695
  %v479 = vpow.pop %v478
  %v480 = vsel %vm271, %v477, 0.0
  %481 = vadd.xlane.f32.xlu0 %v480
  %v482 = vpop.xlane.xlu0 %481
  %v483 = vsel %vm271, %v479, 0.0
  %484 = vadd.xlane.f32.xlu0 %v483
  %v485 = vpop.xlane.xlu0 %484
  %v486 = vrcp.pop %v482
  %v487 = vrcp.pop %v485
  %v488 = vmul.f32 %v477, %v486
  %v489 = vmul.f32 %v479, %v487
  %v490 = vpack.c.bf16 %v489, %v488
  %v491 = vpack.c.bf16 %v442, %v440
  %v493 = vsel %vm271, %v490, 0
  %495 = vmatpush.bf16.msra.mxu0 0
  %496 = vmatpush.bf16.msra.mxu0 0
  %497 = vmatpush.bf16.msra.mxu0 0
  %498 = vmatpush.bf16.msra.mxu0 0
  %499 = vmatpush.bf16.msra.mxu0 0
  %500 = vmatpush.bf16.msra.mxu0 0
  %501 = vmatpush.bf16.msra.mxu0 0
  %502 = vmatpush.bf16.msra.mxu0 %v491
  %503 = vmatmul.bf16.gmra.mxu0 %v493
  %v504 = vpop.f32.mrf.mxu0
  %v505 = vadd.f32 0.0, %v504
  %v506 = vpop.f32.mrf.mxu0
  %v507 = vadd.f32 0.0, %v506
  %508 = vdwg.mxu0
  %v509 = vpack.c.bf16 %v507, %v505
  %s510 = scalar_lea.vmem %s25, 8
  %v511 = vld [vmem:[%s510] sm:$0xf]
  %v512 = vld [vmem:[%s510 + $0x4] sm:$0xf]
  %v515 = vunpack.c.l.b16 %v511
  %v516 = vunpack.c.l.b16 %v512
  %v517 = vpack.c.b16 %v516, %v515
  %v520 = vsel %vm271, %v509, 0
  %522 = vmatpush.bf16.msra.mxu0 0
  %523 = vmatpush.bf16.msra.mxu0 0
  %524 = vmatpush.bf16.msra.mxu0 0
  %525 = vmatpush.bf16.msra.mxu0 0
  %526 = vmatpush.bf16.msra.mxu0 0
  %527 = vmatpush.bf16.msra.mxu0 0
  %528 = vmatpush.bf16.msra.mxu0 0
  %529 = vmatpush.bf16.msra.mxu0 %v517
  %530 = vmatmul.bf16.gmra.mxu0 %v520
  %v531 = vpop.f32.mrf.mxu0
  %v532 = vadd.f32 0.0, %v531
  %v533 = vpop.f32.mrf.mxu0
  %v534 = vadd.f32 0.0, %v533
  %535 = vdwg.mxu0
  %v538 = vunpack.c.l.b16 %v334
  %v539 = vunpack.c.l.b16 %v335
  %v540 = vpack.c.b16 %v539, %v538
  %v543 = vsel %vm271, %v333, 0
  %545 = vmatpush.bf16.msra.mxu0 0
  %546 = vmatpush.bf16.msra.mxu0 0
  %547 = vmatpush.bf16.msra.mxu0 0
  %548 = vmatpush.bf16.msra.mxu0 0
  %549 = vmatpush.bf16.msra.mxu0 0
  %550 = vmatpush.bf16.msra.mxu0 0
  %551 = vmatpush.bf16.msra.mxu0 0
  %552 = vmatpush.bf16.msra.mxu0 %v540
  %553 = vmatmul.bf16.gmra.mxu0 %v543
  %v554 = vpop.f32.mrf.mxu0
  %v555 = vadd.f32 %v532, %v554
  %v556 = vpop.f32.mrf.mxu0
  %v557 = vadd.f32 %v534, %v556
  %558 = vdwg.mxu0
  %v559 = vld [vmem:[%s27] sm:$0x1]
  %v561 = vperm.slane %v559, 0
  %v563 = vadd.f32 %v555, %v561
  %v564 = vadd.f32 %v557, %v561
  %v565 = vadd.f32 %v156, %v563
  %v566 = vadd.f32 %v157, %v564
  %v567 = vld [vmem:[%s29] sm:$0x1]
  %v568 = vld [vmem:[%s31] sm:$0x1]
  %v569 = vsel %vm181, %v565, 0.0
  %570 = vadd.xlane.f32.xlu0 %v569
  %v571 = vpop.xlane.xlu0 %570
  %v572 = vsel %vm181, %v566, 0.0
  %573 = vadd.xlane.f32.xlu0 %v572
  %v574 = vpop.xlane.xlu0 %573
  %v575 = vrcp.pop 32.0
  %v576 = vmul.f32 32.0, %v575
  %v577 = vsub.f32 1.0, %v576
  %v578 = vmul.f32 %v575, %v577
  %v579 = vadd.f32 %v575, %v578
  %vm580 = vweird.f32 %v575
  %v581 = vsel %vm580, %v575, %v579
  %v582 = vmul.f32 %v571, %v581
  %v583 = vmul.f32 %v574, %v581
  %v584 = vsub.f32 %v565, %v582
  %v585 = vsub.f32 %v566, %v583
  %v586 = vmul.f32 %v584, %v584
  %v587 = vmul.f32 %v585, %v585
  %v588 = vsel %vm181, %v586, 0.0
  %589 = vadd.xlane.f32.xlu0 %v588
  %v590 = vpop.xlane.xlu0 %589
  %v591 = vsel %vm181, %v587, 0.0
  %592 = vadd.xlane.f32.xlu0 %v591
  %v593 = vpop.xlane.xlu0 %592
  %v594 = vmul.f32 %v590, %v581
  %v595 = vmul.f32 %v593, %v581
  %v596 = vadd.f32 %v594, 1e-05
  %v597 = vadd.f32 %v595, 1e-05
  %v598 = vrsqrt.pop %v596
  %v599 = vmul.f32 %v598, %v596
  %v600 = vmul.f32 %v599, %v598
  %v601 = vmul.f32 0.5, %v600
  %v602 = vsub.f32 1.5, %v601
  %v603 = vmul.f32 %v598, %v602
  %vm604 = vweird.f32 %v596
  %vm605 = vweird.f32 %v598
  %vm606 = vmor %vm604, %vm605
  %v607 = vsel %vm606, %v598, %v603
  %v608 = vrsqrt.pop %v597
  %v609 = vmul.f32 %v608, %v597
  %v610 = vmul.f32 %v609, %v608
  %v611 = vmul.f32 0.5, %v610
  %v612 = vsub.f32 1.5, %v611
  %v613 = vmul.f32 %v608, %v612
  %vm614 = vweird.f32 %v597
  %vm615 = vweird.f32 %v608
  %vm616 = vmor %vm614, %vm615
  %v617 = vsel %vm616, %v608, %v613
  %v618 = vmul.f32 %v584, %v607
  %v619 = vmul.f32 %v585, %v617
  %v621 = vperm.slane %v567, 0
  %v623 = vmul.f32 %v618, %v621
  %v624 = vmul.f32 %v619, %v621
  %v626 = vperm.slane %v568, 0
  %v628 = vadd.f32 %v623, %v626
  %v629 = vadd.f32 %v624, %v626
  %v630 = vld [vmem:[%s37] sm:$0xf]
  %v631 = vld [vmem:[%s37 + $0x4] sm:$0xf]
  %v632 = vld [vmem:[%s37 + $0x8] sm:$0xf]
  %v633 = vld [vmem:[%s37 + $0xc] sm:$0xf]
  %v634 = vld [vmem:[%s37 + $0x10] sm:$0xf]
  %v635 = vld [vmem:[%s37 + $0x14] sm:$0xf]
  %v636 = vld [vmem:[%s37 + $0x18] sm:$0xf]
  %v637 = vld [vmem:[%s37 + $0x1c] sm:$0xf]
  %v638 = vld [vmem:[%s37 + $0x20] sm:$0xf]
  %v639 = vld [vmem:[%s37 + $0x24] sm:$0xf]
  %v640 = vld [vmem:[%s37 + $0x28] sm:$0xf]
  %v641 = vld [vmem:[%s37 + $0x2c] sm:$0xf]
  %v642 = vld [vmem:[%s39] sm:$0x1]
  %v643 = vpack.c.bf16 %v629, %v628
  %v645 = vsel %vm271, %v150, 0
  %647 = vmatpush.bf16.msra.mxu0 0
  %648 = vmatpush.bf16.msra.mxu0 0
  %649 = vmatpush.bf16.msra.mxu0 0
  %650 = vmatpush.bf16.msra.mxu0 0
  %651 = vmatpush.bf16.msra.mxu0 0
  %652 = vmatpush.bf16.msra.mxu0 0
  %653 = vmatpush.bf16.msra.mxu0 0
  %654 = vmatpush.bf16.msra.mxu0 %v643
  %655 = vmatmul.bf16.gmra.mxu0 %v645
  %v656 = vpop.f32.mrf.mxu0
  %v657 = vadd.f32 0.0, %v656
  %v658 = vpop.f32.mrf.mxu0
  %v659 = vadd.f32 0.0, %v658
  %660 = vdwg.mxu0
  %v661 = vpack.c.bf16 %v659, %v657
  %v663 = vsel %vm271, %v153, 0
  %665 = vmatpush.bf16.msra.mxu0 0
  %666 = vmatpush.bf16.msra.mxu0 0
  %667 = vmatpush.bf16.msra.mxu0 0
  %668 = vmatpush.bf16.msra.mxu0 0
  %669 = vmatpush.bf16.msra.mxu0 0
  %670 = vmatpush.bf16.msra.mxu0 0
  %671 = vmatpush.bf16.msra.mxu0 0
  %672 = vmatpush.bf16.msra.mxu0 %v643
  %673 = vmatmul.bf16.gmra.mxu0 %v663
  %v674 = vpop.f32.mrf.mxu0
  %v675 = vadd.f32 0.0, %v674
  %v676 = vpop.f32.mrf.mxu0
  %v677 = vadd.f32 0.0, %v676
  %678 = vdwg.mxu0
  %v679 = vpack.c.bf16 %v677, %v675
  %v684 = vunpack.c.l.b16 %v634
  %v685 = vunpack.c.l.b16 %v635
  %v686 = vunpack.c.l.b16 %v636
  %v687 = vunpack.c.l.b16 %v637
  %v688 = vpack.c.b16 %v685, %v684
  %v689 = vpack.c.b16 %v687, %v686
  %v693 = vsel %vm181, %v643, 0
  %695 = vmatpush.bf16.msra.mxu0 0
  %696 = vmatpush.bf16.msra.mxu0 0
  %697 = vmatpush.bf16.msra.mxu0 0
  %698 = vmatpush.bf16.msra.mxu0 0
  %699 = vmatpush.bf16.msra.mxu0 0
  %700 = vmatpush.bf16.msra.mxu0 0
  %701 = vmatpush.bf16.msra.mxu0 %v689
  %702 = vmatpush.bf16.msra.mxu0 %v688
  %703 = vmatmul.bf16.gmra.mxu0 %v693
  %v704 = vpop.f32.mrf.mxu0
  %v705 = vadd.f32 0.0, %v704
  %v706 = vpop.f32.mrf.mxu0
  %v707 = vadd.f32 0.0, %v706
  %708 = vdwg.mxu0
  %v713 = vunpack.c.l.b16 %v630
  %v714 = vunpack.c.l.b16 %v631
  %v715 = vunpack.c.l.b16 %v632
  %v716 = vunpack.c.l.b16 %v633
  %v717 = vpack.c.b16 %v714, %v713
  %v718 = vpack.c.b16 %v716, %v715
  %v722 = vsel %vm181, %v661, 0
  %724 = vmatpush.bf16.msra.mxu0 0
  %725 = vmatpush.bf16.msra.mxu0 0
  %726 = vmatpush.bf16.msra.mxu0 0
  %727 = vmatpush.bf16.msra.mxu0 0
  %728 = vmatpush.bf16.msra.mxu0 0
  %729 = vmatpush.bf16.msra.mxu0 0
  %730 = vmatpush.bf16.msra.mxu0 %v718
  %731 = vmatpush.bf16.msra.mxu0 %v717
  %732 = vmatmul.bf16.gmra.mxu0 %v722
  %v733 = vpop.f32.mrf.mxu0
  %v734 = vadd.f32 %v705, %v733
  %v735 = vpop.f32.mrf.mxu0
  %v736 = vadd.f32 %v707, %v735
  %737 = vdwg.mxu0
  %v742 = vunpack.c.l.b16 %v638
  %v743 = vunpack.c.l.b16 %v639
  %v744 = vunpack.c.l.b16 %v640
  %v745 = vunpack.c.l.b16 %v641
  %v746 = vpack.c.b16 %v743, %v742
  %v747 = vpack.c.b16 %v745, %v744
  %v751 = vsel %vm181, %v679, 0
  %753 = vmatpush.bf16.msra.mxu0 0
  %754 = vmatpush.bf16.msra.mxu0 0
  %755 = vmatpush.bf16.msra.mxu0 0
  %756 = vmatpush.bf16.msra.mxu0 0
  %757 = vmatpush.bf16.msra.mxu0 0
  %758 = vmatpush.bf16.msra.mxu0 0
  %759 = vmatpush.bf16.msra.mxu0 %v747
  %760 = vmatpush.bf16.msra.mxu0 %v746
  %761 = vmatmul.bf16.gmra.mxu0 %v751
  %v762 = vpop.f32.mrf.mxu0
  %v763 = vadd.f32 0.0, %v762
  %v764 = vpop.f32.mrf.mxu0
  %v765 = vadd.f32 0.0, %v764
  %766 = vdwg.mxu0
  %v767 = vadd.f32 %v734, %v763
  %v768 = vadd.f32 %v736, %v765
  %v770 = vperm.slane %v642, 0
  %v772 = vadd.f32 %v767, %v770
  %v773 = vadd.f32 %v768, %v770
  %v774 = vmax.f32 %v772, 0.0
  %v775 = vmax.f32 %v773, 0.0
  %v776 = vld [vmem:[%s41] sm:$0xf]
  %v777 = vld [vmem:[%s41 + $0x4] sm:$0xf]
  %v778 = vld [vmem:[%s41 + $0x8] sm:$0xf]
  %v779 = vld [vmem:[%s41 + $0xc] sm:$0xf]
  %v780 = vld [vmem:[%s41 + $0x10] sm:$0xf]
  %v781 = vld [vmem:[%s41 + $0x14] sm:$0xf]
  %v782 = vld [vmem:[%s41 + $0x18] sm:$0xf]
  %v783 = vld [vmem:[%s41 + $0x1c] sm:$0xf]
  %v784 = vld [vmem:[%s41 + $0x20] sm:$0xf]
  %v785 = vld [vmem:[%s41 + $0x24] sm:$0xf]
  %v786 = vld [vmem:[%s41 + $0x28] sm:$0xf]
  %v787 = vld [vmem:[%s41 + $0x2c] sm:$0xf]
  %v788 = vld [vmem:[%s41 + $0x30] sm:$0xf]
  %v789 = vld [vmem:[%s41 + $0x34] sm:$0xf]
  %v790 = vld [vmem:[%s41 + $0x38] sm:$0xf]
  %v791 = vld [vmem:[%s41 + $0x3c] sm:$0xf]
  %v792 = vld [vmem:[%s41 + $0x40] sm:$0xf]
  %v793 = vld [vmem:[%s41 + $0x44] sm:$0xf]
  %v794 = vld [vmem:[%s41 + $0x48] sm:$0xf]
  %v795 = vld [vmem:[%s41 + $0x4c] sm:$0xf]
  %v796 = vld [vmem:[%s41 + $0x50] sm:$0xf]
  %v797 = vld [vmem:[%s41 + $0x54] sm:$0xf]
  %v798 = vld [vmem:[%s41 + $0x58] sm:$0xf]
  %v799 = vld [vmem:[%s41 + $0x5c] sm:$0xf]
  %v800 = vld [vmem:[%s41 + $0x60] sm:$0xf]
  %v801 = vld [vmem:[%s41 + $0x64] sm:$0xf]
  %v802 = vld [vmem:[%s41 + $0x68] sm:$0xf]
  %v803 = vld [vmem:[%s41 + $0x6c] sm:$0xf]
  %v804 = vld [vmem:[%s41 + $0x70] sm:$0xf]
  %v805 = vld [vmem:[%s41 + $0x74] sm:$0xf]
  %v806 = vld [vmem:[%s41 + $0x78] sm:$0xf]
  %v807 = vld [vmem:[%s41 + $0x7c] sm:$0xf]
  %v808 = vld [vmem:[%s41 + $0x80] sm:$0xf]
  %v809 = vld [vmem:[%s41 + $0x84] sm:$0xf]
  %v810 = vld [vmem:[%s41 + $0x88] sm:$0xf]
  %v811 = vld [vmem:[%s41 + $0x8c] sm:$0xf]
  %v812 = vld [vmem:[%s41 + $0x90] sm:$0xf]
  %v813 = vld [vmem:[%s41 + $0x94] sm:$0xf]
  %v814 = vld [vmem:[%s41 + $0x98] sm:$0xf]
  %v815 = vld [vmem:[%s41 + $0x9c] sm:$0xf]
  %v816 = vld [vmem:[%s41 + $0xa0] sm:$0xf]
  %v817 = vld [vmem:[%s41 + $0xa4] sm:$0xf]
  %v818 = vld [vmem:[%s41 + $0xa8] sm:$0xf]
  %v819 = vld [vmem:[%s41 + $0xac] sm:$0xf]
  %v820 = vld [vmem:[%s41 + $0xb0] sm:$0xf]
  %v821 = vld [vmem:[%s41 + $0xb4] sm:$0xf]
  %v822 = vld [vmem:[%s41 + $0xb8] sm:$0xf]
  %v823 = vld [vmem:[%s41 + $0xbc] sm:$0xf]
  %v824 = vld [vmem:[%s43] sm:$0x1]
  %v825 = vpack.c.bf16 %v775, %v774
  %826 = vmatpush.bf16.msra.mxu0 0
  %827 = vmatpush.bf16.msra.mxu0 0
  %828 = vmatpush.bf16.msra.mxu0 0
  %829 = vmatpush.bf16.msra.mxu0 0
  %830 = vmatpush.bf16.msra.mxu0 0
  %831 = vmatpush.bf16.msra.mxu0 0
  %832 = vmatpush.bf16.msra.mxu0 0
  %833 = vmatpush.bf16.msra.mxu0 %v825
  %834 = vmatmul.bf16.gmra.mxu0 %v645
  %v835 = vpop.f32.mrf.mxu0
  %v836 = vadd.f32 0.0, %v835
  %v837 = vpop.f32.mrf.mxu0
  %v838 = vadd.f32 0.0, %v837
  %839 = vdwg.mxu0
  %v840 = vpack.c.bf16 %v838, %v836
  %841 = vmatpush.bf16.msra.mxu0 0
  %842 = vmatpush.bf16.msra.mxu0 0
  %843 = vmatpush.bf16.msra.mxu0 0
  %844 = vmatpush.bf16.msra.mxu0 0
  %845 = vmatpush.bf16.msra.mxu0 0
  %846 = vmatpush.bf16.msra.mxu0 0
  %847 = vmatpush.bf16.msra.mxu0 0
  %848 = vmatpush.bf16.msra.mxu0 %v825
  %849 = vmatmul.bf16.gmra.mxu0 %v663
  %v850 = vpop.f32.mrf.mxu0
  %v851 = vadd.f32 0.0, %v850
  %v852 = vpop.f32.mrf.mxu0
  %v853 = vadd.f32 0.0, %v852
  %854 = vdwg.mxu0
  %v855 = vpack.c.bf16 %v853, %v851
  %v872 = vunpack.c.l.b16 %v792
  %v873 = vunpack.c.l.b16 %v793
  %v874 = vunpack.c.l.b16 %v794
  %v875 = vunpack.c.l.b16 %v795
  %v876 = vunpack.c.l.b16 %v796
  %v877 = vunpack.c.l.b16 %v797
  %v878 = vunpack.c.l.b16 %v798
  %v879 = vunpack.c.l.b16 %v799
  %v880 = vunpack.c.l.b16 %v800
  %v881 = vunpack.c.l.b16 %v801
  %v882 = vunpack.c.l.b16 %v802
  %v883 = vunpack.c.l.b16 %v803
  %v884 = vunpack.c.l.b16 %v804
  %v885 = vunpack.c.l.b16 %v805
  %v886 = vunpack.c.l.b16 %v806
  %v887 = vunpack.c.l.b16 %v807
  %v888 = vpack.c.b16 %v873, %v872
  %v889 = vpack.c.b16 %v875, %v874
  %v890 = vpack.c.b16 %v877, %v876
  %v891 = vpack.c.b16 %v879, %v878
  %v892 = vpack.c.b16 %v881, %v880
  %v893 = vpack.c.b16 %v883, %v882
  %v894 = vpack.c.b16 %v885, %v884
  %v895 = vpack.c.b16 %v887, %v886
  %904 = vmatpush.bf16.msra.mxu0 %v895
  %905 = vmatpush.bf16.msra.mxu0 %v894
  %906 = vmatpush.bf16.msra.mxu0 %v893
  %907 = vmatpush.bf16.msra.mxu0 %v892
  %908 = vmatpush.bf16.msra.mxu0 %v891
  %909 = vmatpush.bf16.msra.mxu0 %v890
  %910 = vmatpush.bf16.msra.mxu0 %v889
  %911 = vmatpush.bf16.msra.mxu0 %v888
  %912 = vmatmul.bf16.gmra.mxu0 %v825
  %v913 = vpop.f32.mrf.mxu0
  %v914 = vadd.f32 0.0, %v913
  %v915 = vpop.f32.mrf.mxu0
  %v916 = vadd.f32 0.0, %v915
  %917 = vdwg.mxu0
  %v934 = vunpack.c.l.b16 %v776
  %v935 = vunpack.c.l.b16 %v777
  %v936 = vunpack.c.l.b16 %v778
  %v937 = vunpack.c.l.b16 %v779
  %v938 = vunpack.c.l.b16 %v780
  %v939 = vunpack.c.l.b16 %v781
  %v940 = vunpack.c.l.b16 %v782
  %v941 = vunpack.c.l.b16 %v783
  %v942 = vunpack.c.l.b16 %v784
  %v943 = vunpack.c.l.b16 %v785
  %v944 = vunpack.c.l.b16 %v786
  %v945 = vunpack.c.l.b16 %v787
  %v946 = vunpack.c.l.b16 %v788
  %v947 = vunpack.c.l.b16 %v789
  %v948 = vunpack.c.l.b16 %v790
  %v949 = vunpack.c.l.b16 %v791
  %v950 = vpack.c.b16 %v935, %v934
  %v951 = vpack.c.b16 %v937, %v936
  %v952 = vpack.c.b16 %v939, %v938
  %v953 = vpack.c.b16 %v941, %v940
  %v954 = vpack.c.b16 %v943, %v942
  %v955 = vpack.c.b16 %v945, %v944
  %v956 = vpack.c.b16 %v947, %v946
  %v957 = vpack.c.b16 %v949, %v948
  %966 = vmatpush.bf16.msra.mxu0 %v957
  %967 = vmatpush.bf16.msra.mxu0 %v956
  %968 = vmatpush.bf16.msra.mxu0 %v955
  %969 = vmatpush.bf16.msra.mxu0 %v954
  %970 = vmatpush.bf16.msra.mxu0 %v953
  %971 = vmatpush.bf16.msra.mxu0 %v952
  %972 = vmatpush.bf16.msra.mxu0 %v951
  %973 = vmatpush.bf16.msra.mxu0 %v950
  %974 = vmatmul.bf16.gmra.mxu0 %v840
  %v975 = vpop.f32.mrf.mxu0
  %v976 = vadd.f32 %v914, %v975
  %v977 = vpop.f32.mrf.mxu0
  %v978 = vadd.f32 %v916, %v977
  %979 = vdwg.mxu0
  %v996 = vunpack.c.l.b16 %v808
  %v997 = vunpack.c.l.b16 %v809
  %v998 = vunpack.c.l.b16 %v810
  %v999 = vunpack.c.l.b16 %v811
  %v1000 = vunpack.c.l.b16 %v812
  %v1001 = vunpack.c.l.b16 %v813
  %v1002 = vunpack.c.l.b16 %v814
  %v1003 = vunpack.c.l.b16 %v815
  %v1004 = vunpack.c.l.b16 %v816
  %v1005 = vunpack.c.l.b16 %v817
  %v1006 = vunpack.c.l.b16 %v818
  %v1007 = vunpack.c.l.b16 %v819
  %v1008 = vunpack.c.l.b16 %v820
  %v1009 = vunpack.c.l.b16 %v821
  %v1010 = vunpack.c.l.b16 %v822
  %v1011 = vunpack.c.l.b16 %v823
  %v1012 = vpack.c.b16 %v997, %v996
  %v1013 = vpack.c.b16 %v999, %v998
  %v1014 = vpack.c.b16 %v1001, %v1000
  %v1015 = vpack.c.b16 %v1003, %v1002
  %v1016 = vpack.c.b16 %v1005, %v1004
  %v1017 = vpack.c.b16 %v1007, %v1006
  %v1018 = vpack.c.b16 %v1009, %v1008
  %v1019 = vpack.c.b16 %v1011, %v1010
  %1028 = vmatpush.bf16.msra.mxu0 %v1019
  %1029 = vmatpush.bf16.msra.mxu0 %v1018
  %1030 = vmatpush.bf16.msra.mxu0 %v1017
  %1031 = vmatpush.bf16.msra.mxu0 %v1016
  %1032 = vmatpush.bf16.msra.mxu0 %v1015
  %1033 = vmatpush.bf16.msra.mxu0 %v1014
  %1034 = vmatpush.bf16.msra.mxu0 %v1013
  %1035 = vmatpush.bf16.msra.mxu0 %v1012
  %1036 = vmatmul.bf16.gmra.mxu0 %v855
  %v1037 = vpop.f32.mrf.mxu0
  %v1038 = vadd.f32 0.0, %v1037
  %v1039 = vpop.f32.mrf.mxu0
  %v1040 = vadd.f32 0.0, %v1039
  %1041 = vdwg.mxu0
  %v1042 = vadd.f32 %v976, %v1038
  %v1043 = vadd.f32 %v978, %v1040
  %v1045 = vperm.slane %v824, 0
  %v1047 = vadd.f32 %v1042, %v1045
  %v1048 = vadd.f32 %v1043, %v1045
  %v1049 = vadd.f32 %v628, %v1047
  %v1050 = vadd.f32 %v629, %v1048
  %v1051 = vld [vmem:[%s33] sm:$0x1]
  %v1052 = vld [vmem:[%s35] sm:$0x1]
  %v1053 = vsel %vm181, %v1049, 0.0
  %1054 = vadd.xlane.f32.xlu0 %v1053
  %v1055 = vpop.xlane.xlu0 %1054
  %v1056 = vsel %vm181, %v1050, 0.0
  %1057 = vadd.xlane.f32.xlu0 %v1056
  %v1058 = vpop.xlane.xlu0 %1057
  %v1059 = vmul.f32 %v1055, %v581
  %v1060 = vmul.f32 %v1058, %v581
  %v1061 = vsub.f32 %v1049, %v1059
  %v1062 = vsub.f32 %v1050, %v1060
  %v1063 = vmul.f32 %v1061, %v1061
  %v1064 = vmul.f32 %v1062, %v1062
  %v1065 = vsel %vm181, %v1063, 0.0
  %1066 = vadd.xlane.f32.xlu0 %v1065
  %v1067 = vpop.xlane.xlu0 %1066
  %v1068 = vsel %vm181, %v1064, 0.0
  %1069 = vadd.xlane.f32.xlu0 %v1068
  %v1070 = vpop.xlane.xlu0 %1069
  %v1071 = vmul.f32 %v1067, %v581
  %v1072 = vmul.f32 %v1070, %v581
  %v1073 = vadd.f32 %v1071, 1e-05
  %v1074 = vadd.f32 %v1072, 1e-05
  %v1075 = vrsqrt.pop %v1073
  %v1076 = vmul.f32 %v1075, %v1073
  %v1077 = vmul.f32 %v1076, %v1075
  %v1078 = vmul.f32 0.5, %v1077
  %v1079 = vsub.f32 1.5, %v1078
  %v1080 = vmul.f32 %v1075, %v1079
  %vm1081 = vweird.f32 %v1073
  %vm1082 = vweird.f32 %v1075
  %vm1083 = vmor %vm1081, %vm1082
  %v1084 = vsel %vm1083, %v1075, %v1080
  %v1085 = vrsqrt.pop %v1074
  %v1086 = vmul.f32 %v1085, %v1074
  %v1087 = vmul.f32 %v1086, %v1085
  %v1088 = vmul.f32 0.5, %v1087
  %v1089 = vsub.f32 1.5, %v1088
  %v1090 = vmul.f32 %v1085, %v1089
  %vm1091 = vweird.f32 %v1074
  %vm1092 = vweird.f32 %v1085
  %vm1093 = vmor %vm1091, %vm1092
  %v1094 = vsel %vm1093, %v1085, %v1090
  %v1095 = vmul.f32 %v1061, %v1084
  %v1096 = vmul.f32 %v1062, %v1094
  %v1098 = vperm.slane %v1051, 0
  %v1100 = vmul.f32 %v1095, %v1098
  %v1101 = vmul.f32 %v1096, %v1098
  %v1103 = vperm.slane %v1052, 0
  %v1105 = vadd.f32 %v1100, %v1103
  %v1106 = vadd.f32 %v1101, %v1103
  %v1107 = vpack.c.bf16 %v1106, %v1105
  %s1108 = scalar_lea.vmem %s13, 32
  %v1109 = vld [vmem:[%s1108] sm:$0xf]
  %v1110 = vld [vmem:[%s1108 + $0x4] sm:$0xf]
  %v1111 = vld [vmem:[%s1108 + $0x8] sm:$0xf]
  %v1112 = vld [vmem:[%s1108 + $0xc] sm:$0xf]
  %s1113 = scalar_lea.vmem %s19, 2
  %v1114 = vld [vmem:[%s1113] sm:$0x1]
  %v1116 = vperm.slane %v1114, 0
  %v1122 = vunpack.c.l.b16 %v1109
  %v1123 = vunpack.c.l.b16 %v1110
  %v1124 = vunpack.c.l.b16 %v1111
  %v1125 = vunpack.c.l.b16 %v1112
  %v1126 = vpack.c.b16 %v1123, %v1122
  %v1127 = vpack.c.b16 %v1125, %v1124
  %v1131 = vsel %vm181, %v1107, 0
  %1133 = vmatpush.bf16.msra.mxu0 0
  %1134 = vmatpush.bf16.msra.mxu0 0
  %1135 = vmatpush.bf16.msra.mxu0 0
  %1136 = vmatpush.bf16.msra.mxu0 0
  %1137 = vmatpush.bf16.msra.mxu0 0
  %1138 = vmatpush.bf16.msra.mxu0 0
  %1139 = vmatpush.bf16.msra.mxu0 %v1127
  %1140 = vmatpush.bf16.msra.mxu0 %v1126
  %1141 = vmatmul.bf16.gmra.mxu0 %v1131
  %v1142 = vpop.f32.mrf.mxu0
  %v1143 = vadd.f32 %v1116, %v1142
  %v1144 = vpop.f32.mrf.mxu0
  %v1145 = vadd.f32 %v1116, %v1144
  %1146 = vdwg.mxu0
  %s1147 = scalar_lea.vmem %s15, 32
  %v1148 = vld [vmem:[%s1147] sm:$0xf]
  %v1149 = vld [vmem:[%s1147 + $0x4] sm:$0xf]
  %v1150 = vld [vmem:[%s1147 + $0x8] sm:$0xf]
  %v1151 = vld [vmem:[%s1147 + $0xc] sm:$0xf]
  %s1152 = scalar_lea.vmem %s21, 2
  %v1153 = vld [vmem:[%s1152] sm:$0x1]
  %v1155 = vperm.slane %v1153, 0
  %v1161 = vunpack.c.l.b16 %v1148
  %v1162 = vunpack.c.l.b16 %v1149
  %v1163 = vunpack.c.l.b16 %v1150
  %v1164 = vunpack.c.l.b16 %v1151
  %v1165 = vpack.c.b16 %v1162, %v1161
  %v1166 = vpack.c.b16 %v1164, %v1163
  %1169 = vmatpush.bf16.msra.mxu0 0
  %1170 = vmatpush.bf16.msra.mxu0 0
  %1171 = vmatpush.bf16.msra.mxu0 0
  %1172 = vmatpush.bf16.msra.mxu0 0
  %1173 = vmatpush.bf16.msra.mxu0 0
  %1174 = vmatpush.bf16.msra.mxu0 0
  %1175 = vmatpush.bf16.msra.mxu0 %v1166
  %1176 = vmatpush.bf16.msra.mxu0 %v1165
  %1177 = vmatmul.bf16.gmra.mxu0 %v1131
  %v1178 = vpop.f32.mrf.mxu0
  %v1179 = vadd.f32 %v1155, %v1178
  %v1180 = vpop.f32.mrf.mxu0
  %v1181 = vadd.f32 %v1155, %v1180
  %1182 = vdwg.mxu0
  %s1183 = scalar_lea.vmem %s17, 32
  %v1184 = vld [vmem:[%s1183] sm:$0xf]
  %v1185 = vld [vmem:[%s1183 + $0x4] sm:$0xf]
  %v1186 = vld [vmem:[%s1183 + $0x8] sm:$0xf]
  %v1187 = vld [vmem:[%s1183 + $0xc] sm:$0xf]
  %s1188 = scalar_lea.vmem %s23, 2
  %v1189 = vld [vmem:[%s1188] sm:$0x1]
  %v1191 = vperm.slane %v1189, 0
  %v1197 = vunpack.c.l.b16 %v1184
  %v1198 = vunpack.c.l.b16 %v1185
  %v1199 = vunpack.c.l.b16 %v1186
  %v1200 = vunpack.c.l.b16 %v1187
  %v1201 = vpack.c.b16 %v1198, %v1197
  %v1202 = vpack.c.b16 %v1200, %v1199
  %1205 = vmatpush.bf16.msra.mxu0 0
  %1206 = vmatpush.bf16.msra.mxu0 0
  %1207 = vmatpush.bf16.msra.mxu0 0
  %1208 = vmatpush.bf16.msra.mxu0 0
  %1209 = vmatpush.bf16.msra.mxu0 0
  %1210 = vmatpush.bf16.msra.mxu0 0
  %1211 = vmatpush.bf16.msra.mxu0 %v1202
  %1212 = vmatpush.bf16.msra.mxu0 %v1201
  %1213 = vmatmul.bf16.gmra.mxu0 %v1131
  %v1214 = vpop.f32.mrf.mxu0
  %v1215 = vadd.f32 %v1191, %v1214
  %v1216 = vpop.f32.mrf.mxu0
  %v1217 = vadd.f32 %v1191, %v1216
  %1218 = vdwg.mxu0
  %v1219 = vmul.f32 %v1143, 0.25
  %v1220 = vmul.f32 %v1145, 0.25
  %v1221 = vpack.c.bf16 %v1220, %v1219
  %v1222 = vpack.c.bf16 %v1181, %v1179
  %v1224 = vsel %vm271, %v1221, 0
  %v1227 = vsel %vm271, %v1222, 0
  %1229 = vmatpush.bf16.xpose.msra.mxu0 0
  %1230 = vmatpush.bf16.xpose.msra.mxu0 0
  %1231 = vmatpush.bf16.xpose.msra.mxu0 0
  %1232 = vmatpush.bf16.xpose.msra.mxu0 0
  %1233 = vmatpush.bf16.xpose.msra.mxu0 0
  %1234 = vmatpush.bf16.xpose.msra.mxu0 0
  %1235 = vmatpush.bf16.xpose.msra.mxu0 0
  %1236 = vmatpush.bf16.xpose.msra.mxu0 %v1227
  %1237 = vmatmul.bf16.gmra.mxu0 %v1224
  %v1238 = vpop.f32.mrf.mxu0
  %v1239 = vadd.f32 %v158, %v1238
  %v1240 = vpop.f32.mrf.mxu0
  %v1241 = vadd.f32 %v159, %v1240
  %1242 = vdwg.mxu0
  %v1243 = vsel %vm271, %v1239, -inf
  %1244 = vmax.xlane.f32.xlu0 %v1243
  %v1245 = vpop.xlane.xlu0 %1244
  %v1246 = vsel %vm271, %v1241, -inf
  %1247 = vmax.xlane.f32.xlu0 %v1246
  %v1248 = vpop.xlane.xlu0 %1247
  %v1249 = vsub.f32 %v1239, %v1245
  %v1250 = vsub.f32 %v1241, %v1248
  %v1251 = vmul.f32 %v1249, 1.442695
  %v1252 = vpow.pop %v1251
  %v1253 = vmul.f32 %v1250, 1.442695
  %v1254 = vpow.pop %v1253
  %v1255 = vsel %vm271, %v1252, 0.0
  %1256 = vadd.xlane.f32.xlu0 %v1255
  %v1257 = vpop.xlane.xlu0 %1256
  %v1258 = vsel %vm271, %v1254, 0.0
  %1259 = vadd.xlane.f32.xlu0 %v1258
  %v1260 = vpop.xlane.xlu0 %1259
  %v1261 = vrcp.pop %v1257
  %v1262 = vrcp.pop %v1260
  %v1263 = vmul.f32 %v1252, %v1261
  %v1264 = vmul.f32 %v1254, %v1262
  %v1265 = vpack.c.bf16 %v1264, %v1263
  %v1266 = vpack.c.bf16 %v1217, %v1215
  %v1268 = vsel %vm271, %v1265, 0
  %1270 = vmatpush.bf16.msra.mxu0 0
  %1271 = vmatpush.bf16.msra.mxu0 0
  %1272 = vmatpush.bf16.msra.mxu0 0
  %1273 = vmatpush.bf16.msra.mxu0 0
  %1274 = vmatpush.bf16.msra.mxu0 0
  %1275 = vmatpush.bf16.msra.mxu0 0
  %1276 = vmatpush.bf16.msra.mxu0 0
  %1277 = vmatpush.bf16.msra.mxu0 %v1266
  %1278 = vmatmul.bf16.gmra.mxu0 %v1268
  %v1279 = vpop.f32.mrf.mxu0
  %v1280 = vadd.f32 0.0, %v1279
  %v1281 = vpop.f32.mrf.mxu0
  %v1282 = vadd.f32 0.0, %v1281
  %1283 = vdwg.mxu0
  %v1284 = vpack.c.bf16 %v1282, %v1280
  %s1285 = scalar_lea.vmem %s25, 16
  %v1286 = vld [vmem:[%s1285] sm:$0xf]
  %v1287 = vld [vmem:[%s1285 + $0x4] sm:$0xf]
  %s1288 = scalar_lea.vmem %s13, 48
  %v1289 = vld [vmem:[%s1288] sm:$0xf]
  %v1290 = vld [vmem:[%s1288 + $0x4] sm:$0xf]
  %v1291 = vld [vmem:[%s1288 + $0x8] sm:$0xf]
  %v1292 = vld [vmem:[%s1288 + $0xc] sm:$0xf]
  %s1293 = scalar_lea.vmem %s19, 3
  %v1294 = vld [vmem:[%s1293] sm:$0x1]
  %v1296 = vperm.slane %v1294, 0
  %v1302 = vunpack.c.l.b16 %v1289
  %v1303 = vunpack.c.l.b16 %v1290
  %v1304 = vunpack.c.l.b16 %v1291
  %v1305 = vunpack.c.l.b16 %v1292
  %v1306 = vpack.c.b16 %v1303, %v1302
  %v1307 = vpack.c.b16 %v1305, %v1304
  %1310 = vmatpush.bf16.msra.mxu0 0
  %1311 = vmatpush.bf16.msra.mxu0 0
  %1312 = vmatpush.bf16.msra.mxu0 0
  %1313 = vmatpush.bf16.msra.mxu0 0
  %1314 = vmatpush.bf16.msra.mxu0 0
  %1315 = vmatpush.bf16.msra.mxu0 0
  %1316 = vmatpush.bf16.msra.mxu0 %v1307
  %1317 = vmatpush.bf16.msra.mxu0 %v1306
  %1318 = vmatmul.bf16.gmra.mxu0 %v1131
  %v1319 = vpop.f32.mrf.mxu0
  %v1320 = vadd.f32 %v1296, %v1319
  %v1321 = vpop.f32.mrf.mxu0
  %v1322 = vadd.f32 %v1296, %v1321
  %1323 = vdwg.mxu0
  %s1324 = scalar_lea.vmem %s15, 48
  %v1325 = vld [vmem:[%s1324] sm:$0xf]
  %v1326 = vld [vmem:[%s1324 + $0x4] sm:$0xf]
  %v1327 = vld [vmem:[%s1324 + $0x8] sm:$0xf]
  %v1328 = vld [vmem:[%s1324 + $0xc] sm:$0xf]
  %s1329 = scalar_lea.vmem %s21, 3
  %v1330 = vld [vmem:[%s1329] sm:$0x1]
  %v1332 = vperm.slane %v1330, 0
  %v1338 = vunpack.c.l.b16 %v1325
  %v1339 = vunpack.c.l.b16 %v1326
  %v1340 = vunpack.c.l.b16 %v1327
  %v1341 = vunpack.c.l.b16 %v1328
  %v1342 = vpack.c.b16 %v1339, %v1338
  %v1343 = vpack.c.b16 %v1341, %v1340
  %1346 = vmatpush.bf16.msra.mxu0 0
  %1347 = vmatpush.bf16.msra.mxu0 0
  %1348 = vmatpush.bf16.msra.mxu0 0
  %1349 = vmatpush.bf16.msra.mxu0 0
  %1350 = vmatpush.bf16.msra.mxu0 0
  %1351 = vmatpush.bf16.msra.mxu0 0
  %1352 = vmatpush.bf16.msra.mxu0 %v1343
  %1353 = vmatpush.bf16.msra.mxu0 %v1342
  %1354 = vmatmul.bf16.gmra.mxu0 %v1131
  %v1355 = vpop.f32.mrf.mxu0
  %v1356 = vadd.f32 %v1332, %v1355
  %v1357 = vpop.f32.mrf.mxu0
  %v1358 = vadd.f32 %v1332, %v1357
  %1359 = vdwg.mxu0
  %s1360 = scalar_lea.vmem %s17, 48
  %v1361 = vld [vmem:[%s1360] sm:$0xf]
  %v1362 = vld [vmem:[%s1360 + $0x4] sm:$0xf]
  %v1363 = vld [vmem:[%s1360 + $0x8] sm:$0xf]
  %v1364 = vld [vmem:[%s1360 + $0xc] sm:$0xf]
  %s1365 = scalar_lea.vmem %s23, 3
  %v1366 = vld [vmem:[%s1365] sm:$0x1]
  %v1368 = vperm.slane %v1366, 0
  %v1374 = vunpack.c.l.b16 %v1361
  %v1375 = vunpack.c.l.b16 %v1362
  %v1376 = vunpack.c.l.b16 %v1363
  %v1377 = vunpack.c.l.b16 %v1364
  %v1378 = vpack.c.b16 %v1375, %v1374
  %v1379 = vpack.c.b16 %v1377, %v1376
  %1382 = vmatpush.bf16.msra.mxu0 0
  %1383 = vmatpush.bf16.msra.mxu0 0
  %1384 = vmatpush.bf16.msra.mxu0 0
  %1385 = vmatpush.bf16.msra.mxu0 0
  %1386 = vmatpush.bf16.msra.mxu0 0
  %1387 = vmatpush.bf16.msra.mxu0 0
  %1388 = vmatpush.bf16.msra.mxu0 %v1379
  %1389 = vmatpush.bf16.msra.mxu0 %v1378
  %1390 = vmatmul.bf16.gmra.mxu0 %v1131
  %v1391 = vpop.f32.mrf.mxu0
  %v1392 = vadd.f32 %v1368, %v1391
  %v1393 = vpop.f32.mrf.mxu0
  %v1394 = vadd.f32 %v1368, %v1393
  %1395 = vdwg.mxu0
  %v1396 = vmul.f32 %v1320, 0.25
  %v1397 = vmul.f32 %v1322, 0.25
  %v1398 = vpack.c.bf16 %v1397, %v1396
  %v1399 = vpack.c.bf16 %v1358, %v1356
  %v1401 = vsel %vm271, %v1398, 0
  %v1404 = vsel %vm271, %v1399, 0
  %1406 = vmatpush.bf16.xpose.msra.mxu0 0
  %1407 = vmatpush.bf16.xpose.msra.mxu0 0
  %1408 = vmatpush.bf16.xpose.msra.mxu0 0
  %1409 = vmatpush.bf16.xpose.msra.mxu0 0
  %1410 = vmatpush.bf16.xpose.msra.mxu0 0
  %1411 = vmatpush.bf16.xpose.msra.mxu0 0
  %1412 = vmatpush.bf16.xpose.msra.mxu0 0
  %1413 = vmatpush.bf16.xpose.msra.mxu0 %v1404
  %1414 = vmatmul.bf16.gmra.mxu0 %v1401
  %v1415 = vpop.f32.mrf.mxu0
  %v1416 = vadd.f32 %v158, %v1415
  %v1417 = vpop.f32.mrf.mxu0
  %v1418 = vadd.f32 %v159, %v1417
  %1419 = vdwg.mxu0
  %v1420 = vsel %vm271, %v1416, -inf
  %1421 = vmax.xlane.f32.xlu0 %v1420
  %v1422 = vpop.xlane.xlu0 %1421
  %v1423 = vsel %vm271, %v1418, -inf
  %1424 = vmax.xlane.f32.xlu0 %v1423
  %v1425 = vpop.xlane.xlu0 %1424
  %v1426 = vsub.f32 %v1416, %v1422
  %v1427 = vsub.f32 %v1418, %v1425
  %v1428 = vmul.f32 %v1426, 1.442695
  %v1429 = vpow.pop %v1428
  %v1430 = vmul.f32 %v1427, 1.442695
  %v1431 = vpow.pop %v1430
  %v1432 = vsel %vm271, %v1429, 0.0
  %1433 = vadd.xlane.f32.xlu0 %v1432
  %v1434 = vpop.xlane.xlu0 %1433
  %v1435 = vsel %vm271, %v1431, 0.0
  %1436 = vadd.xlane.f32.xlu0 %v1435
  %v1437 = vpop.xlane.xlu0 %1436
  %v1438 = vrcp.pop %v1434
  %v1439 = vrcp.pop %v1437
  %v1440 = vmul.f32 %v1429, %v1438
  %v1441 = vmul.f32 %v1431, %v1439
  %v1442 = vpack.c.bf16 %v1441, %v1440
  %v1443 = vpack.c.bf16 %v1394, %v1392
  %v1445 = vsel %vm271, %v1442, 0
  %1447 = vmatpush.bf16.msra.mxu0 0
  %1448 = vmatpush.bf16.msra.mxu0 0
  %1449 = vmatpush.bf16.msra.mxu0 0
  %1450 = vmatpush.bf16.msra.mxu0 0
  %1451 = vmatpush.bf16.msra.mxu0 0
  %1452 = vmatpush.bf16.msra.mxu0 0
  %1453 = vmatpush.bf16.msra.mxu0 0
  %1454 = vmatpush.bf16.msra.mxu0 %v1443
  %1455 = vmatmul.bf16.gmra.mxu0 %v1445
  %v1456 = vpop.f32.mrf.mxu0
  %v1457 = vadd.f32 0.0, %v1456
  %v1458 = vpop.f32.mrf.mxu0
  %v1459 = vadd.f32 0.0, %v1458
  %1460 = vdwg.mxu0
  %v1461 = vpack.c.bf16 %v1459, %v1457
  %s1462 = scalar_lea.vmem %s25, 24
  %v1463 = vld [vmem:[%s1462] sm:$0xf]
  %v1464 = vld [vmem:[%s1462 + $0x4] sm:$0xf]
  %v1467 = vunpack.c.l.b16 %v1463
  %v1468 = vunpack.c.l.b16 %v1464
  %v1469 = vpack.c.b16 %v1468, %v1467
  %v1472 = vsel %vm271, %v1461, 0
  %1474 = vmatpush.bf16.msra.mxu0 0
  %1475 = vmatpush.bf16.msra.mxu0 0
  %1476 = vmatpush.bf16.msra.mxu0 0
  %1477 = vmatpush.bf16.msra.mxu0 0
  %1478 = vmatpush.bf16.msra.mxu0 0
  %1479 = vmatpush.bf16.msra.mxu0 0
  %1480 = vmatpush.bf16.msra.mxu0 0
  %1481 = vmatpush.bf16.msra.mxu0 %v1469
  %1482 = vmatmul.bf16.gmra.mxu0 %v1472
  %v1483 = vpop.f32.mrf.mxu0
  %v1484 = vadd.f32 0.0, %v1483
  %v1485 = vpop.f32.mrf.mxu0
  %v1486 = vadd.f32 0.0, %v1485
  %1487 = vdwg.mxu0
  %v1490 = vunpack.c.l.b16 %v1286
  %v1491 = vunpack.c.l.b16 %v1287
  %v1492 = vpack.c.b16 %v1491, %v1490
  %v1495 = vsel %vm271, %v1284, 0
  %1497 = vmatpush.bf16.msra.mxu0 0
  %1498 = vmatpush.bf16.msra.mxu0 0
  %1499 = vmatpush.bf16.msra.mxu0 0
  %1500 = vmatpush.bf16.msra.mxu0 0
  %1501 = vmatpush.bf16.msra.mxu0 0
  %1502 = vmatpush.bf16.msra.mxu0 0
  %1503 = vmatpush.bf16.msra.mxu0 0
  %1504 = vmatpush.bf16.msra.mxu0 %v1492
  %1505 = vmatmul.bf16.gmra.mxu0 %v1495
  %v1506 = vpop.f32.mrf.mxu0
  %v1507 = vadd.f32 %v1484, %v1506
  %v1508 = vpop.f32.mrf.mxu0
  %v1509 = vadd.f32 %v1486, %v1508
  %1510 = vdwg.mxu0
  %s1511 = scalar_lea.vmem %s27, 1
  %v1512 = vld [vmem:[%s1511] sm:$0x1]
  %v1514 = vperm.slane %v1512, 0
  %v1516 = vadd.f32 %v1507, %v1514
  %v1517 = vadd.f32 %v1509, %v1514
  %v1518 = vadd.f32 %v1105, %v1516
  %v1519 = vadd.f32 %v1106, %v1517
  %s1520 = scalar_lea.vmem %s29, 1
  %v1521 = vld [vmem:[%s1520] sm:$0x1]
  %s1522 = scalar_lea.vmem %s31, 1
  %v1523 = vld [vmem:[%s1522] sm:$0x1]
  %v1524 = vsel %vm181, %v1518, 0.0
  %1525 = vadd.xlane.f32.xlu0 %v1524
  %v1526 = vpop.xlane.xlu0 %1525
  %v1527 = vsel %vm181, %v1519, 0.0
  %1528 = vadd.xlane.f32.xlu0 %v1527
  %v1529 = vpop.xlane.xlu0 %1528
  %v1530 = vmul.f32 %v1526, %v581
  %v1531 = vmul.f32 %v1529, %v581
  %v1532 = vsub.f32 %v1518, %v1530
  %v1533 = vsub.f32 %v1519, %v1531
  %v1534 = vmul.f32 %v1532, %v1532
  %v1535 = vmul.f32 %v1533, %v1533
  %v1536 = vsel %vm181, %v1534, 0.0
  %1537 = vadd.xlane.f32.xlu0 %v1536
  %v1538 = vpop.xlane.xlu0 %1537
  %v1539 = vsel %vm181, %v1535, 0.0
  %1540 = vadd.xlane.f32.xlu0 %v1539
  %v1541 = vpop.xlane.xlu0 %1540
  %v1542 = vmul.f32 %v1538, %v581
  %v1543 = vmul.f32 %v1541, %v581
  %v1544 = vadd.f32 %v1542, 1e-05
  %v1545 = vadd.f32 %v1543, 1e-05
  %v1546 = vrsqrt.pop %v1544
  %v1547 = vmul.f32 %v1546, %v1544
  %v1548 = vmul.f32 %v1547, %v1546
  %v1549 = vmul.f32 0.5, %v1548
  %v1550 = vsub.f32 1.5, %v1549
  %v1551 = vmul.f32 %v1546, %v1550
  %vm1552 = vweird.f32 %v1544
  %vm1553 = vweird.f32 %v1546
  %vm1554 = vmor %vm1552, %vm1553
  %v1555 = vsel %vm1554, %v1546, %v1551
  %v1556 = vrsqrt.pop %v1545
  %v1557 = vmul.f32 %v1556, %v1545
  %v1558 = vmul.f32 %v1557, %v1556
  %v1559 = vmul.f32 0.5, %v1558
  %v1560 = vsub.f32 1.5, %v1559
  %v1561 = vmul.f32 %v1556, %v1560
  %vm1562 = vweird.f32 %v1545
  %vm1563 = vweird.f32 %v1556
  %vm1564 = vmor %vm1562, %vm1563
  %v1565 = vsel %vm1564, %v1556, %v1561
  %v1566 = vmul.f32 %v1532, %v1555
  %v1567 = vmul.f32 %v1533, %v1565
  %v1569 = vperm.slane %v1521, 0
  %v1571 = vmul.f32 %v1566, %v1569
  %v1572 = vmul.f32 %v1567, %v1569
  %v1574 = vperm.slane %v1523, 0
  %v1576 = vadd.f32 %v1571, %v1574
  %v1577 = vadd.f32 %v1572, %v1574
  %s1578 = scalar_lea.vmem %s37, 48
  %v1579 = vld [vmem:[%s1578] sm:$0xf]
  %v1580 = vld [vmem:[%s1578 + $0x4] sm:$0xf]
  %v1581 = vld [vmem:[%s1578 + $0x8] sm:$0xf]
  %v1582 = vld [vmem:[%s1578 + $0xc] sm:$0xf]
  %v1583 = vld [vmem:[%s1578 + $0x10] sm:$0xf]
  %v1584 = vld [vmem:[%s1578 + $0x14] sm:$0xf]
  %v1585 = vld [vmem:[%s1578 + $0x18] sm:$0xf]
  %v1586 = vld [vmem:[%s1578 + $0x1c] sm:$0xf]
  %v1587 = vld [vmem:[%s1578 + $0x20] sm:$0xf]
  %v1588 = vld [vmem:[%s1578 + $0x24] sm:$0xf]
  %v1589 = vld [vmem:[%s1578 + $0x28] sm:$0xf]
  %v1590 = vld [vmem:[%s1578 + $0x2c] sm:$0xf]
  %s1591 = scalar_lea.vmem %s39, 1
  %v1592 = vld [vmem:[%s1591] sm:$0x1]
  %v1593 = vpack.c.bf16 %v1577, %v1576
  %1594 = vmatpush.bf16.msra.mxu0 0
  %1595 = vmatpush.bf16.msra.mxu0 0
  %1596 = vmatpush.bf16.msra.mxu0 0
  %1597 = vmatpush.bf16.msra.mxu0 0
  %1598 = vmatpush.bf16.msra.mxu0 0
  %1599 = vmatpush.bf16.msra.mxu0 0
  %1600 = vmatpush.bf16.msra.mxu0 0
  %1601 = vmatpush.bf16.msra.mxu0 %v1593
  %1602 = vmatmul.bf16.gmra.mxu0 %v645
  %v1603 = vpop.f32.mrf.mxu0
  %v1604 = vadd.f32 0.0, %v1603
  %v1605 = vpop.f32.mrf.mxu0
  %v1606 = vadd.f32 0.0, %v1605
  %1607 = vdwg.mxu0
  %v1608 = vpack.c.bf16 %v1606, %v1604
  %1609 = vmatpush.bf16.msra.mxu0 0
  %1610 = vmatpush.bf16.msra.mxu0 0
  %1611 = vmatpush.bf16.msra.mxu0 0
  %1612 = vmatpush.bf16.msra.mxu0 0
  %1613 = vmatpush.bf16.msra.mxu0 0
  %1614 = vmatpush.bf16.msra.mxu0 0
  %1615 = vmatpush.bf16.msra.mxu0 0
  %1616 = vmatpush.bf16.msra.mxu0 %v1593
  %1617 = vmatmul.bf16.gmra.mxu0 %v663
  %v1618 = vpop.f32.mrf.mxu0
  %v1619 = vadd.f32 0.0, %v1618
  %v1620 = vpop.f32.mrf.mxu0
  %v1621 = vadd.f32 0.0, %v1620
  %1622 = vdwg.mxu0
  %v1623 = vpack.c.bf16 %v1621, %v1619
  %v1628 = vunpack.c.l.b16 %v1583
  %v1629 = vunpack.c.l.b16 %v1584
  %v1630 = vunpack.c.l.b16 %v1585
  %v1631 = vunpack.c.l.b16 %v1586
  %v1632 = vpack.c.b16 %v1629, %v1628
  %v1633 = vpack.c.b16 %v1631, %v1630
  %v1637 = vsel %vm181, %v1593, 0
  %1639 = vmatpush.bf16.msra.mxu0 0
  %1640 = vmatpush.bf16.msra.mxu0 0
  %1641 = vmatpush.bf16.msra.mxu0 0
  %1642 = vmatpush.bf16.msra.mxu0 0
  %1643 = vmatpush.bf16.msra.mxu0 0
  %1644 = vmatpush.bf16.msra.mxu0 0
  %1645 = vmatpush.bf16.msra.mxu0 %v1633
  %1646 = vmatpush.bf16.msra.mxu0 %v1632
  %1647 = vmatmul.bf16.gmra.mxu0 %v1637
  %v1648 = vpop.f32.mrf.mxu0
  %v1649 = vadd.f32 0.0, %v1648
  %v1650 = vpop.f32.mrf.mxu0
  %v1651 = vadd.f32 0.0, %v1650
  %1652 = vdwg.mxu0
  %v1657 = vunpack.c.l.b16 %v1579
  %v1658 = vunpack.c.l.b16 %v1580
  %v1659 = vunpack.c.l.b16 %v1581
  %v1660 = vunpack.c.l.b16 %v1582
  %v1661 = vpack.c.b16 %v1658, %v1657
  %v1662 = vpack.c.b16 %v1660, %v1659
  %v1666 = vsel %vm181, %v1608, 0
  %1668 = vmatpush.bf16.msra.mxu0 0
  %1669 = vmatpush.bf16.msra.mxu0 0
  %1670 = vmatpush.bf16.msra.mxu0 0
  %1671 = vmatpush.bf16.msra.mxu0 0
  %1672 = vmatpush.bf16.msra.mxu0 0
  %1673 = vmatpush.bf16.msra.mxu0 0
  %1674 = vmatpush.bf16.msra.mxu0 %v1662
  %1675 = vmatpush.bf16.msra.mxu0 %v1661
  %1676 = vmatmul.bf16.gmra.mxu0 %v1666
  %v1677 = vpop.f32.mrf.mxu0
  %v1678 = vadd.f32 %v1649, %v1677
  %v1679 = vpop.f32.mrf.mxu0
  %v1680 = vadd.f32 %v1651, %v1679
  %1681 = vdwg.mxu0
  %v1686 = vunpack.c.l.b16 %v1587
  %v1687 = vunpack.c.l.b16 %v1588
  %v1688 = vunpack.c.l.b16 %v1589
  %v1689 = vunpack.c.l.b16 %v1590
  %v1690 = vpack.c.b16 %v1687, %v1686
  %v1691 = vpack.c.b16 %v1689, %v1688
  %v1695 = vsel %vm181, %v1623, 0
  %1697 = vmatpush.bf16.msra.mxu0 0
  %1698 = vmatpush.bf16.msra.mxu0 0
  %1699 = vmatpush.bf16.msra.mxu0 0
  %1700 = vmatpush.bf16.msra.mxu0 0
  %1701 = vmatpush.bf16.msra.mxu0 0
  %1702 = vmatpush.bf16.msra.mxu0 0
  %1703 = vmatpush.bf16.msra.mxu0 %v1691
  %1704 = vmatpush.bf16.msra.mxu0 %v1690
  %1705 = vmatmul.bf16.gmra.mxu0 %v1695
  %v1706 = vpop.f32.mrf.mxu0
  %v1707 = vadd.f32 0.0, %v1706
  %v1708 = vpop.f32.mrf.mxu0
  %v1709 = vadd.f32 0.0, %v1708
  %1710 = vdwg.mxu0
  %v1711 = vadd.f32 %v1678, %v1707
  %v1712 = vadd.f32 %v1680, %v1709
  %v1714 = vperm.slane %v1592, 0
  %v1716 = vadd.f32 %v1711, %v1714
  %v1717 = vadd.f32 %v1712, %v1714
  %v1718 = vmax.f32 %v1716, 0.0
  %v1719 = vmax.f32 %v1717, 0.0
  %s1720 = scalar_lea.vmem %s41, 192
  %v1721 = vld [vmem:[%s1720] sm:$0xf]
  %v1722 = vld [vmem:[%s1720 + $0x4] sm:$0xf]
  %v1723 = vld [vmem:[%s1720 + $0x8] sm:$0xf]
  %v1724 = vld [vmem:[%s1720 + $0xc] sm:$0xf]
  %v1725 = vld [vmem:[%s1720 + $0x10] sm:$0xf]
  %v1726 = vld [vmem:[%s1720 + $0x14] sm:$0xf]
  %v1727 = vld [vmem:[%s1720 + $0x18] sm:$0xf]
  %v1728 = vld [vmem:[%s1720 + $0x1c] sm:$0xf]
  %v1729 = vld [vmem:[%s1720 + $0x20] sm:$0xf]
  %v1730 = vld [vmem:[%s1720 + $0x24] sm:$0xf]
  %v1731 = vld [vmem:[%s1720 + $0x28] sm:$0xf]
  %v1732 = vld [vmem:[%s1720 + $0x2c] sm:$0xf]
  %v1733 = vld [vmem:[%s1720 + $0x30] sm:$0xf]
  %v1734 = vld [vmem:[%s1720 + $0x34] sm:$0xf]
  %v1735 = vld [vmem:[%s1720 + $0x38] sm:$0xf]
  %v1736 = vld [vmem:[%s1720 + $0x3c] sm:$0xf]
  %v1737 = vld [vmem:[%s1720 + $0x40] sm:$0xf]
  %v1738 = vld [vmem:[%s1720 + $0x44] sm:$0xf]
  %v1739 = vld [vmem:[%s1720 + $0x48] sm:$0xf]
  %v1740 = vld [vmem:[%s1720 + $0x4c] sm:$0xf]
  %v1741 = vld [vmem:[%s1720 + $0x50] sm:$0xf]
  %v1742 = vld [vmem:[%s1720 + $0x54] sm:$0xf]
  %v1743 = vld [vmem:[%s1720 + $0x58] sm:$0xf]
  %v1744 = vld [vmem:[%s1720 + $0x5c] sm:$0xf]
  %v1745 = vld [vmem:[%s1720 + $0x60] sm:$0xf]
  %v1746 = vld [vmem:[%s1720 + $0x64] sm:$0xf]
  %v1747 = vld [vmem:[%s1720 + $0x68] sm:$0xf]
  %v1748 = vld [vmem:[%s1720 + $0x6c] sm:$0xf]
  %v1749 = vld [vmem:[%s1720 + $0x70] sm:$0xf]
  %v1750 = vld [vmem:[%s1720 + $0x74] sm:$0xf]
  %v1751 = vld [vmem:[%s1720 + $0x78] sm:$0xf]
  %v1752 = vld [vmem:[%s1720 + $0x7c] sm:$0xf]
  %v1753 = vld [vmem:[%s1720 + $0x80] sm:$0xf]
  %v1754 = vld [vmem:[%s1720 + $0x84] sm:$0xf]
  %v1755 = vld [vmem:[%s1720 + $0x88] sm:$0xf]
  %v1756 = vld [vmem:[%s1720 + $0x8c] sm:$0xf]
  %v1757 = vld [vmem:[%s1720 + $0x90] sm:$0xf]
  %v1758 = vld [vmem:[%s1720 + $0x94] sm:$0xf]
  %v1759 = vld [vmem:[%s1720 + $0x98] sm:$0xf]
  %v1760 = vld [vmem:[%s1720 + $0x9c] sm:$0xf]
  %v1761 = vld [vmem:[%s1720 + $0xa0] sm:$0xf]
  %v1762 = vld [vmem:[%s1720 + $0xa4] sm:$0xf]
  %v1763 = vld [vmem:[%s1720 + $0xa8] sm:$0xf]
  %v1764 = vld [vmem:[%s1720 + $0xac] sm:$0xf]
  %v1765 = vld [vmem:[%s1720 + $0xb0] sm:$0xf]
  %v1766 = vld [vmem:[%s1720 + $0xb4] sm:$0xf]
  %v1767 = vld [vmem:[%s1720 + $0xb8] sm:$0xf]
  %v1768 = vld [vmem:[%s1720 + $0xbc] sm:$0xf]
  %s1769 = scalar_lea.vmem %s43, 1
  %v1770 = vld [vmem:[%s1769] sm:$0x1]
  %v1771 = vpack.c.bf16 %v1719, %v1718
  %1772 = vmatpush.bf16.msra.mxu0 0
  %1773 = vmatpush.bf16.msra.mxu0 0
  %1774 = vmatpush.bf16.msra.mxu0 0
  %1775 = vmatpush.bf16.msra.mxu0 0
  %1776 = vmatpush.bf16.msra.mxu0 0
  %1777 = vmatpush.bf16.msra.mxu0 0
  %1778 = vmatpush.bf16.msra.mxu0 0
  %1779 = vmatpush.bf16.msra.mxu0 %v1771
  %1780 = vmatmul.bf16.gmra.mxu0 %v645
  %v1781 = vpop.f32.mrf.mxu0
  %v1782 = vadd.f32 0.0, %v1781
  %v1783 = vpop.f32.mrf.mxu0
  %v1784 = vadd.f32 0.0, %v1783
  %1785 = vdwg.mxu0
  %v1786 = vpack.c.bf16 %v1784, %v1782
  %1787 = vmatpush.bf16.msra.mxu0 0
  %1788 = vmatpush.bf16.msra.mxu0 0
  %1789 = vmatpush.bf16.msra.mxu0 0
  %1790 = vmatpush.bf16.msra.mxu0 0
  %1791 = vmatpush.bf16.msra.mxu0 0
  %1792 = vmatpush.bf16.msra.mxu0 0
  %1793 = vmatpush.bf16.msra.mxu0 0
  %1794 = vmatpush.bf16.msra.mxu0 %v1771
  %1795 = vmatmul.bf16.gmra.mxu0 %v663
  %v1796 = vpop.f32.mrf.mxu0
  %v1797 = vadd.f32 0.0, %v1796
  %v1798 = vpop.f32.mrf.mxu0
  %v1799 = vadd.f32 0.0, %v1798
  %1800 = vdwg.mxu0
  %v1801 = vpack.c.bf16 %v1799, %v1797
  %v1818 = vunpack.c.l.b16 %v1737
  %v1819 = vunpack.c.l.b16 %v1738
  %v1820 = vunpack.c.l.b16 %v1739
  %v1821 = vunpack.c.l.b16 %v1740
  %v1822 = vunpack.c.l.b16 %v1741
  %v1823 = vunpack.c.l.b16 %v1742
  %v1824 = vunpack.c.l.b16 %v1743
  %v1825 = vunpack.c.l.b16 %v1744
  %v1826 = vunpack.c.l.b16 %v1745
  %v1827 = vunpack.c.l.b16 %v1746
  %v1828 = vunpack.c.l.b16 %v1747
  %v1829 = vunpack.c.l.b16 %v1748
  %v1830 = vunpack.c.l.b16 %v1749
  %v1831 = vunpack.c.l.b16 %v1750
  %v1832 = vunpack.c.l.b16 %v1751
  %v1833 = vunpack.c.l.b16 %v1752
  %v1834 = vpack.c.b16 %v1819, %v1818
  %v1835 = vpack.c.b16 %v1821, %v1820
  %v1836 = vpack.c.b16 %v1823, %v1822
  %v1837 = vpack.c.b16 %v1825, %v1824
  %v1838 = vpack.c.b16 %v1827, %v1826
  %v1839 = vpack.c.b16 %v1829, %v1828
  %v1840 = vpack.c.b16 %v1831, %v1830
  %v1841 = vpack.c.b16 %v1833, %v1832
  %1850 = vmatpush.bf16.msra.mxu0 %v1841
  %1851 = vmatpush.bf16.msra.mxu0 %v1840
  %1852 = vmatpush.bf16.msra.mxu0 %v1839
  %1853 = vmatpush.bf16.msra.mxu0 %v1838
  %1854 = vmatpush.bf16.msra.mxu0 %v1837
  %1855 = vmatpush.bf16.msra.mxu0 %v1836
  %1856 = vmatpush.bf16.msra.mxu0 %v1835
  %1857 = vmatpush.bf16.msra.mxu0 %v1834
  %1858 = vmatmul.bf16.gmra.mxu0 %v1771
  %v1859 = vpop.f32.mrf.mxu0
  %v1860 = vadd.f32 0.0, %v1859
  %v1861 = vpop.f32.mrf.mxu0
  %v1862 = vadd.f32 0.0, %v1861
  %1863 = vdwg.mxu0
  %v1880 = vunpack.c.l.b16 %v1721
  %v1881 = vunpack.c.l.b16 %v1722
  %v1882 = vunpack.c.l.b16 %v1723
  %v1883 = vunpack.c.l.b16 %v1724
  %v1884 = vunpack.c.l.b16 %v1725
  %v1885 = vunpack.c.l.b16 %v1726
  %v1886 = vunpack.c.l.b16 %v1727
  %v1887 = vunpack.c.l.b16 %v1728
  %v1888 = vunpack.c.l.b16 %v1729
  %v1889 = vunpack.c.l.b16 %v1730
  %v1890 = vunpack.c.l.b16 %v1731
  %v1891 = vunpack.c.l.b16 %v1732
  %v1892 = vunpack.c.l.b16 %v1733
  %v1893 = vunpack.c.l.b16 %v1734
  %v1894 = vunpack.c.l.b16 %v1735
  %v1895 = vunpack.c.l.b16 %v1736
  %v1896 = vpack.c.b16 %v1881, %v1880
  %v1897 = vpack.c.b16 %v1883, %v1882
  %v1898 = vpack.c.b16 %v1885, %v1884
  %v1899 = vpack.c.b16 %v1887, %v1886
  %v1900 = vpack.c.b16 %v1889, %v1888
  %v1901 = vpack.c.b16 %v1891, %v1890
  %v1902 = vpack.c.b16 %v1893, %v1892
  %v1903 = vpack.c.b16 %v1895, %v1894
  %1912 = vmatpush.bf16.msra.mxu0 %v1903
  %1913 = vmatpush.bf16.msra.mxu0 %v1902
  %1914 = vmatpush.bf16.msra.mxu0 %v1901
  %1915 = vmatpush.bf16.msra.mxu0 %v1900
  %1916 = vmatpush.bf16.msra.mxu0 %v1899
  %1917 = vmatpush.bf16.msra.mxu0 %v1898
  %1918 = vmatpush.bf16.msra.mxu0 %v1897
  %1919 = vmatpush.bf16.msra.mxu0 %v1896
  %1920 = vmatmul.bf16.gmra.mxu0 %v1786
  %v1921 = vpop.f32.mrf.mxu0
  %v1922 = vadd.f32 %v1860, %v1921
  %v1923 = vpop.f32.mrf.mxu0
  %v1924 = vadd.f32 %v1862, %v1923
  %1925 = vdwg.mxu0
  %v1942 = vunpack.c.l.b16 %v1753
  %v1943 = vunpack.c.l.b16 %v1754
  %v1944 = vunpack.c.l.b16 %v1755
  %v1945 = vunpack.c.l.b16 %v1756
  %v1946 = vunpack.c.l.b16 %v1757
  %v1947 = vunpack.c.l.b16 %v1758
  %v1948 = vunpack.c.l.b16 %v1759
  %v1949 = vunpack.c.l.b16 %v1760
  %v1950 = vunpack.c.l.b16 %v1761
  %v1951 = vunpack.c.l.b16 %v1762
  %v1952 = vunpack.c.l.b16 %v1763
  %v1953 = vunpack.c.l.b16 %v1764
  %v1954 = vunpack.c.l.b16 %v1765
  %v1955 = vunpack.c.l.b16 %v1766
  %v1956 = vunpack.c.l.b16 %v1767
  %v1957 = vunpack.c.l.b16 %v1768
  %v1958 = vpack.c.b16 %v1943, %v1942
  %v1959 = vpack.c.b16 %v1945, %v1944
  %v1960 = vpack.c.b16 %v1947, %v1946
  %v1961 = vpack.c.b16 %v1949, %v1948
  %v1962 = vpack.c.b16 %v1951, %v1950
  %v1963 = vpack.c.b16 %v1953, %v1952
  %v1964 = vpack.c.b16 %v1955, %v1954
  %v1965 = vpack.c.b16 %v1957, %v1956
  %1974 = vmatpush.bf16.msra.mxu0 %v1965
  %1975 = vmatpush.bf16.msra.mxu0 %v1964
  %1976 = vmatpush.bf16.msra.mxu0 %v1963
  %1977 = vmatpush.bf16.msra.mxu0 %v1962
  %1978 = vmatpush.bf16.msra.mxu0 %v1961
  %1979 = vmatpush.bf16.msra.mxu0 %v1960
  %1980 = vmatpush.bf16.msra.mxu0 %v1959
  %1981 = vmatpush.bf16.msra.mxu0 %v1958
  %1982 = vmatmul.bf16.gmra.mxu0 %v1801
  %v1983 = vpop.f32.mrf.mxu0
  %v1984 = vadd.f32 0.0, %v1983
  %v1985 = vpop.f32.mrf.mxu0
  %v1986 = vadd.f32 0.0, %v1985
  %1987 = vdwg.mxu0
  %v1988 = vadd.f32 %v1922, %v1984
  %v1989 = vadd.f32 %v1924, %v1986
  %v1991 = vperm.slane %v1770, 0
  %v1993 = vadd.f32 %v1988, %v1991
  %v1994 = vadd.f32 %v1989, %v1991
  %v1995 = vadd.f32 %v1576, %v1993
  %v1996 = vadd.f32 %v1577, %v1994
  %s1997 = scalar_lea.vmem %s33, 1
  %v1998 = vld [vmem:[%s1997] sm:$0x1]
  %s1999 = scalar_lea.vmem %s35, 1
  %v2000 = vld [vmem:[%s1999] sm:$0x1]
  %v2001 = vsel %vm181, %v1995, 0.0
  %2002 = vadd.xlane.f32.xlu0 %v2001
  %v2003 = vpop.xlane.xlu0 %2002
  %v2004 = vsel %vm181, %v1996, 0.0
  %2005 = vadd.xlane.f32.xlu0 %v2004
  %v2006 = vpop.xlane.xlu0 %2005
  %v2007 = vmul.f32 %v2003, %v581
  %v2008 = vmul.f32 %v2006, %v581
  %v2009 = vsub.f32 %v1995, %v2007
  %v2010 = vsub.f32 %v1996, %v2008
  %v2011 = vmul.f32 %v2009, %v2009
  %v2012 = vmul.f32 %v2010, %v2010
  %v2013 = vsel %vm181, %v2011, 0.0
  %2014 = vadd.xlane.f32.xlu0 %v2013
  %v2015 = vpop.xlane.xlu0 %2014
  %v2016 = vsel %vm181, %v2012, 0.0
  %2017 = vadd.xlane.f32.xlu0 %v2016
  %v2018 = vpop.xlane.xlu0 %2017
  %v2019 = vmul.f32 %v2015, %v581
  %v2020 = vmul.f32 %v2018, %v581
  %v2021 = vadd.f32 %v2019, 1e-05
  %v2022 = vadd.f32 %v2020, 1e-05
  %v2023 = vrsqrt.pop %v2021
  %v2024 = vmul.f32 %v2023, %v2021
  %v2025 = vmul.f32 %v2024, %v2023
  %v2026 = vmul.f32 0.5, %v2025
  %v2027 = vsub.f32 1.5, %v2026
  %v2028 = vmul.f32 %v2023, %v2027
  %vm2029 = vweird.f32 %v2021
  %vm2030 = vweird.f32 %v2023
  %vm2031 = vmor %vm2029, %vm2030
  %v2032 = vsel %vm2031, %v2023, %v2028
  %v2033 = vrsqrt.pop %v2022
  %v2034 = vmul.f32 %v2033, %v2022
  %v2035 = vmul.f32 %v2034, %v2033
  %v2036 = vmul.f32 0.5, %v2035
  %v2037 = vsub.f32 1.5, %v2036
  %v2038 = vmul.f32 %v2033, %v2037
  %vm2039 = vweird.f32 %v2022
  %vm2040 = vweird.f32 %v2033
  %vm2041 = vmor %vm2039, %vm2040
  %v2042 = vsel %vm2041, %v2033, %v2038
  %v2043 = vmul.f32 %v2009, %v2032
  %v2044 = vmul.f32 %v2010, %v2042
  %v2046 = vperm.slane %v1998, 0
  %v2048 = vmul.f32 %v2043, %v2046
  %v2049 = vmul.f32 %v2044, %v2046
  %v2051 = vperm.slane %v2000, 0
  %v2053 = vadd.f32 %v2048, %v2051
  %v2054 = vadd.f32 %v2049, %v2051
  %2056 = vset.pattern.permute.xlu0 0
  %2057 = vperm.xlu0 %2056, %v154
  %v2058 = vpop.permute.xlu0 %2057
  %2061 = vset.pattern.permute.xlu0 0
  %2062 = vperm.xlu0 %2061, %v155
  %v2063 = vpop.permute.xlu0 %2062
  %v2065 = vmul.f32 %v2053, %v2058
  %v2066 = vmul.f32 %v2054, %v2063
  %v2067 = vld [vmem:[%s45] sm:$0x1]
  %v2068 = vld [vmem:[%s47] sm:$0x1]
  %v2069 = vsel %vm181, %v2065, 0.0
  %2070 = vadd.xlane.f32.xlu0 %v2069
  %v2071 = vpop.xlane.xlu0 %2070
  %v2072 = vsel %vm181, %v2066, 0.0
  %2073 = vadd.xlane.f32.xlu0 %v2072
  %v2074 = vpop.xlane.xlu0 %2073
  %v2075 = vmul.f32 %v2071, %v581
  %v2076 = vmul.f32 %v2074, %v581
  %v2077 = vsub.f32 %v2065, %v2075
  %v2078 = vsub.f32 %v2066, %v2076
  %v2079 = vmul.f32 %v2077, %v2077
  %v2080 = vmul.f32 %v2078, %v2078
  %v2081 = vsel %vm181, %v2079, 0.0
  %2082 = vadd.xlane.f32.xlu0 %v2081
  %v2083 = vpop.xlane.xlu0 %2082
  %v2084 = vsel %vm181, %v2080, 0.0
  %2085 = vadd.xlane.f32.xlu0 %v2084
  %v2086 = vpop.xlane.xlu0 %2085
  %v2087 = vmul.f32 %v2083, %v581
  %v2088 = vmul.f32 %v2086, %v581
  %v2089 = vadd.f32 %v2087, 1e-05
  %v2090 = vadd.f32 %v2088, 1e-05
  %v2091 = vrsqrt.pop %v2089
  %v2092 = vmul.f32 %v2091, %v2089
  %v2093 = vmul.f32 %v2092, %v2091
  %v2094 = vmul.f32 0.5, %v2093
  %v2095 = vsub.f32 1.5, %v2094
  %v2096 = vmul.f32 %v2091, %v2095
  %vm2097 = vweird.f32 %v2089
  %vm2098 = vweird.f32 %v2091
  %vm2099 = vmor %vm2097, %vm2098
  %v2100 = vsel %vm2099, %v2091, %v2096
  %v2101 = vrsqrt.pop %v2090
  %v2102 = vmul.f32 %v2101, %v2090
  %v2103 = vmul.f32 %v2102, %v2101
  %v2104 = vmul.f32 0.5, %v2103
  %v2105 = vsub.f32 1.5, %v2104
  %v2106 = vmul.f32 %v2101, %v2105
  %vm2107 = vweird.f32 %v2090
  %vm2108 = vweird.f32 %v2101
  %vm2109 = vmor %vm2107, %vm2108
  %v2110 = vsel %vm2109, %v2101, %v2106
  %v2111 = vmul.f32 %v2077, %v2100
  %v2112 = vmul.f32 %v2078, %v2110
  %v2114 = vperm.slane %v2067, 0
  %v2116 = vmul.f32 %v2111, %v2114
  %v2117 = vmul.f32 %v2112, %v2114
  %v2119 = vperm.slane %v2068, 0
  %v2121 = vadd.f32 %v2116, %v2119
  %v2122 = vadd.f32 %v2117, %v2119
  %v2123 = vmul.f32 %v2121, %v2058
  %v2124 = vmul.f32 %v2122, %v2063
  %v2125 = vld [vmem:[%s3] sm:$0xff]
  %v2126 = vld [vmem:[%s3 + $0x8] sm:$0xff]
  %v2127 = vadd.f32 %v2123, %v2125
  %v2128 = vadd.f32 %v2124, %v2126
  %2129 = vst.msk [vmem:[%s69] sm:$0xff] %vm181, %v2127
  %2130 = vst.msk [vmem:[%s69 + $0x8] sm:$0xff] %vm181, %v2128
  %v2131 = vld [vmem:[%s49] sm:$0xf]
  %v2132 = vld [vmem:[%s49 + $0x4] sm:$0xf]
  %v2133 = vld [vmem:[%s49 + $0x8] sm:$0xf]
  %v2134 = vld [vmem:[%s49 + $0xc] sm:$0xf]
  %v2135 = vld [vmem:[%s49 + $0x10] sm:$0xf]
  %v2136 = vld [vmem:[%s49 + $0x14] sm:$0xf]
  %v2137 = vld [vmem:[%s49 + $0x18] sm:$0xf]
  %v2138 = vld [vmem:[%s49 + $0x1c] sm:$0xf]
  %v2139 = vld [vmem:[%s49 + $0x20] sm:$0xf]
  %v2140 = vld [vmem:[%s49 + $0x24] sm:$0xf]
  %v2141 = vld [vmem:[%s49 + $0x28] sm:$0xf]
  %v2142 = vld [vmem:[%s49 + $0x2c] sm:$0xf]
  %v2143 = vld [vmem:[%s51] sm:$0x1]
  %v2144 = vpack.c.bf16 %v2128, %v2127
  %2145 = vmatpush.bf16.msra.mxu0 0
  %2146 = vmatpush.bf16.msra.mxu0 0
  %2147 = vmatpush.bf16.msra.mxu0 0
  %2148 = vmatpush.bf16.msra.mxu0 0
  %2149 = vmatpush.bf16.msra.mxu0 0
  %2150 = vmatpush.bf16.msra.mxu0 0
  %2151 = vmatpush.bf16.msra.mxu0 0
  %2152 = vmatpush.bf16.msra.mxu0 %v2144
  %2153 = vmatmul.bf16.gmra.mxu0 %v645
  %v2154 = vpop.f32.mrf.mxu0
  %v2155 = vadd.f32 0.0, %v2154
  %v2156 = vpop.f32.mrf.mxu0
  %v2157 = vadd.f32 0.0, %v2156
  %2158 = vdwg.mxu0
  %v2159 = vpack.c.bf16 %v2157, %v2155
  %2160 = vmatpush.bf16.msra.mxu0 0
  %2161 = vmatpush.bf16.msra.mxu0 0
  %2162 = vmatpush.bf16.msra.mxu0 0
  %2163 = vmatpush.bf16.msra.mxu0 0
  %2164 = vmatpush.bf16.msra.mxu0 0
  %2165 = vmatpush.bf16.msra.mxu0 0
  %2166 = vmatpush.bf16.msra.mxu0 0
  %2167 = vmatpush.bf16.msra.mxu0 %v2144
  %2168 = vmatmul.bf16.gmra.mxu0 %v663
  %v2169 = vpop.f32.mrf.mxu0
  %v2170 = vadd.f32 0.0, %v2169
  %v2171 = vpop.f32.mrf.mxu0
  %v2172 = vadd.f32 0.0, %v2171
  %2173 = vdwg.mxu0
  %v2174 = vpack.c.bf16 %v2172, %v2170
  %v2179 = vunpack.c.l.b16 %v2135
  %v2180 = vunpack.c.l.b16 %v2136
  %v2181 = vunpack.c.l.b16 %v2137
  %v2182 = vunpack.c.l.b16 %v2138
  %v2183 = vpack.c.b16 %v2180, %v2179
  %v2184 = vpack.c.b16 %v2182, %v2181
  %v2188 = vsel %vm181, %v2144, 0
  %2190 = vmatpush.bf16.msra.mxu0 0
  %2191 = vmatpush.bf16.msra.mxu0 0
  %2192 = vmatpush.bf16.msra.mxu0 0
  %2193 = vmatpush.bf16.msra.mxu0 0
  %2194 = vmatpush.bf16.msra.mxu0 0
  %2195 = vmatpush.bf16.msra.mxu0 0
  %2196 = vmatpush.bf16.msra.mxu0 %v2184
  %2197 = vmatpush.bf16.msra.mxu0 %v2183
  %2198 = vmatmul.bf16.gmra.mxu0 %v2188
  %v2199 = vpop.f32.mrf.mxu0
  %v2200 = vadd.f32 0.0, %v2199
  %v2201 = vpop.f32.mrf.mxu0
  %v2202 = vadd.f32 0.0, %v2201
  %2203 = vdwg.mxu0
  %v2208 = vunpack.c.l.b16 %v2131
  %v2209 = vunpack.c.l.b16 %v2132
  %v2210 = vunpack.c.l.b16 %v2133
  %v2211 = vunpack.c.l.b16 %v2134
  %v2212 = vpack.c.b16 %v2209, %v2208
  %v2213 = vpack.c.b16 %v2211, %v2210
  %v2217 = vsel %vm181, %v2159, 0
  %2219 = vmatpush.bf16.msra.mxu0 0
  %2220 = vmatpush.bf16.msra.mxu0 0
  %2221 = vmatpush.bf16.msra.mxu0 0
  %2222 = vmatpush.bf16.msra.mxu0 0
  %2223 = vmatpush.bf16.msra.mxu0 0
  %2224 = vmatpush.bf16.msra.mxu0 0
  %2225 = vmatpush.bf16.msra.mxu0 %v2213
  %2226 = vmatpush.bf16.msra.mxu0 %v2212
  %2227 = vmatmul.bf16.gmra.mxu0 %v2217
  %v2228 = vpop.f32.mrf.mxu0
  %v2229 = vadd.f32 %v2200, %v2228
  %v2230 = vpop.f32.mrf.mxu0
  %v2231 = vadd.f32 %v2202, %v2230
  %2232 = vdwg.mxu0
  %v2237 = vunpack.c.l.b16 %v2139
  %v2238 = vunpack.c.l.b16 %v2140
  %v2239 = vunpack.c.l.b16 %v2141
  %v2240 = vunpack.c.l.b16 %v2142
  %v2241 = vpack.c.b16 %v2238, %v2237
  %v2242 = vpack.c.b16 %v2240, %v2239
  %v2246 = vsel %vm181, %v2174, 0
  %2248 = vmatpush.bf16.msra.mxu0 0
  %2249 = vmatpush.bf16.msra.mxu0 0
  %2250 = vmatpush.bf16.msra.mxu0 0
  %2251 = vmatpush.bf16.msra.mxu0 0
  %2252 = vmatpush.bf16.msra.mxu0 0
  %2253 = vmatpush.bf16.msra.mxu0 0
  %2254 = vmatpush.bf16.msra.mxu0 %v2242
  %2255 = vmatpush.bf16.msra.mxu0 %v2241
  %2256 = vmatmul.bf16.gmra.mxu0 %v2246
  %v2257 = vpop.f32.mrf.mxu0
  %v2258 = vadd.f32 0.0, %v2257
  %v2259 = vpop.f32.mrf.mxu0
  %v2260 = vadd.f32 0.0, %v2259
  %2261 = vdwg.mxu0
  %v2262 = vadd.f32 %v2229, %v2258
  %v2263 = vadd.f32 %v2231, %v2260
  %v2265 = vperm.slane %v2143, 0
  %v2267 = vadd.f32 %v2262, %v2265
  %v2268 = vadd.f32 %v2263, %v2265
  %v2269 = vmax.f32 %v2267, 0.0
  %v2270 = vmax.f32 %v2268, 0.0
  %v2271 = vld [vmem:[%s53] sm:$0x1]
  %v2272 = vld [vmem:[%s55] sm:$0x1]
  %v2273 = vsel %vm181, %v2269, 0.0
  %2274 = vadd.xlane.f32.xlu0 %v2273
  %v2275 = vpop.xlane.xlu0 %2274
  %v2276 = vsel %vm181, %v2270, 0.0
  %2277 = vadd.xlane.f32.xlu0 %v2276
  %v2278 = vpop.xlane.xlu0 %2277
  %v2279 = vmul.f32 %v2275, %v581
  %v2280 = vmul.f32 %v2278, %v581
  %v2281 = vsub.f32 %v2269, %v2279
  %v2282 = vsub.f32 %v2270, %v2280
  %v2283 = vmul.f32 %v2281, %v2281
  %v2284 = vmul.f32 %v2282, %v2282
  %v2285 = vsel %vm181, %v2283, 0.0
  %2286 = vadd.xlane.f32.xlu0 %v2285
  %v2287 = vpop.xlane.xlu0 %2286
  %v2288 = vsel %vm181, %v2284, 0.0
  %2289 = vadd.xlane.f32.xlu0 %v2288
  %v2290 = vpop.xlane.xlu0 %2289
  %v2291 = vmul.f32 %v2287, %v581
  %v2292 = vmul.f32 %v2290, %v581
  %v2293 = vadd.f32 %v2291, 1e-05
  %v2294 = vadd.f32 %v2292, 1e-05
  %v2295 = vrsqrt.pop %v2293
  %v2296 = vmul.f32 %v2295, %v2293
  %v2297 = vmul.f32 %v2296, %v2295
  %v2298 = vmul.f32 0.5, %v2297
  %v2299 = vsub.f32 1.5, %v2298
  %v2300 = vmul.f32 %v2295, %v2299
  %vm2301 = vweird.f32 %v2293
  %vm2302 = vweird.f32 %v2295
  %vm2303 = vmor %vm2301, %vm2302
  %v2304 = vsel %vm2303, %v2295, %v2300
  %v2305 = vrsqrt.pop %v2294
  %v2306 = vmul.f32 %v2305, %v2294
  %v2307 = vmul.f32 %v2306, %v2305
  %v2308 = vmul.f32 0.5, %v2307
  %v2309 = vsub.f32 1.5, %v2308
  %v2310 = vmul.f32 %v2305, %v2309
  %vm2311 = vweird.f32 %v2294
  %vm2312 = vweird.f32 %v2305
  %vm2313 = vmor %vm2311, %vm2312
  %v2314 = vsel %vm2313, %v2305, %v2310
  %v2315 = vmul.f32 %v2281, %v2304
  %v2316 = vmul.f32 %v2282, %v2314
  %v2318 = vperm.slane %v2271, 0
  %v2320 = vmul.f32 %v2315, %v2318
  %v2321 = vmul.f32 %v2316, %v2318
  %v2323 = vperm.slane %v2272, 0
  %v2325 = vadd.f32 %v2320, %v2323
  %v2326 = vadd.f32 %v2321, %v2323
  %v2327 = vld [vmem:[%s57] sm:$0xf]
  %v2328 = vld [vmem:[%s57 + $0x4] sm:$0xf]
  %v2329 = vld [vmem:[%s57 + $0x8] sm:$0xf]
  %v2330 = vld [vmem:[%s57 + $0xc] sm:$0xf]
  %v2331 = vld [vmem:[%s57 + $0x10] sm:$0xf]
  %v2332 = vld [vmem:[%s57 + $0x14] sm:$0xf]
  %v2333 = vld [vmem:[%s57 + $0x18] sm:$0xf]
  %v2334 = vld [vmem:[%s57 + $0x1c] sm:$0xf]
  %v2335 = vld [vmem:[%s57 + $0x20] sm:$0xf]
  %v2336 = vld [vmem:[%s57 + $0x24] sm:$0xf]
  %v2337 = vld [vmem:[%s57 + $0x28] sm:$0xf]
  %v2338 = vld [vmem:[%s57 + $0x2c] sm:$0xf]
  %v2339 = vld [vmem:[%s59] sm:$0x1]
  %v2340 = vpack.c.bf16 %v2326, %v2325
  %2341 = vmatpush.bf16.msra.mxu0 0
  %2342 = vmatpush.bf16.msra.mxu0 0
  %2343 = vmatpush.bf16.msra.mxu0 0
  %2344 = vmatpush.bf16.msra.mxu0 0
  %2345 = vmatpush.bf16.msra.mxu0 0
  %2346 = vmatpush.bf16.msra.mxu0 0
  %2347 = vmatpush.bf16.msra.mxu0 0
  %2348 = vmatpush.bf16.msra.mxu0 %v2340
  %2349 = vmatmul.bf16.gmra.mxu0 %v645
  %v2350 = vpop.f32.mrf.mxu0
  %v2351 = vadd.f32 0.0, %v2350
  %v2352 = vpop.f32.mrf.mxu0
  %v2353 = vadd.f32 0.0, %v2352
  %2354 = vdwg.mxu0
  %v2355 = vpack.c.bf16 %v2353, %v2351
  %2356 = vmatpush.bf16.msra.mxu0 0
  %2357 = vmatpush.bf16.msra.mxu0 0
  %2358 = vmatpush.bf16.msra.mxu0 0
  %2359 = vmatpush.bf16.msra.mxu0 0
  %2360 = vmatpush.bf16.msra.mxu0 0
  %2361 = vmatpush.bf16.msra.mxu0 0
  %2362 = vmatpush.bf16.msra.mxu0 0
  %2363 = vmatpush.bf16.msra.mxu0 %v2340
  %2364 = vmatmul.bf16.gmra.mxu0 %v663
  %v2365 = vpop.f32.mrf.mxu0
  %v2366 = vadd.f32 0.0, %v2365
  %v2367 = vpop.f32.mrf.mxu0
  %v2368 = vadd.f32 0.0, %v2367
  %2369 = vdwg.mxu0
  %v2370 = vpack.c.bf16 %v2368, %v2366
  %v2375 = vunpack.c.l.b16 %v2331
  %v2376 = vunpack.c.l.b16 %v2332
  %v2377 = vunpack.c.l.b16 %v2333
  %v2378 = vunpack.c.l.b16 %v2334
  %v2379 = vpack.c.b16 %v2376, %v2375
  %v2380 = vpack.c.b16 %v2378, %v2377
  %v2384 = vsel %vm181, %v2340, 0
  %2386 = vmatpush.bf16.msra.mxu0 0
  %2387 = vmatpush.bf16.msra.mxu0 0
  %2388 = vmatpush.bf16.msra.mxu0 0
  %2389 = vmatpush.bf16.msra.mxu0 0
  %2390 = vmatpush.bf16.msra.mxu0 0
  %2391 = vmatpush.bf16.msra.mxu0 0
  %2392 = vmatpush.bf16.msra.mxu0 %v2380
  %2393 = vmatpush.bf16.msra.mxu0 %v2379
  %2394 = vmatmul.bf16.gmra.mxu0 %v2384
  %v2395 = vpop.f32.mrf.mxu0
  %v2396 = vadd.f32 0.0, %v2395
  %v2397 = vpop.f32.mrf.mxu0
  %v2398 = vadd.f32 0.0, %v2397
  %2399 = vdwg.mxu0
  %v2404 = vunpack.c.l.b16 %v2327
  %v2405 = vunpack.c.l.b16 %v2328
  %v2406 = vunpack.c.l.b16 %v2329
  %v2407 = vunpack.c.l.b16 %v2330
  %v2408 = vpack.c.b16 %v2405, %v2404
  %v2409 = vpack.c.b16 %v2407, %v2406
  %v2413 = vsel %vm181, %v2355, 0
  %2415 = vmatpush.bf16.msra.mxu0 0
  %2416 = vmatpush.bf16.msra.mxu0 0
  %2417 = vmatpush.bf16.msra.mxu0 0
  %2418 = vmatpush.bf16.msra.mxu0 0
  %2419 = vmatpush.bf16.msra.mxu0 0
  %2420 = vmatpush.bf16.msra.mxu0 0
  %2421 = vmatpush.bf16.msra.mxu0 %v2409
  %2422 = vmatpush.bf16.msra.mxu0 %v2408
  %2423 = vmatmul.bf16.gmra.mxu0 %v2413
  %v2424 = vpop.f32.mrf.mxu0
  %v2425 = vadd.f32 %v2396, %v2424
  %v2426 = vpop.f32.mrf.mxu0
  %v2427 = vadd.f32 %v2398, %v2426
  %2428 = vdwg.mxu0
  %v2433 = vunpack.c.l.b16 %v2335
  %v2434 = vunpack.c.l.b16 %v2336
  %v2435 = vunpack.c.l.b16 %v2337
  %v2436 = vunpack.c.l.b16 %v2338
  %v2437 = vpack.c.b16 %v2434, %v2433
  %v2438 = vpack.c.b16 %v2436, %v2435
  %v2442 = vsel %vm181, %v2370, 0
  %2444 = vmatpush.bf16.msra.mxu0 0
  %2445 = vmatpush.bf16.msra.mxu0 0
  %2446 = vmatpush.bf16.msra.mxu0 0
  %2447 = vmatpush.bf16.msra.mxu0 0
  %2448 = vmatpush.bf16.msra.mxu0 0
  %2449 = vmatpush.bf16.msra.mxu0 0
  %2450 = vmatpush.bf16.msra.mxu0 %v2438
  %2451 = vmatpush.bf16.msra.mxu0 %v2437
  %2452 = vmatmul.bf16.gmra.mxu0 %v2442
  %v2453 = vpop.f32.mrf.mxu0
  %v2454 = vadd.f32 0.0, %v2453
  %v2455 = vpop.f32.mrf.mxu0
  %v2456 = vadd.f32 0.0, %v2455
  %2457 = vdwg.mxu0
  %v2458 = vadd.f32 %v2425, %v2454
  %v2459 = vadd.f32 %v2427, %v2456
  %v2461 = vperm.slane %v2339, 0
  %v2463 = vadd.f32 %v2458, %v2461
  %v2464 = vadd.f32 %v2459, %v2461
  %v2465 = vmax.f32 %v2463, 0.0
  %v2466 = vmax.f32 %v2464, 0.0
  %v2467 = vld [vmem:[%s61] sm:$0x1]
  %v2468 = vld [vmem:[%s63] sm:$0x1]
  %v2469 = vsel %vm181, %v2465, 0.0
  %2470 = vadd.xlane.f32.xlu0 %v2469
  %v2471 = vpop.xlane.xlu0 %2470
  %v2472 = vsel %vm181, %v2466, 0.0
  %2473 = vadd.xlane.f32.xlu0 %v2472
  %v2474 = vpop.xlane.xlu0 %2473
  %v2475 = vmul.f32 %v2471, %v581
  %v2476 = vmul.f32 %v2474, %v581
  %v2477 = vsub.f32 %v2465, %v2475
  %v2478 = vsub.f32 %v2466, %v2476
  %v2479 = vmul.f32 %v2477, %v2477
  %v2480 = vmul.f32 %v2478, %v2478
  %v2481 = vsel %vm181, %v2479, 0.0
  %2482 = vadd.xlane.f32.xlu0 %v2481
  %v2483 = vpop.xlane.xlu0 %2482
  %v2484 = vsel %vm181, %v2480, 0.0
  %2485 = vadd.xlane.f32.xlu0 %v2484
  %v2486 = vpop.xlane.xlu0 %2485
  %v2487 = vmul.f32 %v2483, %v581
  %v2488 = vmul.f32 %v2486, %v581
  %v2489 = vadd.f32 %v2487, 1e-05
  %v2490 = vadd.f32 %v2488, 1e-05
  %v2491 = vrsqrt.pop %v2489
  %v2492 = vmul.f32 %v2491, %v2489
  %v2493 = vmul.f32 %v2492, %v2491
  %v2494 = vmul.f32 0.5, %v2493
  %v2495 = vsub.f32 1.5, %v2494
  %v2496 = vmul.f32 %v2491, %v2495
  %vm2497 = vweird.f32 %v2489
  %vm2498 = vweird.f32 %v2491
  %vm2499 = vmor %vm2497, %vm2498
  %v2500 = vsel %vm2499, %v2491, %v2496
  %v2501 = vrsqrt.pop %v2490
  %v2502 = vmul.f32 %v2501, %v2490
  %v2503 = vmul.f32 %v2502, %v2501
  %v2504 = vmul.f32 0.5, %v2503
  %v2505 = vsub.f32 1.5, %v2504
  %v2506 = vmul.f32 %v2501, %v2505
  %vm2507 = vweird.f32 %v2490
  %vm2508 = vweird.f32 %v2501
  %vm2509 = vmor %vm2507, %vm2508
  %v2510 = vsel %vm2509, %v2501, %v2506
  %v2511 = vmul.f32 %v2477, %v2500
  %v2512 = vmul.f32 %v2478, %v2510
  %v2514 = vperm.slane %v2467, 0
  %v2516 = vmul.f32 %v2511, %v2514
  %v2517 = vmul.f32 %v2512, %v2514
  %v2519 = vperm.slane %v2468, 0
  %v2521 = vadd.f32 %v2516, %v2519
  %v2522 = vadd.f32 %v2517, %v2519
  %v2523 = vld [vmem:[%s65] sm:$0x1]
  %v2525 = vperm.slane %v2523, 0
  %v2527 = vmul.f32 %v2521, %v2525
  %v2528 = vmul.f32 %v2522, %v2525
  %v2529 = vsel %vm181, %v2527, 0.0
  %2530 = vadd.xlane.f32.xlu0 %v2529
  %v2531 = vpop.xlane.xlu0 %2530
  %v2532 = vsel %vm181, %v2528, 0.0
  %2533 = vadd.xlane.f32.xlu0 %v2532
  %v2534 = vpop.xlane.xlu0 %2533
  %v2535 = vld [vmem:[#allocation2] sm:$0x1]
  %v2537 = vperm.slane %v2535, 0
  %v2539 = vadd.f32 %v2531, %v2537
  %v2540 = vadd.f32 %v2534, %v2537
  %vm2541 = vcmask 7168
  %2542 = vst.msk [vmem:[%s71] sm:$0xff] %vm2541, %v2539
  %2543 = vst.msk [vmem:[%s71 + $0x8] sm:$0xff] %vm2541, %v2540
  // Predicated region
  $region138: #{multi_speaker_fastspeech.2} parent=0 // pred_check
    _
  $region139: #{multi_speaker_fastspeech.2} parent=0 // pred_check_branch
    %2545 = sbr.rel (0) target = $region141
  $region140: #{multi_speaker_fastspeech.2} parent=0 // pred_region
    _
  $region141: #{multi_speaker_fastspeech.2} parent=0 // pred_fallthru
    _
  // Predicated region
  $region142: #{multi_speaker_fastspeech.2} parent=0 // pred_check
    _
  $region143: #{multi_speaker_fastspeech.2} parent=0 // pred_check_branch
    %2547 = sbr.rel (0) target = $region145
  $region144: #{multi_speaker_fastspeech.2} parent=0 // pred_region
    _
  $region145: #{multi_speaker_fastspeech.2} parent=0 // pred_fallthru
    _
  // Predicated region
  $region146: #{multi_speaker_fastspeech.2} parent=0 // pred_check
    _
  $region147: #{multi_speaker_fastspeech.2} parent=0 // pred_check_branch
    %2549 = sbr.rel (0) target = $region149
  $region148: #{multi_speaker_fastspeech.2} parent=0 // pred_region
    _
  $region149: #{multi_speaker_fastspeech.2} parent=0 // pred_fallthru
    _
  // Predicated region
  $region150: #{multi_speaker_fastspeech.2} parent=0 // pred_check
    _
  $region151: #{multi_speaker_fastspeech.2} parent=0 // pred_check_branch
    %2551 = sbr.rel (0) target = $region153
  $region152: #{multi_speaker_fastspeech.2} parent=0 // pred_region
    _
  $region153: #{multi_speaker_fastspeech.2} parent=0 // pred_fallthru
    _

// kernel: multi_speaker_fastspeech.3
$region0: #{multi_speaker_fastspeech.3}
  #allocation0 [shape = 'u32[]', space=smem, size = 0x4, offset = 0x4, fixed_abs, tag = 'smem constant byte address 0x4 - core index']
  #allocation1 [shape = 'u32[72,128]{1,0:T(1,128)}', space=vmem, size = 0x9000, scoped, tag = 'internal scratch']
  %s0 = inlined_call_operand.vmem [shape: f32[28,32], index: 0, kind: input, shape index: {}]
  %s1 = inlined_call_operand.vmem [shape: f32[28,32], index: 1, kind: input, shape index: {}]
  %s2 = inlined_call_operand.vmem [shape: f32[1,28,28], index: 2, kind: input, shape index: {}]
  %s3 = inlined_call_operand.vmem [shape: f32[1,28,28], index: 3, kind: input, shape index: {}]
  %s4 = inlined_call_operand.vmem [shape: f32[1,28,28], index: 4, kind: input, shape index: {}]
  %s5 = inlined_call_operand.vmem [shape: f32[28,1], index: 5, kind: input, shape index: {}]
  %s6 = inlined_call_operand.vmem [shape: bf16[2,2,32,16], index: 6, kind: input, shape index: {}]
  %s7 = inlined_call_operand.vmem [shape: bf16[2,2,32,16], index: 7, kind: input, shape index: {}]
  %s8 = inlined_call_operand.vmem [shape: bf16[2,2,32,16], index: 8, kind: input, shape index: {}]
  %s9 = inlined_call_operand.vmem [shape: f32[2,2,1,16], index: 9, kind: input, shape index: {}]
  %s10 = inlined_call_operand.vmem [shape: f32[2,2,1,16], index: 10, kind: input, shape index: {}]
  %s11 = inlined_call_operand.vmem [shape: f32[2,2,1,16], index: 11, kind: input, shape index: {}]
  %s12 = inlined_call_operand.vmem [shape: bf16[2,2,16,32], index: 12, kind: input, shape index: {}]
  %s13 = inlined_call_operand.vmem [shape: f32[2,1,32], index: 13, kind: input, shape index: {}]
  %s14 = inlined_call_operand.vmem [shape: f32[2,1,32], index: 14, kind: input, shape index: {}]
  %s15 = inlined_call_operand.vmem [shape: f32[2,1,32], index: 15, kind: input, shape index: {}]
  %s16 = inlined_call_operand.vmem [shape: f32[2,1,32], index: 16, kind: input, shape index: {}]
  %s17 = inlined_call_operand.vmem [shape: f32[2,1,32], index: 17, kind: input, shape index: {}]
  %s18 = inlined_call_operand.vmem [shape: bf16[2,3,32,128], index: 18, kind: input, shape index: {}]
  %s19 = inlined_call_operand.vmem [shape: f32[2,1,128], index: 19, kind: input, shape index: {}]
  %s20 = inlined_call_operand.vmem [shape: bf16[2,3,128,32], index: 20, kind: input, shape index: {}]
  %s21 = inlined_call_operand.vmem [shape: f32[2,1,32], index: 21, kind: input, shape index: {}]
  %s22 = inlined_call_operand.vmem [shape: f32[1,32], index: 22, kind: input, shape index: {}]
  %s23 = inlined_call_operand.vmem [shape: f32[1,32], index: 23, kind: input, shape index: {}]
  %s24 = inlined_call_operand.vmem [shape: bf16[32,128], index: 24, kind: input, shape index: {}]
  %s25 = inlined_call_operand.vmem [shape: f32[1,128], index: 25, kind: input, shape index: {}]
  %s26 = inlined_call_operand.vmem [shape: f32[28,128], index: 26, kind: output, shape index: {}]
  %s27 = sld [smem:[#allocation0]]
  $region114: #{multi_speaker_fastspeech.3} parent=0
    _
  %s29 = ssub.s32 1, %s27
  %s30 = scalar_select 0, %s29, %s27
  // Predicated region
  $region2: #{multi_speaker_fastspeech.3} parent=0 // pred_check
    _
  $region3: #{multi_speaker_fastspeech.3} parent=0 // pred_check_branch
    %32 = sbr.rel (0) target = $region5
  $region4: #{multi_speaker_fastspeech.3} parent=0 // pred_region
    _
  $region5: #{multi_speaker_fastspeech.3} parent=0 // pred_fallthru
    _
  // Predicated region
  $region6: #{multi_speaker_fastspeech.3} parent=0 // pred_check
    _
  $region7: #{multi_speaker_fastspeech.3} parent=0 // pred_check_branch
    %34 = sbr.rel (0) target = $region9
  $region8: #{multi_speaker_fastspeech.3} parent=0 // pred_region
    _
  $region9: #{multi_speaker_fastspeech.3} parent=0 // pred_fallthru
    _
  // Predicated region
  $region10: #{multi_speaker_fastspeech.3} parent=0 // pred_check
    _
  $region11: #{multi_speaker_fastspeech.3} parent=0 // pred_check_branch
    %36 = sbr.rel (0) target = $region13
  $region12: #{multi_speaker_fastspeech.3} parent=0 // pred_region
    _
  $region13: #{multi_speaker_fastspeech.3} parent=0 // pred_fallthru
    _
  // Predicated region
  $region14: #{multi_speaker_fastspeech.3} parent=0 // pred_check
    _
  $region15: #{multi_speaker_fastspeech.3} parent=0 // pred_check_branch
    %38 = sbr.rel (0) target = $region17
  $region16: #{multi_speaker_fastspeech.3} parent=0 // pred_region
    _
  $region17: #{multi_speaker_fastspeech.3} parent=0 // pred_fallthru
    _
  // Predicated region
  $region18: #{multi_speaker_fastspeech.3} parent=0 // pred_check
    _
  $region19: #{multi_speaker_fastspeech.3} parent=0 // pred_check_branch
    %40 = sbr.rel (0) target = $region21
  $region20: #{multi_speaker_fastspeech.3} parent=0 // pred_region
    _
  $region21: #{multi_speaker_fastspeech.3} parent=0 // pred_fallthru
    _
  // Predicated region
  $region22: #{multi_speaker_fastspeech.3} parent=0 // pred_check
    _
  $region23: #{multi_speaker_fastspeech.3} parent=0 // pred_check_branch
    %42 = sbr.rel (0) target = $region25
  $region24: #{multi_speaker_fastspeech.3} parent=0 // pred_region
    _
  $region25: #{multi_speaker_fastspeech.3} parent=0 // pred_fallthru
    _
  // Predicated region
  $region26: #{multi_speaker_fastspeech.3} parent=0 // pred_check
    _
  $region27: #{multi_speaker_fastspeech.3} parent=0 // pred_check_branch
    %44 = sbr.rel (0) target = $region29
  $region28: #{multi_speaker_fastspeech.3} parent=0 // pred_region
    _
  $region29: #{multi_speaker_fastspeech.3} parent=0 // pred_fallthru
    _
  // Predicated region
  $region30: #{multi_speaker_fastspeech.3} parent=0 // pred_check
    _
  $region31: #{multi_speaker_fastspeech.3} parent=0 // pred_check_branch
    %46 = sbr.rel (0) target = $region33
  $region32: #{multi_speaker_fastspeech.3} parent=0 // pred_region
    _
  $region33: #{multi_speaker_fastspeech.3} parent=0 // pred_fallthru
    _
  // Predicated region
  $region34: #{multi_speaker_fastspeech.3} parent=0 // pred_check
    _
  $region35: #{multi_speaker_fastspeech.3} parent=0 // pred_check_branch
    %48 = sbr.rel (0) target = $region37
  $region36: #{multi_speaker_fastspeech.3} parent=0 // pred_region
    _
  $region37: #{multi_speaker_fastspeech.3} parent=0 // pred_fallthru
    _
  // Predicated region
  $region38: #{multi_speaker_fastspeech.3} parent=0 // pred_check
    _
  $region39: #{multi_speaker_fastspeech.3} parent=0 // pred_check_branch
    %50 = sbr.rel (0) target = $region41
  $region40: #{multi_speaker_fastspeech.3} parent=0 // pred_region
    _
  $region41: #{multi_speaker_fastspeech.3} parent=0 // pred_fallthru
    _
  // Predicated region
  $region42: #{multi_speaker_fastspeech.3} parent=0 // pred_check
    _
  $region43: #{multi_speaker_fastspeech.3} parent=0 // pred_check_branch
    %52 = sbr.rel (0) target = $region45
  $region44: #{multi_speaker_fastspeech.3} parent=0 // pred_region
    _
  $region45: #{multi_speaker_fastspeech.3} parent=0 // pred_fallthru
    _
  // Predicated region
  $region46: #{multi_speaker_fastspeech.3} parent=0 // pred_check
    _
  $region47: #{multi_speaker_fastspeech.3} parent=0 // pred_check_branch
    %54 = sbr.rel (0) target = $region49
  $region48: #{multi_speaker_fastspeech.3} parent=0 // pred_region
    _
  $region49: #{multi_speaker_fastspeech.3} parent=0 // pred_fallthru
    _
  // Predicated region
  $region50: #{multi_speaker_fastspeech.3} parent=0 // pred_check
    _
  $region51: #{multi_speaker_fastspeech.3} parent=0 // pred_check_branch
    %56 = sbr.rel (0) target = $region53
  $region52: #{multi_speaker_fastspeech.3} parent=0 // pred_region
    _
  $region53: #{multi_speaker_fastspeech.3} parent=0 // pred_fallthru
    _
  // Predicated region
  $region54: #{multi_speaker_fastspeech.3} parent=0 // pred_check
    _
  $region55: #{multi_speaker_fastspeech.3} parent=0 // pred_check_branch
    %58 = sbr.rel (0) target = $region57
  $region56: #{multi_speaker_fastspeech.3} parent=0 // pred_region
    _
  $region57: #{multi_speaker_fastspeech.3} parent=0 // pred_fallthru
    _
  // Predicated region
  $region58: #{multi_speaker_fastspeech.3} parent=0 // pred_check
    _
  $region59: #{multi_speaker_fastspeech.3} parent=0 // pred_check_branch
    %60 = sbr.rel (0) target = $region61
  $region60: #{multi_speaker_fastspeech.3} parent=0 // pred_region
    _
  $region61: #{multi_speaker_fastspeech.3} parent=0 // pred_fallthru
    _
  // Predicated region
  $region62: #{multi_speaker_fastspeech.3} parent=0 // pred_check
    _
  $region63: #{multi_speaker_fastspeech.3} parent=0 // pred_check_branch
    %62 = sbr.rel (0) target = $region65
  $region64: #{multi_speaker_fastspeech.3} parent=0 // pred_region
    _
  $region65: #{multi_speaker_fastspeech.3} parent=0 // pred_fallthru
    _
  // Predicated region
  $region66: #{multi_speaker_fastspeech.3} parent=0 // pred_check
    _
  $region67: #{multi_speaker_fastspeech.3} parent=0 // pred_check_branch
    %64 = sbr.rel (0) target = $region69
  $region68: #{multi_speaker_fastspeech.3} parent=0 // pred_region
    _
  $region69: #{multi_speaker_fastspeech.3} parent=0 // pred_fallthru
    _
  // Predicated region
  $region70: #{multi_speaker_fastspeech.3} parent=0 // pred_check
    _
  $region71: #{multi_speaker_fastspeech.3} parent=0 // pred_check_branch
    %66 = sbr.rel (0) target = $region73
  $region72: #{multi_speaker_fastspeech.3} parent=0 // pred_region
    _
  $region73: #{multi_speaker_fastspeech.3} parent=0 // pred_fallthru
    _
  // Predicated region
  $region74: #{multi_speaker_fastspeech.3} parent=0 // pred_check
    _
  $region75: #{multi_speaker_fastspeech.3} parent=0 // pred_check_branch
    %68 = sbr.rel (0) target = $region77
  $region76: #{multi_speaker_fastspeech.3} parent=0 // pred_region
    _
  $region77: #{multi_speaker_fastspeech.3} parent=0 // pred_fallthru
    _
  // Predicated region
  $region78: #{multi_speaker_fastspeech.3} parent=0 // pred_check
    _
  $region79: #{multi_speaker_fastspeech.3} parent=0 // pred_check_branch
    %70 = sbr.rel (0) target = $region81
  $region80: #{multi_speaker_fastspeech.3} parent=0 // pred_region
    _
  $region81: #{multi_speaker_fastspeech.3} parent=0 // pred_fallthru
    _
  // Predicated region
  $region82: #{multi_speaker_fastspeech.3} parent=0 // pred_check
    _
  $region83: #{multi_speaker_fastspeech.3} parent=0 // pred_check_branch
    %72 = sbr.rel (0) target = $region85
  $region84: #{multi_speaker_fastspeech.3} parent=0 // pred_region
    _
  $region85: #{multi_speaker_fastspeech.3} parent=0 // pred_fallthru
    _
  // Predicated region
  $region86: #{multi_speaker_fastspeech.3} parent=0 // pred_check
    _
  $region87: #{multi_speaker_fastspeech.3} parent=0 // pred_check_branch
    %74 = sbr.rel (0) target = $region89
  $region88: #{multi_speaker_fastspeech.3} parent=0 // pred_region
    _
  $region89: #{multi_speaker_fastspeech.3} parent=0 // pred_fallthru
    _
  // Predicated region
  $region90: #{multi_speaker_fastspeech.3} parent=0 // pred_check
    _
  $region91: #{multi_speaker_fastspeech.3} parent=0 // pred_check_branch
    %76 = sbr.rel (0) target = $region93
  $region92: #{multi_speaker_fastspeech.3} parent=0 // pred_region
    _
  $region93: #{multi_speaker_fastspeech.3} parent=0 // pred_fallthru
    _
  // Predicated region
  $region94: #{multi_speaker_fastspeech.3} parent=0 // pred_check
    _
  $region95: #{multi_speaker_fastspeech.3} parent=0 // pred_check_branch
    %78 = sbr.rel (0) target = $region97
  $region96: #{multi_speaker_fastspeech.3} parent=0 // pred_region
    _
  $region97: #{multi_speaker_fastspeech.3} parent=0 // pred_fallthru
    _
  // Predicated region
  $region98: #{multi_speaker_fastspeech.3} parent=0 // pred_check
    _
  $region99: #{multi_speaker_fastspeech.3} parent=0 // pred_check_branch
    %80 = sbr.rel (0) target = $region101
  $region100: #{multi_speaker_fastspeech.3} parent=0 // pred_region
    _
  $region101: #{multi_speaker_fastspeech.3} parent=0 // pred_fallthru
    _
  // Predicated region
  $region102: #{multi_speaker_fastspeech.3} parent=0 // pred_check
    _
  $region103: #{multi_speaker_fastspeech.3} parent=0 // pred_check_branch
    %82 = sbr.rel (0) target = $region105
  $region104: #{multi_speaker_fastspeech.3} parent=0 // pred_region
    _
  $region105: #{multi_speaker_fastspeech.3} parent=0 // pred_fallthru
    _
  %v84 = vld [vmem:[%s3] sm:$0xff]
  %v85 = vld [vmem:[%s3 + $0x8] sm:$0xff]
  %v86 = vld [vmem:[%s3 + $0x10] sm:$0xff]
  %v87 = vld [vmem:[%s3 + $0x18] sm:$0xf]
  %v88 = vpack.c.bf16 %v85, %v84
  %v89 = vpack.c.bf16 %v87, %v86
  %v90 = vld [vmem:[%s4] sm:$0xff]
  %v91 = vld [vmem:[%s4 + $0x8] sm:$0xff]
  %v92 = vld [vmem:[%s4 + $0x10] sm:$0xff]
  %v93 = vld [vmem:[%s4 + $0x18] sm:$0xf]
  %v94 = vpack.c.bf16 %v91, %v90
  %v95 = vpack.c.bf16 %v93, %v92
  %v96 = vld [vmem:[%s5] sm:$0xff]
  %v97 = vld [vmem:[%s5 + $0x8] sm:$0xff]
  %v98 = vld [vmem:[%s5 + $0x10] sm:$0xff]
  %v99 = vld [vmem:[%s5 + $0x18] sm:$0xf]
  %v100 = vld [vmem:[%s0] sm:$0xff]
  %v101 = vld [vmem:[%s0 + $0x8] sm:$0xff]
  %v102 = vld [vmem:[%s0 + $0x10] sm:$0xff]
  %v103 = vld [vmem:[%s0 + $0x18] sm:$0xf]
  %v104 = vld [vmem:[%s1] sm:$0xff]
  %v105 = vld [vmem:[%s1 + $0x8] sm:$0xff]
  %v106 = vld [vmem:[%s1 + $0x10] sm:$0xff]
  %v107 = vld [vmem:[%s1 + $0x18] sm:$0xf]
  %v108 = vadd.f32 %v100, %v104
  %v109 = vadd.f32 %v101, %v105
  %v110 = vadd.f32 %v102, %v106
  %v111 = vadd.f32 %v103, %v107
  %v112 = vld [vmem:[%s2] sm:$0xff]
  %v113 = vld [vmem:[%s2 + $0x8] sm:$0xff]
  %v114 = vld [vmem:[%s2 + $0x10] sm:$0xff]
  %v115 = vld [vmem:[%s2 + $0x18] sm:$0xf]
  %v116 = vpack.c.bf16 %v109, %v108
  %v117 = vpack.c.bf16 %v111, %v110
  %v118 = vld [vmem:[%s6] sm:$0xf]
  %v119 = vld [vmem:[%s6 + $0x4] sm:$0xf]
  %v120 = vld [vmem:[%s6 + $0x8] sm:$0xf]
  %v121 = vld [vmem:[%s6 + $0xc] sm:$0xf]
  %v122 = vld [vmem:[%s9] sm:$0x1]
  %v124 = vperm.slane %v122, 0
  %v130 = vunpack.c.l.b16 %v118
  %v131 = vunpack.c.l.b16 %v119
  %v132 = vunpack.c.l.b16 %v120
  %v133 = vunpack.c.l.b16 %v121
  %v134 = vpack.c.b16 %v131, %v130
  %v135 = vpack.c.b16 %v133, %v132
  %vm138 = vcmask 261120
  %v140 = vsel %vm138, %v116, 0
  %v143 = vsel %vm138, %v117, 0
  %145 = vmatpush.bf16.msra.mxu0 0
  %146 = vmatpush.bf16.msra.mxu0 0
  %147 = vmatpush.bf16.msra.mxu0 0
  %148 = vmatpush.bf16.msra.mxu0 0
  %149 = vmatpush.bf16.msra.mxu0 0
  %150 = vmatpush.bf16.msra.mxu0 0
  %151 = vmatpush.bf16.msra.mxu0 %v135
  %152 = vmatpush.bf16.msra.mxu0 %v134
  %153 = vmatmul.bf16.gmra.mxu0 %v140
  %v154 = vpop.f32.mrf.mxu0
  %v155 = vadd.f32 %v124, %v154
  %v156 = vpop.f32.mrf.mxu0
  %v157 = vadd.f32 %v124, %v156
  %158 = vmatmul.bf16.gmra.mxu0 %v143
  %v159 = vpop.f32.mrf.mxu0
  %v160 = vadd.f32 %v124, %v159
  %v161 = vpop.f32.mrf.mxu0
  %v162 = vadd.f32 %v124, %v161
  %163 = vdwg.mxu0
  %v164 = vld [vmem:[%s7] sm:$0xf]
  %v165 = vld [vmem:[%s7 + $0x4] sm:$0xf]
  %v166 = vld [vmem:[%s7 + $0x8] sm:$0xf]
  %v167 = vld [vmem:[%s7 + $0xc] sm:$0xf]
  %v168 = vld [vmem:[%s10] sm:$0x1]
  %v170 = vperm.slane %v168, 0
  %v176 = vunpack.c.l.b16 %v164
  %v177 = vunpack.c.l.b16 %v165
  %v178 = vunpack.c.l.b16 %v166
  %v179 = vunpack.c.l.b16 %v167
  %v180 = vpack.c.b16 %v177, %v176
  %v181 = vpack.c.b16 %v179, %v178
  %184 = vmatpush.bf16.msra.mxu0 0
  %185 = vmatpush.bf16.msra.mxu0 0
  %186 = vmatpush.bf16.msra.mxu0 0
  %187 = vmatpush.bf16.msra.mxu0 0
  %188 = vmatpush.bf16.msra.mxu0 0
  %189 = vmatpush.bf16.msra.mxu0 0
  %190 = vmatpush.bf16.msra.mxu0 %v181
  %191 = vmatpush.bf16.msra.mxu0 %v180
  %192 = vmatmul.bf16.gmra.mxu0 %v140
  %v193 = vpop.f32.mrf.mxu0
  %v194 = vadd.f32 %v170, %v193
  %v195 = vpop.f32.mrf.mxu0
  %v196 = vadd.f32 %v170, %v195
  %197 = vmatmul.bf16.gmra.mxu0 %v143
  %v198 = vpop.f32.mrf.mxu0
  %v199 = vadd.f32 %v170, %v198
  %v200 = vpop.f32.mrf.mxu0
  %v201 = vadd.f32 %v170, %v200
  %202 = vdwg.mxu0
  %v203 = vld [vmem:[%s8] sm:$0xf]
  %v204 = vld [vmem:[%s8 + $0x4] sm:$0xf]
  %v205 = vld [vmem:[%s8 + $0x8] sm:$0xf]
  %v206 = vld [vmem:[%s8 + $0xc] sm:$0xf]
  %v207 = vld [vmem:[%s11] sm:$0x1]
  %v209 = vperm.slane %v207, 0
  %v215 = vunpack.c.l.b16 %v203
  %v216 = vunpack.c.l.b16 %v204
  %v217 = vunpack.c.l.b16 %v205
  %v218 = vunpack.c.l.b16 %v206
  %v219 = vpack.c.b16 %v216, %v215
  %v220 = vpack.c.b16 %v218, %v217
  %223 = vmatpush.bf16.msra.mxu0 0
  %224 = vmatpush.bf16.msra.mxu0 0
  %225 = vmatpush.bf16.msra.mxu0 0
  %226 = vmatpush.bf16.msra.mxu0 0
  %227 = vmatpush.bf16.msra.mxu0 0
  %228 = vmatpush.bf16.msra.mxu0 0
  %229 = vmatpush.bf16.msra.mxu0 %v220
  %230 = vmatpush.bf16.msra.mxu0 %v219
  %231 = vmatmul.bf16.gmra.mxu0 %v140
  %v232 = vpop.f32.mrf.mxu0
  %v233 = vadd.f32 %v209, %v232
  %v234 = vpop.f32.mrf.mxu0
  %v235 = vadd.f32 %v209, %v234
  %236 = vmatmul.bf16.gmra.mxu0 %v143
  %v237 = vpop.f32.mrf.mxu0
  %v238 = vadd.f32 %v209, %v237
  %v239 = vpop.f32.mrf.mxu0
  %v240 = vadd.f32 %v209, %v239
  %241 = vdwg.mxu0
  %v242 = vmul.f32 %v155, 0.25
  %v243 = vmul.f32 %v157, 0.25
  %v244 = vmul.f32 %v160, 0.25
  %v245 = vmul.f32 %v162, 0.25
  %v246 = vpack.c.bf16 %v243, %v242
  %v247 = vpack.c.bf16 %v245, %v244
  %v248 = vpack.c.bf16 %v196, %v194
  %v249 = vpack.c.bf16 %v201, %v199
  %vm250 = vcmask 130048
  %v252 = vsel %vm250, %v246, 0
  %v255 = vsel %vm250, %v247, 0
  %v258 = vsel %vm250, %v248, 0
  %v261 = vsel %vm250, %v249, 0
  %263 = vmatpush.bf16.xpose.msra.mxu0 0
  %264 = vmatpush.bf16.xpose.msra.mxu0 0
  %265 = vmatpush.bf16.xpose.msra.mxu0 0
  %266 = vmatpush.bf16.xpose.msra.mxu0 0
  %267 = vmatpush.bf16.xpose.msra.mxu0 0
  %268 = vmatpush.bf16.xpose.msra.mxu0 0
  %269 = vmatpush.bf16.xpose.msra.mxu0 %v261
  %270 = vmatpush.bf16.xpose.msra.mxu0 %v258
  %271 = vmatmul.bf16.gmra.mxu0 %v252
  %v272 = vpop.f32.mrf.mxu0
  %v273 = vadd.f32 %v112, %v272
  %v274 = vpop.f32.mrf.mxu0
  %v275 = vadd.f32 %v113, %v274
  %276 = vmatmul.bf16.gmra.mxu0 %v255
  %v277 = vpop.f32.mrf.mxu0
  %v278 = vadd.f32 %v114, %v277
  %v279 = vpop.f32.mrf.mxu0
  %v280 = vadd.f32 %v115, %v279
  %281 = vdwg.mxu0
  %vm282 = vcmask 228352
  %v283 = vsel %vm282, %v273, -inf
  %284 = vmax.xlane.f32.xlu0 %v283
  %v285 = vpop.xlane.xlu0 %284
  %v286 = vsel %vm282, %v275, -inf
  %287 = vmax.xlane.f32.xlu0 %v286
  %v288 = vpop.xlane.xlu0 %287
  %v289 = vsel %vm282, %v278, -inf
  %290 = vmax.xlane.f32.xlu0 %v289
  %v291 = vpop.xlane.xlu0 %290
  %vm292 = vcmask 224256
  %v293 = vsel %vm292, %v280, -inf
  %294 = vmax.xlane.f32.xlu0 %v293
  %v295 = vpop.xlane.xlu0 %294
  %v296 = vsub.f32 %v273, %v285
  %v297 = vsub.f32 %v275, %v288
  %v298 = vsub.f32 %v278, %v291
  %v299 = vsub.f32 %v280, %v295
  %v300 = vmul.f32 %v296, 1.442695
  %v301 = vpow.pop %v300
  %v302 = vmul.f32 %v297, 1.442695
  %v303 = vpow.pop %v302
  %v304 = vmul.f32 %v298, 1.442695
  %v305 = vpow.pop %v304
  %v306 = vmul.f32 %v299, 1.442695
  %v307 = vpow.pop %v306
  %v308 = vsel %vm282, %v301, 0.0
  %309 = vadd.xlane.f32.xlu0 %v308
  %v310 = vpop.xlane.xlu0 %309
  %v311 = vsel %vm282, %v303, 0.0
  %312 = vadd.xlane.f32.xlu0 %v311
  %v313 = vpop.xlane.xlu0 %312
  %v314 = vsel %vm282, %v305, 0.0
  %315 = vadd.xlane.f32.xlu0 %v314
  %v316 = vpop.xlane.xlu0 %315
  %v317 = vsel %vm292, %v307, 0.0
  %318 = vadd.xlane.f32.xlu0 %v317
  %v319 = vpop.xlane.xlu0 %318
  %v320 = vrcp.pop %v310
  %v321 = vrcp.pop %v313
  %v322 = vrcp.pop %v316
  %v323 = vrcp.pop %v319
  %v324 = vmul.f32 %v301, %v320
  %v325 = vmul.f32 %v303, %v321
  %v326 = vmul.f32 %v305, %v322
  %v327 = vmul.f32 %v307, %v323
  %v328 = vpack.c.bf16 %v325, %v324
  %v329 = vpack.c.bf16 %v327, %v326
  %v330 = vpack.c.bf16 %v235, %v233
  %v331 = vpack.c.bf16 %v240, %v238
  %v333 = vsel %vm282, %v328, 0
  %v336 = vsel %vm282, %v329, 0
  %vm338 = vcmask 1045504
  %v340 = vsel %vm338, %v331, 0
  %342 = vmatpush.bf16.msra.mxu0 0
  %343 = vmatpush.bf16.msra.mxu0 0
  %344 = vmatpush.bf16.msra.mxu0 0
  %345 = vmatpush.bf16.msra.mxu0 0
  %346 = vmatpush.bf16.msra.mxu0 0
  %347 = vmatpush.bf16.msra.mxu0 0
  %348 = vmatpush.bf16.msra.mxu0 %v340
  %349 = vmatpush.bf16.msra.mxu0 %v330
  %350 = vmatmul.bf16.gmra.mxu0 %v333
  %v351 = vpop.f32.mrf.mxu0
  %v352 = vadd.f32 0.0, %v351
  %v353 = vpop.f32.mrf.mxu0
  %v354 = vadd.f32 0.0, %v353
  %355 = vmatmul.bf16.gmra.mxu0 %v336
  %v356 = vpop.f32.mrf.mxu0
  %v357 = vadd.f32 0.0, %v356
  %v358 = vpop.f32.mrf.mxu0
  %v359 = vadd.f32 0.0, %v358
  %360 = vdwg.mxu0
  %v361 = vpack.c.bf16 %v354, %v352
  %v362 = vpack.c.bf16 %v359, %v357
  %v363 = vld [vmem:[%s12] sm:$0xf]
  %v364 = vld [vmem:[%s12 + $0x4] sm:$0xf]
  %s365 = scalar_lea.vmem %s6, 16
  %v366 = vld [vmem:[%s365] sm:$0xf]
  %v367 = vld [vmem:[%s365 + $0x4] sm:$0xf]
  %v368 = vld [vmem:[%s365 + $0x8] sm:$0xf]
  %v369 = vld [vmem:[%s365 + $0xc] sm:$0xf]
  %s370 = scalar_lea.vmem %s9, 1
  %v371 = vld [vmem:[%s370] sm:$0x1]
  %v373 = vperm.slane %v371, 0
  %v379 = vunpack.c.l.b16 %v366
  %v380 = vunpack.c.l.b16 %v367
  %v381 = vunpack.c.l.b16 %v368
  %v382 = vunpack.c.l.b16 %v369
  %v383 = vpack.c.b16 %v380, %v379
  %v384 = vpack.c.b16 %v382, %v381
  %387 = vmatpush.bf16.msra.mxu0 0
  %388 = vmatpush.bf16.msra.mxu0 0
  %389 = vmatpush.bf16.msra.mxu0 0
  %390 = vmatpush.bf16.msra.mxu0 0
  %391 = vmatpush.bf16.msra.mxu0 0
  %392 = vmatpush.bf16.msra.mxu0 0
  %393 = vmatpush.bf16.msra.mxu0 %v384
  %394 = vmatpush.bf16.msra.mxu0 %v383
  %395 = vmatmul.bf16.gmra.mxu0 %v140
  %v396 = vpop.f32.mrf.mxu0
  %v397 = vadd.f32 %v373, %v396
  %v398 = vpop.f32.mrf.mxu0
  %v399 = vadd.f32 %v373, %v398
  %400 = vmatmul.bf16.gmra.mxu0 %v143
  %v401 = vpop.f32.mrf.mxu0
  %v402 = vadd.f32 %v373, %v401
  %v403 = vpop.f32.mrf.mxu0
  %v404 = vadd.f32 %v373, %v403
  %405 = vdwg.mxu0
  %s406 = scalar_lea.vmem %s7, 16
  %v407 = vld [vmem:[%s406] sm:$0xf]
  %v408 = vld [vmem:[%s406 + $0x4] sm:$0xf]
  %v409 = vld [vmem:[%s406 + $0x8] sm:$0xf]
  %v410 = vld [vmem:[%s406 + $0xc] sm:$0xf]
  %s411 = scalar_lea.vmem %s10, 1
  %v412 = vld [vmem:[%s411] sm:$0x1]
  %v414 = vperm.slane %v412, 0
  %v420 = vunpack.c.l.b16 %v407
  %v421 = vunpack.c.l.b16 %v408
  %v422 = vunpack.c.l.b16 %v409
  %v423 = vunpack.c.l.b16 %v410
  %v424 = vpack.c.b16 %v421, %v420
  %v425 = vpack.c.b16 %v423, %v422
  %428 = vmatpush.bf16.msra.mxu0 0
  %429 = vmatpush.bf16.msra.mxu0 0
  %430 = vmatpush.bf16.msra.mxu0 0
  %431 = vmatpush.bf16.msra.mxu0 0
  %432 = vmatpush.bf16.msra.mxu0 0
  %433 = vmatpush.bf16.msra.mxu0 0
  %434 = vmatpush.bf16.msra.mxu0 %v425
  %435 = vmatpush.bf16.msra.mxu0 %v424
  %436 = vmatmul.bf16.gmra.mxu0 %v140
  %v437 = vpop.f32.mrf.mxu0
  %v438 = vadd.f32 %v414, %v437
  %v439 = vpop.f32.mrf.mxu0
  %v440 = vadd.f32 %v414, %v439
  %441 = vmatmul.bf16.gmra.mxu0 %v143
  %v442 = vpop.f32.mrf.mxu0
  %v443 = vadd.f32 %v414, %v442
  %v444 = vpop.f32.mrf.mxu0
  %v445 = vadd.f32 %v414, %v444
  %446 = vdwg.mxu0
  %s447 = scalar_lea.vmem %s8, 16
  %v448 = vld [vmem:[%s447] sm:$0xf]
  %v449 = vld [vmem:[%s447 + $0x4] sm:$0xf]
  %v450 = vld [vmem:[%s447 + $0x8] sm:$0xf]
  %v451 = vld [vmem:[%s447 + $0xc] sm:$0xf]
  %s452 = scalar_lea.vmem %s11, 1
  %v453 = vld [vmem:[%s452] sm:$0x1]
  %v455 = vperm.slane %v453, 0
  %v461 = vunpack.c.l.b16 %v448
  %v462 = vunpack.c.l.b16 %v449
  %v463 = vunpack.c.l.b16 %v450
  %v464 = vunpack.c.l.b16 %v451
  %v465 = vpack.c.b16 %v462, %v461
  %v466 = vpack.c.b16 %v464, %v463
  %469 = vmatpush.bf16.msra.mxu0 0
  %470 = vmatpush.bf16.msra.mxu0 0
  %471 = vmatpush.bf16.msra.mxu0 0
  %472 = vmatpush.bf16.msra.mxu0 0
  %473 = vmatpush.bf16.msra.mxu0 0
  %474 = vmatpush.bf16.msra.mxu0 0
  %475 = vmatpush.bf16.msra.mxu0 %v466
  %476 = vmatpush.bf16.msra.mxu0 %v465
  %477 = vmatmul.bf16.gmra.mxu0 %v140
  %v478 = vpop.f32.mrf.mxu0
  %v479 = vadd.f32 %v455, %v478
  %v480 = vpop.f32.mrf.mxu0
  %v481 = vadd.f32 %v455, %v480
  %482 = vmatmul.bf16.gmra.mxu0 %v143
  %v483 = vpop.f32.mrf.mxu0
  %v484 = vadd.f32 %v455, %v483
  %v485 = vpop.f32.mrf.mxu0
  %v486 = vadd.f32 %v455, %v485
  %487 = vdwg.mxu0
  %v488 = vmul.f32 %v397, 0.25
  %v489 = vmul.f32 %v399, 0.25
  %v490 = vmul.f32 %v402, 0.25
  %v491 = vmul.f32 %v404, 0.25
  %v492 = vpack.c.bf16 %v489, %v488
  %v493 = vpack.c.bf16 %v491, %v490
  %v494 = vpack.c.bf16 %v440, %v438
  %v495 = vpack.c.bf16 %v445, %v443
  %v497 = vsel %vm250, %v492, 0
  %v500 = vsel %vm250, %v493, 0
  %v503 = vsel %vm250, %v494, 0
  %v506 = vsel %vm250, %v495, 0
  %508 = vmatpush.bf16.xpose.msra.mxu0 0
  %509 = vmatpush.bf16.xpose.msra.mxu0 0
  %510 = vmatpush.bf16.xpose.msra.mxu0 0
  %511 = vmatpush.bf16.xpose.msra.mxu0 0
  %512 = vmatpush.bf16.xpose.msra.mxu0 0
  %513 = vmatpush.bf16.xpose.msra.mxu0 0
  %514 = vmatpush.bf16.xpose.msra.mxu0 %v506
  %515 = vmatpush.bf16.xpose.msra.mxu0 %v503
  %516 = vmatmul.bf16.gmra.mxu0 %v497
  %v517 = vpop.f32.mrf.mxu0
  %v518 = vadd.f32 %v112, %v517
  %v519 = vpop.f32.mrf.mxu0
  %v520 = vadd.f32 %v113, %v519
  %521 = vmatmul.bf16.gmra.mxu0 %v500
  %v522 = vpop.f32.mrf.mxu0
  %v523 = vadd.f32 %v114, %v522
  %v524 = vpop.f32.mrf.mxu0
  %v525 = vadd.f32 %v115, %v524
  %526 = vdwg.mxu0
  %v527 = vsel %vm282, %v518, -inf
  %528 = vmax.xlane.f32.xlu0 %v527
  %v529 = vpop.xlane.xlu0 %528
  %v530 = vsel %vm282, %v520, -inf
  %531 = vmax.xlane.f32.xlu0 %v530
  %v532 = vpop.xlane.xlu0 %531
  %v533 = vsel %vm282, %v523, -inf
  %534 = vmax.xlane.f32.xlu0 %v533
  %v535 = vpop.xlane.xlu0 %534
  %v536 = vsel %vm292, %v525, -inf
  %537 = vmax.xlane.f32.xlu0 %v536
  %v538 = vpop.xlane.xlu0 %537
  %v539 = vsub.f32 %v518, %v529
  %v540 = vsub.f32 %v520, %v532
  %v541 = vsub.f32 %v523, %v535
  %v542 = vsub.f32 %v525, %v538
  %v543 = vmul.f32 %v539, 1.442695
  %v544 = vpow.pop %v543
  %v545 = vmul.f32 %v540, 1.442695
  %v546 = vpow.pop %v545
  %v547 = vmul.f32 %v541, 1.442695
  %v548 = vpow.pop %v547
  %v549 = vmul.f32 %v542, 1.442695
  %v550 = vpow.pop %v549
  %v551 = vsel %vm282, %v544, 0.0
  %552 = vadd.xlane.f32.xlu0 %v551
  %v553 = vpop.xlane.xlu0 %552
  %v554 = vsel %vm282, %v546, 0.0
  %555 = vadd.xlane.f32.xlu0 %v554
  %v556 = vpop.xlane.xlu0 %555
  %v557 = vsel %vm282, %v548, 0.0
  %558 = vadd.xlane.f32.xlu0 %v557
  %v559 = vpop.xlane.xlu0 %558
  %v560 = vsel %vm292, %v550, 0.0
  %561 = vadd.xlane.f32.xlu0 %v560
  %v562 = vpop.xlane.xlu0 %561
  %v563 = vrcp.pop %v553
  %v564 = vrcp.pop %v556
  %v565 = vrcp.pop %v559
  %v566 = vrcp.pop %v562
  %v567 = vmul.f32 %v544, %v563
  %v568 = vmul.f32 %v546, %v564
  %v569 = vmul.f32 %v548, %v565
  %v570 = vmul.f32 %v550, %v566
  %v571 = vpack.c.bf16 %v568, %v567
  %v572 = vpack.c.bf16 %v570, %v569
  %v573 = vpack.c.bf16 %v481, %v479
  %v574 = vpack.c.bf16 %v486, %v484
  %v576 = vsel %vm282, %v571, 0
  %v579 = vsel %vm282, %v572, 0
  %v582 = vsel %vm338, %v574, 0
  %584 = vmatpush.bf16.msra.mxu0 0
  %585 = vmatpush.bf16.msra.mxu0 0
  %586 = vmatpush.bf16.msra.mxu0 0
  %587 = vmatpush.bf16.msra.mxu0 0
  %588 = vmatpush.bf16.msra.mxu0 0
  %589 = vmatpush.bf16.msra.mxu0 0
  %590 = vmatpush.bf16.msra.mxu0 %v582
  %591 = vmatpush.bf16.msra.mxu0 %v573
  %592 = vmatmul.bf16.gmra.mxu0 %v576
  %v593 = vpop.f32.mrf.mxu0
  %v594 = vadd.f32 0.0, %v593
  %v595 = vpop.f32.mrf.mxu0
  %v596 = vadd.f32 0.0, %v595
  %597 = vmatmul.bf16.gmra.mxu0 %v579
  %v598 = vpop.f32.mrf.mxu0
  %v599 = vadd.f32 0.0, %v598
  %v600 = vpop.f32.mrf.mxu0
  %v601 = vadd.f32 0.0, %v600
  %602 = vdwg.mxu0
  %v603 = vpack.c.bf16 %v596, %v594
  %v604 = vpack.c.bf16 %v601, %v599
  %s605 = scalar_lea.vmem %s12, 8
  %v606 = vld [vmem:[%s605] sm:$0xf]
  %v607 = vld [vmem:[%s605 + $0x4] sm:$0xf]
  %v610 = vunpack.c.l.b16 %v606
  %v611 = vunpack.c.l.b16 %v607
  %v612 = vpack.c.b16 %v611, %v610
  %v615 = vsel %vm250, %v603, 0
  %v618 = vsel %vm250, %v604, 0
  %620 = vmatpush.bf16.msra.mxu0 0
  %621 = vmatpush.bf16.msra.mxu0 0
  %622 = vmatpush.bf16.msra.mxu0 0
  %623 = vmatpush.bf16.msra.mxu0 0
  %624 = vmatpush.bf16.msra.mxu0 0
  %625 = vmatpush.bf16.msra.mxu0 0
  %626 = vmatpush.bf16.msra.mxu0 0
  %627 = vmatpush.bf16.msra.mxu0 %v612
  %628 = vmatmul.bf16.gmra.mxu0 %v615
  %v629 = vpop.f32.mrf.mxu0
  %v630 = vadd.f32 0.0, %v629
  %v631 = vpop.f32.mrf.mxu0
  %v632 = vadd.f32 0.0, %v631
  %633 = vmatmul.bf16.gmra.mxu0 %v618
  %v634 = vpop.f32.mrf.mxu0
  %v635 = vadd.f32 0.0, %v634
  %v636 = vpop.f32.mrf.mxu0
  %v637 = vadd.f32 0.0, %v636
  %638 = vdwg.mxu0
  %v641 = vunpack.c.l.b16 %v363
  %v642 = vunpack.c.l.b16 %v364
  %v643 = vpack.c.b16 %v642, %v641
  %v646 = vsel %vm250, %v361, 0
  %v649 = vsel %vm250, %v362, 0
  %651 = vmatpush.bf16.msra.mxu0 0
  %652 = vmatpush.bf16.msra.mxu0 0
  %653 = vmatpush.bf16.msra.mxu0 0
  %654 = vmatpush.bf16.msra.mxu0 0
  %655 = vmatpush.bf16.msra.mxu0 0
  %656 = vmatpush.bf16.msra.mxu0 0
  %657 = vmatpush.bf16.msra.mxu0 0
  %658 = vmatpush.bf16.msra.mxu0 %v643
  %659 = vmatmul.bf16.gmra.mxu0 %v646
  %v660 = vpop.f32.mrf.mxu0
  %v661 = vadd.f32 %v630, %v660
  %v662 = vpop.f32.mrf.mxu0
  %v663 = vadd.f32 %v632, %v662
  %664 = vmatmul.bf16.gmra.mxu0 %v649
  %v665 = vpop.f32.mrf.mxu0
  %v666 = vadd.f32 %v635, %v665
  %v667 = vpop.f32.mrf.mxu0
  %v668 = vadd.f32 %v637, %v667
  %669 = vdwg.mxu0
  %v670 = vld [vmem:[%s13] sm:$0x1]
  %v672 = vperm.slane %v670, 0
  %v674 = vadd.f32 %v661, %v672
  %v675 = vadd.f32 %v663, %v672
  %v676 = vadd.f32 %v666, %v672
  %v677 = vadd.f32 %v668, %v672
  %v678 = vadd.f32 %v108, %v674
  %v679 = vadd.f32 %v109, %v675
  %v680 = vadd.f32 %v110, %v676
  %v681 = vadd.f32 %v111, %v677
  %v682 = vld [vmem:[%s14] sm:$0x1]
  %v683 = vld [vmem:[%s15] sm:$0x1]
  %v684 = vsel %vm138, %v678, 0.0
  %685 = vadd.xlane.f32.xlu0 %v684
  %v686 = vpop.xlane.xlu0 %685
  %v687 = vsel %vm138, %v679, 0.0
  %688 = vadd.xlane.f32.xlu0 %v687
  %v689 = vpop.xlane.xlu0 %688
  %v690 = vsel %vm138, %v680, 0.0
  %691 = vadd.xlane.f32.xlu0 %v690
  %v692 = vpop.xlane.xlu0 %691
  %vm693 = vcmask 257024
  %v694 = vsel %vm693, %v681, 0.0
  %695 = vadd.xlane.f32.xlu0 %v694
  %v696 = vpop.xlane.xlu0 %695
  %v697 = vrcp.pop 32.0
  %v698 = vmul.f32 32.0, %v697
  %v699 = vsub.f32 1.0, %v698
  %v700 = vmul.f32 %v697, %v699
  %v701 = vadd.f32 %v697, %v700
  %vm702 = vweird.f32 %v697
  %v703 = vsel %vm702, %v697, %v701
  %v704 = vmul.f32 %v686, %v703
  %v705 = vmul.f32 %v689, %v703
  %v706 = vmul.f32 %v692, %v703
  %v707 = vmul.f32 %v696, %v703
  %v708 = vsub.f32 %v678, %v704
  %v709 = vsub.f32 %v679, %v705
  %v710 = vsub.f32 %v680, %v706
  %v711 = vsub.f32 %v681, %v707
  %v712 = vmul.f32 %v708, %v708
  %v713 = vmul.f32 %v709, %v709
  %v714 = vmul.f32 %v710, %v710
  %v715 = vmul.f32 %v711, %v711
  %v716 = vsel %vm138, %v712, 0.0
  %717 = vadd.xlane.f32.xlu0 %v716
  %v718 = vpop.xlane.xlu0 %717
  %v719 = vsel %vm138, %v713, 0.0
  %720 = vadd.xlane.f32.xlu0 %v719
  %v721 = vpop.xlane.xlu0 %720
  %v722 = vsel %vm138, %v714, 0.0
  %723 = vadd.xlane.f32.xlu0 %v722
  %v724 = vpop.xlane.xlu0 %723
  %v725 = vsel %vm693, %v715, 0.0
  %726 = vadd.xlane.f32.xlu0 %v725
  %v727 = vpop.xlane.xlu0 %726
  %v728 = vmul.f32 %v718, %v703
  %v729 = vmul.f32 %v721, %v703
  %v730 = vmul.f32 %v724, %v703
  %v731 = vmul.f32 %v727, %v703
  %v732 = vadd.f32 %v728, 1e-05
  %v733 = vadd.f32 %v729, 1e-05
  %v734 = vadd.f32 %v730, 1e-05
  %v735 = vadd.f32 %v731, 1e-05
  %v736 = vrsqrt.pop %v732
  %v737 = vmul.f32 %v736, %v732
  %v738 = vmul.f32 %v737, %v736
  %v739 = vmul.f32 0.5, %v738
  %v740 = vsub.f32 1.5, %v739
  %v741 = vmul.f32 %v736, %v740
  %vm742 = vweird.f32 %v732
  %vm743 = vweird.f32 %v736
  %vm744 = vmor %vm742, %vm743
  %v745 = vsel %vm744, %v736, %v741
  %v746 = vrsqrt.pop %v733
  %v747 = vmul.f32 %v746, %v733
  %v748 = vmul.f32 %v747, %v746
  %v749 = vmul.f32 0.5, %v748
  %v750 = vsub.f32 1.5, %v749
  %v751 = vmul.f32 %v746, %v750
  %vm752 = vweird.f32 %v733
  %vm753 = vweird.f32 %v746
  %vm754 = vmor %vm752, %vm753
  %v755 = vsel %vm754, %v746, %v751
  %v756 = vrsqrt.pop %v734
  %v757 = vmul.f32 %v756, %v734
  %v758 = vmul.f32 %v757, %v756
  %v759 = vmul.f32 0.5, %v758
  %v760 = vsub.f32 1.5, %v759
  %v761 = vmul.f32 %v756, %v760
  %vm762 = vweird.f32 %v734
  %vm763 = vweird.f32 %v756
  %vm764 = vmor %vm762, %vm763
  %v765 = vsel %vm764, %v756, %v761
  %v766 = vrsqrt.pop %v735
  %v767 = vmul.f32 %v766, %v735
  %v768 = vmul.f32 %v767, %v766
  %v769 = vmul.f32 0.5, %v768
  %v770 = vsub.f32 1.5, %v769
  %v771 = vmul.f32 %v766, %v770
  %vm772 = vweird.f32 %v735
  %vm773 = vweird.f32 %v766
  %vm774 = vmor %vm772, %vm773
  %v775 = vsel %vm774, %v766, %v771
  %v776 = vmul.f32 %v708, %v745
  %v777 = vmul.f32 %v709, %v755
  %v778 = vmul.f32 %v710, %v765
  %v779 = vmul.f32 %v711, %v775
  %v781 = vperm.slane %v682, 0
  %v783 = vmul.f32 %v776, %v781
  %v784 = vmul.f32 %v777, %v781
  %v785 = vmul.f32 %v778, %v781
  %v786 = vmul.f32 %v779, %v781
  %v788 = vperm.slane %v683, 0
  %v790 = vadd.f32 %v783, %v788
  %v791 = vadd.f32 %v784, %v788
  %v792 = vadd.f32 %v785, %v788
  %v793 = vadd.f32 %v786, %v788
  %v794 = vld [vmem:[%s18] sm:$0xf]
  %v795 = vld [vmem:[%s18 + $0x4] sm:$0xf]
  %v796 = vld [vmem:[%s18 + $0x8] sm:$0xf]
  %v797 = vld [vmem:[%s18 + $0xc] sm:$0xf]
  %v798 = vld [vmem:[%s18 + $0x10] sm:$0xf]
  %v799 = vld [vmem:[%s18 + $0x14] sm:$0xf]
  %v800 = vld [vmem:[%s18 + $0x18] sm:$0xf]
  %v801 = vld [vmem:[%s18 + $0x1c] sm:$0xf]
  %v802 = vld [vmem:[%s18 + $0x20] sm:$0xf]
  %v803 = vld [vmem:[%s18 + $0x24] sm:$0xf]
  %v804 = vld [vmem:[%s18 + $0x28] sm:$0xf]
  %v805 = vld [vmem:[%s18 + $0x2c] sm:$0xf]
  %v806 = vld [vmem:[%s19] sm:$0x1]
  %v807 = vpack.c.bf16 %v791, %v790
  %v808 = vpack.c.bf16 %v793, %v792
  %v810 = vsel %vm282, %v88, 0
  %v813 = vsel %vm282, %v89, 0
  %v816 = vsel %vm338, %v808, 0
  %818 = vmatpush.bf16.msra.mxu0 0
  %819 = vmatpush.bf16.msra.mxu0 0
  %820 = vmatpush.bf16.msra.mxu0 0
  %821 = vmatpush.bf16.msra.mxu0 0
  %822 = vmatpush.bf16.msra.mxu0 0
  %823 = vmatpush.bf16.msra.mxu0 0
  %824 = vmatpush.bf16.msra.mxu0 %v816
  %825 = vmatpush.bf16.msra.mxu0 %v807
  %826 = vmatmul.bf16.gmra.mxu0 %v810
  %v827 = vpop.f32.mrf.mxu0
  %v828 = vadd.f32 0.0, %v827
  %v829 = vpop.f32.mrf.mxu0
  %v830 = vadd.f32 0.0, %v829
  %831 = vmatmul.bf16.gmra.mxu0 %v813
  %v832 = vpop.f32.mrf.mxu0
  %v833 = vadd.f32 0.0, %v832
  %v834 = vpop.f32.mrf.mxu0
  %v835 = vadd.f32 0.0, %v834
  %836 = vdwg.mxu0
  %v837 = vpack.c.bf16 %v830, %v828
  %v838 = vpack.c.bf16 %v835, %v833
  %v840 = vsel %vm282, %v94, 0
  %v843 = vsel %vm282, %v95, 0
  %845 = vmatpush.bf16.msra.mxu0 0
  %846 = vmatpush.bf16.msra.mxu0 0
  %847 = vmatpush.bf16.msra.mxu0 0
  %848 = vmatpush.bf16.msra.mxu0 0
  %849 = vmatpush.bf16.msra.mxu0 0
  %850 = vmatpush.bf16.msra.mxu0 0
  %851 = vmatpush.bf16.msra.mxu0 %v816
  %852 = vmatpush.bf16.msra.mxu0 %v807
  %853 = vmatmul.bf16.gmra.mxu0 %v840
  %v854 = vpop.f32.mrf.mxu0
  %v855 = vadd.f32 0.0, %v854
  %v856 = vpop.f32.mrf.mxu0
  %v857 = vadd.f32 0.0, %v856
  %858 = vmatmul.bf16.gmra.mxu0 %v843
  %v859 = vpop.f32.mrf.mxu0
  %v860 = vadd.f32 0.0, %v859
  %v861 = vpop.f32.mrf.mxu0
  %v862 = vadd.f32 0.0, %v861
  %863 = vdwg.mxu0
  %v864 = vpack.c.bf16 %v857, %v855
  %v865 = vpack.c.bf16 %v862, %v860
  %v870 = vunpack.c.l.b16 %v798
  %v871 = vunpack.c.l.b16 %v799
  %v872 = vunpack.c.l.b16 %v800
  %v873 = vunpack.c.l.b16 %v801
  %v874 = vpack.c.b16 %v871, %v870
  %v875 = vpack.c.b16 %v873, %v872
  %v879 = vsel %vm138, %v807, 0
  %v881 = vsel %vm138, %v808, 0
  %883 = vmatpush.bf16.msra.mxu0 0
  %884 = vmatpush.bf16.msra.mxu0 0
  %885 = vmatpush.bf16.msra.mxu0 0
  %886 = vmatpush.bf16.msra.mxu0 0
  %887 = vmatpush.bf16.msra.mxu0 0
  %888 = vmatpush.bf16.msra.mxu0 0
  %889 = vmatpush.bf16.msra.mxu0 %v875
  %890 = vmatpush.bf16.msra.mxu0 %v874
  %891 = vmatmul.bf16.gmra.mxu0 %v879
  %v892 = vpop.f32.mrf.mxu0
  %v893 = vadd.f32 0.0, %v892
  %v894 = vpop.f32.mrf.mxu0
  %v895 = vadd.f32 0.0, %v894
  %896 = vmatmul.bf16.gmra.mxu0 %v881
  %v897 = vpop.f32.mrf.mxu0
  %v898 = vadd.f32 0.0, %v897
  %v899 = vpop.f32.mrf.mxu0
  %v900 = vadd.f32 0.0, %v899
  %901 = vdwg.mxu0
  %v906 = vunpack.c.l.b16 %v794
  %v907 = vunpack.c.l.b16 %v795
  %v908 = vunpack.c.l.b16 %v796
  %v909 = vunpack.c.l.b16 %v797
  %v910 = vpack.c.b16 %v907, %v906
  %v911 = vpack.c.b16 %v909, %v908
  %v915 = vsel %vm138, %v837, 0
  %v918 = vsel %vm138, %v838, 0
  %920 = vmatpush.bf16.msra.mxu0 0
  %921 = vmatpush.bf16.msra.mxu0 0
  %922 = vmatpush.bf16.msra.mxu0 0
  %923 = vmatpush.bf16.msra.mxu0 0
  %924 = vmatpush.bf16.msra.mxu0 0
  %925 = vmatpush.bf16.msra.mxu0 0
  %926 = vmatpush.bf16.msra.mxu0 %v911
  %927 = vmatpush.bf16.msra.mxu0 %v910
  %928 = vmatmul.bf16.gmra.mxu0 %v915
  %v929 = vpop.f32.mrf.mxu0
  %v930 = vadd.f32 %v893, %v929
  %v931 = vpop.f32.mrf.mxu0
  %v932 = vadd.f32 %v895, %v931
  %933 = vmatmul.bf16.gmra.mxu0 %v918
  %v934 = vpop.f32.mrf.mxu0
  %v935 = vadd.f32 %v898, %v934
  %v936 = vpop.f32.mrf.mxu0
  %v937 = vadd.f32 %v900, %v936
  %938 = vdwg.mxu0
  %v943 = vunpack.c.l.b16 %v802
  %v944 = vunpack.c.l.b16 %v803
  %v945 = vunpack.c.l.b16 %v804
  %v946 = vunpack.c.l.b16 %v805
  %v947 = vpack.c.b16 %v944, %v943
  %v948 = vpack.c.b16 %v946, %v945
  %v952 = vsel %vm138, %v864, 0
  %v955 = vsel %vm138, %v865, 0
  %957 = vmatpush.bf16.msra.mxu0 0
  %958 = vmatpush.bf16.msra.mxu0 0
  %959 = vmatpush.bf16.msra.mxu0 0
  %960 = vmatpush.bf16.msra.mxu0 0
  %961 = vmatpush.bf16.msra.mxu0 0
  %962 = vmatpush.bf16.msra.mxu0 0
  %963 = vmatpush.bf16.msra.mxu0 %v948
  %964 = vmatpush.bf16.msra.mxu0 %v947
  %965 = vmatmul.bf16.gmra.mxu0 %v952
  %v966 = vpop.f32.mrf.mxu0
  %v967 = vadd.f32 0.0, %v966
  %v968 = vpop.f32.mrf.mxu0
  %v969 = vadd.f32 0.0, %v968
  %970 = vmatmul.bf16.gmra.mxu0 %v955
  %v971 = vpop.f32.mrf.mxu0
  %v972 = vadd.f32 0.0, %v971
  %v973 = vpop.f32.mrf.mxu0
  %v974 = vadd.f32 0.0, %v973
  %975 = vdwg.mxu0
  %v976 = vadd.f32 %v930, %v967
  %v977 = vadd.f32 %v932, %v969
  %v978 = vadd.f32 %v935, %v972
  %v979 = vadd.f32 %v937, %v974
  %v981 = vperm.slane %v806, 0
  %v983 = vadd.f32 %v976, %v981
  %v984 = vadd.f32 %v977, %v981
  %v985 = vadd.f32 %v978, %v981
  %v986 = vadd.f32 %v979, %v981
  %v987 = vmax.f32 %v983, 0.0
  %v988 = vmax.f32 %v984, 0.0
  %v989 = vmax.f32 %v985, 0.0
  %v990 = vmax.f32 %v986, 0.0
  %v991 = vld [vmem:[%s20] sm:$0xf]
  %v992 = vld [vmem:[%s20 + $0x4] sm:$0xf]
  %v993 = vld [vmem:[%s20 + $0x8] sm:$0xf]
  %v994 = vld [vmem:[%s20 + $0xc] sm:$0xf]
  %v995 = vld [vmem:[%s20 + $0x10] sm:$0xf]
  %v996 = vld [vmem:[%s20 + $0x14] sm:$0xf]
  %v997 = vld [vmem:[%s20 + $0x18] sm:$0xf]
  %v998 = vld [vmem:[%s20 + $0x1c] sm:$0xf]
  %v999 = vld [vmem:[%s20 + $0x20] sm:$0xf]
  %v1000 = vld [vmem:[%s20 + $0x24] sm:$0xf]
  %v1001 = vld [vmem:[%s20 + $0x28] sm:$0xf]
  %v1002 = vld [vmem:[%s20 + $0x2c] sm:$0xf]
  %v1003 = vld [vmem:[%s20 + $0x30] sm:$0xf]
  %v1004 = vld [vmem:[%s20 + $0x34] sm:$0xf]
  %v1005 = vld [vmem:[%s20 + $0x38] sm:$0xf]
  %v1006 = vld [vmem:[%s20 + $0x3c] sm:$0xf]
  %v1007 = vld [vmem:[%s20 + $0x40] sm:$0xf]
  %v1008 = vld [vmem:[%s20 + $0x44] sm:$0xf]
  %v1009 = vld [vmem:[%s20 + $0x48] sm:$0xf]
  %v1010 = vld [vmem:[%s20 + $0x4c] sm:$0xf]
  %v1011 = vld [vmem:[%s20 + $0x50] sm:$0xf]
  %v1012 = vld [vmem:[%s20 + $0x54] sm:$0xf]
  %v1013 = vld [vmem:[%s20 + $0x58] sm:$0xf]
  %v1014 = vld [vmem:[%s20 + $0x5c] sm:$0xf]
  %v1015 = vld [vmem:[%s20 + $0x60] sm:$0xf]
  %v1016 = vld [vmem:[%s20 + $0x64] sm:$0xf]
  %v1017 = vld [vmem:[%s20 + $0x68] sm:$0xf]
  %v1018 = vld [vmem:[%s20 + $0x6c] sm:$0xf]
  %v1019 = vld [vmem:[%s20 + $0x70] sm:$0xf]
  %v1020 = vld [vmem:[%s20 + $0x74] sm:$0xf]
  %v1021 = vld [vmem:[%s20 + $0x78] sm:$0xf]
  %v1022 = vld [vmem:[%s20 + $0x7c] sm:$0xf]
  %v1023 = vld [vmem:[%s20 + $0x80] sm:$0xf]
  %v1024 = vld [vmem:[%s20 + $0x84] sm:$0xf]
  %v1025 = vld [vmem:[%s20 + $0x88] sm:$0xf]
  %v1026 = vld [vmem:[%s20 + $0x8c] sm:$0xf]
  %v1027 = vld [vmem:[%s20 + $0x90] sm:$0xf]
  %v1028 = vld [vmem:[%s20 + $0x94] sm:$0xf]
  %v1029 = vld [vmem:[%s20 + $0x98] sm:$0xf]
  %v1030 = vld [vmem:[%s20 + $0x9c] sm:$0xf]
  %v1031 = vld [vmem:[%s20 + $0xa0] sm:$0xf]
  %v1032 = vld [vmem:[%s20 + $0xa4] sm:$0xf]
  %v1033 = vld [vmem:[%s20 + $0xa8] sm:$0xf]
  %v1034 = vld [vmem:[%s20 + $0xac] sm:$0xf]
  %v1035 = vld [vmem:[%s20 + $0xb0] sm:$0xf]
  %v1036 = vld [vmem:[%s20 + $0xb4] sm:$0xf]
  %v1037 = vld [vmem:[%s20 + $0xb8] sm:$0xf]
  %v1038 = vld [vmem:[%s20 + $0xbc] sm:$0xf]
  %v1039 = vld [vmem:[%s21] sm:$0x1]
  %v1040 = vpack.c.bf16 %v988, %v987
  %v1041 = vpack.c.bf16 %v990, %v989
  %v1043 = vsel %vm338, %v1041, 0
  %1045 = vmatpush.bf16.msra.mxu0 0
  %1046 = vmatpush.bf16.msra.mxu0 0
  %1047 = vmatpush.bf16.msra.mxu0 0
  %1048 = vmatpush.bf16.msra.mxu0 0
  %1049 = vmatpush.bf16.msra.mxu0 0
  %1050 = vmatpush.bf16.msra.mxu0 0
  %1051 = vmatpush.bf16.msra.mxu0 %v1043
  %1052 = vmatpush.bf16.msra.mxu0 %v1040
  %1053 = vmatmul.bf16.gmra.mxu0 %v810
  %v1054 = vpop.f32.mrf.mxu0
  %v1055 = vadd.f32 0.0, %v1054
  %v1056 = vpop.f32.mrf.mxu0
  %v1057 = vadd.f32 0.0, %v1056
  %1058 = vmatmul.bf16.gmra.mxu0 %v813
  %v1059 = vpop.f32.mrf.mxu0
  %v1060 = vadd.f32 0.0, %v1059
  %v1061 = vpop.f32.mrf.mxu0
  %v1062 = vadd.f32 0.0, %v1061
  %1063 = vdwg.mxu0
  %v1064 = vpack.c.bf16 %v1057, %v1055
  %v1065 = vpack.c.bf16 %v1062, %v1060
  %1066 = vmatpush.bf16.msra.mxu0 0
  %1067 = vmatpush.bf16.msra.mxu0 0
  %1068 = vmatpush.bf16.msra.mxu0 0
  %1069 = vmatpush.bf16.msra.mxu0 0
  %1070 = vmatpush.bf16.msra.mxu0 0
  %1071 = vmatpush.bf16.msra.mxu0 0
  %1072 = vmatpush.bf16.msra.mxu0 %v1043
  %1073 = vmatpush.bf16.msra.mxu0 %v1040
  %1074 = vmatmul.bf16.gmra.mxu0 %v840
  %v1075 = vpop.f32.mrf.mxu0
  %v1076 = vadd.f32 0.0, %v1075
  %v1077 = vpop.f32.mrf.mxu0
  %v1078 = vadd.f32 0.0, %v1077
  %1079 = vmatmul.bf16.gmra.mxu0 %v843
  %v1080 = vpop.f32.mrf.mxu0
  %v1081 = vadd.f32 0.0, %v1080
  %v1082 = vpop.f32.mrf.mxu0
  %v1083 = vadd.f32 0.0, %v1082
  %1084 = vdwg.mxu0
  %v1085 = vpack.c.bf16 %v1078, %v1076
  %v1086 = vpack.c.bf16 %v1083, %v1081
  %v1103 = vunpack.c.l.b16 %v1007
  %v1104 = vunpack.c.l.b16 %v1008
  %v1105 = vunpack.c.l.b16 %v1009
  %v1106 = vunpack.c.l.b16 %v1010
  %v1107 = vunpack.c.l.b16 %v1011
  %v1108 = vunpack.c.l.b16 %v1012
  %v1109 = vunpack.c.l.b16 %v1013
  %v1110 = vunpack.c.l.b16 %v1014
  %v1111 = vunpack.c.l.b16 %v1015
  %v1112 = vunpack.c.l.b16 %v1016
  %v1113 = vunpack.c.l.b16 %v1017
  %v1114 = vunpack.c.l.b16 %v1018
  %v1115 = vunpack.c.l.b16 %v1019
  %v1116 = vunpack.c.l.b16 %v1020
  %v1117 = vunpack.c.l.b16 %v1021
  %v1118 = vunpack.c.l.b16 %v1022
  %v1119 = vpack.c.b16 %v1104, %v1103
  %v1120 = vpack.c.b16 %v1106, %v1105
  %v1121 = vpack.c.b16 %v1108, %v1107
  %v1122 = vpack.c.b16 %v1110, %v1109
  %v1123 = vpack.c.b16 %v1112, %v1111
  %v1124 = vpack.c.b16 %v1114, %v1113
  %v1125 = vpack.c.b16 %v1116, %v1115
  %v1126 = vpack.c.b16 %v1118, %v1117
  %1135 = vmatpush.bf16.msra.mxu0 %v1126
  %1136 = vmatpush.bf16.msra.mxu0 %v1125
  %1137 = vmatpush.bf16.msra.mxu0 %v1124
  %1138 = vmatpush.bf16.msra.mxu0 %v1123
  %1139 = vmatpush.bf16.msra.mxu0 %v1122
  %1140 = vmatpush.bf16.msra.mxu0 %v1121
  %1141 = vmatpush.bf16.msra.mxu0 %v1120
  %1142 = vmatpush.bf16.msra.mxu0 %v1119
  %1143 = vmatmul.bf16.gmra.mxu0 %v1040
  %v1144 = vpop.f32.mrf.mxu0
  %v1145 = vadd.f32 0.0, %v1144
  %v1146 = vpop.f32.mrf.mxu0
  %v1147 = vadd.f32 0.0, %v1146
  %1148 = vmatmul.bf16.gmra.mxu0 %v1041
  %v1149 = vpop.f32.mrf.mxu0
  %v1150 = vadd.f32 0.0, %v1149
  %v1151 = vpop.f32.mrf.mxu0
  %v1152 = vadd.f32 0.0, %v1151
  %1153 = vdwg.mxu0
  %v1170 = vunpack.c.l.b16 %v991
  %v1171 = vunpack.c.l.b16 %v992
  %v1172 = vunpack.c.l.b16 %v993
  %v1173 = vunpack.c.l.b16 %v994
  %v1174 = vunpack.c.l.b16 %v995
  %v1175 = vunpack.c.l.b16 %v996
  %v1176 = vunpack.c.l.b16 %v997
  %v1177 = vunpack.c.l.b16 %v998
  %v1178 = vunpack.c.l.b16 %v999
  %v1179 = vunpack.c.l.b16 %v1000
  %v1180 = vunpack.c.l.b16 %v1001
  %v1181 = vunpack.c.l.b16 %v1002
  %v1182 = vunpack.c.l.b16 %v1003
  %v1183 = vunpack.c.l.b16 %v1004
  %v1184 = vunpack.c.l.b16 %v1005
  %v1185 = vunpack.c.l.b16 %v1006
  %v1186 = vpack.c.b16 %v1171, %v1170
  %v1187 = vpack.c.b16 %v1173, %v1172
  %v1188 = vpack.c.b16 %v1175, %v1174
  %v1189 = vpack.c.b16 %v1177, %v1176
  %v1190 = vpack.c.b16 %v1179, %v1178
  %v1191 = vpack.c.b16 %v1181, %v1180
  %v1192 = vpack.c.b16 %v1183, %v1182
  %v1193 = vpack.c.b16 %v1185, %v1184
  %1202 = vmatpush.bf16.msra.mxu0 %v1193
  %1203 = vmatpush.bf16.msra.mxu0 %v1192
  %1204 = vmatpush.bf16.msra.mxu0 %v1191
  %1205 = vmatpush.bf16.msra.mxu0 %v1190
  %1206 = vmatpush.bf16.msra.mxu0 %v1189
  %1207 = vmatpush.bf16.msra.mxu0 %v1188
  %1208 = vmatpush.bf16.msra.mxu0 %v1187
  %1209 = vmatpush.bf16.msra.mxu0 %v1186
  %1210 = vmatmul.bf16.gmra.mxu0 %v1064
  %v1211 = vpop.f32.mrf.mxu0
  %v1212 = vadd.f32 %v1145, %v1211
  %v1213 = vpop.f32.mrf.mxu0
  %v1214 = vadd.f32 %v1147, %v1213
  %1215 = vmatmul.bf16.gmra.mxu0 %v1065
  %v1216 = vpop.f32.mrf.mxu0
  %v1217 = vadd.f32 %v1150, %v1216
  %v1218 = vpop.f32.mrf.mxu0
  %v1219 = vadd.f32 %v1152, %v1218
  %1220 = vdwg.mxu0
  %v1237 = vunpack.c.l.b16 %v1023
  %v1238 = vunpack.c.l.b16 %v1024
  %v1239 = vunpack.c.l.b16 %v1025
  %v1240 = vunpack.c.l.b16 %v1026
  %v1241 = vunpack.c.l.b16 %v1027
  %v1242 = vunpack.c.l.b16 %v1028
  %v1243 = vunpack.c.l.b16 %v1029
  %v1244 = vunpack.c.l.b16 %v1030
  %v1245 = vunpack.c.l.b16 %v1031
  %v1246 = vunpack.c.l.b16 %v1032
  %v1247 = vunpack.c.l.b16 %v1033
  %v1248 = vunpack.c.l.b16 %v1034
  %v1249 = vunpack.c.l.b16 %v1035
  %v1250 = vunpack.c.l.b16 %v1036
  %v1251 = vunpack.c.l.b16 %v1037
  %v1252 = vunpack.c.l.b16 %v1038
  %v1253 = vpack.c.b16 %v1238, %v1237
  %v1254 = vpack.c.b16 %v1240, %v1239
  %v1255 = vpack.c.b16 %v1242, %v1241
  %v1256 = vpack.c.b16 %v1244, %v1243
  %v1257 = vpack.c.b16 %v1246, %v1245
  %v1258 = vpack.c.b16 %v1248, %v1247
  %v1259 = vpack.c.b16 %v1250, %v1249
  %v1260 = vpack.c.b16 %v1252, %v1251
  %1269 = vmatpush.bf16.msra.mxu0 %v1260
  %1270 = vmatpush.bf16.msra.mxu0 %v1259
  %1271 = vmatpush.bf16.msra.mxu0 %v1258
  %1272 = vmatpush.bf16.msra.mxu0 %v1257
  %1273 = vmatpush.bf16.msra.mxu0 %v1256
  %1274 = vmatpush.bf16.msra.mxu0 %v1255
  %1275 = vmatpush.bf16.msra.mxu0 %v1254
  %1276 = vmatpush.bf16.msra.mxu0 %v1253
  %1277 = vmatmul.bf16.gmra.mxu0 %v1085
  %v1278 = vpop.f32.mrf.mxu0
  %v1279 = vadd.f32 0.0, %v1278
  %v1280 = vpop.f32.mrf.mxu0
  %v1281 = vadd.f32 0.0, %v1280
  %1282 = vmatmul.bf16.gmra.mxu0 %v1086
  %v1283 = vpop.f32.mrf.mxu0
  %v1284 = vadd.f32 0.0, %v1283
  %v1285 = vpop.f32.mrf.mxu0
  %v1286 = vadd.f32 0.0, %v1285
  %1287 = vdwg.mxu0
  %v1288 = vadd.f32 %v1212, %v1279
  %v1289 = vadd.f32 %v1214, %v1281
  %v1290 = vadd.f32 %v1217, %v1284
  %v1291 = vadd.f32 %v1219, %v1286
  %v1293 = vperm.slane %v1039, 0
  %v1295 = vadd.f32 %v1288, %v1293
  %v1296 = vadd.f32 %v1289, %v1293
  %v1297 = vadd.f32 %v1290, %v1293
  %v1298 = vadd.f32 %v1291, %v1293
  %v1299 = vadd.f32 %v790, %v1295
  %v1300 = vadd.f32 %v791, %v1296
  %v1301 = vadd.f32 %v792, %v1297
  %v1302 = vadd.f32 %v793, %v1298
  %v1303 = vld [vmem:[%s16] sm:$0x1]
  %v1304 = vld [vmem:[%s17] sm:$0x1]
  %v1305 = vsel %vm138, %v1299, 0.0
  %1306 = vadd.xlane.f32.xlu0 %v1305
  %v1307 = vpop.xlane.xlu0 %1306
  %v1308 = vsel %vm138, %v1300, 0.0
  %1309 = vadd.xlane.f32.xlu0 %v1308
  %v1310 = vpop.xlane.xlu0 %1309
  %v1311 = vsel %vm138, %v1301, 0.0
  %1312 = vadd.xlane.f32.xlu0 %v1311
  %v1313 = vpop.xlane.xlu0 %1312
  %v1314 = vsel %vm693, %v1302, 0.0
  %1315 = vadd.xlane.f32.xlu0 %v1314
  %v1316 = vpop.xlane.xlu0 %1315
  %v1317 = vmul.f32 %v1307, %v703
  %v1318 = vmul.f32 %v1310, %v703
  %v1319 = vmul.f32 %v1313, %v703
  %v1320 = vmul.f32 %v1316, %v703
  %v1321 = vsub.f32 %v1299, %v1317
  %v1322 = vsub.f32 %v1300, %v1318
  %v1323 = vsub.f32 %v1301, %v1319
  %v1324 = vsub.f32 %v1302, %v1320
  %v1325 = vmul.f32 %v1321, %v1321
  %v1326 = vmul.f32 %v1322, %v1322
  %v1327 = vmul.f32 %v1323, %v1323
  %v1328 = vmul.f32 %v1324, %v1324
  %v1329 = vsel %vm138, %v1325, 0.0
  %1330 = vadd.xlane.f32.xlu0 %v1329
  %v1331 = vpop.xlane.xlu0 %1330
  %v1332 = vsel %vm138, %v1326, 0.0
  %1333 = vadd.xlane.f32.xlu0 %v1332
  %v1334 = vpop.xlane.xlu0 %1333
  %v1335 = vsel %vm138, %v1327, 0.0
  %1336 = vadd.xlane.f32.xlu0 %v1335
  %v1337 = vpop.xlane.xlu0 %1336
  %v1338 = vsel %vm693, %v1328, 0.0
  %1339 = vadd.xlane.f32.xlu0 %v1338
  %v1340 = vpop.xlane.xlu0 %1339
  %v1341 = vmul.f32 %v1331, %v703
  %v1342 = vmul.f32 %v1334, %v703
  %v1343 = vmul.f32 %v1337, %v703
  %v1344 = vmul.f32 %v1340, %v703
  %v1345 = vadd.f32 %v1341, 1e-05
  %v1346 = vadd.f32 %v1342, 1e-05
  %v1347 = vadd.f32 %v1343, 1e-05
  %v1348 = vadd.f32 %v1344, 1e-05
  %v1349 = vrsqrt.pop %v1345
  %v1350 = vmul.f32 %v1349, %v1345
  %v1351 = vmul.f32 %v1350, %v1349
  %v1352 = vmul.f32 0.5, %v1351
  %v1353 = vsub.f32 1.5, %v1352
  %v1354 = vmul.f32 %v1349, %v1353
  %vm1355 = vweird.f32 %v1345
  %vm1356 = vweird.f32 %v1349
  %vm1357 = vmor %vm1355, %vm1356
  %v1358 = vsel %vm1357, %v1349, %v1354
  %v1359 = vrsqrt.pop %v1346
  %v1360 = vmul.f32 %v1359, %v1346
  %v1361 = vmul.f32 %v1360, %v1359
  %v1362 = vmul.f32 0.5, %v1361
  %v1363 = vsub.f32 1.5, %v1362
  %v1364 = vmul.f32 %v1359, %v1363
  %vm1365 = vweird.f32 %v1346
  %vm1366 = vweird.f32 %v1359
  %vm1367 = vmor %vm1365, %vm1366
  %v1368 = vsel %vm1367, %v1359, %v1364
  %v1369 = vrsqrt.pop %v1347
  %v1370 = vmul.f32 %v1369, %v1347
  %v1371 = vmul.f32 %v1370, %v1369
  %v1372 = vmul.f32 0.5, %v1371
  %v1373 = vsub.f32 1.5, %v1372
  %v1374 = vmul.f32 %v1369, %v1373
  %vm1375 = vweird.f32 %v1347
  %vm1376 = vweird.f32 %v1369
  %vm1377 = vmor %vm1375, %vm1376
  %v1378 = vsel %vm1377, %v1369, %v1374
  %v1379 = vrsqrt.pop %v1348
  %v1380 = vmul.f32 %v1379, %v1348
  %v1381 = vmul.f32 %v1380, %v1379
  %v1382 = vmul.f32 0.5, %v1381
  %v1383 = vsub.f32 1.5, %v1382
  %v1384 = vmul.f32 %v1379, %v1383
  %vm1385 = vweird.f32 %v1348
  %vm1386 = vweird.f32 %v1379
  %vm1387 = vmor %vm1385, %vm1386
  %v1388 = vsel %vm1387, %v1379, %v1384
  %v1389 = vmul.f32 %v1321, %v1358
  %v1390 = vmul.f32 %v1322, %v1368
  %v1391 = vmul.f32 %v1323, %v1378
  %v1392 = vmul.f32 %v1324, %v1388
  %v1394 = vperm.slane %v1303, 0
  %v1396 = vmul.f32 %v1389, %v1394
  %v1397 = vmul.f32 %v1390, %v1394
  %v1398 = vmul.f32 %v1391, %v1394
  %v1399 = vmul.f32 %v1392, %v1394
  %v1401 = vperm.slane %v1304, 0
  %v1403 = vadd.f32 %v1396, %v1401
  %v1404 = vadd.f32 %v1397, %v1401
  %v1405 = vadd.f32 %v1398, %v1401
  %v1406 = vadd.f32 %v1399, %v1401
  %v1407 = vpack.c.bf16 %v1404, %v1403
  %v1408 = vpack.c.bf16 %v1406, %v1405
  %s1409 = scalar_lea.vmem %s6, 32
  %v1410 = vld [vmem:[%s1409] sm:$0xf]
  %v1411 = vld [vmem:[%s1409 + $0x4] sm:$0xf]
  %v1412 = vld [vmem:[%s1409 + $0x8] sm:$0xf]
  %v1413 = vld [vmem:[%s1409 + $0xc] sm:$0xf]
  %s1414 = scalar_lea.vmem %s9, 2
  %v1415 = vld [vmem:[%s1414] sm:$0x1]
  %v1417 = vperm.slane %v1415, 0
  %v1423 = vunpack.c.l.b16 %v1410
  %v1424 = vunpack.c.l.b16 %v1411
  %v1425 = vunpack.c.l.b16 %v1412
  %v1426 = vunpack.c.l.b16 %v1413
  %v1427 = vpack.c.b16 %v1424, %v1423
  %v1428 = vpack.c.b16 %v1426, %v1425
  %v1432 = vsel %vm138, %v1407, 0
  %v1435 = vsel %vm138, %v1408, 0
  %1437 = vmatpush.bf16.msra.mxu0 0
  %1438 = vmatpush.bf16.msra.mxu0 0
  %1439 = vmatpush.bf16.msra.mxu0 0
  %1440 = vmatpush.bf16.msra.mxu0 0
  %1441 = vmatpush.bf16.msra.mxu0 0
  %1442 = vmatpush.bf16.msra.mxu0 0
  %1443 = vmatpush.bf16.msra.mxu0 %v1428
  %1444 = vmatpush.bf16.msra.mxu0 %v1427
  %1445 = vmatmul.bf16.gmra.mxu0 %v1432
  %v1446 = vpop.f32.mrf.mxu0
  %v1447 = vadd.f32 %v1417, %v1446
  %v1448 = vpop.f32.mrf.mxu0
  %v1449 = vadd.f32 %v1417, %v1448
  %1450 = vmatmul.bf16.gmra.mxu0 %v1435
  %v1451 = vpop.f32.mrf.mxu0
  %v1452 = vadd.f32 %v1417, %v1451
  %v1453 = vpop.f32.mrf.mxu0
  %v1454 = vadd.f32 %v1417, %v1453
  %1455 = vdwg.mxu0
  %s1456 = scalar_lea.vmem %s7, 32
  %v1457 = vld [vmem:[%s1456] sm:$0xf]
  %v1458 = vld [vmem:[%s1456 + $0x4] sm:$0xf]
  %v1459 = vld [vmem:[%s1456 + $0x8] sm:$0xf]
  %v1460 = vld [vmem:[%s1456 + $0xc] sm:$0xf]
  %s1461 = scalar_lea.vmem %s10, 2
  %v1462 = vld [vmem:[%s1461] sm:$0x1]
  %v1464 = vperm.slane %v1462, 0
  %v1470 = vunpack.c.l.b16 %v1457
  %v1471 = vunpack.c.l.b16 %v1458
  %v1472 = vunpack.c.l.b16 %v1459
  %v1473 = vunpack.c.l.b16 %v1460
  %v1474 = vpack.c.b16 %v1471, %v1470
  %v1475 = vpack.c.b16 %v1473, %v1472
  %1478 = vmatpush.bf16.msra.mxu0 0
  %1479 = vmatpush.bf16.msra.mxu0 0
  %1480 = vmatpush.bf16.msra.mxu0 0
  %1481 = vmatpush.bf16.msra.mxu0 0
  %1482 = vmatpush.bf16.msra.mxu0 0
  %1483 = vmatpush.bf16.msra.mxu0 0
  %1484 = vmatpush.bf16.msra.mxu0 %v1475
  %1485 = vmatpush.bf16.msra.mxu0 %v1474
  %1486 = vmatmul.bf16.gmra.mxu0 %v1432
  %v1487 = vpop.f32.mrf.mxu0
  %v1488 = vadd.f32 %v1464, %v1487
  %v1489 = vpop.f32.mrf.mxu0
  %v1490 = vadd.f32 %v1464, %v1489
  %1491 = vmatmul.bf16.gmra.mxu0 %v1435
  %v1492 = vpop.f32.mrf.mxu0
  %v1493 = vadd.f32 %v1464, %v1492
  %v1494 = vpop.f32.mrf.mxu0
  %v1495 = vadd.f32 %v1464, %v1494
  %1496 = vdwg.mxu0
  %s1497 = scalar_lea.vmem %s8, 32
  %v1498 = vld [vmem:[%s1497] sm:$0xf]
  %v1499 = vld [vmem:[%s1497 + $0x4] sm:$0xf]
  %v1500 = vld [vmem:[%s1497 + $0x8] sm:$0xf]
  %v1501 = vld [vmem:[%s1497 + $0xc] sm:$0xf]
  %s1502 = scalar_lea.vmem %s11, 2
  %v1503 = vld [vmem:[%s1502] sm:$0x1]
  %v1505 = vperm.slane %v1503, 0
  %v1511 = vunpack.c.l.b16 %v1498
  %v1512 = vunpack.c.l.b16 %v1499
  %v1513 = vunpack.c.l.b16 %v1500
  %v1514 = vunpack.c.l.b16 %v1501
  %v1515 = vpack.c.b16 %v1512, %v1511
  %v1516 = vpack.c.b16 %v1514, %v1513
  %1519 = vmatpush.bf16.msra.mxu0 0
  %1520 = vmatpush.bf16.msra.mxu0 0
  %1521 = vmatpush.bf16.msra.mxu0 0
  %1522 = vmatpush.bf16.msra.mxu0 0
  %1523 = vmatpush.bf16.msra.mxu0 0
  %1524 = vmatpush.bf16.msra.mxu0 0
  %1525 = vmatpush.bf16.msra.mxu0 %v1516
  %1526 = vmatpush.bf16.msra.mxu0 %v1515
  %1527 = vmatmul.bf16.gmra.mxu0 %v1432
  %v1528 = vpop.f32.mrf.mxu0
  %v1529 = vadd.f32 %v1505, %v1528
  %v1530 = vpop.f32.mrf.mxu0
  %v1531 = vadd.f32 %v1505, %v1530
  %1532 = vmatmul.bf16.gmra.mxu0 %v1435
  %v1533 = vpop.f32.mrf.mxu0
  %v1534 = vadd.f32 %v1505, %v1533
  %v1535 = vpop.f32.mrf.mxu0
  %v1536 = vadd.f32 %v1505, %v1535
  %1537 = vdwg.mxu0
  %v1538 = vmul.f32 %v1447, 0.25
  %v1539 = vmul.f32 %v1449, 0.25
  %v1540 = vmul.f32 %v1452, 0.25
  %v1541 = vmul.f32 %v1454, 0.25
  %v1542 = vpack.c.bf16 %v1539, %v1538
  %v1543 = vpack.c.bf16 %v1541, %v1540
  %v1544 = vpack.c.bf16 %v1490, %v1488
  %v1545 = vpack.c.bf16 %v1495, %v1493
  %v1547 = vsel %vm250, %v1542, 0
  %v1550 = vsel %vm250, %v1543, 0
  %v1553 = vsel %vm250, %v1544, 0
  %v1556 = vsel %vm250, %v1545, 0
  %1558 = vmatpush.bf16.xpose.msra.mxu0 0
  %1559 = vmatpush.bf16.xpose.msra.mxu0 0
  %1560 = vmatpush.bf16.xpose.msra.mxu0 0
  %1561 = vmatpush.bf16.xpose.msra.mxu0 0
  %1562 = vmatpush.bf16.xpose.msra.mxu0 0
  %1563 = vmatpush.bf16.xpose.msra.mxu0 0
  %1564 = vmatpush.bf16.xpose.msra.mxu0 %v1556
  %1565 = vmatpush.bf16.xpose.msra.mxu0 %v1553
  %1566 = vmatmul.bf16.gmra.mxu0 %v1547
  %v1567 = vpop.f32.mrf.mxu0
  %v1568 = vadd.f32 %v112, %v1567
  %v1569 = vpop.f32.mrf.mxu0
  %v1570 = vadd.f32 %v113, %v1569
  %1571 = vmatmul.bf16.gmra.mxu0 %v1550
  %v1572 = vpop.f32.mrf.mxu0
  %v1573 = vadd.f32 %v114, %v1572
  %v1574 = vpop.f32.mrf.mxu0
  %v1575 = vadd.f32 %v115, %v1574
  %1576 = vdwg.mxu0
  %v1577 = vsel %vm282, %v1568, -inf
  %1578 = vmax.xlane.f32.xlu0 %v1577
  %v1579 = vpop.xlane.xlu0 %1578
  %v1580 = vsel %vm282, %v1570, -inf
  %1581 = vmax.xlane.f32.xlu0 %v1580
  %v1582 = vpop.xlane.xlu0 %1581
  %v1583 = vsel %vm282, %v1573, -inf
  %1584 = vmax.xlane.f32.xlu0 %v1583
  %v1585 = vpop.xlane.xlu0 %1584
  %v1586 = vsel %vm292, %v1575, -inf
  %1587 = vmax.xlane.f32.xlu0 %v1586
  %v1588 = vpop.xlane.xlu0 %1587
  %v1589 = vsub.f32 %v1568, %v1579
  %v1590 = vsub.f32 %v1570, %v1582
  %v1591 = vsub.f32 %v1573, %v1585
  %v1592 = vsub.f32 %v1575, %v1588
  %v1593 = vmul.f32 %v1589, 1.442695
  %v1594 = vpow.pop %v1593
  %v1595 = vmul.f32 %v1590, 1.442695
  %v1596 = vpow.pop %v1595
  %v1597 = vmul.f32 %v1591, 1.442695
  %v1598 = vpow.pop %v1597
  %v1599 = vmul.f32 %v1592, 1.442695
  %v1600 = vpow.pop %v1599
  %v1601 = vsel %vm282, %v1594, 0.0
  %1602 = vadd.xlane.f32.xlu0 %v1601
  %v1603 = vpop.xlane.xlu0 %1602
  %v1604 = vsel %vm282, %v1596, 0.0
  %1605 = vadd.xlane.f32.xlu0 %v1604
  %v1606 = vpop.xlane.xlu0 %1605
  %v1607 = vsel %vm282, %v1598, 0.0
  %1608 = vadd.xlane.f32.xlu0 %v1607
  %v1609 = vpop.xlane.xlu0 %1608
  %v1610 = vsel %vm292, %v1600, 0.0
  %1611 = vadd.xlane.f32.xlu0 %v1610
  %v1612 = vpop.xlane.xlu0 %1611
  %v1613 = vrcp.pop %v1603
  %v1614 = vrcp.pop %v1606
  %v1615 = vrcp.pop %v1609
  %v1616 = vrcp.pop %v1612
  %v1617 = vmul.f32 %v1594, %v1613
  %v1618 = vmul.f32 %v1596, %v1614
  %v1619 = vmul.f32 %v1598, %v1615
  %v1620 = vmul.f32 %v1600, %v1616
  %v1621 = vpack.c.bf16 %v1618, %v1617
  %v1622 = vpack.c.bf16 %v1620, %v1619
  %v1623 = vpack.c.bf16 %v1531, %v1529
  %v1624 = vpack.c.bf16 %v1536, %v1534
  %v1626 = vsel %vm282, %v1621, 0
  %v1629 = vsel %vm282, %v1622, 0
  %v1632 = vsel %vm338, %v1624, 0
  %1634 = vmatpush.bf16.msra.mxu0 0
  %1635 = vmatpush.bf16.msra.mxu0 0
  %1636 = vmatpush.bf16.msra.mxu0 0
  %1637 = vmatpush.bf16.msra.mxu0 0
  %1638 = vmatpush.bf16.msra.mxu0 0
  %1639 = vmatpush.bf16.msra.mxu0 0
  %1640 = vmatpush.bf16.msra.mxu0 %v1632
  %1641 = vmatpush.bf16.msra.mxu0 %v1623
  %1642 = vmatmul.bf16.gmra.mxu0 %v1626
  %v1643 = vpop.f32.mrf.mxu0
  %v1644 = vadd.f32 0.0, %v1643
  %v1645 = vpop.f32.mrf.mxu0
  %v1646 = vadd.f32 0.0, %v1645
  %1647 = vmatmul.bf16.gmra.mxu0 %v1629
  %v1648 = vpop.f32.mrf.mxu0
  %v1649 = vadd.f32 0.0, %v1648
  %v1650 = vpop.f32.mrf.mxu0
  %v1651 = vadd.f32 0.0, %v1650
  %1652 = vdwg.mxu0
  %v1653 = vpack.c.bf16 %v1646, %v1644
  %v1654 = vpack.c.bf16 %v1651, %v1649
  %s1655 = scalar_lea.vmem %s12, 16
  %v1656 = vld [vmem:[%s1655] sm:$0xf]
  %v1657 = vld [vmem:[%s1655 + $0x4] sm:$0xf]
  %s1658 = scalar_lea.vmem %s6, 48
  %v1659 = vld [vmem:[%s1658] sm:$0xf]
  %v1660 = vld [vmem:[%s1658 + $0x4] sm:$0xf]
  %v1661 = vld [vmem:[%s1658 + $0x8] sm:$0xf]
  %v1662 = vld [vmem:[%s1658 + $0xc] sm:$0xf]
  %s1663 = scalar_lea.vmem %s9, 3
  %v1664 = vld [vmem:[%s1663] sm:$0x1]
  %v1666 = vperm.slane %v1664, 0
  %v1672 = vunpack.c.l.b16 %v1659
  %v1673 = vunpack.c.l.b16 %v1660
  %v1674 = vunpack.c.l.b16 %v1661
  %v1675 = vunpack.c.l.b16 %v1662
  %v1676 = vpack.c.b16 %v1673, %v1672
  %v1677 = vpack.c.b16 %v1675, %v1674
  %1680 = vmatpush.bf16.msra.mxu0 0
  %1681 = vmatpush.bf16.msra.mxu0 0
  %1682 = vmatpush.bf16.msra.mxu0 0
  %1683 = vmatpush.bf16.msra.mxu0 0
  %1684 = vmatpush.bf16.msra.mxu0 0
  %1685 = vmatpush.bf16.msra.mxu0 0
  %1686 = vmatpush.bf16.msra.mxu0 %v1677
  %1687 = vmatpush.bf16.msra.mxu0 %v1676
  %1688 = vmatmul.bf16.gmra.mxu0 %v1432
  %v1689 = vpop.f32.mrf.mxu0
  %v1690 = vadd.f32 %v1666, %v1689
  %v1691 = vpop.f32.mrf.mxu0
  %v1692 = vadd.f32 %v1666, %v1691
  %1693 = vmatmul.bf16.gmra.mxu0 %v1435
  %v1694 = vpop.f32.mrf.mxu0
  %v1695 = vadd.f32 %v1666, %v1694
  %v1696 = vpop.f32.mrf.mxu0
  %v1697 = vadd.f32 %v1666, %v1696
  %1698 = vdwg.mxu0
  %s1699 = scalar_lea.vmem %s7, 48
  %v1700 = vld [vmem:[%s1699] sm:$0xf]
  %v1701 = vld [vmem:[%s1699 + $0x4] sm:$0xf]
  %v1702 = vld [vmem:[%s1699 + $0x8] sm:$0xf]
  %v1703 = vld [vmem:[%s1699 + $0xc] sm:$0xf]
  %s1704 = scalar_lea.vmem %s10, 3
  %v1705 = vld [vmem:[%s1704] sm:$0x1]
  %v1707 = vperm.slane %v1705, 0
  %v1713 = vunpack.c.l.b16 %v1700
  %v1714 = vunpack.c.l.b16 %v1701
  %v1715 = vunpack.c.l.b16 %v1702
  %v1716 = vunpack.c.l.b16 %v1703
  %v1717 = vpack.c.b16 %v1714, %v1713
  %v1718 = vpack.c.b16 %v1716, %v1715
  %1721 = vmatpush.bf16.msra.mxu0 0
  %1722 = vmatpush.bf16.msra.mxu0 0
  %1723 = vmatpush.bf16.msra.mxu0 0
  %1724 = vmatpush.bf16.msra.mxu0 0
  %1725 = vmatpush.bf16.msra.mxu0 0
  %1726 = vmatpush.bf16.msra.mxu0 0
  %1727 = vmatpush.bf16.msra.mxu0 %v1718
  %1728 = vmatpush.bf16.msra.mxu0 %v1717
  %1729 = vmatmul.bf16.gmra.mxu0 %v1432
  %v1730 = vpop.f32.mrf.mxu0
  %v1731 = vadd.f32 %v1707, %v1730
  %v1732 = vpop.f32.mrf.mxu0
  %v1733 = vadd.f32 %v1707, %v1732
  %1734 = vmatmul.bf16.gmra.mxu0 %v1435
  %v1735 = vpop.f32.mrf.mxu0
  %v1736 = vadd.f32 %v1707, %v1735
  %v1737 = vpop.f32.mrf.mxu0
  %v1738 = vadd.f32 %v1707, %v1737
  %1739 = vdwg.mxu0
  %s1740 = scalar_lea.vmem %s8, 48
  %v1741 = vld [vmem:[%s1740] sm:$0xf]
  %v1742 = vld [vmem:[%s1740 + $0x4] sm:$0xf]
  %v1743 = vld [vmem:[%s1740 + $0x8] sm:$0xf]
  %v1744 = vld [vmem:[%s1740 + $0xc] sm:$0xf]
  %s1745 = scalar_lea.vmem %s11, 3
  %v1746 = vld [vmem:[%s1745] sm:$0x1]
  %v1748 = vperm.slane %v1746, 0
  %v1754 = vunpack.c.l.b16 %v1741
  %v1755 = vunpack.c.l.b16 %v1742
  %v1756 = vunpack.c.l.b16 %v1743
  %v1757 = vunpack.c.l.b16 %v1744
  %v1758 = vpack.c.b16 %v1755, %v1754
  %v1759 = vpack.c.b16 %v1757, %v1756
  %1762 = vmatpush.bf16.msra.mxu0 0
  %1763 = vmatpush.bf16.msra.mxu0 0
  %1764 = vmatpush.bf16.msra.mxu0 0
  %1765 = vmatpush.bf16.msra.mxu0 0
  %1766 = vmatpush.bf16.msra.mxu0 0
  %1767 = vmatpush.bf16.msra.mxu0 0
  %1768 = vmatpush.bf16.msra.mxu0 %v1759
  %1769 = vmatpush.bf16.msra.mxu0 %v1758
  %1770 = vmatmul.bf16.gmra.mxu0 %v1432
  %v1771 = vpop.f32.mrf.mxu0
  %v1772 = vadd.f32 %v1748, %v1771
  %v1773 = vpop.f32.mrf.mxu0
  %v1774 = vadd.f32 %v1748, %v1773
  %1775 = vmatmul.bf16.gmra.mxu0 %v1435
  %v1776 = vpop.f32.mrf.mxu0
  %v1777 = vadd.f32 %v1748, %v1776
  %v1778 = vpop.f32.mrf.mxu0
  %v1779 = vadd.f32 %v1748, %v1778
  %1780 = vdwg.mxu0
  %v1781 = vmul.f32 %v1690, 0.25
  %v1782 = vmul.f32 %v1692, 0.25
  %v1783 = vmul.f32 %v1695, 0.25
  %v1784 = vmul.f32 %v1697, 0.25
  %v1785 = vpack.c.bf16 %v1782, %v1781
  %v1786 = vpack.c.bf16 %v1784, %v1783
  %v1787 = vpack.c.bf16 %v1733, %v1731
  %v1788 = vpack.c.bf16 %v1738, %v1736
  %v1790 = vsel %vm250, %v1785, 0
  %v1793 = vsel %vm250, %v1786, 0
  %v1796 = vsel %vm250, %v1787, 0
  %v1799 = vsel %vm250, %v1788, 0
  %1801 = vmatpush.bf16.xpose.msra.mxu0 0
  %1802 = vmatpush.bf16.xpose.msra.mxu0 0
  %1803 = vmatpush.bf16.xpose.msra.mxu0 0
  %1804 = vmatpush.bf16.xpose.msra.mxu0 0
  %1805 = vmatpush.bf16.xpose.msra.mxu0 0
  %1806 = vmatpush.bf16.xpose.msra.mxu0 0
  %1807 = vmatpush.bf16.xpose.msra.mxu0 %v1799
  %1808 = vmatpush.bf16.xpose.msra.mxu0 %v1796
  %1809 = vmatmul.bf16.gmra.mxu0 %v1790
  %v1810 = vpop.f32.mrf.mxu0
  %v1811 = vadd.f32 %v112, %v1810
  %v1812 = vpop.f32.mrf.mxu0
  %v1813 = vadd.f32 %v113, %v1812
  %1814 = vmatmul.bf16.gmra.mxu0 %v1793
  %v1815 = vpop.f32.mrf.mxu0
  %v1816 = vadd.f32 %v114, %v1815
  %v1817 = vpop.f32.mrf.mxu0
  %v1818 = vadd.f32 %v115, %v1817
  %1819 = vdwg.mxu0
  %v1820 = vsel %vm282, %v1811, -inf
  %1821 = vmax.xlane.f32.xlu0 %v1820
  %v1822 = vpop.xlane.xlu0 %1821
  %v1823 = vsel %vm282, %v1813, -inf
  %1824 = vmax.xlane.f32.xlu0 %v1823
  %v1825 = vpop.xlane.xlu0 %1824
  %v1826 = vsel %vm282, %v1816, -inf
  %1827 = vmax.xlane.f32.xlu0 %v1826
  %v1828 = vpop.xlane.xlu0 %1827
  %v1829 = vsel %vm292, %v1818, -inf
  %1830 = vmax.xlane.f32.xlu0 %v1829
  %v1831 = vpop.xlane.xlu0 %1830
  %v1832 = vsub.f32 %v1811, %v1822
  %v1833 = vsub.f32 %v1813, %v1825
  %v1834 = vsub.f32 %v1816, %v1828
  %v1835 = vsub.f32 %v1818, %v1831
  %v1836 = vmul.f32 %v1832, 1.442695
  %v1837 = vpow.pop %v1836
  %v1838 = vmul.f32 %v1833, 1.442695
  %v1839 = vpow.pop %v1838
  %v1840 = vmul.f32 %v1834, 1.442695
  %v1841 = vpow.pop %v1840
  %v1842 = vmul.f32 %v1835, 1.442695
  %v1843 = vpow.pop %v1842
  %v1844 = vsel %vm282, %v1837, 0.0
  %1845 = vadd.xlane.f32.xlu0 %v1844
  %v1846 = vpop.xlane.xlu0 %1845
  %v1847 = vsel %vm282, %v1839, 0.0
  %1848 = vadd.xlane.f32.xlu0 %v1847
  %v1849 = vpop.xlane.xlu0 %1848
  %v1850 = vsel %vm282, %v1841, 0.0
  %1851 = vadd.xlane.f32.xlu0 %v1850
  %v1852 = vpop.xlane.xlu0 %1851
  %v1853 = vsel %vm292, %v1843, 0.0
  %1854 = vadd.xlane.f32.xlu0 %v1853
  %v1855 = vpop.xlane.xlu0 %1854
  %v1856 = vrcp.pop %v1846
  %v1857 = vrcp.pop %v1849
  %v1858 = vrcp.pop %v1852
  %v1859 = vrcp.pop %v1855
  %v1860 = vmul.f32 %v1837, %v1856
  %v1861 = vmul.f32 %v1839, %v1857
  %v1862 = vmul.f32 %v1841, %v1858
  %v1863 = vmul.f32 %v1843, %v1859
  %v1864 = vpack.c.bf16 %v1861, %v1860
  %v1865 = vpack.c.bf16 %v1863, %v1862
  %v1866 = vpack.c.bf16 %v1774, %v1772
  %v1867 = vpack.c.bf16 %v1779, %v1777
  %v1869 = vsel %vm282, %v1864, 0
  %v1872 = vsel %vm282, %v1865, 0
  %v1875 = vsel %vm338, %v1867, 0
  %1877 = vmatpush.bf16.msra.mxu0 0
  %1878 = vmatpush.bf16.msra.mxu0 0
  %1879 = vmatpush.bf16.msra.mxu0 0
  %1880 = vmatpush.bf16.msra.mxu0 0
  %1881 = vmatpush.bf16.msra.mxu0 0
  %1882 = vmatpush.bf16.msra.mxu0 0
  %1883 = vmatpush.bf16.msra.mxu0 %v1875
  %1884 = vmatpush.bf16.msra.mxu0 %v1866
  %1885 = vmatmul.bf16.gmra.mxu0 %v1869
  %v1886 = vpop.f32.mrf.mxu0
  %v1887 = vadd.f32 0.0, %v1886
  %v1888 = vpop.f32.mrf.mxu0
  %v1889 = vadd.f32 0.0, %v1888
  %1890 = vmatmul.bf16.gmra.mxu0 %v1872
  %v1891 = vpop.f32.mrf.mxu0
  %v1892 = vadd.f32 0.0, %v1891
  %v1893 = vpop.f32.mrf.mxu0
  %v1894 = vadd.f32 0.0, %v1893
  %1895 = vdwg.mxu0
  %v1896 = vpack.c.bf16 %v1889, %v1887
  %v1897 = vpack.c.bf16 %v1894, %v1892
  %s1898 = scalar_lea.vmem %s12, 24
  %v1899 = vld [vmem:[%s1898] sm:$0xf]
  %v1900 = vld [vmem:[%s1898 + $0x4] sm:$0xf]
  %v1903 = vunpack.c.l.b16 %v1899
  %v1904 = vunpack.c.l.b16 %v1900
  %v1905 = vpack.c.b16 %v1904, %v1903
  %v1908 = vsel %vm250, %v1896, 0
  %v1911 = vsel %vm250, %v1897, 0
  %1913 = vmatpush.bf16.msra.mxu0 0
  %1914 = vmatpush.bf16.msra.mxu0 0
  %1915 = vmatpush.bf16.msra.mxu0 0
  %1916 = vmatpush.bf16.msra.mxu0 0
  %1917 = vmatpush.bf16.msra.mxu0 0
  %1918 = vmatpush.bf16.msra.mxu0 0
  %1919 = vmatpush.bf16.msra.mxu0 0
  %1920 = vmatpush.bf16.msra.mxu0 %v1905
  %1921 = vmatmul.bf16.gmra.mxu0 %v1908
  %v1922 = vpop.f32.mrf.mxu0
  %v1923 = vadd.f32 0.0, %v1922
  %v1924 = vpop.f32.mrf.mxu0
  %v1925 = vadd.f32 0.0, %v1924
  %1926 = vmatmul.bf16.gmra.mxu0 %v1911
  %v1927 = vpop.f32.mrf.mxu0
  %v1928 = vadd.f32 0.0, %v1927
  %v1929 = vpop.f32.mrf.mxu0
  %v1930 = vadd.f32 0.0, %v1929
  %1931 = vdwg.mxu0
  %v1934 = vunpack.c.l.b16 %v1656
  %v1935 = vunpack.c.l.b16 %v1657
  %v1936 = vpack.c.b16 %v1935, %v1934
  %v1939 = vsel %vm250, %v1653, 0
  %v1942 = vsel %vm250, %v1654, 0
  %1944 = vmatpush.bf16.msra.mxu0 0
  %1945 = vmatpush.bf16.msra.mxu0 0
  %1946 = vmatpush.bf16.msra.mxu0 0
  %1947 = vmatpush.bf16.msra.mxu0 0
  %1948 = vmatpush.bf16.msra.mxu0 0
  %1949 = vmatpush.bf16.msra.mxu0 0
  %1950 = vmatpush.bf16.msra.mxu0 0
  %1951 = vmatpush.bf16.msra.mxu0 %v1936
  %1952 = vmatmul.bf16.gmra.mxu0 %v1939
  %v1953 = vpop.f32.mrf.mxu0
  %v1954 = vadd.f32 %v1923, %v1953
  %v1955 = vpop.f32.mrf.mxu0
  %v1956 = vadd.f32 %v1925, %v1955
  %1957 = vmatmul.bf16.gmra.mxu0 %v1942
  %v1958 = vpop.f32.mrf.mxu0
  %v1959 = vadd.f32 %v1928, %v1958
  %v1960 = vpop.f32.mrf.mxu0
  %v1961 = vadd.f32 %v1930, %v1960
  %1962 = vdwg.mxu0
  %s1963 = scalar_lea.vmem %s13, 1
  %v1964 = vld [vmem:[%s1963] sm:$0x1]
  %v1966 = vperm.slane %v1964, 0
  %v1968 = vadd.f32 %v1954, %v1966
  %v1969 = vadd.f32 %v1956, %v1966
  %v1970 = vadd.f32 %v1959, %v1966
  %v1971 = vadd.f32 %v1961, %v1966
  %v1972 = vadd.f32 %v1403, %v1968
  %v1973 = vadd.f32 %v1404, %v1969
  %v1974 = vadd.f32 %v1405, %v1970
  %v1975 = vadd.f32 %v1406, %v1971
  %s1976 = scalar_lea.vmem %s14, 1
  %v1977 = vld [vmem:[%s1976] sm:$0x1]
  %s1978 = scalar_lea.vmem %s15, 1
  %v1979 = vld [vmem:[%s1978] sm:$0x1]
  %v1980 = vsel %vm138, %v1972, 0.0
  %1981 = vadd.xlane.f32.xlu0 %v1980
  %v1982 = vpop.xlane.xlu0 %1981
  %v1983 = vsel %vm138, %v1973, 0.0
  %1984 = vadd.xlane.f32.xlu0 %v1983
  %v1985 = vpop.xlane.xlu0 %1984
  %v1986 = vsel %vm138, %v1974, 0.0
  %1987 = vadd.xlane.f32.xlu0 %v1986
  %v1988 = vpop.xlane.xlu0 %1987
  %v1989 = vsel %vm693, %v1975, 0.0
  %1990 = vadd.xlane.f32.xlu0 %v1989
  %v1991 = vpop.xlane.xlu0 %1990
  %v1992 = vmul.f32 %v1982, %v703
  %v1993 = vmul.f32 %v1985, %v703
  %v1994 = vmul.f32 %v1988, %v703
  %v1995 = vmul.f32 %v1991, %v703
  %v1996 = vsub.f32 %v1972, %v1992
  %v1997 = vsub.f32 %v1973, %v1993
  %v1998 = vsub.f32 %v1974, %v1994
  %v1999 = vsub.f32 %v1975, %v1995
  %v2000 = vmul.f32 %v1996, %v1996
  %v2001 = vmul.f32 %v1997, %v1997
  %v2002 = vmul.f32 %v1998, %v1998
  %v2003 = vmul.f32 %v1999, %v1999
  %v2004 = vsel %vm138, %v2000, 0.0
  %2005 = vadd.xlane.f32.xlu0 %v2004
  %v2006 = vpop.xlane.xlu0 %2005
  %v2007 = vsel %vm138, %v2001, 0.0
  %2008 = vadd.xlane.f32.xlu0 %v2007
  %v2009 = vpop.xlane.xlu0 %2008
  %v2010 = vsel %vm138, %v2002, 0.0
  %2011 = vadd.xlane.f32.xlu0 %v2010
  %v2012 = vpop.xlane.xlu0 %2011
  %v2013 = vsel %vm693, %v2003, 0.0
  %2014 = vadd.xlane.f32.xlu0 %v2013
  %v2015 = vpop.xlane.xlu0 %2014
  %v2016 = vmul.f32 %v2006, %v703
  %v2017 = vmul.f32 %v2009, %v703
  %v2018 = vmul.f32 %v2012, %v703
  %v2019 = vmul.f32 %v2015, %v703
  %v2020 = vadd.f32 %v2016, 1e-05
  %v2021 = vadd.f32 %v2017, 1e-05
  %v2022 = vadd.f32 %v2018, 1e-05
  %v2023 = vadd.f32 %v2019, 1e-05
  %v2024 = vrsqrt.pop %v2020
  %v2025 = vmul.f32 %v2024, %v2020
  %v2026 = vmul.f32 %v2025, %v2024
  %v2027 = vmul.f32 0.5, %v2026
  %v2028 = vsub.f32 1.5, %v2027
  %v2029 = vmul.f32 %v2024, %v2028
  %vm2030 = vweird.f32 %v2020
  %vm2031 = vweird.f32 %v2024
  %vm2032 = vmor %vm2030, %vm2031
  %v2033 = vsel %vm2032, %v2024, %v2029
  %v2034 = vrsqrt.pop %v2021
  %v2035 = vmul.f32 %v2034, %v2021
  %v2036 = vmul.f32 %v2035, %v2034
  %v2037 = vmul.f32 0.5, %v2036
  %v2038 = vsub.f32 1.5, %v2037
  %v2039 = vmul.f32 %v2034, %v2038
  %vm2040 = vweird.f32 %v2021
  %vm2041 = vweird.f32 %v2034
  %vm2042 = vmor %vm2040, %vm2041
  %v2043 = vsel %vm2042, %v2034, %v2039
  %v2044 = vrsqrt.pop %v2022
  %v2045 = vmul.f32 %v2044, %v2022
  %v2046 = vmul.f32 %v2045, %v2044
  %v2047 = vmul.f32 0.5, %v2046
  %v2048 = vsub.f32 1.5, %v2047
  %v2049 = vmul.f32 %v2044, %v2048
  %vm2050 = vweird.f32 %v2022
  %vm2051 = vweird.f32 %v2044
  %vm2052 = vmor %vm2050, %vm2051
  %v2053 = vsel %vm2052, %v2044, %v2049
  %v2054 = vrsqrt.pop %v2023
  %v2055 = vmul.f32 %v2054, %v2023
  %v2056 = vmul.f32 %v2055, %v2054
  %v2057 = vmul.f32 0.5, %v2056
  %v2058 = vsub.f32 1.5, %v2057
  %v2059 = vmul.f32 %v2054, %v2058
  %vm2060 = vweird.f32 %v2023
  %vm2061 = vweird.f32 %v2054
  %vm2062 = vmor %vm2060, %vm2061
  %v2063 = vsel %vm2062, %v2054, %v2059
  %v2064 = vmul.f32 %v1996, %v2033
  %v2065 = vmul.f32 %v1997, %v2043
  %v2066 = vmul.f32 %v1998, %v2053
  %v2067 = vmul.f32 %v1999, %v2063
  %v2069 = vperm.slane %v1977, 0
  %v2071 = vmul.f32 %v2064, %v2069
  %v2072 = vmul.f32 %v2065, %v2069
  %v2073 = vmul.f32 %v2066, %v2069
  %v2074 = vmul.f32 %v2067, %v2069
  %v2076 = vperm.slane %v1979, 0
  %v2078 = vadd.f32 %v2071, %v2076
  %v2079 = vadd.f32 %v2072, %v2076
  %v2080 = vadd.f32 %v2073, %v2076
  %v2081 = vadd.f32 %v2074, %v2076
  %s2082 = scalar_lea.vmem %s18, 48
  %v2083 = vld [vmem:[%s2082] sm:$0xf]
  %v2084 = vld [vmem:[%s2082 + $0x4] sm:$0xf]
  %v2085 = vld [vmem:[%s2082 + $0x8] sm:$0xf]
  %v2086 = vld [vmem:[%s2082 + $0xc] sm:$0xf]
  %v2087 = vld [vmem:[%s2082 + $0x10] sm:$0xf]
  %v2088 = vld [vmem:[%s2082 + $0x14] sm:$0xf]
  %v2089 = vld [vmem:[%s2082 + $0x18] sm:$0xf]
  %v2090 = vld [vmem:[%s2082 + $0x1c] sm:$0xf]
  %v2091 = vld [vmem:[%s2082 + $0x20] sm:$0xf]
  %v2092 = vld [vmem:[%s2082 + $0x24] sm:$0xf]
  %v2093 = vld [vmem:[%s2082 + $0x28] sm:$0xf]
  %v2094 = vld [vmem:[%s2082 + $0x2c] sm:$0xf]
  %s2095 = scalar_lea.vmem %s19, 1
  %v2096 = vld [vmem:[%s2095] sm:$0x1]
  %v2097 = vpack.c.bf16 %v2079, %v2078
  %v2098 = vpack.c.bf16 %v2081, %v2080
  %v2100 = vsel %vm338, %v2098, 0
  %2102 = vmatpush.bf16.msra.mxu0 0
  %2103 = vmatpush.bf16.msra.mxu0 0
  %2104 = vmatpush.bf16.msra.mxu0 0
  %2105 = vmatpush.bf16.msra.mxu0 0
  %2106 = vmatpush.bf16.msra.mxu0 0
  %2107 = vmatpush.bf16.msra.mxu0 0
  %2108 = vmatpush.bf16.msra.mxu0 %v2100
  %2109 = vmatpush.bf16.msra.mxu0 %v2097
  %2110 = vmatmul.bf16.gmra.mxu0 %v810
  %v2111 = vpop.f32.mrf.mxu0
  %v2112 = vadd.f32 0.0, %v2111
  %v2113 = vpop.f32.mrf.mxu0
  %v2114 = vadd.f32 0.0, %v2113
  %2115 = vmatmul.bf16.gmra.mxu0 %v813
  %v2116 = vpop.f32.mrf.mxu0
  %v2117 = vadd.f32 0.0, %v2116
  %v2118 = vpop.f32.mrf.mxu0
  %v2119 = vadd.f32 0.0, %v2118
  %2120 = vdwg.mxu0
  %v2121 = vpack.c.bf16 %v2114, %v2112
  %v2122 = vpack.c.bf16 %v2119, %v2117
  %2123 = vmatpush.bf16.msra.mxu0 0
  %2124 = vmatpush.bf16.msra.mxu0 0
  %2125 = vmatpush.bf16.msra.mxu0 0
  %2126 = vmatpush.bf16.msra.mxu0 0
  %2127 = vmatpush.bf16.msra.mxu0 0
  %2128 = vmatpush.bf16.msra.mxu0 0
  %2129 = vmatpush.bf16.msra.mxu0 %v2100
  %2130 = vmatpush.bf16.msra.mxu0 %v2097
  %2131 = vmatmul.bf16.gmra.mxu0 %v840
  %v2132 = vpop.f32.mrf.mxu0
  %v2133 = vadd.f32 0.0, %v2132
  %v2134 = vpop.f32.mrf.mxu0
  %v2135 = vadd.f32 0.0, %v2134
  %2136 = vmatmul.bf16.gmra.mxu0 %v843
  %v2137 = vpop.f32.mrf.mxu0
  %v2138 = vadd.f32 0.0, %v2137
  %v2139 = vpop.f32.mrf.mxu0
  %v2140 = vadd.f32 0.0, %v2139
  %2141 = vdwg.mxu0
  %v2142 = vpack.c.bf16 %v2135, %v2133
  %v2143 = vpack.c.bf16 %v2140, %v2138
  %v2148 = vunpack.c.l.b16 %v2087
  %v2149 = vunpack.c.l.b16 %v2088
  %v2150 = vunpack.c.l.b16 %v2089
  %v2151 = vunpack.c.l.b16 %v2090
  %v2152 = vpack.c.b16 %v2149, %v2148
  %v2153 = vpack.c.b16 %v2151, %v2150
  %v2157 = vsel %vm138, %v2097, 0
  %v2159 = vsel %vm138, %v2098, 0
  %2161 = vmatpush.bf16.msra.mxu0 0
  %2162 = vmatpush.bf16.msra.mxu0 0
  %2163 = vmatpush.bf16.msra.mxu0 0
  %2164 = vmatpush.bf16.msra.mxu0 0
  %2165 = vmatpush.bf16.msra.mxu0 0
  %2166 = vmatpush.bf16.msra.mxu0 0
  %2167 = vmatpush.bf16.msra.mxu0 %v2153
  %2168 = vmatpush.bf16.msra.mxu0 %v2152
  %2169 = vmatmul.bf16.gmra.mxu0 %v2157
  %v2170 = vpop.f32.mrf.mxu0
  %v2171 = vadd.f32 0.0, %v2170
  %v2172 = vpop.f32.mrf.mxu0
  %v2173 = vadd.f32 0.0, %v2172
  %2174 = vmatmul.bf16.gmra.mxu0 %v2159
  %v2175 = vpop.f32.mrf.mxu0
  %v2176 = vadd.f32 0.0, %v2175
  %v2177 = vpop.f32.mrf.mxu0
  %v2178 = vadd.f32 0.0, %v2177
  %2179 = vdwg.mxu0
  %v2184 = vunpack.c.l.b16 %v2083
  %v2185 = vunpack.c.l.b16 %v2084
  %v2186 = vunpack.c.l.b16 %v2085
  %v2187 = vunpack.c.l.b16 %v2086
  %v2188 = vpack.c.b16 %v2185, %v2184
  %v2189 = vpack.c.b16 %v2187, %v2186
  %v2193 = vsel %vm138, %v2121, 0
  %v2196 = vsel %vm138, %v2122, 0
  %2198 = vmatpush.bf16.msra.mxu0 0
  %2199 = vmatpush.bf16.msra.mxu0 0
  %2200 = vmatpush.bf16.msra.mxu0 0
  %2201 = vmatpush.bf16.msra.mxu0 0
  %2202 = vmatpush.bf16.msra.mxu0 0
  %2203 = vmatpush.bf16.msra.mxu0 0
  %2204 = vmatpush.bf16.msra.mxu0 %v2189
  %2205 = vmatpush.bf16.msra.mxu0 %v2188
  %2206 = vmatmul.bf16.gmra.mxu0 %v2193
  %v2207 = vpop.f32.mrf.mxu0
  %v2208 = vadd.f32 %v2171, %v2207
  %v2209 = vpop.f32.mrf.mxu0
  %v2210 = vadd.f32 %v2173, %v2209
  %2211 = vmatmul.bf16.gmra.mxu0 %v2196
  %v2212 = vpop.f32.mrf.mxu0
  %v2213 = vadd.f32 %v2176, %v2212
  %v2214 = vpop.f32.mrf.mxu0
  %v2215 = vadd.f32 %v2178, %v2214
  %2216 = vdwg.mxu0
  %v2221 = vunpack.c.l.b16 %v2091
  %v2222 = vunpack.c.l.b16 %v2092
  %v2223 = vunpack.c.l.b16 %v2093
  %v2224 = vunpack.c.l.b16 %v2094
  %v2225 = vpack.c.b16 %v2222, %v2221
  %v2226 = vpack.c.b16 %v2224, %v2223
  %v2230 = vsel %vm138, %v2142, 0
  %v2233 = vsel %vm138, %v2143, 0
  %2235 = vmatpush.bf16.msra.mxu0 0
  %2236 = vmatpush.bf16.msra.mxu0 0
  %2237 = vmatpush.bf16.msra.mxu0 0
  %2238 = vmatpush.bf16.msra.mxu0 0
  %2239 = vmatpush.bf16.msra.mxu0 0
  %2240 = vmatpush.bf16.msra.mxu0 0
  %2241 = vmatpush.bf16.msra.mxu0 %v2226
  %2242 = vmatpush.bf16.msra.mxu0 %v2225
  %2243 = vmatmul.bf16.gmra.mxu0 %v2230
  %v2244 = vpop.f32.mrf.mxu0
  %v2245 = vadd.f32 0.0, %v2244
  %v2246 = vpop.f32.mrf.mxu0
  %v2247 = vadd.f32 0.0, %v2246
  %2248 = vmatmul.bf16.gmra.mxu0 %v2233
  %v2249 = vpop.f32.mrf.mxu0
  %v2250 = vadd.f32 0.0, %v2249
  %v2251 = vpop.f32.mrf.mxu0
  %v2252 = vadd.f32 0.0, %v2251
  %2253 = vdwg.mxu0
  %v2254 = vadd.f32 %v2208, %v2245
  %v2255 = vadd.f32 %v2210, %v2247
  %v2256 = vadd.f32 %v2213, %v2250
  %v2257 = vadd.f32 %v2215, %v2252
  %v2259 = vperm.slane %v2096, 0
  %v2261 = vadd.f32 %v2254, %v2259
  %v2262 = vadd.f32 %v2255, %v2259
  %v2263 = vadd.f32 %v2256, %v2259
  %v2264 = vadd.f32 %v2257, %v2259
  %v2265 = vmax.f32 %v2261, 0.0
  %v2266 = vmax.f32 %v2262, 0.0
  %v2267 = vmax.f32 %v2263, 0.0
  %v2268 = vmax.f32 %v2264, 0.0
  %s2269 = scalar_lea.vmem %s20, 192
  %v2270 = vld [vmem:[%s2269] sm:$0xf]
  %v2271 = vld [vmem:[%s2269 + $0x4] sm:$0xf]
  %v2272 = vld [vmem:[%s2269 + $0x8] sm:$0xf]
  %v2273 = vld [vmem:[%s2269 + $0xc] sm:$0xf]
  %v2274 = vld [vmem:[%s2269 + $0x10] sm:$0xf]
  %v2275 = vld [vmem:[%s2269 + $0x14] sm:$0xf]
  %v2276 = vld [vmem:[%s2269 + $0x18] sm:$0xf]
  %v2277 = vld [vmem:[%s2269 + $0x1c] sm:$0xf]
  %v2278 = vld [vmem:[%s2269 + $0x20] sm:$0xf]
  %v2279 = vld [vmem:[%s2269 + $0x24] sm:$0xf]
  %v2280 = vld [vmem:[%s2269 + $0x28] sm:$0xf]
  %v2281 = vld [vmem:[%s2269 + $0x2c] sm:$0xf]
  %v2282 = vld [vmem:[%s2269 + $0x30] sm:$0xf]
  %v2283 = vld [vmem:[%s2269 + $0x34] sm:$0xf]
  %v2284 = vld [vmem:[%s2269 + $0x38] sm:$0xf]
  %v2285 = vld [vmem:[%s2269 + $0x3c] sm:$0xf]
  %v2286 = vld [vmem:[%s2269 + $0x40] sm:$0xf]
  %v2287 = vld [vmem:[%s2269 + $0x44] sm:$0xf]
  %v2288 = vld [vmem:[%s2269 + $0x48] sm:$0xf]
  %v2289 = vld [vmem:[%s2269 + $0x4c] sm:$0xf]
  %v2290 = vld [vmem:[%s2269 + $0x50] sm:$0xf]
  %v2291 = vld [vmem:[%s2269 + $0x54] sm:$0xf]
  %v2292 = vld [vmem:[%s2269 + $0x58] sm:$0xf]
  %v2293 = vld [vmem:[%s2269 + $0x5c] sm:$0xf]
  %v2294 = vld [vmem:[%s2269 + $0x60] sm:$0xf]
  %v2295 = vld [vmem:[%s2269 + $0x64] sm:$0xf]
  %v2296 = vld [vmem:[%s2269 + $0x68] sm:$0xf]
  %v2297 = vld [vmem:[%s2269 + $0x6c] sm:$0xf]
  %v2298 = vld [vmem:[%s2269 + $0x70] sm:$0xf]
  %v2299 = vld [vmem:[%s2269 + $0x74] sm:$0xf]
  %v2300 = vld [vmem:[%s2269 + $0x78] sm:$0xf]
  %v2301 = vld [vmem:[%s2269 + $0x7c] sm:$0xf]
  %v2302 = vld [vmem:[%s2269 + $0x80] sm:$0xf]
  %v2303 = vld [vmem:[%s2269 + $0x84] sm:$0xf]
  %v2304 = vld [vmem:[%s2269 + $0x88] sm:$0xf]
  %v2305 = vld [vmem:[%s2269 + $0x8c] sm:$0xf]
  %v2306 = vld [vmem:[%s2269 + $0x90] sm:$0xf]
  %v2307 = vld [vmem:[%s2269 + $0x94] sm:$0xf]
  %v2308 = vld [vmem:[%s2269 + $0x98] sm:$0xf]
  %v2309 = vld [vmem:[%s2269 + $0x9c] sm:$0xf]
  %v2310 = vld [vmem:[%s2269 + $0xa0] sm:$0xf]
  %v2311 = vld [vmem:[%s2269 + $0xa4] sm:$0xf]
  %v2312 = vld [vmem:[%s2269 + $0xa8] sm:$0xf]
  %v2313 = vld [vmem:[%s2269 + $0xac] sm:$0xf]
  %v2314 = vld [vmem:[%s2269 + $0xb0] sm:$0xf]
  %v2315 = vld [vmem:[%s2269 + $0xb4] sm:$0xf]
  %v2316 = vld [vmem:[%s2269 + $0xb8] sm:$0xf]
  %v2317 = vld [vmem:[%s2269 + $0xbc] sm:$0xf]
  %s2318 = scalar_lea.vmem %s21, 1
  %v2319 = vld [vmem:[%s2318] sm:$0x1]
  %v2320 = vpack.c.bf16 %v2266, %v2265
  %v2321 = vpack.c.bf16 %v2268, %v2267
  %v2323 = vsel %vm338, %v2321, 0
  %2325 = vmatpush.bf16.msra.mxu0 0
  %2326 = vmatpush.bf16.msra.mxu0 0
  %2327 = vmatpush.bf16.msra.mxu0 0
  %2328 = vmatpush.bf16.msra.mxu0 0
  %2329 = vmatpush.bf16.msra.mxu0 0
  %2330 = vmatpush.bf16.msra.mxu0 0
  %2331 = vmatpush.bf16.msra.mxu0 %v2323
  %2332 = vmatpush.bf16.msra.mxu0 %v2320
  %2333 = vmatmul.bf16.gmra.mxu0 %v810
  %v2334 = vpop.f32.mrf.mxu0
  %v2335 = vadd.f32 0.0, %v2334
  %v2336 = vpop.f32.mrf.mxu0
  %v2337 = vadd.f32 0.0, %v2336
  %2338 = vmatmul.bf16.gmra.mxu0 %v813
  %v2339 = vpop.f32.mrf.mxu0
  %v2340 = vadd.f32 0.0, %v2339
  %v2341 = vpop.f32.mrf.mxu0
  %v2342 = vadd.f32 0.0, %v2341
  %2343 = vdwg.mxu0
  %v2344 = vpack.c.bf16 %v2337, %v2335
  %v2345 = vpack.c.bf16 %v2342, %v2340
  %2346 = vmatpush.bf16.msra.mxu0 0
  %2347 = vmatpush.bf16.msra.mxu0 0
  %2348 = vmatpush.bf16.msra.mxu0 0
  %2349 = vmatpush.bf16.msra.mxu0 0
  %2350 = vmatpush.bf16.msra.mxu0 0
  %2351 = vmatpush.bf16.msra.mxu0 0
  %2352 = vmatpush.bf16.msra.mxu0 %v2323
  %2353 = vmatpush.bf16.msra.mxu0 %v2320
  %2354 = vmatmul.bf16.gmra.mxu0 %v840
  %v2355 = vpop.f32.mrf.mxu0
  %v2356 = vadd.f32 0.0, %v2355
  %v2357 = vpop.f32.mrf.mxu0
  %v2358 = vadd.f32 0.0, %v2357
  %2359 = vmatmul.bf16.gmra.mxu0 %v843
  %v2360 = vpop.f32.mrf.mxu0
  %v2361 = vadd.f32 0.0, %v2360
  %v2362 = vpop.f32.mrf.mxu0
  %v2363 = vadd.f32 0.0, %v2362
  %2364 = vdwg.mxu0
  %v2365 = vpack.c.bf16 %v2358, %v2356
  %v2366 = vpack.c.bf16 %v2363, %v2361
  %v2383 = vunpack.c.l.b16 %v2286
  %v2384 = vunpack.c.l.b16 %v2287
  %v2385 = vunpack.c.l.b16 %v2288
  %v2386 = vunpack.c.l.b16 %v2289
  %v2387 = vunpack.c.l.b16 %v2290
  %v2388 = vunpack.c.l.b16 %v2291
  %v2389 = vunpack.c.l.b16 %v2292
  %v2390 = vunpack.c.l.b16 %v2293
  %v2391 = vunpack.c.l.b16 %v2294
  %v2392 = vunpack.c.l.b16 %v2295
  %v2393 = vunpack.c.l.b16 %v2296
  %v2394 = vunpack.c.l.b16 %v2297
  %v2395 = vunpack.c.l.b16 %v2298
  %v2396 = vunpack.c.l.b16 %v2299
  %v2397 = vunpack.c.l.b16 %v2300
  %v2398 = vunpack.c.l.b16 %v2301
  %v2399 = vpack.c.b16 %v2384, %v2383
  %v2400 = vpack.c.b16 %v2386, %v2385
  %v2401 = vpack.c.b16 %v2388, %v2387
  %v2402 = vpack.c.b16 %v2390, %v2389
  %v2403 = vpack.c.b16 %v2392, %v2391
  %v2404 = vpack.c.b16 %v2394, %v2393
  %v2405 = vpack.c.b16 %v2396, %v2395
  %v2406 = vpack.c.b16 %v2398, %v2397
  %2415 = vmatpush.bf16.msra.mxu0 %v2406
  %2416 = vmatpush.bf16.msra.mxu0 %v2405
  %2417 = vmatpush.bf16.msra.mxu0 %v2404
  %2418 = vmatpush.bf16.msra.mxu0 %v2403
  %2419 = vmatpush.bf16.msra.mxu0 %v2402
  %2420 = vmatpush.bf16.msra.mxu0 %v2401
  %2421 = vmatpush.bf16.msra.mxu0 %v2400
  %2422 = vmatpush.bf16.msra.mxu0 %v2399
  %2423 = vmatmul.bf16.gmra.mxu0 %v2320
  %v2424 = vpop.f32.mrf.mxu0
  %v2425 = vadd.f32 0.0, %v2424
  %v2426 = vpop.f32.mrf.mxu0
  %v2427 = vadd.f32 0.0, %v2426
  %2428 = vmatmul.bf16.gmra.mxu0 %v2321
  %v2429 = vpop.f32.mrf.mxu0
  %v2430 = vadd.f32 0.0, %v2429
  %v2431 = vpop.f32.mrf.mxu0
  %v2432 = vadd.f32 0.0, %v2431
  %2433 = vdwg.mxu0
  %v2450 = vunpack.c.l.b16 %v2270
  %v2451 = vunpack.c.l.b16 %v2271
  %v2452 = vunpack.c.l.b16 %v2272
  %v2453 = vunpack.c.l.b16 %v2273
  %v2454 = vunpack.c.l.b16 %v2274
  %v2455 = vunpack.c.l.b16 %v2275
  %v2456 = vunpack.c.l.b16 %v2276
  %v2457 = vunpack.c.l.b16 %v2277
  %v2458 = vunpack.c.l.b16 %v2278
  %v2459 = vunpack.c.l.b16 %v2279
  %v2460 = vunpack.c.l.b16 %v2280
  %v2461 = vunpack.c.l.b16 %v2281
  %v2462 = vunpack.c.l.b16 %v2282
  %v2463 = vunpack.c.l.b16 %v2283
  %v2464 = vunpack.c.l.b16 %v2284
  %v2465 = vunpack.c.l.b16 %v2285
  %v2466 = vpack.c.b16 %v2451, %v2450
  %v2467 = vpack.c.b16 %v2453, %v2452
  %v2468 = vpack.c.b16 %v2455, %v2454
  %v2469 = vpack.c.b16 %v2457, %v2456
  %v2470 = vpack.c.b16 %v2459, %v2458
  %v2471 = vpack.c.b16 %v2461, %v2460
  %v2472 = vpack.c.b16 %v2463, %v2462
  %v2473 = vpack.c.b16 %v2465, %v2464
  %2482 = vmatpush.bf16.msra.mxu0 %v2473
  %2483 = vmatpush.bf16.msra.mxu0 %v2472
  %2484 = vmatpush.bf16.msra.mxu0 %v2471
  %2485 = vmatpush.bf16.msra.mxu0 %v2470
  %2486 = vmatpush.bf16.msra.mxu0 %v2469
  %2487 = vmatpush.bf16.msra.mxu0 %v2468
  %2488 = vmatpush.bf16.msra.mxu0 %v2467
  %2489 = vmatpush.bf16.msra.mxu0 %v2466
  %2490 = vmatmul.bf16.gmra.mxu0 %v2344
  %v2491 = vpop.f32.mrf.mxu0
  %v2492 = vadd.f32 %v2425, %v2491
  %v2493 = vpop.f32.mrf.mxu0
  %v2494 = vadd.f32 %v2427, %v2493
  %2495 = vmatmul.bf16.gmra.mxu0 %v2345
  %v2496 = vpop.f32.mrf.mxu0
  %v2497 = vadd.f32 %v2430, %v2496
  %v2498 = vpop.f32.mrf.mxu0
  %v2499 = vadd.f32 %v2432, %v2498
  %2500 = vdwg.mxu0
  %v2517 = vunpack.c.l.b16 %v2302
  %v2518 = vunpack.c.l.b16 %v2303
  %v2519 = vunpack.c.l.b16 %v2304
  %v2520 = vunpack.c.l.b16 %v2305
  %v2521 = vunpack.c.l.b16 %v2306
  %v2522 = vunpack.c.l.b16 %v2307
  %v2523 = vunpack.c.l.b16 %v2308
  %v2524 = vunpack.c.l.b16 %v2309
  %v2525 = vunpack.c.l.b16 %v2310
  %v2526 = vunpack.c.l.b16 %v2311
  %v2527 = vunpack.c.l.b16 %v2312
  %v2528 = vunpack.c.l.b16 %v2313
  %v2529 = vunpack.c.l.b16 %v2314
  %v2530 = vunpack.c.l.b16 %v2315
  %v2531 = vunpack.c.l.b16 %v2316
  %v2532 = vunpack.c.l.b16 %v2317
  %v2533 = vpack.c.b16 %v2518, %v2517
  %v2534 = vpack.c.b16 %v2520, %v2519
  %v2535 = vpack.c.b16 %v2522, %v2521
  %v2536 = vpack.c.b16 %v2524, %v2523
  %v2537 = vpack.c.b16 %v2526, %v2525
  %v2538 = vpack.c.b16 %v2528, %v2527
  %v2539 = vpack.c.b16 %v2530, %v2529
  %v2540 = vpack.c.b16 %v2532, %v2531
  %2549 = vmatpush.bf16.msra.mxu0 %v2540
  %2550 = vmatpush.bf16.msra.mxu0 %v2539
  %2551 = vmatpush.bf16.msra.mxu0 %v2538
  %2552 = vmatpush.bf16.msra.mxu0 %v2537
  %2553 = vmatpush.bf16.msra.mxu0 %v2536
  %2554 = vmatpush.bf16.msra.mxu0 %v2535
  %2555 = vmatpush.bf16.msra.mxu0 %v2534
  %2556 = vmatpush.bf16.msra.mxu0 %v2533
  %2557 = vmatmul.bf16.gmra.mxu0 %v2365
  %v2558 = vpop.f32.mrf.mxu0
  %v2559 = vadd.f32 0.0, %v2558
  %v2560 = vpop.f32.mrf.mxu0
  %v2561 = vadd.f32 0.0, %v2560
  %2562 = vmatmul.bf16.gmra.mxu0 %v2366
  %v2563 = vpop.f32.mrf.mxu0
  %v2564 = vadd.f32 0.0, %v2563
  %v2565 = vpop.f32.mrf.mxu0
  %v2566 = vadd.f32 0.0, %v2565
  %2567 = vdwg.mxu0
  %v2568 = vadd.f32 %v2492, %v2559
  %v2569 = vadd.f32 %v2494, %v2561
  %v2570 = vadd.f32 %v2497, %v2564
  %v2571 = vadd.f32 %v2499, %v2566
  %v2573 = vperm.slane %v2319, 0
  %v2575 = vadd.f32 %v2568, %v2573
  %v2576 = vadd.f32 %v2569, %v2573
  %v2577 = vadd.f32 %v2570, %v2573
  %v2578 = vadd.f32 %v2571, %v2573
  %v2579 = vadd.f32 %v2078, %v2575
  %v2580 = vadd.f32 %v2079, %v2576
  %v2581 = vadd.f32 %v2080, %v2577
  %v2582 = vadd.f32 %v2081, %v2578
  %s2583 = scalar_lea.vmem %s16, 1
  %v2584 = vld [vmem:[%s2583] sm:$0x1]
  %s2585 = scalar_lea.vmem %s17, 1
  %v2586 = vld [vmem:[%s2585] sm:$0x1]
  %v2587 = vsel %vm138, %v2579, 0.0
  %2588 = vadd.xlane.f32.xlu0 %v2587
  %v2589 = vpop.xlane.xlu0 %2588
  %v2590 = vsel %vm138, %v2580, 0.0
  %2591 = vadd.xlane.f32.xlu0 %v2590
  %v2592 = vpop.xlane.xlu0 %2591
  %v2593 = vsel %vm138, %v2581, 0.0
  %2594 = vadd.xlane.f32.xlu0 %v2593
  %v2595 = vpop.xlane.xlu0 %2594
  %v2596 = vsel %vm693, %v2582, 0.0
  %2597 = vadd.xlane.f32.xlu0 %v2596
  %v2598 = vpop.xlane.xlu0 %2597
  %v2599 = vmul.f32 %v2589, %v703
  %v2600 = vmul.f32 %v2592, %v703
  %v2601 = vmul.f32 %v2595, %v703
  %v2602 = vmul.f32 %v2598, %v703
  %v2603 = vsub.f32 %v2579, %v2599
  %v2604 = vsub.f32 %v2580, %v2600
  %v2605 = vsub.f32 %v2581, %v2601
  %v2606 = vsub.f32 %v2582, %v2602
  %v2607 = vmul.f32 %v2603, %v2603
  %v2608 = vmul.f32 %v2604, %v2604
  %v2609 = vmul.f32 %v2605, %v2605
  %v2610 = vmul.f32 %v2606, %v2606
  %v2611 = vsel %vm138, %v2607, 0.0
  %2612 = vadd.xlane.f32.xlu0 %v2611
  %v2613 = vpop.xlane.xlu0 %2612
  %v2614 = vsel %vm138, %v2608, 0.0
  %2615 = vadd.xlane.f32.xlu0 %v2614
  %v2616 = vpop.xlane.xlu0 %2615
  %v2617 = vsel %vm138, %v2609, 0.0
  %2618 = vadd.xlane.f32.xlu0 %v2617
  %v2619 = vpop.xlane.xlu0 %2618
  %v2620 = vsel %vm693, %v2610, 0.0
  %2621 = vadd.xlane.f32.xlu0 %v2620
  %v2622 = vpop.xlane.xlu0 %2621
  %v2623 = vmul.f32 %v2613, %v703
  %v2624 = vmul.f32 %v2616, %v703
  %v2625 = vmul.f32 %v2619, %v703
  %v2626 = vmul.f32 %v2622, %v703
  %v2627 = vadd.f32 %v2623, 1e-05
  %v2628 = vadd.f32 %v2624, 1e-05
  %v2629 = vadd.f32 %v2625, 1e-05
  %v2630 = vadd.f32 %v2626, 1e-05
  %v2631 = vrsqrt.pop %v2627
  %v2632 = vmul.f32 %v2631, %v2627
  %v2633 = vmul.f32 %v2632, %v2631
  %v2634 = vmul.f32 0.5, %v2633
  %v2635 = vsub.f32 1.5, %v2634
  %v2636 = vmul.f32 %v2631, %v2635
  %vm2637 = vweird.f32 %v2627
  %vm2638 = vweird.f32 %v2631
  %vm2639 = vmor %vm2637, %vm2638
  %v2640 = vsel %vm2639, %v2631, %v2636
  %v2641 = vrsqrt.pop %v2628
  %v2642 = vmul.f32 %v2641, %v2628
  %v2643 = vmul.f32 %v2642, %v2641
  %v2644 = vmul.f32 0.5, %v2643
  %v2645 = vsub.f32 1.5, %v2644
  %v2646 = vmul.f32 %v2641, %v2645
  %vm2647 = vweird.f32 %v2628
  %vm2648 = vweird.f32 %v2641
  %vm2649 = vmor %vm2647, %vm2648
  %v2650 = vsel %vm2649, %v2641, %v2646
  %v2651 = vrsqrt.pop %v2629
  %v2652 = vmul.f32 %v2651, %v2629
  %v2653 = vmul.f32 %v2652, %v2651
  %v2654 = vmul.f32 0.5, %v2653
  %v2655 = vsub.f32 1.5, %v2654
  %v2656 = vmul.f32 %v2651, %v2655
  %vm2657 = vweird.f32 %v2629
  %vm2658 = vweird.f32 %v2651
  %vm2659 = vmor %vm2657, %vm2658
  %v2660 = vsel %vm2659, %v2651, %v2656
  %v2661 = vrsqrt.pop %v2630
  %v2662 = vmul.f32 %v2661, %v2630
  %v2663 = vmul.f32 %v2662, %v2661
  %v2664 = vmul.f32 0.5, %v2663
  %v2665 = vsub.f32 1.5, %v2664
  %v2666 = vmul.f32 %v2661, %v2665
  %vm2667 = vweird.f32 %v2630
  %vm2668 = vweird.f32 %v2661
  %vm2669 = vmor %vm2667, %vm2668
  %v2670 = vsel %vm2669, %v2661, %v2666
  %v2671 = vmul.f32 %v2603, %v2640
  %v2672 = vmul.f32 %v2604, %v2650
  %v2673 = vmul.f32 %v2605, %v2660
  %v2674 = vmul.f32 %v2606, %v2670
  %v2676 = vperm.slane %v2584, 0
  %v2678 = vmul.f32 %v2671, %v2676
  %v2679 = vmul.f32 %v2672, %v2676
  %v2680 = vmul.f32 %v2673, %v2676
  %v2681 = vmul.f32 %v2674, %v2676
  %v2683 = vperm.slane %v2586, 0
  %v2685 = vadd.f32 %v2678, %v2683
  %v2686 = vadd.f32 %v2679, %v2683
  %v2687 = vadd.f32 %v2680, %v2683
  %v2688 = vadd.f32 %v2681, %v2683
  %2690 = vset.pattern.permute.xlu0 0
  %2691 = vperm.xlu0 %2690, %v96
  %v2692 = vpop.permute.xlu0 %2691
  %2695 = vset.pattern.permute.xlu0 0
  %2696 = vperm.xlu0 %2695, %v97
  %v2697 = vpop.permute.xlu0 %2696
  %2700 = vset.pattern.permute.xlu0 0
  %2701 = vperm.xlu0 %2700, %v98
  %v2702 = vpop.permute.xlu0 %2701
  %2705 = vset.pattern.permute.xlu0 0
  %2706 = vperm.xlu0 %2705, %v99
  %v2707 = vpop.permute.xlu0 %2706
  %v2709 = vmul.f32 %v2685, %v2692
  %v2710 = vmul.f32 %v2686, %v2697
  %v2711 = vmul.f32 %v2687, %v2702
  %v2712 = vmul.f32 %v2688, %v2707
  %v2713 = vld [vmem:[%s22] sm:$0x1]
  %v2714 = vld [vmem:[%s23] sm:$0x1]
  %v2715 = vsel %vm138, %v2709, 0.0
  %2716 = vadd.xlane.f32.xlu0 %v2715
  %v2717 = vpop.xlane.xlu0 %2716
  %v2718 = vsel %vm138, %v2710, 0.0
  %2719 = vadd.xlane.f32.xlu0 %v2718
  %v2720 = vpop.xlane.xlu0 %2719
  %v2721 = vsel %vm138, %v2711, 0.0
  %2722 = vadd.xlane.f32.xlu0 %v2721
  %v2723 = vpop.xlane.xlu0 %2722
  %v2724 = vsel %vm693, %v2712, 0.0
  %2725 = vadd.xlane.f32.xlu0 %v2724
  %v2726 = vpop.xlane.xlu0 %2725
  %v2727 = vmul.f32 %v2717, %v703
  %v2728 = vmul.f32 %v2720, %v703
  %v2729 = vmul.f32 %v2723, %v703
  %v2730 = vmul.f32 %v2726, %v703
  %v2731 = vsub.f32 %v2709, %v2727
  %v2732 = vsub.f32 %v2710, %v2728
  %v2733 = vsub.f32 %v2711, %v2729
  %v2734 = vsub.f32 %v2712, %v2730
  %v2735 = vmul.f32 %v2731, %v2731
  %v2736 = vmul.f32 %v2732, %v2732
  %v2737 = vmul.f32 %v2733, %v2733
  %v2738 = vmul.f32 %v2734, %v2734
  %v2739 = vsel %vm138, %v2735, 0.0
  %2740 = vadd.xlane.f32.xlu0 %v2739
  %v2741 = vpop.xlane.xlu0 %2740
  %v2742 = vsel %vm138, %v2736, 0.0
  %2743 = vadd.xlane.f32.xlu0 %v2742
  %v2744 = vpop.xlane.xlu0 %2743
  %v2745 = vsel %vm138, %v2737, 0.0
  %2746 = vadd.xlane.f32.xlu0 %v2745
  %v2747 = vpop.xlane.xlu0 %2746
  %v2748 = vsel %vm693, %v2738, 0.0
  %2749 = vadd.xlane.f32.xlu0 %v2748
  %v2750 = vpop.xlane.xlu0 %2749
  %v2751 = vmul.f32 %v2741, %v703
  %v2752 = vmul.f32 %v2744, %v703
  %v2753 = vmul.f32 %v2747, %v703
  %v2754 = vmul.f32 %v2750, %v703
  %v2755 = vadd.f32 %v2751, 1e-05
  %v2756 = vadd.f32 %v2752, 1e-05
  %v2757 = vadd.f32 %v2753, 1e-05
  %v2758 = vadd.f32 %v2754, 1e-05
  %v2759 = vrsqrt.pop %v2755
  %v2760 = vmul.f32 %v2759, %v2755
  %v2761 = vmul.f32 %v2760, %v2759
  %v2762 = vmul.f32 0.5, %v2761
  %v2763 = vsub.f32 1.5, %v2762
  %v2764 = vmul.f32 %v2759, %v2763
  %vm2765 = vweird.f32 %v2755
  %vm2766 = vweird.f32 %v2759
  %vm2767 = vmor %vm2765, %vm2766
  %v2768 = vsel %vm2767, %v2759, %v2764
  %v2769 = vrsqrt.pop %v2756
  %v2770 = vmul.f32 %v2769, %v2756
  %v2771 = vmul.f32 %v2770, %v2769
  %v2772 = vmul.f32 0.5, %v2771
  %v2773 = vsub.f32 1.5, %v2772
  %v2774 = vmul.f32 %v2769, %v2773
  %vm2775 = vweird.f32 %v2756
  %vm2776 = vweird.f32 %v2769
  %vm2777 = vmor %vm2775, %vm2776
  %v2778 = vsel %vm2777, %v2769, %v2774
  %v2779 = vrsqrt.pop %v2757
  %v2780 = vmul.f32 %v2779, %v2757
  %v2781 = vmul.f32 %v2780, %v2779
  %v2782 = vmul.f32 0.5, %v2781
  %v2783 = vsub.f32 1.5, %v2782
  %v2784 = vmul.f32 %v2779, %v2783
  %vm2785 = vweird.f32 %v2757
  %vm2786 = vweird.f32 %v2779
  %vm2787 = vmor %vm2785, %vm2786
  %v2788 = vsel %vm2787, %v2779, %v2784
  %v2789 = vrsqrt.pop %v2758
  %v2790 = vmul.f32 %v2789, %v2758
  %v2791 = vmul.f32 %v2790, %v2789
  %v2792 = vmul.f32 0.5, %v2791
  %v2793 = vsub.f32 1.5, %v2792
  %v2794 = vmul.f32 %v2789, %v2793
  %vm2795 = vweird.f32 %v2758
  %vm2796 = vweird.f32 %v2789
  %vm2797 = vmor %vm2795, %vm2796
  %v2798 = vsel %vm2797, %v2789, %v2794
  %v2799 = vmul.f32 %v2731, %v2768
  %v2800 = vmul.f32 %v2732, %v2778
  %v2801 = vmul.f32 %v2733, %v2788
  %v2802 = vmul.f32 %v2734, %v2798
  %v2804 = vperm.slane %v2713, 0
  %v2806 = vmul.f32 %v2799, %v2804
  %v2807 = vmul.f32 %v2800, %v2804
  %v2808 = vmul.f32 %v2801, %v2804
  %v2809 = vmul.f32 %v2802, %v2804
  %v2811 = vperm.slane %v2714, 0
  %v2813 = vadd.f32 %v2806, %v2811
  %v2814 = vadd.f32 %v2807, %v2811
  %v2815 = vadd.f32 %v2808, %v2811
  %v2816 = vadd.f32 %v2809, %v2811
  %v2817 = vmul.f32 %v2813, %v2692
  %v2818 = vmul.f32 %v2814, %v2697
  %v2819 = vmul.f32 %v2815, %v2702
  %v2820 = vmul.f32 %v2816, %v2707
  %v2821 = vpack.c.bf16 %v2818, %v2817
  %v2822 = vpack.c.bf16 %v2820, %v2819
  %v2823 = vld [vmem:[%s24] sm:$0xf]
  %v2824 = vld [vmem:[%s24 + $0x4] sm:$0xf]
  %v2825 = vld [vmem:[%s24 + $0x8] sm:$0xf]
  %v2826 = vld [vmem:[%s24 + $0xc] sm:$0xf]
  %v2827 = vld [vmem:[%s25] sm:$0x1]
  %v2829 = vperm.slane %v2827, 0
  %v2835 = vunpack.c.l.b16 %v2823
  %v2836 = vunpack.c.l.b16 %v2824
  %v2837 = vunpack.c.l.b16 %v2825
  %v2838 = vunpack.c.l.b16 %v2826
  %v2839 = vpack.c.b16 %v2836, %v2835
  %v2840 = vpack.c.b16 %v2838, %v2837
  %v2844 = vsel %vm138, %v2821, 0
  %v2847 = vsel %vm138, %v2822, 0
  %2849 = vmatpush.bf16.msra.mxu0 0
  %2850 = vmatpush.bf16.msra.mxu0 0
  %2851 = vmatpush.bf16.msra.mxu0 0
  %2852 = vmatpush.bf16.msra.mxu0 0
  %2853 = vmatpush.bf16.msra.mxu0 0
  %2854 = vmatpush.bf16.msra.mxu0 0
  %2855 = vmatpush.bf16.msra.mxu0 %v2840
  %2856 = vmatpush.bf16.msra.mxu0 %v2839
  %2857 = vmatmul.bf16.gmra.mxu0 %v2844
  %v2858 = vpop.f32.mrf.mxu0
  %v2859 = vadd.f32 %v2829, %v2858
  %v2860 = vpop.f32.mrf.mxu0
  %v2861 = vadd.f32 %v2829, %v2860
  %2862 = vmatmul.bf16.gmra.mxu0 %v2847
  %v2863 = vpop.f32.mrf.mxu0
  %v2864 = vadd.f32 %v2829, %v2863
  %v2865 = vpop.f32.mrf.mxu0
  %v2866 = vadd.f32 %v2829, %v2865
  %2867 = vdwg.mxu0
  %v2868 = vmul.f32 %v2859, %v2692
  %v2869 = vmul.f32 %v2861, %v2697
  %v2870 = vmul.f32 %v2864, %v2702
  %v2871 = vmul.f32 %v2866, %v2707
  %2872 = vst [vmem:[%s26] sm:$0xff] %v2868
  %2873 = vst [vmem:[%s26 + $0x8] sm:$0xff] %v2869
  %2874 = vst [vmem:[%s26 + $0x10] sm:$0xff] %v2870
  %2875 = vst [vmem:[%s26 + $0x18] sm:$0xf] %v2871
  // Predicated region
  $region106: #{multi_speaker_fastspeech.3} parent=0 // pred_check
    _
  $region107: #{multi_speaker_fastspeech.3} parent=0 // pred_check_branch
    %2877 = sbr.rel (0) target = $region109
  $region108: #{multi_speaker_fastspeech.3} parent=0 // pred_region
    _
  $region109: #{multi_speaker_fastspeech.3} parent=0 // pred_fallthru
    _
  // Predicated region
  $region110: #{multi_speaker_fastspeech.3} parent=0 // pred_check
    _
  $region111: #{multi_speaker_fastspeech.3} parent=0 // pred_check_branch
    %2879 = sbr.rel (0) target = $region113
  $region112: #{multi_speaker_fastspeech.3} parent=0 // pred_region
    _
  $region113: #{multi_speaker_fastspeech.3} parent=0 // pred_fallthru
    _

</llo_original>
